<compile_context>
chip_gen: v6e
topology: v6e:2x2x1
jax: 0.10.0
libtpu: 0.0.40
codegen_flags: <defaults>
</compile_context>

<pallas_src>
import math

import jax
import jax.numpy as jnp
import numpy as np
from jax.experimental import pallas as pl
from jax.experimental.pallas import tpu as pltpu

BN_EPS = 1e-5
LANE = 128                          # pad channel dims to multiples of 128 (lane-dense)
ROW_TILE = 256                      # row tile for matmul / apply grids
VMEM_LIMIT_BYTES = 48 * 1024 * 1024


def _ceil_to(n, m):
    return ((n + m - 1) // m) * m


# ---------------------------------------------------------------------------
# Kernel A:  one row tile of  H = X @ W  (bf16 x bf16 -> f32)  +  BN partial stats.
# ---------------------------------------------------------------------------
def _matmul_stats_kernel(x_ref, w_ref, h_ref, stats_ref):
    acc = jnp.dot(x_ref[...], w_ref[...], preferred_element_type=jnp.float32)
    h_ref[...] = acc
    s1 = jnp.sum(acc, axis=0, keepdims=True)
    s2 = jnp.sum(acc * acc, axis=0, keepdims=True)
    stats_ref[...] = jnp.concatenate([s1, s2], axis=0)[None]      # (1, 2, C)


def matmul_stats(x2d, w2d):
    """x2d [P, K] bf16, w2d [K, C] bf16 -> (H [Ppad, C] f32, stats [nt, 2, C] f32)."""
    P, K = x2d.shape
    C = w2d.shape[1]
    tm = min(ROW_TILE, _ceil_to(P, 8))
    Ppad = _ceil_to(P, tm)
    if Ppad != P:                                   # zero rows: contribute 0 to s1/s2
        x2d = jnp.pad(x2d, ((0, Ppad - P), (0, 0)))
    nt = Ppad // tm
    cost = pl.CostEstimate(
        flops=2 * Ppad * K * C, transcendentals=0,
        bytes_accessed=Ppad * K * 2 + K * C * 2 + Ppad * C * 4 + nt * 2 * C * 4)
    return pl.pallas_call(
        _matmul_stats_kernel,
        out_shape=(jax.ShapeDtypeStruct((Ppad, C), jnp.float32),
                   jax.ShapeDtypeStruct((nt, 2, C), jnp.float32)),
        grid_spec=pltpu.PrefetchScalarGridSpec(
            num_scalar_prefetch=0, grid=(nt,),
            in_specs=[pl.BlockSpec((tm, K), lambda i: (i, 0)),
                      pl.BlockSpec((K, C), lambda i: (0, 0))],      # W resident in VMEM
            out_specs=[pl.BlockSpec((tm, C), lambda i: (i, 0)),
                       pl.BlockSpec((1, 2, C), lambda i: (i, 0, 0))]),
        compiler_params=pltpu.CompilerParams(
            dimension_semantics=("parallel",),
            vmem_limit_bytes=VMEM_LIMIT_BYTES),
        cost_estimate=cost,
    )(x2d, w2d)


# ---------------------------------------------------------------------------
# Kernel B:  y = [ReLU]( h * scale + shift  [+ residual] ),  row-tiled.
# ---------------------------------------------------------------------------
def _make_apply_kernel(add_residual, apply_relu):
    def kernel(*refs):
        if add_residual:
            h_ref, ss_ref, r_ref, o_ref = refs
        else:
            h_ref, ss_ref, o_ref = refs
        y = h_ref[...] * ss_ref[0:1, :] + ss_ref[1:2, :]
        if add_residual:
            y = y + r_ref[...]
        if apply_relu:
            y = jnp.maximum(y, 0.0)
        o_ref[...] = y
    return kernel


def bn_apply(h, ss, residual=None, relu=True):
    """h [Ppad, C] f32, ss [2, C] f32 (row0=scale, row1=shift)."""
    Ppad, C = h.shape
    tm = min(ROW_TILE, Ppad)
    nt = Ppad // tm
    add_res = residual is not None
    in_specs = [pl.BlockSpec((tm, C), lambda i: (i, 0)),
                pl.BlockSpec((2, C), lambda i: (0, 0))]             # scale/shift resident
    args = [h, ss]
    if add_res:
        in_specs.append(pl.BlockSpec((tm, C), lambda i: (i, 0)))
        args.append(residual)
    cost = pl.CostEstimate(
        flops=(3 + add_res) * Ppad * C, transcendentals=0,
        bytes_accessed=(2 + add_res) * Ppad * C * 4 + 2 * C * 4)
    return pl.pallas_call(
        _make_apply_kernel(add_res, relu),
        out_shape=jax.ShapeDtypeStruct((Ppad, C), jnp.float32),
        grid_spec=pltpu.PrefetchScalarGridSpec(
            num_scalar_prefetch=0, grid=(nt,),
            in_specs=in_specs,
            out_specs=pl.BlockSpec((tm, C), lambda i: (i, 0))),
        compiler_params=pltpu.CompilerParams(
            dimension_semantics=("parallel",),
            vmem_limit_bytes=VMEM_LIMIT_BYTES),
        cost_estimate=cost,
    )(*args)


def fold_bn(stats, n_rows, gb):
    """Combine per-tile partial stats into per-channel (scale, shift). Tiny O(C) work."""
    s = jnp.sum(stats, axis=0)                                      # (2, C)
    mean = s[0] / float(n_rows)
    var = jnp.maximum(s[1] / float(n_rows) - mean * mean, 0.0)
    scale = gb[0] * jax.lax.rsqrt(var + BN_EPS)
    shift = gb[1] - mean * scale
    return jnp.stack([scale, shift], axis=0)                        # (2, C) f32


# ---------------------------------------------------------------------------
# Static im2col / weight reshaping (layout plumbing).  Activations are channels-last
# [N, T, H, W, Cpad]; taps are cast to bf16 (the dominant matmul operand).
# ---------------------------------------------------------------------------
def spatial_im2col(x, k, pad, stride):
    N, T, H, W, C = x.shape
    Ho = (H + 2 * pad - k) // stride + 1
    Wo = (W + 2 * pad - k) // stride + 1
    xp = jnp.pad(x, ((0, 0), (0, 0), (pad, pad), (pad, pad), (0, 0)))
    cols = []
    for dh in range(k):
        for dw in range(k):
            cols.append(xp[:, :, dh:dh + stride * Ho:stride,
                              dw:dw + stride * Wo:stride, :])
    taps = jnp.concatenate(cols, axis=-1).astype(jnp.bfloat16)
    return taps.reshape(N * T * Ho * Wo, k * k * C), (N, T, Ho, Wo)


def temporal_im2col(x, kt, pad, stride):
    N, T, H, W, C = x.shape
    To = (T + 2 * pad - kt) // stride + 1
    xp = jnp.pad(x, ((0, 0), (pad, pad), (0, 0), (0, 0), (0, 0)))
    cols = [xp[:, dt:dt + stride * To:stride] for dt in range(kt)]
    taps = jnp.concatenate(cols, axis=-1).astype(jnp.bfloat16)
    return taps.reshape(N * To * H * W, kt * C), (N, To, H, W)


def spatial_w2d(w):          # [Cmid, Cin, 1, k, k] -> [k*k*Cin, Cmid]
    cmid, cin, _, kh, kw = w.shape
    return jnp.transpose(w[:, :, 0], (2, 3, 1, 0)).reshape(kh * kw * cin, cmid)


def temporal_w2d(w):         # [Cout, Cmid, kt, 1, 1] -> [kt*Cmid, Cout]
    cout, cmid, kt, _, _ = w.shape
    return jnp.transpose(w[:, :, :, 0, 0], (2, 1, 0)).reshape(kt * cmid, cout)


def _pad_oi(w, o_pad, i_pad):
    o, i = w.shape[0], w.shape[1]
    return jnp.pad(w, ((0, o_pad - o), (0, i_pad - i)) + ((0, 0),) * (w.ndim - 2))


def _pad_vec(v, n_pad):
    return jnp.pad(v, (0, n_pad - v.shape[0]))


# ---------------------------------------------------------------------------
# Module forward (Pallas path), channels-last with lane-padded channels.
# ---------------------------------------------------------------------------
def st_conv_bn_fwd(x, cp, gb_out, *, stride=1, residual=None, relu=True):
    """SpatioTemporalConv (spatial conv -> BN -> ReLU -> temporal conv) fused with the
    BatchNorm3d that always follows it in the ResBlock (+ optional residual / ReLU)."""
    k, pad = cp['k'], cp['pad']
    # spatial (1,k,k) conv, stride (1,s,s), pad (0,p,p)  ->  BN(mid)  ->  ReLU
    taps, (N, T, Ho, Wo) = spatial_im2col(x, k, pad, stride)
    P1 = N * T * Ho * Wo
    h_rows, st1 = matmul_stats(taps, cp['ws2d'])
    h_rows = bn_apply(h_rows, fold_bn(st1, P1, cp['gb_mid']), relu=True)
    h = h_rows[:P1].reshape(N, T, Ho, Wo, -1)
    # temporal (k,1,1) conv, stride (s,1,1), pad (p,0,0)  ->  BN(out) [+res] [ReLU]
    taps_t, (N, To, Ho, Wo) = temporal_im2col(h, k, pad, stride)
    P2 = N * To * Ho * Wo
    y_rows, st2 = matmul_stats(taps_t, cp['wt2d'])
    r_rows = None
    if residual is not None:
        r_rows = residual.reshape(P2, -1)
        if r_rows.shape[0] != y_rows.shape[0]:
            r_rows = jnp.pad(r_rows, ((0, y_rows.shape[0] - P2), (0, 0)))
    y_rows = bn_apply(y_rows, fold_bn(st2, P2, gb_out), residual=r_rows, relu=relu)
    return y_rows[:P2].reshape(N, To, Ho, Wo, -1)


def res_block_fwd(x, bp):
    """SpatioTemporalResBlock:  relu( bn2(conv2( relu(bn1(conv1(x))) )) + skip )."""
    stride = 2 if bp['downsample'] else 1
    r = st_conv_bn_fwd(x, bp['conv1'], bp['gb1'], stride=stride, relu=True)
    if bp['downsample']:
        skip = st_conv_bn_fwd(x, bp['dconv'], bp['gb_d'], stride=2, relu=False)
    else:
        skip = x
    return st_conv_bn_fwd(r, bp['conv2'], bp['gb2'], stride=1,
                          residual=skip, relu=True)


def spatio_temporal_res_layer(x_ncdhw, layer_params, c_out):
    """x: [N, C, T, H, W] (PyTorch layout).  Returns [N, c_out, T', H', W']."""
    N, C, T, H, W = x_ncdhw.shape
    x = jnp.transpose(x_ncdhw, (0, 2, 3, 4, 1))                     # -> channels-last
    x = jnp.pad(x, ((0, 0),) * 4 + ((0, _ceil_to(C, LANE) - C),))   # lane-pad channels
    for bp in layer_params:
        x = res_block_fwd(x, bp)
    x = x[..., :c_out]
    return jnp.transpose(x, (0, 4, 1, 2, 3))                        # -> NCDHW


# ---------------------------------------------------------------------------
# Parameter construction (mirrors the PyTorch module's structure).
# ---------------------------------------------------------------------------
def init_st_conv(key, cin, cout, k, pad):
    mid = int(math.floor(k * k * k * cin * cout / (k * k * cin + k * cout)))
    cin_p = _ceil_to(cin, LANE)
    mid_p = _ceil_to(mid, LANE)
    cout_p = _ceil_to(cout, LANE)
    k1, k2, k3, k4 = jax.random.split(key, 4)
    ws = jax.random.normal(k1, (mid, cin, 1, k, k), jnp.float32) / math.sqrt(cin * k * k)
    wt = jax.random.normal(k2, (cout, mid, k, 1, 1), jnp.float32) / math.sqrt(mid * k)
    g_mid = 1.0 + 0.1 * jax.random.normal(k3, (mid,), jnp.float32)
    b_mid = 0.1 * jax.random.normal(k4, (mid,), jnp.float32)
    ws_p = _pad_oi(ws, mid_p, cin_p)
    wt_p = _pad_oi(wt, cout_p, mid_p)
    return {
        'k': k, 'pad': pad, 'mid': mid,
        # unpadded f32 params for the independent reference path
        'ws': ws, 'wt': wt, 'g_mid': g_mid, 'b_mid': b_mid,
        # lane-padded, im2col'd, bf16 weights for the Pallas path (cast once at init)
        'ws2d': spatial_w2d(ws_p).astype(jnp.bfloat16),
        'wt2d': temporal_w2d(wt_p).astype(jnp.bfloat16),
        # packed gamma/beta (padded channels get gamma=beta=0 -> scale=shift=0 -> output 0)
        'gb_mid': jnp.stack([_pad_vec(g_mid, mid_p), _pad_vec(b_mid, mid_p)], axis=0),
    }


def init_block(key, cin, cout, k, downsample):
    ks = jax.random.split(key, 9)
    pad = k // 2
    cout_p = _ceil_to(cout, LANE)

    def bn_pair(kg, kb, c):
        g = 1.0 + 0.1 * jax.random.normal(kg, (c,), jnp.float32)
        b = 0.1 * jax.random.normal(kb, (c,), jnp.float32)
        return g, b

    bp = {'downsample': downsample,
          'conv1': init_st_conv(ks[0], cin, cout, k, pad),
          'conv2': init_st_conv(ks[1], cout, cout, k, pad)}
    bp['g1'], bp['b1'] = bn_pair(ks[2], ks[3], cout)
    bp['g2'], bp['b2'] = bn_pair(ks[4], ks[5], cout)
    bp['gb1'] = jnp.stack([_pad_vec(bp['g1'], cout_p), _pad_vec(bp['b1'], cout_p)], axis=0)
    bp['gb2'] = jnp.stack([_pad_vec(bp['g2'], cout_p), _pad_vec(bp['b2'], cout_p)], axis=0)
    if downsample:
        bp['dconv'] = init_st_conv(ks[6], cin, cout, 1, 0)
        bp['g_d'], bp['b_d'] = bn_pair(ks[7], ks[8], cout)
        bp['gb_d'] = jnp.stack([_pad_vec(bp['g_d'], cout_p),
                                _pad_vec(bp['b_d'], cout_p)], axis=0)
    return bp


def init_layer(key, cin, cout, k, layer_size, downsample):
    keys = jax.random.split(key, layer_size)
    blocks = [init_block(keys[0], cin, cout, k, downsample)]
    for i in range(1, layer_size):
        blocks.append(init_block(keys[i], cout, cout, k, False))
    return blocks


# ---------------------------------------------------------------------------
# Pure-JAX reference (independent path: lax.conv on NCDHW).  Conv operands are cast to
# bf16 (f32 accumulation) to match the kernel's MXU precision; BN/residual/ReLU in f32.
# ---------------------------------------------------------------------------
def _conv3d_ref(x, w, stride, padding):
    return jax.lax.conv_general_dilated(
        x.astype(jnp.bfloat16), w.astype(jnp.bfloat16),
        window_strides=stride, padding=[(p, p) for p in padding],
        dimension_numbers=('NCDHW', 'OIDHW', 'NCDHW'),
        preferred_element_type=jnp.float32)


def _bn3d_ref(x, g, b):
    mean = jnp.mean(x, axis=(0, 2, 3, 4), keepdims=True)
    var = jnp.mean((x - mean) ** 2, axis=(0, 2, 3, 4), keepdims=True)
    gr, br = g.reshape(1, -1, 1, 1, 1), b.reshape(1, -1, 1, 1, 1)
    return gr * (x - mean) * jax.lax.rsqrt(var + BN_EPS) + br


def _st_conv_ref(x, cp, stride):
    k, p = cp['k'], cp['pad']
    h = _conv3d_ref(x, cp['ws'], (1, stride, stride), (0, p, p))
    h = jnp.maximum(_bn3d_ref(h, cp['g_mid'], cp['b_mid']), 0.0)
    return _conv3d_ref(h, cp['wt'], (stride, 1, 1), (p, 0, 0))


def _res_block_ref(x, bp):
    stride = 2 if bp['downsample'] else 1
    r = jnp.maximum(_bn3d_ref(_st_conv_ref(x, bp['conv1'], stride), bp['g1'], bp['b1']), 0.0)
    r = _bn3d_ref(_st_conv_ref(r, bp['conv2'], 1), bp['g2'], bp['b2'])
    skip = x
    if bp['downsample']:
        skip = _bn3d_ref(_st_conv_ref(x, bp['dconv'], 2), bp['g_d'], bp['b_d'])
    return jnp.maximum(skip + r, 0.0)


def res_layer_ref(x, layer_params):
    for bp in layer_params:
        x = _res_block_ref(x, bp)
    return x


# ---------------------------------------------------------------------------
if __name__ == "__main__":
    # Small shapes consistent with the module: x is [N, C, T, H, W].
    # H=W=16 makes the first spatial stage span 2 row tiles (exercises the tiled
    # partial-stats BN path) while later stages are single-tile.
    N, C_IN, C_OUT, T, H, W = 2, 4, 8, 4, 16, 16
    KERNEL, LAYER_SIZE, DOWNSAMPLE = 3, 2, True   # exercises downsample + identity blocks

    key = jax.random.PRNGKey(0)
    kx, kp = jax.random.split(key)
    x = jax.random.normal(kx, (N, C_IN, T, H, W), jnp.float32)
    layer_params = init_layer(kp, C_IN, C_OUT, KERNEL, LAYER_SIZE, DOWNSAMPLE)

    fwd = jax.jit(lambda xx: spatio_temporal_res_layer(xx, layer_params, C_OUT))
    out = jax.block_until_ready(fwd(x))

    ref = jax.block_until_ready(res_layer_ref(x, layer_params))
    np.testing.assert_allclose(np.asarray(out), np.asarray(ref), rtol=5e-3, atol=5e-3)

    print("KERNEL_OK")
</pallas_src>

<mosaic_0001>
module attributes {stable_mosaic.version = 11 : i64} {
  func.func @_matmul_stats_kernel(%arg0: i32, %arg1: memref<256x128xbf16, #tpu.memory_space<vmem>>, %arg2: memref<128x128xbf16, #tpu.memory_space<vmem>>, %arg3: memref<256x128xf32, #tpu.memory_space<vmem>>, %arg4: memref<1x2x128xf32, #tpu.memory_space<vmem>>) attributes {dimension_semantics = [#tpu.dimension_semantics<parallel>], iteration_bounds = array<i64: 2>, scalar_prefetch = 0 : i64, scratch_operands = 0 : i64, tpu.core_type = #tpu.core_type<tc>, window_params = [{transform_indices = @transform_0, window_bounds = array<i64: 256, 128>}, {pipeline_mode = #tpu.pipeline_mode<synchronous>, transform_indices = @transform_1, window_bounds = array<i64: 128, 128>}, {transform_indices = @transform_2, window_bounds = array<i64: 256, 128>}, {transform_indices = @transform_3, window_bounds = array<i64: 1, 2, 128>}]} {
    %c0 = arith.constant 0 : index
    %c0_0 = arith.constant 0 : index
    %0 = vector.load %arg1[%c0, %c0_0] : memref<256x128xbf16, #tpu.memory_space<vmem>>, vector<256x128xbf16>
    %c0_1 = arith.constant 0 : index
    %c0_2 = arith.constant 0 : index
    %1 = vector.load %arg2[%c0_1, %c0_2] : memref<128x128xbf16, #tpu.memory_space<vmem>>, vector<128x128xbf16>
    %cst = arith.constant dense<0.000000e+00> : vector<256x128xf32>
    %2 = tpu.matmul %0, %1, %cst {dimension_numbers = #tpu.dot_dimension_numbers<[1], [0], [0], [1], [0, 0, 1, 1], [], []>} : vector<256x128xbf16>, vector<128x128xbf16>, vector<256x128xf32> -> vector<256x128xf32>
    %c0_3 = arith.constant 0 : index
    %c0_4 = arith.constant 0 : index
    %3 = vector.load %arg3[%c0_3, %c0_4] : memref<256x128xf32, #tpu.memory_space<vmem>>, vector<256x128xf32>
    tpu.vector_store %arg3[%c0_3, %c0_4], %2 {strides = array<i32>} : memref<256x128xf32, #tpu.memory_space<vmem>>, vector<256x128xf32>,
    %cst_5 = arith.constant dense<0.000000e+00> : vector<128xf32>
    %4 = vector.multi_reduction <add>, %2, %cst_5 [0] : vector<256x128xf32> to vector<128xf32>
    %5 = vector.shape_cast %4 : vector<128xf32> to vector<1x128xf32>
    %6 = arith.mulf %2, %2 : vector<256x128xf32>
    %cst_6 = arith.constant dense<0.000000e+00> : vector<128xf32>
    %7 = vector.multi_reduction <add>, %6, %cst_6 [0] : vector<256x128xf32> to vector<128xf32>
    %8 = vector.shape_cast %7 : vector<128xf32> to vector<1x128xf32>
    %9 = tpu.concatenate %5, %8 in 0 : vector<1x128xf32>, vector<1x128xf32> -> vector<2x128xf32>
    %10 = vector.shape_cast %9 : vector<2x128xf32> to vector<1x2x128xf32>
    %c0_7 = arith.constant 0 : index
    %c0_8 = arith.constant 0 : index
    %c0_9 = arith.constant 0 : index
    %11 = vector.load %arg4[%c0_7, %c0_8, %c0_9] : memref<1x2x128xf32, #tpu.memory_space<vmem>>, vector<1x2x128xf32>
    tpu.vector_store %arg4[%c0_7, %c0_8, %c0_9], %10 {strides = array<i32>} : memref<1x2x128xf32, #tpu.memory_space<vmem>>, vector<1x2x128xf32>,
    return
  }
  func.func @transform_0(%arg0: i32) -> (i32, i32) {
    %c0_i32 = arith.constant 0 : i32
    %c0_i32_0 = arith.constant 0 : i32
    return %arg0, %c0_i32 : i32, i32
  }
  func.func @transform_1(%arg0: i32) -> (i32, i32) {
    %c0_i32 = arith.constant 0 : i32
    %c0_i32_0 = arith.constant 0 : i32
    %c0_i32_1 = arith.constant 0 : i32
    return %c0_i32, %c0_i32_0 : i32, i32
  }
  func.func @transform_2(%arg0: i32) -> (i32, i32) {
    %c0_i32 = arith.constant 0 : i32
    %c0_i32_0 = arith.constant 0 : i32
    return %arg0, %c0_i32 : i32, i32
  }
  func.func @transform_3(%arg0: i32) -> (i32, i32, i32) {
    %c0_i32 = arith.constant 0 : i32
    %c0_i32_0 = arith.constant 0 : i32
    %c0_i32_1 = arith.constant 0 : i32
    return %arg0, %c0_i32, %c0_i32_0 : i32, i32, i32
  }
}

module attributes {stable_mosaic.version = 11 : i64} {
  func.func @kernel(%arg0: i32, %arg1: memref<256x128xf32, #tpu.memory_space<vmem>>, %arg2: memref<2x128xf32, #tpu.memory_space<vmem>>, %arg3: memref<256x128xf32, #tpu.memory_space<vmem>>) attributes {dimension_semantics = [#tpu.dimension_semantics<parallel>], iteration_bounds = array<i64: 2>, scalar_prefetch = 0 : i64, scratch_operands = 0 : i64, tpu.core_type = #tpu.core_type<tc>, window_params = [{transform_indices = @transform_0, window_bounds = array<i64: 256, 128>}, {pipeline_mode = #tpu.pipeline_mode<synchronous>, transform_indices = @transform_1, window_bounds = array<i64: 2, 128>}, {transform_indices = @transform_2, window_bounds = array<i64: 256, 128>}]} {
    %c0 = arith.constant 0 : index
    %c0_0 = arith.constant 0 : index
    %0 = vector.load %arg1[%c0, %c0_0] : memref<256x128xf32, #tpu.memory_space<vmem>>, vector<256x128xf32>
    %c0_1 = arith.constant 0 : index
    %c0_2 = arith.constant 0 : index
    %1 = vector.load %arg2[%c0_1, %c0_2] : memref<2x128xf32, #tpu.memory_space<vmem>>, vector<1x128xf32>
    %2 = vector.broadcast %1 : vector<1x128xf32> to vector<256x128xf32>
    %3 = arith.mulf %0, %2 : vector<256x128xf32>
    %c1 = arith.constant 1 : index
    %c0_3 = arith.constant 0 : index
    %4 = vector.load %arg2[%c1, %c0_3] : memref<2x128xf32, #tpu.memory_space<vmem>>, vector<1x128xf32>
    %5 = vector.broadcast %4 : vector<1x128xf32> to vector<256x128xf32>
    %6 = arith.addf %3, %5 : vector<256x128xf32>
    %cst = arith.constant 0.000000e+00 : f32
    %7 = vector.broadcast %cst : f32 to vector<256x128xf32>
    %8 = arith.maximumf %6, %7 : vector<256x128xf32>
    %c0_4 = arith.constant 0 : index
    %c0_5 = arith.constant 0 : index
    %9 = vector.load %arg3[%c0_4, %c0_5] : memref<256x128xf32, #tpu.memory_space<vmem>>, vector<256x128xf32>
    tpu.vector_store %arg3[%c0_4, %c0_5], %8 {strides = array<i32>} : memref<256x128xf32, #tpu.memory_space<vmem>>, vector<256x128xf32>,
    return
  }
  func.func @transform_0(%arg0: i32) -> (i32, i32) {
    %c0_i32 = arith.constant 0 : i32
    %c0_i32_0 = arith.constant 0 : i32
    return %arg0, %c0_i32 : i32, i32
  }
  func.func @transform_1(%arg0: i32) -> (i32, i32) {
    %c0_i32 = arith.constant 0 : i32
    %c0_i32_0 = arith.constant 0 : i32
    %c0_i32_1 = arith.constant 0 : i32
    return %c0_i32, %c0_i32_0 : i32, i32
  }
  func.func @transform_2(%arg0: i32) -> (i32, i32) {
    %c0_i32 = arith.constant 0 : i32
    %c0_i32_0 = arith.constant 0 : i32
    return %arg0, %c0_i32 : i32, i32
  }
}

module attributes {stable_mosaic.version = 11 : i64} {
  func.func @_matmul_stats_kernel(%arg0: i32, %arg1: memref<256x128xbf16, #tpu.memory_space<vmem>>, %arg2: memref<128x128xbf16, #tpu.memory_space<vmem>>, %arg3: memref<256x128xf32, #tpu.memory_space<vmem>>, %arg4: memref<1x2x128xf32, #tpu.memory_space<vmem>>) attributes {dimension_semantics = [#tpu.dimension_semantics<parallel>], iteration_bounds = array<i64: 1>, scalar_prefetch = 0 : i64, scratch_operands = 0 : i64, tpu.core_type = #tpu.core_type<tc>, window_params = [{transform_indices = @transform_0, window_bounds = array<i64: 256, 128>}, {pipeline_mode = #tpu.pipeline_mode<synchronous>, transform_indices = @transform_1, window_bounds = array<i64: 128, 128>}, {transform_indices = @transform_2, window_bounds = array<i64: 256, 128>}, {transform_indices = @transform_3, window_bounds = array<i64: 1, 2, 128>}]} {
    %c0 = arith.constant 0 : index
    %c0_0 = arith.constant 0 : index
    %0 = vector.load %arg1[%c0, %c0_0] : memref<256x128xbf16, #tpu.memory_space<vmem>>, vector<256x128xbf16>
    %c0_1 = arith.constant 0 : index
    %c0_2 = arith.constant 0 : index
    %1 = vector.load %arg2[%c0_1, %c0_2] : memref<128x128xbf16, #tpu.memory_space<vmem>>, vector<128x128xbf16>
    %cst = arith.constant dense<0.000000e+00> : vector<256x128xf32>
    %2 = tpu.matmul %0, %1, %cst {dimension_numbers = #tpu.dot_dimension_numbers<[1], [0], [0], [1], [0, 0, 1, 1], [], []>} : vector<256x128xbf16>, vector<128x128xbf16>, vector<256x128xf32> -> vector<256x128xf32>
    %c0_3 = arith.constant 0 : index
    %c0_4 = arith.constant 0 : index
    %3 = vector.load %arg3[%c0_3, %c0_4] : memref<256x128xf32, #tpu.memory_space<vmem>>, vector<256x128xf32>
    tpu.vector_store %arg3[%c0_3, %c0_4], %2 {strides = array<i32>} : memref<256x128xf32, #tpu.memory_space<vmem>>, vector<256x128xf32>,
    %cst_5 = arith.constant dense<0.000000e+00> : vector<128xf32>
    %4 = vector.multi_reduction <add>, %2, %cst_5 [0] : vector<256x128xf32> to vector<128xf32>
    %5 = vector.shape_cast %4 : vector<128xf32> to vector<1x128xf32>
    %6 = arith.mulf %2, %2 : vector<256x128xf32>
    %cst_6 = arith.constant dense<0.000000e+00> : vector<128xf32>
    %7 = vector.multi_reduction <add>, %6, %cst_6 [0] : vector<256x128xf32> to vector<128xf32>
    %8 = vector.shape_cast %7 : vector<128xf32> to vector<1x128xf32>
    %9 = tpu.concatenate %5, %8 in 0 : vector<1x128xf32>, vector<1x128xf32> -> vector<2x128xf32>
    %10 = vector.shape_cast %9 : vector<2x128xf32> to vector<1x2x128xf32>
    %c0_7 = arith.constant 0 : index
    %c0_8 = arith.constant 0 : index
    %c0_9 = arith.constant 0 : index
    %11 = vector.load %arg4[%c0_7, %c0_8, %c0_9] : memref<1x2x128xf32, #tpu.memory_space<vmem>>, vector<1x2x128xf32>
    tpu.vector_store %arg4[%c0_7, %c0_8, %c0_9], %10 {strides = array<i32>} : memref<1x2x128xf32, #tpu.memory_space<vmem>>, vector<1x2x128xf32>,
    return
  }
  func.func @transform_0(%arg0: i32) -> (i32, i32) {
    %c0_i32 = arith.constant 0 : i32
    %c0_i32_0 = arith.constant 0 : i32
    return %arg0, %c0_i32 : i32, i32
  }
  func.func @transform_1(%arg0: i32) -> (i32, i32) {
    %c0_i32 = arith.constant 0 : i32
    %c0_i32_0 = arith.constant 0 : i32
    %c0_i32_1 = arith.constant 0 : i32
    return %c0_i32, %c0_i32_0 : i32, i32
  }
  func.func @transform_2(%arg0: i32) -> (i32, i32) {
    %c0_i32 = arith.constant 0 : i32
    %c0_i32_0 = arith.constant 0 : i32
    return %arg0, %c0_i32 : i32, i32
  }
  func.func @transform_3(%arg0: i32) -> (i32, i32, i32) {
    %c0_i32 = arith.constant 0 : i32
    %c0_i32_0 = arith.constant 0 : i32
    %c0_i32_1 = arith.constant 0 : i32
    return %arg0, %c0_i32, %c0_i32_0 : i32, i32, i32
  }
}

module attributes {stable_mosaic.version = 11 : i64} {
  func.func @kernel(%arg0: i32, %arg1: memref<256x128xf32, #tpu.memory_space<vmem>>, %arg2: memref<2x128xf32, #tpu.memory_space<vmem>>, %arg3: memref<256x128xf32, #tpu.memory_space<vmem>>) attributes {dimension_semantics = [#tpu.dimension_semantics<parallel>], iteration_bounds = array<i64: 1>, scalar_prefetch = 0 : i64, scratch_operands = 0 : i64, tpu.core_type = #tpu.core_type<tc>, window_params = [{transform_indices = @transform_0, window_bounds = array<i64: 256, 128>}, {pipeline_mode = #tpu.pipeline_mode<synchronous>, transform_indices = @transform_1, window_bounds = array<i64: 2, 128>}, {transform_indices = @transform_2, window_bounds = array<i64: 256, 128>}]} {
    %c0 = arith.constant 0 : index
    %c0_0 = arith.constant 0 : index
    %0 = vector.load %arg1[%c0, %c0_0] : memref<256x128xf32, #tpu.memory_space<vmem>>, vector<256x128xf32>
    %c0_1 = arith.constant 0 : index
    %c0_2 = arith.constant 0 : index
    %1 = vector.load %arg2[%c0_1, %c0_2] : memref<2x128xf32, #tpu.memory_space<vmem>>, vector<1x128xf32>
    %2 = vector.broadcast %1 : vector<1x128xf32> to vector<256x128xf32>
    %3 = arith.mulf %0, %2 : vector<256x128xf32>
    %c1 = arith.constant 1 : index
    %c0_3 = arith.constant 0 : index
    %4 = vector.load %arg2[%c1, %c0_3] : memref<2x128xf32, #tpu.memory_space<vmem>>, vector<1x128xf32>
    %5 = vector.broadcast %4 : vector<1x128xf32> to vector<256x128xf32>
    %6 = arith.addf %3, %5 : vector<256x128xf32>
    %c0_4 = arith.constant 0 : index
    %c0_5 = arith.constant 0 : index
    %7 = vector.load %arg3[%c0_4, %c0_5] : memref<256x128xf32, #tpu.memory_space<vmem>>, vector<256x128xf32>
    tpu.vector_store %arg3[%c0_4, %c0_5], %6 {strides = array<i32>} : memref<256x128xf32, #tpu.memory_space<vmem>>, vector<256x128xf32>,
    return
  }
  func.func @transform_0(%arg0: i32) -> (i32, i32) {
    %c0_i32 = arith.constant 0 : i32
    %c0_i32_0 = arith.constant 0 : i32
    return %arg0, %c0_i32 : i32, i32
  }
  func.func @transform_1(%arg0: i32) -> (i32, i32) {
    %c0_i32 = arith.constant 0 : i32
    %c0_i32_0 = arith.constant 0 : i32
    %c0_i32_1 = arith.constant 0 : i32
    return %c0_i32, %c0_i32_0 : i32, i32
  }
  func.func @transform_2(%arg0: i32) -> (i32, i32) {
    %c0_i32 = arith.constant 0 : i32
    %c0_i32_0 = arith.constant 0 : i32
    return %arg0, %c0_i32 : i32, i32
  }
}

module attributes {stable_mosaic.version = 11 : i64} {
  func.func @_matmul_stats_kernel(%arg0: i32, %arg1: memref<256x1152xbf16, #tpu.memory_space<vmem>>, %arg2: memref<1152x128xbf16, #tpu.memory_space<vmem>>, %arg3: memref<256x128xf32, #tpu.memory_space<vmem>>, %arg4: memref<1x2x128xf32, #tpu.memory_space<vmem>>) attributes {dimension_semantics = [#tpu.dimension_semantics<parallel>], iteration_bounds = array<i64: 2>, scalar_prefetch = 0 : i64, scratch_operands = 0 : i64, tpu.core_type = #tpu.core_type<tc>, window_params = [{transform_indices = @transform_0, window_bounds = array<i64: 256, 1152>}, {pipeline_mode = #tpu.pipeline_mode<synchronous>, transform_indices = @transform_1, window_bounds = array<i64: 1152, 128>}, {transform_indices = @transform_2, window_bounds = array<i64: 256, 128>}, {transform_indices = @transform_3, window_bounds = array<i64: 1, 2, 128>}]} {
    %c0 = arith.constant 0 : index
    %c0_0 = arith.constant 0 : index
    %0 = vector.load %arg1[%c0, %c0_0] : memref<256x1152xbf16, #tpu.memory_space<vmem>>, vector<256x1152xbf16>
    %c0_1 = arith.constant 0 : index
    %c0_2 = arith.constant 0 : index
    %1 = vector.load %arg2[%c0_1, %c0_2] : memref<1152x128xbf16, #tpu.memory_space<vmem>>, vector<1152x128xbf16>
    %cst = arith.constant dense<0.000000e+00> : vector<256x128xf32>
    %2 = tpu.matmul %0, %1, %cst {dimension_numbers = #tpu.dot_dimension_numbers<[1], [0], [0], [1], [0, 0, 1, 1], [], []>} : vector<256x1152xbf16>, vector<1152x128xbf16>, vector<256x128xf32> -> vector<256x128xf32>
    %c0_3 = arith.constant 0 : index
    %c0_4 = arith.constant 0 : index
    %3 = vector.load %arg3[%c0_3, %c0_4] : memref<256x128xf32, #tpu.memory_space<vmem>>, vector<256x128xf32>
    tpu.vector_store %arg3[%c0_3, %c0_4], %2 {strides = array<i32>} : memref<256x128xf32, #tpu.memory_space<vmem>>, vector<256x128xf32>,
    %cst_5 = arith.constant dense<0.000000e+00> : vector<128xf32>
    %4 = vector.multi_reduction <add>, %2, %cst_5 [0] : vector<256x128xf32> to vector<128xf32>
    %5 = vector.shape_cast %4 : vector<128xf32> to vector<1x128xf32>
    %6 = arith.mulf %2, %2 : vector<256x128xf32>
    %cst_6 = arith.constant dense<0.000000e+00> : vector<128xf32>
    %7 = vector.multi_reduction <add>, %6, %cst_6 [0] : vector<256x128xf32> to vector<128xf32>
    %8 = vector.shape_cast %7 : vector<128xf32> to vector<1x128xf32>
    %9 = tpu.concatenate %5, %8 in 0 : vector<1x128xf32>, vector<1x128xf32> -> vector<2x128xf32>
    %10 = vector.shape_cast %9 : vector<2x128xf32> to vector<1x2x128xf32>
    %c0_7 = arith.constant 0 : index
    %c0_8 = arith.constant 0 : index
    %c0_9 = arith.constant 0 : index
    %11 = vector.load %arg4[%c0_7, %c0_8, %c0_9] : memref<1x2x128xf32, #tpu.memory_space<vmem>>, vector<1x2x128xf32>
    tpu.vector_store %arg4[%c0_7, %c0_8, %c0_9], %10 {strides = array<i32>} : memref<1x2x128xf32, #tpu.memory_space<vmem>>, vector<1x2x128xf32>,
    return
  }
  func.func @transform_0(%arg0: i32) -> (i32, i32) {
    %c0_i32 = arith.constant 0 : i32
    %c0_i32_0 = arith.constant 0 : i32
    return %arg0, %c0_i32 : i32, i32
  }
  func.func @transform_1(%arg0: i32) -> (i32, i32) {
    %c0_i32 = arith.constant 0 : i32
    %c0_i32_0 = arith.constant 0 : i32
    %c0_i32_1 = arith.constant 0 : i32
    return %c0_i32, %c0_i32_0 : i32, i32
  }
  func.func @transform_2(%arg0: i32) -> (i32, i32) {
    %c0_i32 = arith.constant 0 : i32
    %c0_i32_0 = arith.constant 0 : i32
    return %arg0, %c0_i32 : i32, i32
  }
  func.func @transform_3(%arg0: i32) -> (i32, i32, i32) {
    %c0_i32 = arith.constant 0 : i32
    %c0_i32_0 = arith.constant 0 : i32
    %c0_i32_1 = arith.constant 0 : i32
    return %arg0, %c0_i32, %c0_i32_0 : i32, i32, i32
  }
}

module attributes {stable_mosaic.version = 11 : i64} {
  func.func @_matmul_stats_kernel(%arg0: i32, %arg1: memref<256x384xbf16, #tpu.memory_space<vmem>>, %arg2: memref<384x128xbf16, #tpu.memory_space<vmem>>, %arg3: memref<256x128xf32, #tpu.memory_space<vmem>>, %arg4: memref<1x2x128xf32, #tpu.memory_space<vmem>>) attributes {dimension_semantics = [#tpu.dimension_semantics<parallel>], iteration_bounds = array<i64: 1>, scalar_prefetch = 0 : i64, scratch_operands = 0 : i64, tpu.core_type = #tpu.core_type<tc>, window_params = [{transform_indices = @transform_0, window_bounds = array<i64: 256, 384>}, {pipeline_mode = #tpu.pipeline_mode<synchronous>, transform_indices = @transform_1, window_bounds = array<i64: 384, 128>}, {transform_indices = @transform_2, window_bounds = array<i64: 256, 128>}, {transform_indices = @transform_3, window_bounds = array<i64: 1, 2, 128>}]} {
    %c0 = arith.constant 0 : index
    %c0_0 = arith.constant 0 : index
    %0 = vector.load %arg1[%c0, %c0_0] : memref<256x384xbf16, #tpu.memory_space<vmem>>, vector<256x384xbf16>
    %c0_1 = arith.constant 0 : index
    %c0_2 = arith.constant 0 : index
    %1 = vector.load %arg2[%c0_1, %c0_2] : memref<384x128xbf16, #tpu.memory_space<vmem>>, vector<384x128xbf16>
    %cst = arith.constant dense<0.000000e+00> : vector<256x128xf32>
    %2 = tpu.matmul %0, %1, %cst {dimension_numbers = #tpu.dot_dimension_numbers<[1], [0], [0], [1], [0, 0, 1, 1], [], []>} : vector<256x384xbf16>, vector<384x128xbf16>, vector<256x128xf32> -> vector<256x128xf32>
    %c0_3 = arith.constant 0 : index
    %c0_4 = arith.constant 0 : index
    %3 = vector.load %arg3[%c0_3, %c0_4] : memref<256x128xf32, #tpu.memory_space<vmem>>, vector<256x128xf32>
    tpu.vector_store %arg3[%c0_3, %c0_4], %2 {strides = array<i32>} : memref<256x128xf32, #tpu.memory_space<vmem>>, vector<256x128xf32>,
    %cst_5 = arith.constant dense<0.000000e+00> : vector<128xf32>
    %4 = vector.multi_reduction <add>, %2, %cst_5 [0] : vector<256x128xf32> to vector<128xf32>
    %5 = vector.shape_cast %4 : vector<128xf32> to vector<1x128xf32>
    %6 = arith.mulf %2, %2 : vector<256x128xf32>
    %cst_6 = arith.constant dense<0.000000e+00> : vector<128xf32>
    %7 = vector.multi_reduction <add>, %6, %cst_6 [0] : vector<256x128xf32> to vector<128xf32>
    %8 = vector.shape_cast %7 : vector<128xf32> to vector<1x128xf32>
    %9 = tpu.concatenate %5, %8 in 0 : vector<1x128xf32>, vector<1x128xf32> -> vector<2x128xf32>
    %10 = vector.shape_cast %9 : vector<2x128xf32> to vector<1x2x128xf32>
    %c0_7 = arith.constant 0 : index
    %c0_8 = arith.constant 0 : index
    %c0_9 = arith.constant 0 : index
    %11 = vector.load %arg4[%c0_7, %c0_8, %c0_9] : memref<1x2x128xf32, #tpu.memory_space<vmem>>, vector<1x2x128xf32>
    tpu.vector_store %arg4[%c0_7, %c0_8, %c0_9], %10 {strides = array<i32>} : memref<1x2x128xf32, #tpu.memory_space<vmem>>, vector<1x2x128xf32>,
    return
  }
  func.func @transform_0(%arg0: i32) -> (i32, i32) {
    %c0_i32 = arith.constant 0 : i32
    %c0_i32_0 = arith.constant 0 : i32
    return %arg0, %c0_i32 : i32, i32
  }
  func.func @transform_1(%arg0: i32) -> (i32, i32) {
    %c0_i32 = arith.constant 0 : i32
    %c0_i32_0 = arith.constant 0 : i32
    %c0_i32_1 = arith.constant 0 : i32
    return %c0_i32, %c0_i32_0 : i32, i32
  }
  func.func @transform_2(%arg0: i32) -> (i32, i32) {
    %c0_i32 = arith.constant 0 : i32
    %c0_i32_0 = arith.constant 0 : i32
    return %arg0, %c0_i32 : i32, i32
  }
  func.func @transform_3(%arg0: i32) -> (i32, i32, i32) {
    %c0_i32 = arith.constant 0 : i32
    %c0_i32_0 = arith.constant 0 : i32
    %c0_i32_1 = arith.constant 0 : i32
    return %arg0, %c0_i32, %c0_i32_0 : i32, i32, i32
  }
}

module attributes {stable_mosaic.version = 11 : i64} {
  func.func @kernel(%arg0: i32, %arg1: memref<256x128xf32, #tpu.memory_space<vmem>>, %arg2: memref<2x128xf32, #tpu.memory_space<vmem>>, %arg3: memref<256x128xf32, #tpu.memory_space<vmem>>) attributes {dimension_semantics = [#tpu.dimension_semantics<parallel>], iteration_bounds = array<i64: 1>, scalar_prefetch = 0 : i64, scratch_operands = 0 : i64, tpu.core_type = #tpu.core_type<tc>, window_params = [{transform_indices = @transform_0, window_bounds = array<i64: 256, 128>}, {pipeline_mode = #tpu.pipeline_mode<synchronous>, transform_indices = @transform_1, window_bounds = array<i64: 2, 128>}, {transform_indices = @transform_2, window_bounds = array<i64: 256, 128>}]} {
    %c0 = arith.constant 0 : index
    %c0_0 = arith.constant 0 : index
    %0 = vector.load %arg1[%c0, %c0_0] : memref<256x128xf32, #tpu.memory_space<vmem>>, vector<256x128xf32>
    %c0_1 = arith.constant 0 : index
    %c0_2 = arith.constant 0 : index
    %1 = vector.load %arg2[%c0_1, %c0_2] : memref<2x128xf32, #tpu.memory_space<vmem>>, vector<1x128xf32>
    %2 = vector.broadcast %1 : vector<1x128xf32> to vector<256x128xf32>
    %3 = arith.mulf %0, %2 : vector<256x128xf32>
    %c1 = arith.constant 1 : index
    %c0_3 = arith.constant 0 : index
    %4 = vector.load %arg2[%c1, %c0_3] : memref<2x128xf32, #tpu.memory_space<vmem>>, vector<1x128xf32>
    %5 = vector.broadcast %4 : vector<1x128xf32> to vector<256x128xf32>
    %6 = arith.addf %3, %5 : vector<256x128xf32>
    %cst = arith.constant 0.000000e+00 : f32
    %7 = vector.broadcast %cst : f32 to vector<256x128xf32>
    %8 = arith.maximumf %6, %7 : vector<256x128xf32>
    %c0_4 = arith.constant 0 : index
    %c0_5 = arith.constant 0 : index
    %9 = vector.load %arg3[%c0_4, %c0_5] : memref<256x128xf32, #tpu.memory_space<vmem>>, vector<256x128xf32>
    tpu.vector_store %arg3[%c0_4, %c0_5], %8 {strides = array<i32>} : memref<256x128xf32, #tpu.memory_space<vmem>>, vector<256x128xf32>,
    return
  }
  func.func @transform_0(%arg0: i32) -> (i32, i32) {
    %c0_i32 = arith.constant 0 : i32
    %c0_i32_0 = arith.constant 0 : i32
    return %arg0, %c0_i32 : i32, i32
  }
  func.func @transform_1(%arg0: i32) -> (i32, i32) {
    %c0_i32 = arith.constant 0 : i32
    %c0_i32_0 = arith.constant 0 : i32
    %c0_i32_1 = arith.constant 0 : i32
    return %c0_i32, %c0_i32_0 : i32, i32
  }
  func.func @transform_2(%arg0: i32) -> (i32, i32) {
    %c0_i32 = arith.constant 0 : i32
    %c0_i32_0 = arith.constant 0 : i32
    return %arg0, %c0_i32 : i32, i32
  }
}

module attributes {stable_mosaic.version = 11 : i64} {
  func.func @_matmul_stats_kernel(%arg0: i32, %arg1: memref<256x1152xbf16, #tpu.memory_space<vmem>>, %arg2: memref<1152x128xbf16, #tpu.memory_space<vmem>>, %arg3: memref<256x128xf32, #tpu.memory_space<vmem>>, %arg4: memref<1x2x128xf32, #tpu.memory_space<vmem>>) attributes {dimension_semantics = [#tpu.dimension_semantics<parallel>], iteration_bounds = array<i64: 1>, scalar_prefetch = 0 : i64, scratch_operands = 0 : i64, tpu.core_type = #tpu.core_type<tc>, window_params = [{transform_indices = @transform_0, window_bounds = array<i64: 256, 1152>}, {pipeline_mode = #tpu.pipeline_mode<synchronous>, transform_indices = @transform_1, window_bounds = array<i64: 1152, 128>}, {transform_indices = @transform_2, window_bounds = array<i64: 256, 128>}, {transform_indices = @transform_3, window_bounds = array<i64: 1, 2, 128>}]} {
    %c0 = arith.constant 0 : index
    %c0_0 = arith.constant 0 : index
    %0 = vector.load %arg1[%c0, %c0_0] : memref<256x1152xbf16, #tpu.memory_space<vmem>>, vector<256x1152xbf16>
    %c0_1 = arith.constant 0 : index
    %c0_2 = arith.constant 0 : index
    %1 = vector.load %arg2[%c0_1, %c0_2] : memref<1152x128xbf16, #tpu.memory_space<vmem>>, vector<1152x128xbf16>
    %cst = arith.constant dense<0.000000e+00> : vector<256x128xf32>
    %2 = tpu.matmul %0, %1, %cst {dimension_numbers = #tpu.dot_dimension_numbers<[1], [0], [0], [1], [0, 0, 1, 1], [], []>} : vector<256x1152xbf16>, vector<1152x128xbf16>, vector<256x128xf32> -> vector<256x128xf32>
    %c0_3 = arith.constant 0 : index
    %c0_4 = arith.constant 0 : index
    %3 = vector.load %arg3[%c0_3, %c0_4] : memref<256x128xf32, #tpu.memory_space<vmem>>, vector<256x128xf32>
    tpu.vector_store %arg3[%c0_3, %c0_4], %2 {strides = array<i32>} : memref<256x128xf32, #tpu.memory_space<vmem>>, vector<256x128xf32>,
    %cst_5 = arith.constant dense<0.000000e+00> : vector<128xf32>
    %4 = vector.multi_reduction <add>, %2, %cst_5 [0] : vector<256x128xf32> to vector<128xf32>
    %5 = vector.shape_cast %4 : vector<128xf32> to vector<1x128xf32>
    %6 = arith.mulf %2, %2 : vector<256x128xf32>
    %cst_6 = arith.constant dense<0.000000e+00> : vector<128xf32>
    %7 = vector.multi_reduction <add>, %6, %cst_6 [0] : vector<256x128xf32> to vector<128xf32>
    %8 = vector.shape_cast %7 : vector<128xf32> to vector<1x128xf32>
    %9 = tpu.concatenate %5, %8 in 0 : vector<1x128xf32>, vector<1x128xf32> -> vector<2x128xf32>
    %10 = vector.shape_cast %9 : vector<2x128xf32> to vector<1x2x128xf32>
    %c0_7 = arith.constant 0 : index
    %c0_8 = arith.constant 0 : index
    %c0_9 = arith.constant 0 : index
    %11 = vector.load %arg4[%c0_7, %c0_8, %c0_9] : memref<1x2x128xf32, #tpu.memory_space<vmem>>, vector<1x2x128xf32>
    tpu.vector_store %arg4[%c0_7, %c0_8, %c0_9], %10 {strides = array<i32>} : memref<1x2x128xf32, #tpu.memory_space<vmem>>, vector<1x2x128xf32>,
    return
  }
  func.func @transform_0(%arg0: i32) -> (i32, i32) {
    %c0_i32 = arith.constant 0 : i32
    %c0_i32_0 = arith.constant 0 : i32
    return %arg0, %c0_i32 : i32, i32
  }
  func.func @transform_1(%arg0: i32) -> (i32, i32) {
    %c0_i32 = arith.constant 0 : i32
    %c0_i32_0 = arith.constant 0 : i32
    %c0_i32_1 = arith.constant 0 : i32
    return %c0_i32, %c0_i32_0 : i32, i32
  }
  func.func @transform_2(%arg0: i32) -> (i32, i32) {
    %c0_i32 = arith.constant 0 : i32
    %c0_i32_0 = arith.constant 0 : i32
    return %arg0, %c0_i32 : i32, i32
  }
  func.func @transform_3(%arg0: i32) -> (i32, i32, i32) {
    %c0_i32 = arith.constant 0 : i32
    %c0_i32_0 = arith.constant 0 : i32
    %c0_i32_1 = arith.constant 0 : i32
    return %arg0, %c0_i32, %c0_i32_0 : i32, i32, i32
  }
}

module attributes {stable_mosaic.version = 11 : i64} {
  func.func @kernel(%arg0: i32, %arg1: memref<256x128xf32, #tpu.memory_space<vmem>>, %arg2: memref<2x128xf32, #tpu.memory_space<vmem>>, %arg3: memref<256x128xf32, #tpu.memory_space<vmem>>, %arg4: memref<256x128xf32, #tpu.memory_space<vmem>>) attributes {dimension_semantics = [#tpu.dimension_semantics<parallel>], iteration_bounds = array<i64: 1>, scalar_prefetch = 0 : i64, scratch_operands = 0 : i64, tpu.core_type = #tpu.core_type<tc>, window_params = [{transform_indices = @transform_0, window_bounds = array<i64: 256, 128>}, {pipeline_mode = #tpu.pipeline_mode<synchronous>, transform_indices = @transform_1, window_bounds = array<i64: 2, 128>}, {transform_indices = @transform_2, window_bounds = array<i64: 256, 128>}, {transform_indices = @transform_3, window_bounds = array<i64: 256, 128>}]} {
    %c0 = arith.constant 0 : index
    %c0_0 = arith.constant 0 : index
    %0 = vector.load %arg1[%c0, %c0_0] : memref<256x128xf32, #tpu.memory_space<vmem>>, vector<256x128xf32>
    %c0_1 = arith.constant 0 : index
    %c0_2 = arith.constant 0 : index
    %1 = vector.load %arg2[%c0_1, %c0_2] : memref<2x128xf32, #tpu.memory_space<vmem>>, vector<1x128xf32>
    %2 = vector.broadcast %1 : vector<1x128xf32> to vector<256x128xf32>
    %3 = arith.mulf %0, %2 : vector<256x128xf32>
    %c1 = arith.constant 1 : index
    %c0_3 = arith.constant 0 : index
    %4 = vector.load %arg2[%c1, %c0_3] : memref<2x128xf32, #tpu.memory_space<vmem>>, vector<1x128xf32>
    %5 = vector.broadcast %4 : vector<1x128xf32> to vector<256x128xf32>
    %6 = arith.addf %3, %5 : vector<256x128xf32>
    %c0_4 = arith.constant 0 : index
    %c0_5 = arith.constant 0 : index
    %7 = vector.load %arg3[%c0_4, %c0_5] : memref<256x128xf32, #tpu.memory_space<vmem>>, vector<256x128xf32>
    %8 = arith.addf %6, %7 : vector<256x128xf32>
    %cst = arith.constant 0.000000e+00 : f32
    %9 = vector.broadcast %cst : f32 to vector<256x128xf32>
    %10 = arith.maximumf %8, %9 : vector<256x128xf32>
    %c0_6 = arith.constant 0 : index
    %c0_7 = arith.constant 0 : index
    %11 = vector.load %arg4[%c0_6, %c0_7] : memref<256x128xf32, #tpu.memory_space<vmem>>, vector<256x128xf32>
    tpu.vector_store %arg4[%c0_6, %c0_7], %10 {strides = array<i32>} : memref<256x128xf32, #tpu.memory_space<vmem>>, vector<256x128xf32>,
    return
  }
  func.func @transform_0(%arg0: i32) -> (i32, i32) {
    %c0_i32 = arith.constant 0 : i32
    %c0_i32_0 = arith.constant 0 : i32
    return %arg0, %c0_i32 : i32, i32
  }
  func.func @transform_1(%arg0: i32) -> (i32, i32) {
    %c0_i32 = arith.constant 0 : i32
    %c0_i32_0 = arith.constant 0 : i32
    %c0_i32_1 = arith.constant 0 : i32
    return %c0_i32, %c0_i32_0 : i32, i32
  }
  func.func @transform_2(%arg0: i32) -> (i32, i32) {
    %c0_i32 = arith.constant 0 : i32
    %c0_i32_0 = arith.constant 0 : i32
    return %arg0, %c0_i32 : i32, i32
  }
  func.func @transform_3(%arg0: i32) -> (i32, i32) {
    %c0_i32 = arith.constant 0 : i32
    %c0_i32_0 = arith.constant 0 : i32
    return %arg0, %c0_i32 : i32, i32
  }
}

</mosaic_0001>

<llo_original>
// kernel: _lambda_.24
$region0: #{_lambda_.24}
  #allocation0 [shape = 'u32[]', space=smem, size = 0x4, offset = 0x4, fixed_abs, tag = 'smem constant byte address 0x4 - core index']
  #allocation1 [shape = 'u32[144,128]{1,0:T(1,128)}', space=vmem, size = 0x12000, scoped, tag = 'internal scratch']
  %s0 = inlined_call_operand.vmem [shape: bf16[512,128], index: 0, kind: input, shape index: {}]
  %s1 = inlined_call_operand.vmem [shape: bf16[128,128], index: 1, kind: input, shape index: {}]
  %s2 = inlined_call_operand.vmem [shape: f32[512,128], index: 2, kind: output, shape index: {0}]
  %s3 = inlined_call_operand.vmem [shape: f32[2,2,128], index: 3, kind: output, shape index: {1}]
  %4 = xla_tuple %s2, %s3
  %s5 = sld [smem:[#allocation0]]
  $region49: #{_lambda_.24} parent=0
    _
  %s7 = ssub.s32 1, %s5
  %s8 = scalar_select 0, %s7, %s5
  loop: start=0, step=1, limit=4
  $region2: #{_lambda_.24} parent=0 // loop_pre_header
    _
  $region3: #{_lambda_.24} parent=0 // loop_header
    %s10 = sphi 0, %s14
    %p11 = scmp.ge.s32.totalorder %s10, 4
    %s20 = sphi 0, %s22
    %s23 = sphi 0, %s20
    %s24 = sphi 0, %s23
    %s40 = sphi 0, %s24
    %s44 = sphi 0, %s44
    %s46 = sphi 0, %s44
    %s47 = sphi 0, %s46
    %s61 = sphi 0, %s47
    %s67 = sphi 0, %s69
    %s70 = sphi 0, %s67
    %s71 = sphi 0, %s70
    %s87 = sphi 0, %s71
    %s93 = sphi 0, %s95
    %s96 = sphi 0, %s93
    %s97 = sphi 0, %s96
    %s113 = sphi 0, %s97
  $region4: #{_lambda_.24} parent=0 // loop_header_branch
    %13 = sbr.rel (%p11) target = $region8
  $region5: #{_lambda_.24} parent=0 // loop_body
    %s15 = ssub.s32 %s10, 1
    %s16 = ssub.s32 %s10, 2
    %s17 = sadd.s32 %s10, 1
    %s18 = ssub.s32 %s10, %s17
    %p19 = scmp.eq.s32.totalorder %s18, 0
    %s21 = sadd.s32 %s20, 1
    %s22 = scalar_select %p19, %s20, %s21
    %p25 = pneg %p19
    %p26 = scmp.eq.s32.totalorder %s10, 1
    %p27 = por %p25, %p26
    %p28 = scmp.ne.s32.totalorder %s20, %s23
    %p29 = scmp.eq.s32.totalorder %s10, 0
    %p30 = por %p28, %p29
    %p31 = scmp.ne.s32.totalorder %s20, %s23
    %p32 = scmp.eq.s32.totalorder %s15, 1
    %p33 = por %p31, %p32
    %p34 = scmp.ne.s32.totalorder %s23, %s24
    %p35 = scmp.eq.s32.totalorder %s15, 0
    %p36 = por %p34, %p35
    %p37 = scmp.ne.s32.totalorder %s23, %s24
    %p38 = scmp.eq.s32.totalorder %s16, 1
    %p39 = por %p37, %p38
    %p41 = scmp.ne.s32.totalorder %s24, %s40
    %p42 = scmp.eq.s32.totalorder %s16, 0
    %p43 = por %p41, %p42
    %s45 = sadd.s32 %s44, 1
    %p48 = scmp.eq.s32.totalorder %s10, 1
    %p49 = scmp.ne.s32.totalorder %s44, %s46
    %p50 = scmp.eq.s32.totalorder %s10, 0
    %p51 = por %p49, %p50
    %p52 = scmp.ne.s32.totalorder %s44, %s46
    %p53 = scmp.eq.s32.totalorder %s15, 1
    %p54 = por %p52, %p53
    %p55 = scmp.ne.s32.totalorder %s46, %s47
    %p56 = scmp.eq.s32.totalorder %s15, 0
    %p57 = por %p55, %p56
    %p58 = scmp.ne.s32.totalorder %s46, %s47
    %p59 = scmp.eq.s32.totalorder %s16, 1
    %p60 = por %p58, %p59
    %p62 = scmp.ne.s32.totalorder %s47, %s61
    %p63 = scmp.eq.s32.totalorder %s16, 0
    %p64 = por %p62, %p63
    %s65 = ssub.s32 %s10, %s17
    %p66 = scmp.eq.s32.totalorder %s65, 0
    %s68 = sadd.s32 %s67, 1
    %s69 = scalar_select %p66, %s67, %s68
    %p72 = pneg %p66
    %p73 = scmp.eq.s32.totalorder %s10, 1
    %p74 = por %p72, %p73
    %p75 = scmp.ne.s32.totalorder %s67, %s70
    %p76 = scmp.eq.s32.totalorder %s10, 0
    %p77 = por %p75, %p76
    %p78 = scmp.ne.s32.totalorder %s67, %s70
    %p79 = scmp.eq.s32.totalorder %s15, 1
    %p80 = por %p78, %p79
    %p81 = scmp.ne.s32.totalorder %s70, %s71
    %p82 = scmp.eq.s32.totalorder %s15, 0
    %p83 = por %p81, %p82
    %p84 = scmp.ne.s32.totalorder %s70, %s71
    %p85 = scmp.eq.s32.totalorder %s16, 1
    %p86 = por %p84, %p85
    %p88 = scmp.ne.s32.totalorder %s71, %s87
    %p89 = scmp.eq.s32.totalorder %s16, 0
    %p90 = por %p88, %p89
    %s91 = ssub.s32 %s10, %s17
    %p92 = scmp.eq.s32.totalorder %s91, 0
    %s94 = sadd.s32 %s93, 1
    %s95 = scalar_select %p92, %s93, %s94
    %p98 = pneg %p92
    %p99 = scmp.eq.s32.totalorder %s10, 1
    %p100 = por %p98, %p99
    %p101 = scmp.ne.s32.totalorder %s93, %s96
    %p102 = scmp.eq.s32.totalorder %s10, 0
    %p103 = por %p101, %p102
    %p104 = scmp.ne.s32.totalorder %s93, %s96
    %p105 = scmp.eq.s32.totalorder %s15, 1
    %p106 = por %p104, %p105
    %p107 = scmp.ne.s32.totalorder %s96, %s97
    %p108 = scmp.eq.s32.totalorder %s15, 0
    %p109 = por %p107, %p108
    %p110 = scmp.ne.s32.totalorder %s96, %s97
    %p111 = scmp.eq.s32.totalorder %s16, 1
    %p112 = por %p110, %p111
    %p114 = scmp.ne.s32.totalorder %s97, %s113
    %p115 = scmp.eq.s32.totalorder %s16, 0
    %p116 = por %p114, %p115
    %p117 = scmp.le.s32.totalorder 1, %s10
    %p118 = scmp.lt.s32.totalorder %s10, 3
    %p119 = pnand %p117, %p118
    %p120 = pneg %p119
    // Predicated region
    $region9: #{_lambda_.24} parent=5 // pred_check
      _
    $region10: #{_lambda_.24} parent=5 // pred_check_branch
      %122 = sbr.rel (%p119) target = $region12
    $region11: #{_lambda_.24} parent=5 // pred_region
      %s123 = ssub.s32 %s10, 1
      // Predicated region
      $region13: #{_lambda_.24} parent=11 // pred_check
        %p124 = pneg %p57
      $region14: #{_lambda_.24} parent=11 // pred_check_branch
        %126 = sbr.rel (%p124) target = $region16
      $region15: #{_lambda_.24} parent=11 // pred_region
        _
      $region16: #{_lambda_.24} parent=11 // pred_fallthru
        _
    $region12: #{_lambda_.24} parent=5 // pred_fallthru
      _
    %p127 = scmp.lt.s32.totalorder %s10, 2
    // Predicated region
    $region17: #{_lambda_.24} parent=5 // pred_check
      %p128 = pneg %p127
    $region18: #{_lambda_.24} parent=5 // pred_check_branch
      %130 = sbr.rel (%p128) target = $region20
    $region19: #{_lambda_.24} parent=5 // pred_region
      // Predicated region
      $region21: #{_lambda_.24} parent=19 // pred_check
        %p131 = pneg %p30
      $region22: #{_lambda_.24} parent=19 // pred_check_branch
        %133 = sbr.rel (%p131) target = $region24
      $region23: #{_lambda_.24} parent=19 // pred_region
        %s134 = smul.u32 32, %s10
        %p135 = scmp.lt.s32.totalorder %s134, 63
        %s136 = scalar_select %p135, %s134, 63
        %s137 = smul.addr %s136, 4
        %s138 = scalar_lea.vmem %s0, %s137
        %s139 = smul.u32 32, %s10
      $region24: #{_lambda_.24} parent=19 // pred_fallthru
        _
    $region20: #{_lambda_.24} parent=5 // pred_fallthru
      _
    %p140 = scmp.le.s32.totalorder 1, %s10
    %p141 = scmp.lt.s32.totalorder %s10, 3
    %p142 = pnand %p140, %p141
    %p143 = pneg %p142
    // Predicated region
    $region25: #{_lambda_.24} parent=5 // pred_check
      _
    $region26: #{_lambda_.24} parent=5 // pred_check_branch
      %145 = sbr.rel (%p142) target = $region28
    $region27: #{_lambda_.24} parent=5 // pred_region
      %s146 = ssub.s32 %s10, 1
      %s147 = smul.u32 32, %s15
      %p148 = scmp.lt.s32.totalorder %s147, 63
      %s149 = scalar_select %p148, %s147, 63
      %s150 = smul.addr %s149, 4
      %s151 = scalar_lea.vmem %s0, %s150
      %p152 = pneg %p36
      %p153 = pneg %p33
      %p154 = pneg %p57
      %p155 = pneg %p54
      %p156 = pneg %p83
      %p157 = pneg %p80
      %s158 = smul.u32 32, %s15
      %p159 = scmp.lt.s32.totalorder %s158, 63
      %s160 = scalar_select %p159, %s158, 63
      %s161 = smul.addr %s160, 8
      %s162 = scalar_lea.vmem %s2, %s161
      %p163 = pneg %p109
      %p164 = pneg %p106
      %p165 = scmp.lt.s32.totalorder %s15, 1
      %s166 = scalar_select %p165, %s15, 1
      %s167 = smul.addr %s166, 2
      %s168 = scalar_lea.vmem %s3, %s167
      %s169 = smul.u32 32, %s15
      %p170 = scmp.lt.s32.totalorder %s169, 63
      %s171 = scalar_select %p170, %s169, 63
      %s172 = smul.addr %s171, 4
      %s173 = scalar_lea.vmem %s0, %s172
      %s174 = smul.u32 32, %s15
      %s175 = smul.u32 32, %s15
      %p176 = scmp.lt.s32.totalorder %s175, 63
      %s177 = scalar_select %p176, %s175, 63
      %s178 = smul.addr %s177, 8
      %s179 = scalar_lea.vmem %s2, %s178
      %s180 = smul.u32 32, %s15
      %p181 = scmp.lt.s32.totalorder %s15, 1
      %s182 = scalar_select %p181, %s15, 1
      %s183 = smul.addr %s182, 2
      %s184 = scalar_lea.vmem %s3, %s183
      %v186 = vld [vmem:[%s173] sm:$0xf]
      %v187 = vld [vmem:[%s173 + $0x4] sm:$0xf]
      %v188 = vld [vmem:[%s173 + $0x8] sm:$0xf]
      %v189 = vld [vmem:[%s173 + $0xc] sm:$0xf]
      %v190 = vld [vmem:[%s173 + $0x10] sm:$0xf]
      %v191 = vld [vmem:[%s173 + $0x14] sm:$0xf]
      %v192 = vld [vmem:[%s173 + $0x18] sm:$0xf]
      %v193 = vld [vmem:[%s173 + $0x1c] sm:$0xf]
      %v194 = vld [vmem:[%s173 + $0x20] sm:$0xf]
      %v195 = vld [vmem:[%s173 + $0x24] sm:$0xf]
      %v196 = vld [vmem:[%s173 + $0x28] sm:$0xf]
      %v197 = vld [vmem:[%s173 + $0x2c] sm:$0xf]
      %v198 = vld [vmem:[%s173 + $0x30] sm:$0xf]
      %v199 = vld [vmem:[%s173 + $0x34] sm:$0xf]
      %v200 = vld [vmem:[%s173 + $0x38] sm:$0xf]
      %v201 = vld [vmem:[%s173 + $0x3c] sm:$0xf]
      %v202 = vld [vmem:[%s173 + $0x40] sm:$0xf]
      %v203 = vld [vmem:[%s173 + $0x44] sm:$0xf]
      %v204 = vld [vmem:[%s173 + $0x48] sm:$0xf]
      %v205 = vld [vmem:[%s173 + $0x4c] sm:$0xf]
      %v206 = vld [vmem:[%s173 + $0x50] sm:$0xf]
      %v207 = vld [vmem:[%s173 + $0x54] sm:$0xf]
      %v208 = vld [vmem:[%s173 + $0x58] sm:$0xf]
      %v209 = vld [vmem:[%s173 + $0x5c] sm:$0xf]
      %v210 = vld [vmem:[%s173 + $0x60] sm:$0xf]
      %v211 = vld [vmem:[%s173 + $0x64] sm:$0xf]
      %v212 = vld [vmem:[%s173 + $0x68] sm:$0xf]
      %v213 = vld [vmem:[%s173 + $0x6c] sm:$0xf]
      %v214 = vld [vmem:[%s173 + $0x70] sm:$0xf]
      %v215 = vld [vmem:[%s173 + $0x74] sm:$0xf]
      %v216 = vld [vmem:[%s173 + $0x78] sm:$0xf]
      %v217 = vld [vmem:[%s173 + $0x7c] sm:$0xf]
      %v218 = vld [vmem:[%s1] sm:$0xf]
      %v219 = vld [vmem:[%s1 + $0x4] sm:$0xf]
      %v220 = vld [vmem:[%s1 + $0x8] sm:$0xf]
      %v221 = vld [vmem:[%s1 + $0xc] sm:$0xf]
      %v222 = vld [vmem:[%s1 + $0x10] sm:$0xf]
      %v223 = vld [vmem:[%s1 + $0x14] sm:$0xf]
      %v224 = vld [vmem:[%s1 + $0x18] sm:$0xf]
      %v225 = vld [vmem:[%s1 + $0x1c] sm:$0xf]
      %v226 = vld [vmem:[%s1 + $0x20] sm:$0xf]
      %v227 = vld [vmem:[%s1 + $0x24] sm:$0xf]
      %v228 = vld [vmem:[%s1 + $0x28] sm:$0xf]
      %v229 = vld [vmem:[%s1 + $0x2c] sm:$0xf]
      %v230 = vld [vmem:[%s1 + $0x30] sm:$0xf]
      %v231 = vld [vmem:[%s1 + $0x34] sm:$0xf]
      %v232 = vld [vmem:[%s1 + $0x38] sm:$0xf]
      %v233 = vld [vmem:[%s1 + $0x3c] sm:$0xf]
      %v266 = vunpack.c.l.b16 %v186
      %v267 = vunpack.c.l.b16 %v187
      %v268 = vunpack.c.l.b16 %v188
      %v269 = vunpack.c.l.b16 %v189
      %v270 = vunpack.c.l.b16 %v190
      %v271 = vunpack.c.l.b16 %v191
      %v272 = vunpack.c.l.b16 %v192
      %v273 = vunpack.c.l.b16 %v193
      %v274 = vunpack.c.l.b16 %v194
      %v275 = vunpack.c.l.b16 %v195
      %v276 = vunpack.c.l.b16 %v196
      %v277 = vunpack.c.l.b16 %v197
      %v278 = vunpack.c.l.b16 %v198
      %v279 = vunpack.c.l.b16 %v199
      %v280 = vunpack.c.l.b16 %v200
      %v281 = vunpack.c.l.b16 %v201
      %v282 = vunpack.c.l.b16 %v202
      %v283 = vunpack.c.l.b16 %v203
      %v284 = vunpack.c.l.b16 %v204
      %v285 = vunpack.c.l.b16 %v205
      %v286 = vunpack.c.l.b16 %v206
      %v287 = vunpack.c.l.b16 %v207
      %v288 = vunpack.c.l.b16 %v208
      %v289 = vunpack.c.l.b16 %v209
      %v290 = vunpack.c.l.b16 %v210
      %v291 = vunpack.c.l.b16 %v211
      %v292 = vunpack.c.l.b16 %v212
      %v293 = vunpack.c.l.b16 %v213
      %v294 = vunpack.c.l.b16 %v214
      %v295 = vunpack.c.l.b16 %v215
      %v296 = vunpack.c.l.b16 %v216
      %v297 = vunpack.c.l.b16 %v217
      %v298 = vpack.c.b16 %v267, %v266
      %v299 = vpack.c.b16 %v269, %v268
      %v300 = vpack.c.b16 %v271, %v270
      %v301 = vpack.c.b16 %v273, %v272
      %v302 = vpack.c.b16 %v275, %v274
      %v303 = vpack.c.b16 %v277, %v276
      %v304 = vpack.c.b16 %v279, %v278
      %v305 = vpack.c.b16 %v281, %v280
      %v306 = vpack.c.b16 %v283, %v282
      %v307 = vpack.c.b16 %v285, %v284
      %v308 = vpack.c.b16 %v287, %v286
      %v309 = vpack.c.b16 %v289, %v288
      %v310 = vpack.c.b16 %v291, %v290
      %v311 = vpack.c.b16 %v293, %v292
      %v312 = vpack.c.b16 %v295, %v294
      %v313 = vpack.c.b16 %v297, %v296
      %v346 = vunpack.c.l.b16 %v218
      %v347 = vunpack.c.l.b16 %v219
      %v348 = vunpack.c.l.b16 %v220
      %v349 = vunpack.c.l.b16 %v221
      %v350 = vunpack.c.l.b16 %v222
      %v351 = vunpack.c.l.b16 %v223
      %v352 = vunpack.c.l.b16 %v224
      %v353 = vunpack.c.l.b16 %v225
      %v354 = vunpack.c.l.b16 %v226
      %v355 = vunpack.c.l.b16 %v227
      %v356 = vunpack.c.l.b16 %v228
      %v357 = vunpack.c.l.b16 %v229
      %v358 = vunpack.c.l.b16 %v230
      %v359 = vunpack.c.l.b16 %v231
      %v360 = vunpack.c.l.b16 %v232
      %v361 = vunpack.c.l.b16 %v233
      %v362 = vpack.c.b16 %v347, %v346
      %v363 = vpack.c.b16 %v349, %v348
      %v364 = vpack.c.b16 %v351, %v350
      %v365 = vpack.c.b16 %v353, %v352
      %v366 = vpack.c.b16 %v355, %v354
      %v367 = vpack.c.b16 %v357, %v356
      %v368 = vpack.c.b16 %v359, %v358
      %v369 = vpack.c.b16 %v361, %v360
      %378 = vmatprep.subr.bf16.mxu0 0
      %379 = vmatpush1.bf16.msra.mxu0 %v369
      %380 = vmatprep.subr.bf16.mxu0 0
      %381 = vmatpush1.bf16.msra.mxu0 %v368
      %382 = vmatprep.subr.bf16.mxu0 0
      %383 = vmatpush1.bf16.msra.mxu0 %v367
      %384 = vmatprep.subr.bf16.mxu0 0
      %385 = vmatpush1.bf16.msra.mxu0 %v366
      %386 = vmatprep.subr.bf16.mxu0 0
      %387 = vmatpush1.bf16.msra.mxu0 %v365
      %388 = vmatprep.subr.bf16.mxu0 0
      %389 = vmatpush1.bf16.msra.mxu0 %v364
      %390 = vmatprep.subr.bf16.mxu0 0
      %391 = vmatpush1.bf16.msra.mxu0 %v363
      %392 = vmatprep.subr.bf16.mxu0 0
      %393 = vmatpush1.bf16.msra.mxu0 %v362
      %394 = vmatprep.subr.bf16.mxu0 0
      %395 = vmatpush2.bf16.msra.mxu0 0
      %396 = vmatprep.subr.bf16.mxu0 0
      %397 = vmatpush2.bf16.msra.mxu0 0
      %398 = vmatprep.subr.bf16.mxu0 0
      %399 = vmatpush2.bf16.msra.mxu0 0
      %400 = vmatprep.subr.bf16.mxu0 0
      %401 = vmatpush2.bf16.msra.mxu0 0
      %402 = vmatprep.subr.bf16.mxu0 0
      %403 = vmatpush2.bf16.msra.mxu0 0
      %404 = vmatprep.subr.bf16.mxu0 0
      %405 = vmatpush2.bf16.msra.mxu0 0
      %406 = vmatprep.subr.bf16.mxu0 0
      %407 = vmatpush2.bf16.msra.mxu0 0
      %408 = vmatprep.subr.bf16.mxu0 0
      %409 = vmatpush2.bf16.msra.mxu0 0
      %410 = vmatprep.mubr.bf16.mxu0 0
      %411 = vmatmul.mubr.bf16.gmra.mxu0 %v298
      %v412 = vpop.f32.mrf.mxu0
      %v413 = vadd.f32 0.0, %v412
      %v414 = vpop.f32.mrf.mxu0
      %v415 = vpop.f32.mrf.mxu0
      %v416 = vadd.f32 0.0, %v415
      %v417 = vpop.f32.mrf.mxu0
      %418 = vmatprep.mubr.bf16.mxu0 0
      %419 = vmatmul.mubr.bf16.gmra.mxu0 %v299
      %v420 = vpop.f32.mrf.mxu0
      %v421 = vadd.f32 0.0, %v420
      %v422 = vpop.f32.mrf.mxu0
      %v423 = vpop.f32.mrf.mxu0
      %v424 = vadd.f32 0.0, %v423
      %v425 = vpop.f32.mrf.mxu0
      %426 = vmatprep.mubr.bf16.mxu0 0
      %427 = vmatmul.mubr.bf16.gmra.mxu0 %v300
      %v428 = vpop.f32.mrf.mxu0
      %v429 = vadd.f32 0.0, %v428
      %v430 = vpop.f32.mrf.mxu0
      %v431 = vpop.f32.mrf.mxu0
      %v432 = vadd.f32 0.0, %v431
      %v433 = vpop.f32.mrf.mxu0
      %434 = vmatprep.mubr.bf16.mxu0 0
      %435 = vmatmul.mubr.bf16.gmra.mxu0 %v301
      %v436 = vpop.f32.mrf.mxu0
      %v437 = vadd.f32 0.0, %v436
      %v438 = vpop.f32.mrf.mxu0
      %v439 = vpop.f32.mrf.mxu0
      %v440 = vadd.f32 0.0, %v439
      %v441 = vpop.f32.mrf.mxu0
      %442 = vmatprep.mubr.bf16.mxu0 0
      %443 = vmatmul.mubr.bf16.gmra.mxu0 %v302
      %v444 = vpop.f32.mrf.mxu0
      %v445 = vadd.f32 0.0, %v444
      %v446 = vpop.f32.mrf.mxu0
      %v447 = vpop.f32.mrf.mxu0
      %v448 = vadd.f32 0.0, %v447
      %v449 = vpop.f32.mrf.mxu0
      %450 = vmatprep.mubr.bf16.mxu0 0
      %451 = vmatmul.mubr.bf16.gmra.mxu0 %v303
      %v452 = vpop.f32.mrf.mxu0
      %v453 = vadd.f32 0.0, %v452
      %v454 = vpop.f32.mrf.mxu0
      %v455 = vpop.f32.mrf.mxu0
      %v456 = vadd.f32 0.0, %v455
      %v457 = vpop.f32.mrf.mxu0
      %458 = vmatprep.mubr.bf16.mxu0 0
      %459 = vmatmul.mubr.bf16.gmra.mxu0 %v304
      %v460 = vpop.f32.mrf.mxu0
      %v461 = vadd.f32 0.0, %v460
      %v462 = vpop.f32.mrf.mxu0
      %v463 = vpop.f32.mrf.mxu0
      %v464 = vadd.f32 0.0, %v463
      %v465 = vpop.f32.mrf.mxu0
      %466 = vmatprep.mubr.bf16.mxu0 0
      %467 = vmatmul.mubr.bf16.gmra.mxu0 %v305
      %v468 = vpop.f32.mrf.mxu0
      %v469 = vadd.f32 0.0, %v468
      %v470 = vpop.f32.mrf.mxu0
      %v471 = vpop.f32.mrf.mxu0
      %v472 = vadd.f32 0.0, %v471
      %v473 = vpop.f32.mrf.mxu0
      %474 = vmatprep.mubr.bf16.mxu0 0
      %475 = vmatmul.mubr.bf16.gmra.mxu0 %v306
      %v476 = vpop.f32.mrf.mxu0
      %v477 = vadd.f32 0.0, %v476
      %v478 = vpop.f32.mrf.mxu0
      %v479 = vpop.f32.mrf.mxu0
      %v480 = vadd.f32 0.0, %v479
      %v481 = vpop.f32.mrf.mxu0
      %482 = vmatprep.mubr.bf16.mxu0 0
      %483 = vmatmul.mubr.bf16.gmra.mxu0 %v307
      %v484 = vpop.f32.mrf.mxu0
      %v485 = vadd.f32 0.0, %v484
      %v486 = vpop.f32.mrf.mxu0
      %v487 = vpop.f32.mrf.mxu0
      %v488 = vadd.f32 0.0, %v487
      %v489 = vpop.f32.mrf.mxu0
      %490 = vmatprep.mubr.bf16.mxu0 0
      %491 = vmatmul.mubr.bf16.gmra.mxu0 %v308
      %v492 = vpop.f32.mrf.mxu0
      %v493 = vadd.f32 0.0, %v492
      %v494 = vpop.f32.mrf.mxu0
      %v495 = vpop.f32.mrf.mxu0
      %v496 = vadd.f32 0.0, %v495
      %v497 = vpop.f32.mrf.mxu0
      %498 = vmatprep.mubr.bf16.mxu0 0
      %499 = vmatmul.mubr.bf16.gmra.mxu0 %v309
      %v500 = vpop.f32.mrf.mxu0
      %v501 = vadd.f32 0.0, %v500
      %v502 = vpop.f32.mrf.mxu0
      %v503 = vpop.f32.mrf.mxu0
      %v504 = vadd.f32 0.0, %v503
      %v505 = vpop.f32.mrf.mxu0
      %506 = vmatprep.mubr.bf16.mxu0 0
      %507 = vmatmul.mubr.bf16.gmra.mxu0 %v310
      %v508 = vpop.f32.mrf.mxu0
      %v509 = vadd.f32 0.0, %v508
      %v510 = vpop.f32.mrf.mxu0
      %v511 = vpop.f32.mrf.mxu0
      %v512 = vadd.f32 0.0, %v511
      %v513 = vpop.f32.mrf.mxu0
      %514 = vmatprep.mubr.bf16.mxu0 0
      %515 = vmatmul.mubr.bf16.gmra.mxu0 %v311
      %v516 = vpop.f32.mrf.mxu0
      %v517 = vadd.f32 0.0, %v516
      %v518 = vpop.f32.mrf.mxu0
      %v519 = vpop.f32.mrf.mxu0
      %v520 = vadd.f32 0.0, %v519
      %v521 = vpop.f32.mrf.mxu0
      %522 = vmatprep.mubr.bf16.mxu0 0
      %523 = vmatmul.mubr.bf16.gmra.mxu0 %v312
      %v524 = vpop.f32.mrf.mxu0
      %v525 = vadd.f32 0.0, %v524
      %v526 = vpop.f32.mrf.mxu0
      %v527 = vpop.f32.mrf.mxu0
      %v528 = vadd.f32 0.0, %v527
      %v529 = vpop.f32.mrf.mxu0
      %530 = vmatprep.mubr.bf16.mxu0 0
      %531 = vmatmul.mubr.bf16.gmra.mxu0 %v313
      %v532 = vpop.f32.mrf.mxu0
      %v533 = vadd.f32 0.0, %v532
      %v534 = vpop.f32.mrf.mxu0
      %v535 = vpop.f32.mrf.mxu0
      %v536 = vadd.f32 0.0, %v535
      %v537 = vpop.f32.mrf.mxu0
      %538 = vdwg.mxu0
      %539 = vst [vmem:[%s179] sm:$0xff] %v413
      %540 = vst [vmem:[%s179 + $0x8] sm:$0xff] %v416
      %541 = vst [vmem:[%s179 + $0x10] sm:$0xff] %v421
      %542 = vst [vmem:[%s179 + $0x18] sm:$0xff] %v424
      %543 = vst [vmem:[%s179 + $0x20] sm:$0xff] %v429
      %544 = vst [vmem:[%s179 + $0x28] sm:$0xff] %v432
      %545 = vst [vmem:[%s179 + $0x30] sm:$0xff] %v437
      %546 = vst [vmem:[%s179 + $0x38] sm:$0xff] %v440
      %547 = vst [vmem:[%s179 + $0x40] sm:$0xff] %v445
      %548 = vst [vmem:[%s179 + $0x48] sm:$0xff] %v448
      %549 = vst [vmem:[%s179 + $0x50] sm:$0xff] %v453
      %550 = vst [vmem:[%s179 + $0x58] sm:$0xff] %v456
      %551 = vst [vmem:[%s179 + $0x60] sm:$0xff] %v461
      %552 = vst [vmem:[%s179 + $0x68] sm:$0xff] %v464
      %553 = vst [vmem:[%s179 + $0x70] sm:$0xff] %v469
      %554 = vst [vmem:[%s179 + $0x78] sm:$0xff] %v472
      %555 = vst [vmem:[%s179 + $0x80] sm:$0xff] %v477
      %556 = vst [vmem:[%s179 + $0x88] sm:$0xff] %v480
      %557 = vst [vmem:[%s179 + $0x90] sm:$0xff] %v485
      %558 = vst [vmem:[%s179 + $0x98] sm:$0xff] %v488
      %559 = vst [vmem:[%s179 + $0xa0] sm:$0xff] %v493
      %560 = vst [vmem:[%s179 + $0xa8] sm:$0xff] %v496
      %561 = vst [vmem:[%s179 + $0xb0] sm:$0xff] %v501
      %562 = vst [vmem:[%s179 + $0xb8] sm:$0xff] %v504
      %563 = vst [vmem:[%s179 + $0xc0] sm:$0xff] %v509
      %564 = vst [vmem:[%s179 + $0xc8] sm:$0xff] %v512
      %565 = vst [vmem:[%s179 + $0xd0] sm:$0xff] %v517
      %566 = vst [vmem:[%s179 + $0xd8] sm:$0xff] %v520
      %567 = vst [vmem:[%s179 + $0xe0] sm:$0xff] %v525
      %568 = vst [vmem:[%s179 + $0xe8] sm:$0xff] %v528
      %569 = vst [vmem:[%s179 + $0xf0] sm:$0xff] %v533
      %570 = vst [vmem:[%s179 + $0xf8] sm:$0xff] %v536
      %v571 = vadd.f32 %v413, %v416
      %v572 = vadd.f32 %v571, %v421
      %v573 = vadd.f32 %v572, %v424
      %v574 = vadd.f32 %v573, %v429
      %v575 = vadd.f32 %v574, %v432
      %v576 = vadd.f32 %v575, %v437
      %v577 = vadd.f32 %v576, %v440
      %v578 = vadd.f32 %v577, %v445
      %v579 = vadd.f32 %v578, %v448
      %v580 = vadd.f32 %v579, %v453
      %v581 = vadd.f32 %v580, %v456
      %v582 = vadd.f32 %v581, %v461
      %v583 = vadd.f32 %v582, %v464
      %v584 = vadd.f32 %v583, %v469
      %v585 = vadd.f32 %v584, %v472
      %v586 = vadd.f32 %v585, %v477
      %v587 = vadd.f32 %v586, %v480
      %v588 = vadd.f32 %v587, %v485
      %v589 = vadd.f32 %v588, %v488
      %v590 = vadd.f32 %v589, %v493
      %v591 = vadd.f32 %v590, %v496
      %v592 = vadd.f32 %v591, %v501
      %v593 = vadd.f32 %v592, %v504
      %v594 = vadd.f32 %v593, %v509
      %v595 = vadd.f32 %v594, %v512
      %v596 = vadd.f32 %v595, %v517
      %v597 = vadd.f32 %v596, %v520
      %v598 = vadd.f32 %v597, %v525
      %v599 = vadd.f32 %v598, %v528
      %v600 = vadd.f32 %v599, %v533
      %v601 = vadd.f32 %v600, %v536
      %v602 = vrot.slane %v601, 4
      %v603 = vadd.f32 %v601, %v602
      %v604 = vrot.slane %v603, 2
      %v605 = vadd.f32 %v603, %v604
      %v606 = vrot.slane %v605, 1
      %v607 = vadd.f32 %v605, %v606
      %v608 = vmul.f32 %v413, %v413
      %v609 = vmul.f32 %v416, %v416
      %v610 = vmul.f32 %v421, %v421
      %v611 = vmul.f32 %v424, %v424
      %v612 = vmul.f32 %v429, %v429
      %v613 = vmul.f32 %v432, %v432
      %v614 = vmul.f32 %v437, %v437
      %v615 = vmul.f32 %v440, %v440
      %v616 = vmul.f32 %v445, %v445
      %v617 = vmul.f32 %v448, %v448
      %v618 = vmul.f32 %v453, %v453
      %v619 = vmul.f32 %v456, %v456
      %v620 = vmul.f32 %v461, %v461
      %v621 = vmul.f32 %v464, %v464
      %v622 = vmul.f32 %v469, %v469
      %v623 = vmul.f32 %v472, %v472
      %v624 = vmul.f32 %v477, %v477
      %v625 = vmul.f32 %v480, %v480
      %v626 = vmul.f32 %v485, %v485
      %v627 = vmul.f32 %v488, %v488
      %v628 = vmul.f32 %v493, %v493
      %v629 = vmul.f32 %v496, %v496
      %v630 = vmul.f32 %v501, %v501
      %v631 = vmul.f32 %v504, %v504
      %v632 = vmul.f32 %v509, %v509
      %v633 = vmul.f32 %v512, %v512
      %v634 = vmul.f32 %v517, %v517
      %v635 = vmul.f32 %v520, %v520
      %v636 = vmul.f32 %v525, %v525
      %v637 = vmul.f32 %v528, %v528
      %v638 = vmul.f32 %v533, %v533
      %v639 = vmul.f32 %v536, %v536
      %v640 = vadd.f32 %v608, %v609
      %v641 = vadd.f32 %v640, %v610
      %v642 = vadd.f32 %v641, %v611
      %v643 = vadd.f32 %v642, %v612
      %v644 = vadd.f32 %v643, %v613
      %v645 = vadd.f32 %v644, %v614
      %v646 = vadd.f32 %v645, %v615
      %v647 = vadd.f32 %v646, %v616
      %v648 = vadd.f32 %v647, %v617
      %v649 = vadd.f32 %v648, %v618
      %v650 = vadd.f32 %v649, %v619
      %v651 = vadd.f32 %v650, %v620
      %v652 = vadd.f32 %v651, %v621
      %v653 = vadd.f32 %v652, %v622
      %v654 = vadd.f32 %v653, %v623
      %v655 = vadd.f32 %v654, %v624
      %v656 = vadd.f32 %v655, %v625
      %v657 = vadd.f32 %v656, %v626
      %v658 = vadd.f32 %v657, %v627
      %v659 = vadd.f32 %v658, %v628
      %v660 = vadd.f32 %v659, %v629
      %v661 = vadd.f32 %v660, %v630
      %v662 = vadd.f32 %v661, %v631
      %v663 = vadd.f32 %v662, %v632
      %v664 = vadd.f32 %v663, %v633
      %v665 = vadd.f32 %v664, %v634
      %v666 = vadd.f32 %v665, %v635
      %v667 = vadd.f32 %v666, %v636
      %v668 = vadd.f32 %v667, %v637
      %v669 = vadd.f32 %v668, %v638
      %v670 = vadd.f32 %v669, %v639
      %v671 = vrot.slane %v670, 4
      %v672 = vadd.f32 %v670, %v671
      %v673 = vrot.slane %v672, 2
      %v674 = vadd.f32 %v672, %v673
      %v675 = vrot.slane %v674, 1
      %v676 = vadd.f32 %v674, %v675
      %vm677 = vcmask 1040384
      %v678 = vsel %vm677, %v607, %v676
      %679 = vst [vmem:[%s184] sm:$0x3] %v678
      %s680 = smul.u32 32, %s15
      %p681 = scmp.lt.s32.totalorder %s680, 63
      %s682 = scalar_select %p681, %s680, 63
      %s683 = smul.addr %s682, 8
      %s684 = scalar_lea.vmem %s2, %s683
      %p685 = scmp.lt.s32.totalorder %s15, 1
      %s686 = scalar_select %p685, %s15, 1
      %s687 = smul.addr %s686, 2
      %s688 = scalar_lea.vmem %s3, %s687
      // Predicated region
      $region29: #{_lambda_.24} parent=27 // pred_check
        %p689 = pneg %p80
      $region30: #{_lambda_.24} parent=27 // pred_check_branch
        %691 = sbr.rel (%p689) target = $region32
      $region31: #{_lambda_.24} parent=27 // pred_region
        %s692 = smul.u32 32, %s15
      $region32: #{_lambda_.24} parent=27 // pred_fallthru
        _
      // Predicated region
      $region33: #{_lambda_.24} parent=27 // pred_check
        %p693 = pneg %p106
      $region34: #{_lambda_.24} parent=27 // pred_check_branch
        %695 = sbr.rel (%p693) target = $region36
      $region35: #{_lambda_.24} parent=27 // pred_region
        _
      $region36: #{_lambda_.24} parent=27 // pred_fallthru
        _
    $region28: #{_lambda_.24} parent=5 // pred_fallthru
      _
    %p696 = scmp.le.s32.totalorder 2, %s10
    // Predicated region
    $region37: #{_lambda_.24} parent=5 // pred_check
      %p697 = pneg %p696
    $region38: #{_lambda_.24} parent=5 // pred_check_branch
      %699 = sbr.rel (%p697) target = $region40
    $region39: #{_lambda_.24} parent=5 // pred_region
      %s700 = ssub.s32 %s10, 2
      // Predicated region
      $region41: #{_lambda_.24} parent=39 // pred_check
        %p701 = pneg %p86
      $region42: #{_lambda_.24} parent=39 // pred_check_branch
        %703 = sbr.rel (%p701) target = $region44
      $region43: #{_lambda_.24} parent=39 // pred_region
        %s704 = smul.u32 32, %s16
        %p705 = scmp.lt.s32.totalorder %s704, 63
        %s706 = scalar_select %p705, %s704, 63
        %s707 = smul.addr %s706, 8
        %s708 = scalar_lea.vmem %s2, %s707
      $region44: #{_lambda_.24} parent=39 // pred_fallthru
        _
      // Predicated region
      $region45: #{_lambda_.24} parent=39 // pred_check
        %p709 = pneg %p112
      $region46: #{_lambda_.24} parent=39 // pred_check_branch
        %711 = sbr.rel (%p709) target = $region48
      $region47: #{_lambda_.24} parent=39 // pred_region
        %p712 = scmp.lt.s32.totalorder %s16, 1
        %s713 = scalar_select %p712, %s16, 1
        %s714 = smul.addr %s713, 2
        %s715 = scalar_lea.vmem %s3, %s714
      $region48: #{_lambda_.24} parent=39 // pred_fallthru
        _
    $region40: #{_lambda_.24} parent=5 // pred_fallthru
      _
  $region6: #{_lambda_.24} parent=0 // loop_footer
    %s14 = sadd.s32 1, %s10
  $region7: #{_lambda_.24} parent=0 // loop_footer_branch
    %9 = sbr.rel target = $region3
  $region8: #{_lambda_.24} parent=0 // loop_exit
    _

// kernel: _lambda_.25
$region0: #{_lambda_.25}
  #allocation0 [shape = 'u32[]', space=smem, size = 0x4, offset = 0x4, fixed_abs, tag = 'smem constant byte address 0x4 - core index']
  #allocation1 [shape = 'u32[144,128]{1,0:T(1,128)}', space=vmem, size = 0x12000, scoped, tag = 'internal scratch']
  %s0 = inlined_call_operand.vmem [shape: f32[512,128], index: 0, kind: input, shape index: {}]
  %s1 = inlined_call_operand.vmem [shape: f32[2,128], index: 1, kind: input, shape index: {}]
  %s2 = inlined_call_operand.vmem [shape: f32[512,128], index: 2, kind: output, shape index: {}]
  %s3 = sld [smem:[#allocation0]]
  $region41: #{_lambda_.25} parent=0
    _
  %s5 = ssub.s32 1, %s3
  %s6 = scalar_select 0, %s5, %s3
  loop: start=0, step=1, limit=4
  $region2: #{_lambda_.25} parent=0 // loop_pre_header
    _
  $region3: #{_lambda_.25} parent=0 // loop_header
    %s8 = sphi 0, %s12
    %p9 = scmp.ge.s32.totalorder %s8, 4
    %s18 = sphi 0, %s20
    %s21 = sphi 0, %s18
    %s22 = sphi 0, %s21
    %s38 = sphi 0, %s22
    %s42 = sphi 0, %s42
    %s44 = sphi 0, %s42
    %s45 = sphi 0, %s44
    %s59 = sphi 0, %s45
    %s65 = sphi 0, %s67
    %s68 = sphi 0, %s65
    %s69 = sphi 0, %s68
    %s85 = sphi 0, %s69
  $region4: #{_lambda_.25} parent=0 // loop_header_branch
    %11 = sbr.rel (%p9) target = $region8
  $region5: #{_lambda_.25} parent=0 // loop_body
    %s13 = ssub.s32 %s8, 1
    %s14 = ssub.s32 %s8, 2
    %s15 = sadd.s32 %s8, 1
    %s16 = ssub.s32 %s8, %s15
    %p17 = scmp.eq.s32.totalorder %s16, 0
    %s19 = sadd.s32 %s18, 1
    %s20 = scalar_select %p17, %s18, %s19
    %p23 = pneg %p17
    %p24 = scmp.eq.s32.totalorder %s8, 1
    %p25 = por %p23, %p24
    %p26 = scmp.ne.s32.totalorder %s18, %s21
    %p27 = scmp.eq.s32.totalorder %s8, 0
    %p28 = por %p26, %p27
    %p29 = scmp.ne.s32.totalorder %s18, %s21
    %p30 = scmp.eq.s32.totalorder %s13, 1
    %p31 = por %p29, %p30
    %p32 = scmp.ne.s32.totalorder %s21, %s22
    %p33 = scmp.eq.s32.totalorder %s13, 0
    %p34 = por %p32, %p33
    %p35 = scmp.ne.s32.totalorder %s21, %s22
    %p36 = scmp.eq.s32.totalorder %s14, 1
    %p37 = por %p35, %p36
    %p39 = scmp.ne.s32.totalorder %s22, %s38
    %p40 = scmp.eq.s32.totalorder %s14, 0
    %p41 = por %p39, %p40
    %s43 = sadd.s32 %s42, 1
    %p46 = scmp.eq.s32.totalorder %s8, 1
    %p47 = scmp.ne.s32.totalorder %s42, %s44
    %p48 = scmp.eq.s32.totalorder %s8, 0
    %p49 = por %p47, %p48
    %p50 = scmp.ne.s32.totalorder %s42, %s44
    %p51 = scmp.eq.s32.totalorder %s13, 1
    %p52 = por %p50, %p51
    %p53 = scmp.ne.s32.totalorder %s44, %s45
    %p54 = scmp.eq.s32.totalorder %s13, 0
    %p55 = por %p53, %p54
    %p56 = scmp.ne.s32.totalorder %s44, %s45
    %p57 = scmp.eq.s32.totalorder %s14, 1
    %p58 = por %p56, %p57
    %p60 = scmp.ne.s32.totalorder %s45, %s59
    %p61 = scmp.eq.s32.totalorder %s14, 0
    %p62 = por %p60, %p61
    %s63 = ssub.s32 %s8, %s15
    %p64 = scmp.eq.s32.totalorder %s63, 0
    %s66 = sadd.s32 %s65, 1
    %s67 = scalar_select %p64, %s65, %s66
    %p70 = pneg %p64
    %p71 = scmp.eq.s32.totalorder %s8, 1
    %p72 = por %p70, %p71
    %p73 = scmp.ne.s32.totalorder %s65, %s68
    %p74 = scmp.eq.s32.totalorder %s8, 0
    %p75 = por %p73, %p74
    %p76 = scmp.ne.s32.totalorder %s65, %s68
    %p77 = scmp.eq.s32.totalorder %s13, 1
    %p78 = por %p76, %p77
    %p79 = scmp.ne.s32.totalorder %s68, %s69
    %p80 = scmp.eq.s32.totalorder %s13, 0
    %p81 = por %p79, %p80
    %p82 = scmp.ne.s32.totalorder %s68, %s69
    %p83 = scmp.eq.s32.totalorder %s14, 1
    %p84 = por %p82, %p83
    %p86 = scmp.ne.s32.totalorder %s69, %s85
    %p87 = scmp.eq.s32.totalorder %s14, 0
    %p88 = por %p86, %p87
    %p89 = scmp.le.s32.totalorder 1, %s8
    %p90 = scmp.lt.s32.totalorder %s8, 3
    %p91 = pnand %p89, %p90
    %p92 = pneg %p91
    // Predicated region
    $region9: #{_lambda_.25} parent=5 // pred_check
      _
    $region10: #{_lambda_.25} parent=5 // pred_check_branch
      %94 = sbr.rel (%p91) target = $region12
    $region11: #{_lambda_.25} parent=5 // pred_region
      %s95 = ssub.s32 %s8, 1
      // Predicated region
      $region13: #{_lambda_.25} parent=11 // pred_check
        %p96 = pneg %p55
      $region14: #{_lambda_.25} parent=11 // pred_check_branch
        %98 = sbr.rel (%p96) target = $region16
      $region15: #{_lambda_.25} parent=11 // pred_region
        _
      $region16: #{_lambda_.25} parent=11 // pred_fallthru
        _
    $region12: #{_lambda_.25} parent=5 // pred_fallthru
      _
    %p99 = scmp.lt.s32.totalorder %s8, 2
    // Predicated region
    $region17: #{_lambda_.25} parent=5 // pred_check
      %p100 = pneg %p99
    $region18: #{_lambda_.25} parent=5 // pred_check_branch
      %102 = sbr.rel (%p100) target = $region20
    $region19: #{_lambda_.25} parent=5 // pred_region
      // Predicated region
      $region21: #{_lambda_.25} parent=19 // pred_check
        %p103 = pneg %p28
      $region22: #{_lambda_.25} parent=19 // pred_check_branch
        %105 = sbr.rel (%p103) target = $region24
      $region23: #{_lambda_.25} parent=19 // pred_region
        %s106 = smul.u32 32, %s8
        %p107 = scmp.lt.s32.totalorder %s106, 63
        %s108 = scalar_select %p107, %s106, 63
        %s109 = smul.addr %s108, 8
        %s110 = scalar_lea.vmem %s0, %s109
        %s111 = smul.u32 32, %s8
      $region24: #{_lambda_.25} parent=19 // pred_fallthru
        _
    $region20: #{_lambda_.25} parent=5 // pred_fallthru
      _
    %p112 = scmp.le.s32.totalorder 1, %s8
    %p113 = scmp.lt.s32.totalorder %s8, 3
    %p114 = pnand %p112, %p113
    %p115 = pneg %p114
    // Predicated region
    $region25: #{_lambda_.25} parent=5 // pred_check
      _
    $region26: #{_lambda_.25} parent=5 // pred_check_branch
      %117 = sbr.rel (%p114) target = $region28
    $region27: #{_lambda_.25} parent=5 // pred_region
      %s118 = ssub.s32 %s8, 1
      %s119 = smul.u32 32, %s13
      %p120 = scmp.lt.s32.totalorder %s119, 63
      %s121 = scalar_select %p120, %s119, 63
      %s122 = smul.addr %s121, 8
      %s123 = scalar_lea.vmem %s0, %s122
      %p124 = pneg %p34
      %p125 = pneg %p31
      %p126 = pneg %p55
      %p127 = pneg %p52
      %p128 = pneg %p81
      %p129 = pneg %p78
      %s130 = smul.u32 32, %s13
      %p131 = scmp.lt.s32.totalorder %s130, 63
      %s132 = scalar_select %p131, %s130, 63
      %s133 = smul.addr %s132, 8
      %s134 = scalar_lea.vmem %s2, %s133
      %s135 = smul.u32 32, %s13
      %p136 = scmp.lt.s32.totalorder %s135, 63
      %s137 = scalar_select %p136, %s135, 63
      %s138 = smul.addr %s137, 8
      %s139 = scalar_lea.vmem %s0, %s138
      %s140 = smul.u32 32, %s13
      %s141 = smul.u32 32, %s13
      %p142 = scmp.lt.s32.totalorder %s141, 63
      %s143 = scalar_select %p142, %s141, 63
      %s144 = smul.addr %s143, 8
      %s145 = scalar_lea.vmem %s2, %s144
      %s146 = smul.u32 32, %s13
      %v147 = vld [vmem:[%s139] sm:$0xff]
      %v148 = vld [vmem:[%s139 + $0x8] sm:$0xff]
      %v149 = vld [vmem:[%s139 + $0x10] sm:$0xff]
      %v150 = vld [vmem:[%s139 + $0x18] sm:$0xff]
      %v151 = vld [vmem:[%s139 + $0x20] sm:$0xff]
      %v152 = vld [vmem:[%s139 + $0x28] sm:$0xff]
      %v153 = vld [vmem:[%s139 + $0x30] sm:$0xff]
      %v154 = vld [vmem:[%s139 + $0x38] sm:$0xff]
      %v155 = vld [vmem:[%s139 + $0x40] sm:$0xff]
      %v156 = vld [vmem:[%s139 + $0x48] sm:$0xff]
      %v157 = vld [vmem:[%s139 + $0x50] sm:$0xff]
      %v158 = vld [vmem:[%s139 + $0x58] sm:$0xff]
      %v159 = vld [vmem:[%s139 + $0x60] sm:$0xff]
      %v160 = vld [vmem:[%s139 + $0x68] sm:$0xff]
      %v161 = vld [vmem:[%s139 + $0x70] sm:$0xff]
      %v162 = vld [vmem:[%s139 + $0x78] sm:$0xff]
      %v163 = vld [vmem:[%s139 + $0x80] sm:$0xff]
      %v164 = vld [vmem:[%s139 + $0x88] sm:$0xff]
      %v165 = vld [vmem:[%s139 + $0x90] sm:$0xff]
      %v166 = vld [vmem:[%s139 + $0x98] sm:$0xff]
      %v167 = vld [vmem:[%s139 + $0xa0] sm:$0xff]
      %v168 = vld [vmem:[%s139 + $0xa8] sm:$0xff]
      %v169 = vld [vmem:[%s139 + $0xb0] sm:$0xff]
      %v170 = vld [vmem:[%s139 + $0xb8] sm:$0xff]
      %v171 = vld [vmem:[%s139 + $0xc0] sm:$0xff]
      %v172 = vld [vmem:[%s139 + $0xc8] sm:$0xff]
      %v173 = vld [vmem:[%s139 + $0xd0] sm:$0xff]
      %v174 = vld [vmem:[%s139 + $0xd8] sm:$0xff]
      %v175 = vld [vmem:[%s139 + $0xe0] sm:$0xff]
      %v176 = vld [vmem:[%s139 + $0xe8] sm:$0xff]
      %v177 = vld [vmem:[%s139 + $0xf0] sm:$0xff]
      %v178 = vld [vmem:[%s139 + $0xf8] sm:$0xff]
      %v179 = vld [vmem:[%s1] sm:$0x1]
      %v180 = vlaneseq
      %v181 = vshrl.u32 %v180, 7
      %v182 = vsub.s32 0, %v181
      %v183 = vrot.slane %v179, %v182
      %v184 = vmul.f32 %v147, %v183
      %v185 = vmul.f32 %v148, %v183
      %v186 = vmul.f32 %v149, %v183
      %v187 = vmul.f32 %v150, %v183
      %v188 = vmul.f32 %v151, %v183
      %v189 = vmul.f32 %v152, %v183
      %v190 = vmul.f32 %v153, %v183
      %v191 = vmul.f32 %v154, %v183
      %v192 = vmul.f32 %v155, %v183
      %v193 = vmul.f32 %v156, %v183
      %v194 = vmul.f32 %v157, %v183
      %v195 = vmul.f32 %v158, %v183
      %v196 = vmul.f32 %v159, %v183
      %v197 = vmul.f32 %v160, %v183
      %v198 = vmul.f32 %v161, %v183
      %v199 = vmul.f32 %v162, %v183
      %v200 = vmul.f32 %v163, %v183
      %v201 = vmul.f32 %v164, %v183
      %v202 = vmul.f32 %v165, %v183
      %v203 = vmul.f32 %v166, %v183
      %v204 = vmul.f32 %v167, %v183
      %v205 = vmul.f32 %v168, %v183
      %v206 = vmul.f32 %v169, %v183
      %v207 = vmul.f32 %v170, %v183
      %v208 = vmul.f32 %v171, %v183
      %v209 = vmul.f32 %v172, %v183
      %v210 = vmul.f32 %v173, %v183
      %v211 = vmul.f32 %v174, %v183
      %v212 = vmul.f32 %v175, %v183
      %v213 = vmul.f32 %v176, %v183
      %v214 = vmul.f32 %v177, %v183
      %v215 = vmul.f32 %v178, %v183
      %v216 = vld [vmem:[%s1 + $0x1] sm:$0x1]
      %v217 = vlaneseq
      %v218 = vshrl.u32 %v217, 7
      %v219 = vsub.s32 0, %v218
      %v220 = vrot.slane %v216, %v219
      %v221 = vadd.f32 %v184, %v220
      %v222 = vadd.f32 %v185, %v220
      %v223 = vadd.f32 %v186, %v220
      %v224 = vadd.f32 %v187, %v220
      %v225 = vadd.f32 %v188, %v220
      %v226 = vadd.f32 %v189, %v220
      %v227 = vadd.f32 %v190, %v220
      %v228 = vadd.f32 %v191, %v220
      %v229 = vadd.f32 %v192, %v220
      %v230 = vadd.f32 %v193, %v220
      %v231 = vadd.f32 %v194, %v220
      %v232 = vadd.f32 %v195, %v220
      %v233 = vadd.f32 %v196, %v220
      %v234 = vadd.f32 %v197, %v220
      %v235 = vadd.f32 %v198, %v220
      %v236 = vadd.f32 %v199, %v220
      %v237 = vadd.f32 %v200, %v220
      %v238 = vadd.f32 %v201, %v220
      %v239 = vadd.f32 %v202, %v220
      %v240 = vadd.f32 %v203, %v220
      %v241 = vadd.f32 %v204, %v220
      %v242 = vadd.f32 %v205, %v220
      %v243 = vadd.f32 %v206, %v220
      %v244 = vadd.f32 %v207, %v220
      %v245 = vadd.f32 %v208, %v220
      %v246 = vadd.f32 %v209, %v220
      %v247 = vadd.f32 %v210, %v220
      %v248 = vadd.f32 %v211, %v220
      %v249 = vadd.f32 %v212, %v220
      %v250 = vadd.f32 %v213, %v220
      %v251 = vadd.f32 %v214, %v220
      %v252 = vadd.f32 %v215, %v220
      %v253 = vmax.f32 %v221, 0.0
      %v254 = vmax.f32 %v222, 0.0
      %v255 = vmax.f32 %v223, 0.0
      %v256 = vmax.f32 %v224, 0.0
      %v257 = vmax.f32 %v225, 0.0
      %v258 = vmax.f32 %v226, 0.0
      %v259 = vmax.f32 %v227, 0.0
      %v260 = vmax.f32 %v228, 0.0
      %v261 = vmax.f32 %v229, 0.0
      %v262 = vmax.f32 %v230, 0.0
      %v263 = vmax.f32 %v231, 0.0
      %v264 = vmax.f32 %v232, 0.0
      %v265 = vmax.f32 %v233, 0.0
      %v266 = vmax.f32 %v234, 0.0
      %v267 = vmax.f32 %v235, 0.0
      %v268 = vmax.f32 %v236, 0.0
      %v269 = vmax.f32 %v237, 0.0
      %v270 = vmax.f32 %v238, 0.0
      %v271 = vmax.f32 %v239, 0.0
      %v272 = vmax.f32 %v240, 0.0
      %v273 = vmax.f32 %v241, 0.0
      %v274 = vmax.f32 %v242, 0.0
      %v275 = vmax.f32 %v243, 0.0
      %v276 = vmax.f32 %v244, 0.0
      %v277 = vmax.f32 %v245, 0.0
      %v278 = vmax.f32 %v246, 0.0
      %v279 = vmax.f32 %v247, 0.0
      %v280 = vmax.f32 %v248, 0.0
      %v281 = vmax.f32 %v249, 0.0
      %v282 = vmax.f32 %v250, 0.0
      %v283 = vmax.f32 %v251, 0.0
      %v284 = vmax.f32 %v252, 0.0
      %285 = vst [vmem:[%s145] sm:$0xff] %v253
      %286 = vst [vmem:[%s145 + $0x8] sm:$0xff] %v254
      %287 = vst [vmem:[%s145 + $0x10] sm:$0xff] %v255
      %288 = vst [vmem:[%s145 + $0x18] sm:$0xff] %v256
      %289 = vst [vmem:[%s145 + $0x20] sm:$0xff] %v257
      %290 = vst [vmem:[%s145 + $0x28] sm:$0xff] %v258
      %291 = vst [vmem:[%s145 + $0x30] sm:$0xff] %v259
      %292 = vst [vmem:[%s145 + $0x38] sm:$0xff] %v260
      %293 = vst [vmem:[%s145 + $0x40] sm:$0xff] %v261
      %294 = vst [vmem:[%s145 + $0x48] sm:$0xff] %v262
      %295 = vst [vmem:[%s145 + $0x50] sm:$0xff] %v263
      %296 = vst [vmem:[%s145 + $0x58] sm:$0xff] %v264
      %297 = vst [vmem:[%s145 + $0x60] sm:$0xff] %v265
      %298 = vst [vmem:[%s145 + $0x68] sm:$0xff] %v266
      %299 = vst [vmem:[%s145 + $0x70] sm:$0xff] %v267
      %300 = vst [vmem:[%s145 + $0x78] sm:$0xff] %v268
      %301 = vst [vmem:[%s145 + $0x80] sm:$0xff] %v269
      %302 = vst [vmem:[%s145 + $0x88] sm:$0xff] %v270
      %303 = vst [vmem:[%s145 + $0x90] sm:$0xff] %v271
      %304 = vst [vmem:[%s145 + $0x98] sm:$0xff] %v272
      %305 = vst [vmem:[%s145 + $0xa0] sm:$0xff] %v273
      %306 = vst [vmem:[%s145 + $0xa8] sm:$0xff] %v274
      %307 = vst [vmem:[%s145 + $0xb0] sm:$0xff] %v275
      %308 = vst [vmem:[%s145 + $0xb8] sm:$0xff] %v276
      %309 = vst [vmem:[%s145 + $0xc0] sm:$0xff] %v277
      %310 = vst [vmem:[%s145 + $0xc8] sm:$0xff] %v278
      %311 = vst [vmem:[%s145 + $0xd0] sm:$0xff] %v279
      %312 = vst [vmem:[%s145 + $0xd8] sm:$0xff] %v280
      %313 = vst [vmem:[%s145 + $0xe0] sm:$0xff] %v281
      %314 = vst [vmem:[%s145 + $0xe8] sm:$0xff] %v282
      %315 = vst [vmem:[%s145 + $0xf0] sm:$0xff] %v283
      %316 = vst [vmem:[%s145 + $0xf8] sm:$0xff] %v284
      %s317 = smul.u32 32, %s13
      %p318 = scmp.lt.s32.totalorder %s317, 63
      %s319 = scalar_select %p318, %s317, 63
      %s320 = smul.addr %s319, 8
      %s321 = scalar_lea.vmem %s2, %s320
      // Predicated region
      $region29: #{_lambda_.25} parent=27 // pred_check
        %p322 = pneg %p78
      $region30: #{_lambda_.25} parent=27 // pred_check_branch
        %324 = sbr.rel (%p322) target = $region32
      $region31: #{_lambda_.25} parent=27 // pred_region
        %s325 = smul.u32 32, %s13
      $region32: #{_lambda_.25} parent=27 // pred_fallthru
        _
    $region28: #{_lambda_.25} parent=5 // pred_fallthru
      _
    %p326 = scmp.le.s32.totalorder 2, %s8
    // Predicated region
    $region33: #{_lambda_.25} parent=5 // pred_check
      %p327 = pneg %p326
    $region34: #{_lambda_.25} parent=5 // pred_check_branch
      %329 = sbr.rel (%p327) target = $region36
    $region35: #{_lambda_.25} parent=5 // pred_region
      %s330 = ssub.s32 %s8, 2
      // Predicated region
      $region37: #{_lambda_.25} parent=35 // pred_check
        %p331 = pneg %p84
      $region38: #{_lambda_.25} parent=35 // pred_check_branch
        %333 = sbr.rel (%p331) target = $region40
      $region39: #{_lambda_.25} parent=35 // pred_region
        %s334 = smul.u32 32, %s14
        %p335 = scmp.lt.s32.totalorder %s334, 63
        %s336 = scalar_select %p335, %s334, 63
        %s337 = smul.addr %s336, 8
        %s338 = scalar_lea.vmem %s2, %s337
      $region40: #{_lambda_.25} parent=35 // pred_fallthru
        _
    $region36: #{_lambda_.25} parent=5 // pred_fallthru
      _
  $region6: #{_lambda_.25} parent=0 // loop_footer
    %s12 = sadd.s32 1, %s8
  $region7: #{_lambda_.25} parent=0 // loop_footer_branch
    %7 = sbr.rel target = $region3
  $region8: #{_lambda_.25} parent=0 // loop_exit
    _

// kernel: _lambda_.27
$region0: #{_lambda_.27}
  #allocation0 [shape = 'u32[]', space=smem, size = 0x4, offset = 0x4, fixed_abs, tag = 'smem constant byte address 0x4 - core index']
  #allocation1 [shape = 'u32[144,128]{1,0:T(1,128)}', space=vmem, size = 0x12000, scoped, tag = 'internal scratch']
  %s0 = inlined_call_operand.vmem [shape: f32[256,128], index: 0, kind: input, shape index: {}]
  %s1 = inlined_call_operand.vmem [shape: f32[2,128], index: 1, kind: input, shape index: {}]
  %s2 = inlined_call_operand.vmem [shape: f32[256,128], index: 2, kind: output, shape index: {}]
  %s3 = sld [smem:[#allocation0]]
  $region18: #{_lambda_.27} parent=0
    _
  %s5 = ssub.s32 1, %s3
  %s6 = scalar_select 0, %s5, %s3
  // Predicated region
  $region2: #{_lambda_.27} parent=0 // pred_check
    _
  $region3: #{_lambda_.27} parent=0 // pred_check_branch
    %8 = sbr.rel (0) target = $region5
  $region4: #{_lambda_.27} parent=0 // pred_region
    _
  $region5: #{_lambda_.27} parent=0 // pred_fallthru
    _
  // Predicated region
  $region6: #{_lambda_.27} parent=0 // pred_check
    _
  $region7: #{_lambda_.27} parent=0 // pred_check_branch
    %10 = sbr.rel (0) target = $region9
  $region8: #{_lambda_.27} parent=0 // pred_region
    _
  $region9: #{_lambda_.27} parent=0 // pred_fallthru
    _
  %v11 = vld [vmem:[%s0] sm:$0xff]
  %v12 = vld [vmem:[%s0 + $0x8] sm:$0xff]
  %v13 = vld [vmem:[%s0 + $0x10] sm:$0xff]
  %v14 = vld [vmem:[%s0 + $0x18] sm:$0xff]
  %v15 = vld [vmem:[%s0 + $0x20] sm:$0xff]
  %v16 = vld [vmem:[%s0 + $0x28] sm:$0xff]
  %v17 = vld [vmem:[%s0 + $0x30] sm:$0xff]
  %v18 = vld [vmem:[%s0 + $0x38] sm:$0xff]
  %v19 = vld [vmem:[%s0 + $0x40] sm:$0xff]
  %v20 = vld [vmem:[%s0 + $0x48] sm:$0xff]
  %v21 = vld [vmem:[%s0 + $0x50] sm:$0xff]
  %v22 = vld [vmem:[%s0 + $0x58] sm:$0xff]
  %v23 = vld [vmem:[%s0 + $0x60] sm:$0xff]
  %v24 = vld [vmem:[%s0 + $0x68] sm:$0xff]
  %v25 = vld [vmem:[%s0 + $0x70] sm:$0xff]
  %v26 = vld [vmem:[%s0 + $0x78] sm:$0xff]
  %v27 = vld [vmem:[%s0 + $0x80] sm:$0xff]
  %v28 = vld [vmem:[%s0 + $0x88] sm:$0xff]
  %v29 = vld [vmem:[%s0 + $0x90] sm:$0xff]
  %v30 = vld [vmem:[%s0 + $0x98] sm:$0xff]
  %v31 = vld [vmem:[%s0 + $0xa0] sm:$0xff]
  %v32 = vld [vmem:[%s0 + $0xa8] sm:$0xff]
  %v33 = vld [vmem:[%s0 + $0xb0] sm:$0xff]
  %v34 = vld [vmem:[%s0 + $0xb8] sm:$0xff]
  %v35 = vld [vmem:[%s0 + $0xc0] sm:$0xff]
  %v36 = vld [vmem:[%s0 + $0xc8] sm:$0xff]
  %v37 = vld [vmem:[%s0 + $0xd0] sm:$0xff]
  %v38 = vld [vmem:[%s0 + $0xd8] sm:$0xff]
  %v39 = vld [vmem:[%s0 + $0xe0] sm:$0xff]
  %v40 = vld [vmem:[%s0 + $0xe8] sm:$0xff]
  %v41 = vld [vmem:[%s0 + $0xf0] sm:$0xff]
  %v42 = vld [vmem:[%s0 + $0xf8] sm:$0xff]
  %v43 = vld [vmem:[%s1] sm:$0x1]
  %v44 = vlaneseq
  %v45 = vshrl.u32 %v44, 7
  %v46 = vsub.s32 0, %v45
  %v47 = vrot.slane %v43, %v46
  %v48 = vmul.f32 %v11, %v47
  %v49 = vmul.f32 %v12, %v47
  %v50 = vmul.f32 %v13, %v47
  %v51 = vmul.f32 %v14, %v47
  %v52 = vmul.f32 %v15, %v47
  %v53 = vmul.f32 %v16, %v47
  %v54 = vmul.f32 %v17, %v47
  %v55 = vmul.f32 %v18, %v47
  %v56 = vmul.f32 %v19, %v47
  %v57 = vmul.f32 %v20, %v47
  %v58 = vmul.f32 %v21, %v47
  %v59 = vmul.f32 %v22, %v47
  %v60 = vmul.f32 %v23, %v47
  %v61 = vmul.f32 %v24, %v47
  %v62 = vmul.f32 %v25, %v47
  %v63 = vmul.f32 %v26, %v47
  %v64 = vmul.f32 %v27, %v47
  %v65 = vmul.f32 %v28, %v47
  %v66 = vmul.f32 %v29, %v47
  %v67 = vmul.f32 %v30, %v47
  %v68 = vmul.f32 %v31, %v47
  %v69 = vmul.f32 %v32, %v47
  %v70 = vmul.f32 %v33, %v47
  %v71 = vmul.f32 %v34, %v47
  %v72 = vmul.f32 %v35, %v47
  %v73 = vmul.f32 %v36, %v47
  %v74 = vmul.f32 %v37, %v47
  %v75 = vmul.f32 %v38, %v47
  %v76 = vmul.f32 %v39, %v47
  %v77 = vmul.f32 %v40, %v47
  %v78 = vmul.f32 %v41, %v47
  %v79 = vmul.f32 %v42, %v47
  %v80 = vld [vmem:[%s1 + $0x1] sm:$0x1]
  %v81 = vlaneseq
  %v82 = vshrl.u32 %v81, 7
  %v83 = vsub.s32 0, %v82
  %v84 = vrot.slane %v80, %v83
  %v85 = vadd.f32 %v48, %v84
  %v86 = vadd.f32 %v49, %v84
  %v87 = vadd.f32 %v50, %v84
  %v88 = vadd.f32 %v51, %v84
  %v89 = vadd.f32 %v52, %v84
  %v90 = vadd.f32 %v53, %v84
  %v91 = vadd.f32 %v54, %v84
  %v92 = vadd.f32 %v55, %v84
  %v93 = vadd.f32 %v56, %v84
  %v94 = vadd.f32 %v57, %v84
  %v95 = vadd.f32 %v58, %v84
  %v96 = vadd.f32 %v59, %v84
  %v97 = vadd.f32 %v60, %v84
  %v98 = vadd.f32 %v61, %v84
  %v99 = vadd.f32 %v62, %v84
  %v100 = vadd.f32 %v63, %v84
  %v101 = vadd.f32 %v64, %v84
  %v102 = vadd.f32 %v65, %v84
  %v103 = vadd.f32 %v66, %v84
  %v104 = vadd.f32 %v67, %v84
  %v105 = vadd.f32 %v68, %v84
  %v106 = vadd.f32 %v69, %v84
  %v107 = vadd.f32 %v70, %v84
  %v108 = vadd.f32 %v71, %v84
  %v109 = vadd.f32 %v72, %v84
  %v110 = vadd.f32 %v73, %v84
  %v111 = vadd.f32 %v74, %v84
  %v112 = vadd.f32 %v75, %v84
  %v113 = vadd.f32 %v76, %v84
  %v114 = vadd.f32 %v77, %v84
  %v115 = vadd.f32 %v78, %v84
  %v116 = vadd.f32 %v79, %v84
  %117 = vst [vmem:[%s2] sm:$0xff] %v85
  %118 = vst [vmem:[%s2 + $0x8] sm:$0xff] %v86
  %119 = vst [vmem:[%s2 + $0x10] sm:$0xff] %v87
  %120 = vst [vmem:[%s2 + $0x18] sm:$0xff] %v88
  %121 = vst [vmem:[%s2 + $0x20] sm:$0xff] %v89
  %122 = vst [vmem:[%s2 + $0x28] sm:$0xff] %v90
  %123 = vst [vmem:[%s2 + $0x30] sm:$0xff] %v91
  %124 = vst [vmem:[%s2 + $0x38] sm:$0xff] %v92
  %125 = vst [vmem:[%s2 + $0x40] sm:$0xff] %v93
  %126 = vst [vmem:[%s2 + $0x48] sm:$0xff] %v94
  %127 = vst [vmem:[%s2 + $0x50] sm:$0xff] %v95
  %128 = vst [vmem:[%s2 + $0x58] sm:$0xff] %v96
  %129 = vst [vmem:[%s2 + $0x60] sm:$0xff] %v97
  %130 = vst [vmem:[%s2 + $0x68] sm:$0xff] %v98
  %131 = vst [vmem:[%s2 + $0x70] sm:$0xff] %v99
  %132 = vst [vmem:[%s2 + $0x78] sm:$0xff] %v100
  %133 = vst [vmem:[%s2 + $0x80] sm:$0xff] %v101
  %134 = vst [vmem:[%s2 + $0x88] sm:$0xff] %v102
  %135 = vst [vmem:[%s2 + $0x90] sm:$0xff] %v103
  %136 = vst [vmem:[%s2 + $0x98] sm:$0xff] %v104
  %137 = vst [vmem:[%s2 + $0xa0] sm:$0xff] %v105
  %138 = vst [vmem:[%s2 + $0xa8] sm:$0xff] %v106
  %139 = vst [vmem:[%s2 + $0xb0] sm:$0xff] %v107
  %140 = vst [vmem:[%s2 + $0xb8] sm:$0xff] %v108
  %141 = vst [vmem:[%s2 + $0xc0] sm:$0xff] %v109
  %142 = vst [vmem:[%s2 + $0xc8] sm:$0xff] %v110
  %143 = vst [vmem:[%s2 + $0xd0] sm:$0xff] %v111
  %144 = vst [vmem:[%s2 + $0xd8] sm:$0xff] %v112
  %145 = vst [vmem:[%s2 + $0xe0] sm:$0xff] %v113
  %146 = vst [vmem:[%s2 + $0xe8] sm:$0xff] %v114
  %147 = vst [vmem:[%s2 + $0xf0] sm:$0xff] %v115
  %148 = vst [vmem:[%s2 + $0xf8] sm:$0xff] %v116
  // Predicated region
  $region10: #{_lambda_.27} parent=0 // pred_check
    _
  $region11: #{_lambda_.27} parent=0 // pred_check_branch
    %150 = sbr.rel (0) target = $region13
  $region12: #{_lambda_.27} parent=0 // pred_region
    _
  $region13: #{_lambda_.27} parent=0 // pred_fallthru
    _
  // Predicated region
  $region14: #{_lambda_.27} parent=0 // pred_check
    _
  $region15: #{_lambda_.27} parent=0 // pred_check_branch
    %152 = sbr.rel (0) target = $region17
  $region16: #{_lambda_.27} parent=0 // pred_region
    _
  $region17: #{_lambda_.27} parent=0 // pred_fallthru
    _

// kernel: _lambda_.26
$region0: #{_lambda_.26}
  #allocation0 [shape = 'u32[]', space=smem, size = 0x4, offset = 0x4, fixed_abs, tag = 'smem constant byte address 0x4 - core index']
  #allocation1 [shape = 'u32[144,128]{1,0:T(1,128)}', space=vmem, size = 0x12000, scoped, tag = 'internal scratch']
  %s0 = inlined_call_operand.vmem [shape: bf16[256,128], index: 0, kind: input, shape index: {}]
  %s1 = inlined_call_operand.vmem [shape: bf16[128,128], index: 1, kind: input, shape index: {}]
  %s2 = inlined_call_operand.vmem [shape: f32[256,128], index: 2, kind: output, shape index: {0}]
  %s3 = inlined_call_operand.vmem [shape: f32[1,2,128], index: 3, kind: output, shape index: {1}]
  %4 = xla_tuple %s2, %s3
  %s5 = sld [smem:[#allocation0]]
  $region26: #{_lambda_.26} parent=0
    _
  %s7 = ssub.s32 1, %s5
  %s8 = scalar_select 0, %s7, %s5
  // Predicated region
  $region2: #{_lambda_.26} parent=0 // pred_check
    _
  $region3: #{_lambda_.26} parent=0 // pred_check_branch
    %10 = sbr.rel (0) target = $region5
  $region4: #{_lambda_.26} parent=0 // pred_region
    _
  $region5: #{_lambda_.26} parent=0 // pred_fallthru
    _
  // Predicated region
  $region6: #{_lambda_.26} parent=0 // pred_check
    _
  $region7: #{_lambda_.26} parent=0 // pred_check_branch
    %12 = sbr.rel (0) target = $region9
  $region8: #{_lambda_.26} parent=0 // pred_region
    _
  $region9: #{_lambda_.26} parent=0 // pred_fallthru
    _
  %v14 = vld [vmem:[%s0] sm:$0xf]
  %v15 = vld [vmem:[%s0 + $0x4] sm:$0xf]
  %v16 = vld [vmem:[%s0 + $0x8] sm:$0xf]
  %v17 = vld [vmem:[%s0 + $0xc] sm:$0xf]
  %v18 = vld [vmem:[%s0 + $0x10] sm:$0xf]
  %v19 = vld [vmem:[%s0 + $0x14] sm:$0xf]
  %v20 = vld [vmem:[%s0 + $0x18] sm:$0xf]
  %v21 = vld [vmem:[%s0 + $0x1c] sm:$0xf]
  %v22 = vld [vmem:[%s0 + $0x20] sm:$0xf]
  %v23 = vld [vmem:[%s0 + $0x24] sm:$0xf]
  %v24 = vld [vmem:[%s0 + $0x28] sm:$0xf]
  %v25 = vld [vmem:[%s0 + $0x2c] sm:$0xf]
  %v26 = vld [vmem:[%s0 + $0x30] sm:$0xf]
  %v27 = vld [vmem:[%s0 + $0x34] sm:$0xf]
  %v28 = vld [vmem:[%s0 + $0x38] sm:$0xf]
  %v29 = vld [vmem:[%s0 + $0x3c] sm:$0xf]
  %v30 = vld [vmem:[%s0 + $0x40] sm:$0xf]
  %v31 = vld [vmem:[%s0 + $0x44] sm:$0xf]
  %v32 = vld [vmem:[%s0 + $0x48] sm:$0xf]
  %v33 = vld [vmem:[%s0 + $0x4c] sm:$0xf]
  %v34 = vld [vmem:[%s0 + $0x50] sm:$0xf]
  %v35 = vld [vmem:[%s0 + $0x54] sm:$0xf]
  %v36 = vld [vmem:[%s0 + $0x58] sm:$0xf]
  %v37 = vld [vmem:[%s0 + $0x5c] sm:$0xf]
  %v38 = vld [vmem:[%s0 + $0x60] sm:$0xf]
  %v39 = vld [vmem:[%s0 + $0x64] sm:$0xf]
  %v40 = vld [vmem:[%s0 + $0x68] sm:$0xf]
  %v41 = vld [vmem:[%s0 + $0x6c] sm:$0xf]
  %v42 = vld [vmem:[%s0 + $0x70] sm:$0xf]
  %v43 = vld [vmem:[%s0 + $0x74] sm:$0xf]
  %v44 = vld [vmem:[%s0 + $0x78] sm:$0xf]
  %v45 = vld [vmem:[%s0 + $0x7c] sm:$0xf]
  %v46 = vld [vmem:[%s1] sm:$0xf]
  %v47 = vld [vmem:[%s1 + $0x4] sm:$0xf]
  %v48 = vld [vmem:[%s1 + $0x8] sm:$0xf]
  %v49 = vld [vmem:[%s1 + $0xc] sm:$0xf]
  %v50 = vld [vmem:[%s1 + $0x10] sm:$0xf]
  %v51 = vld [vmem:[%s1 + $0x14] sm:$0xf]
  %v52 = vld [vmem:[%s1 + $0x18] sm:$0xf]
  %v53 = vld [vmem:[%s1 + $0x1c] sm:$0xf]
  %v54 = vld [vmem:[%s1 + $0x20] sm:$0xf]
  %v55 = vld [vmem:[%s1 + $0x24] sm:$0xf]
  %v56 = vld [vmem:[%s1 + $0x28] sm:$0xf]
  %v57 = vld [vmem:[%s1 + $0x2c] sm:$0xf]
  %v58 = vld [vmem:[%s1 + $0x30] sm:$0xf]
  %v59 = vld [vmem:[%s1 + $0x34] sm:$0xf]
  %v60 = vld [vmem:[%s1 + $0x38] sm:$0xf]
  %v61 = vld [vmem:[%s1 + $0x3c] sm:$0xf]
  %v94 = vunpack.c.l.b16 %v14
  %v95 = vunpack.c.l.b16 %v15
  %v96 = vunpack.c.l.b16 %v16
  %v97 = vunpack.c.l.b16 %v17
  %v98 = vunpack.c.l.b16 %v18
  %v99 = vunpack.c.l.b16 %v19
  %v100 = vunpack.c.l.b16 %v20
  %v101 = vunpack.c.l.b16 %v21
  %v102 = vunpack.c.l.b16 %v22
  %v103 = vunpack.c.l.b16 %v23
  %v104 = vunpack.c.l.b16 %v24
  %v105 = vunpack.c.l.b16 %v25
  %v106 = vunpack.c.l.b16 %v26
  %v107 = vunpack.c.l.b16 %v27
  %v108 = vunpack.c.l.b16 %v28
  %v109 = vunpack.c.l.b16 %v29
  %v110 = vunpack.c.l.b16 %v30
  %v111 = vunpack.c.l.b16 %v31
  %v112 = vunpack.c.l.b16 %v32
  %v113 = vunpack.c.l.b16 %v33
  %v114 = vunpack.c.l.b16 %v34
  %v115 = vunpack.c.l.b16 %v35
  %v116 = vunpack.c.l.b16 %v36
  %v117 = vunpack.c.l.b16 %v37
  %v118 = vunpack.c.l.b16 %v38
  %v119 = vunpack.c.l.b16 %v39
  %v120 = vunpack.c.l.b16 %v40
  %v121 = vunpack.c.l.b16 %v41
  %v122 = vunpack.c.l.b16 %v42
  %v123 = vunpack.c.l.b16 %v43
  %v124 = vunpack.c.l.b16 %v44
  %v125 = vunpack.c.l.b16 %v45
  %v126 = vpack.c.b16 %v95, %v94
  %v127 = vpack.c.b16 %v97, %v96
  %v128 = vpack.c.b16 %v99, %v98
  %v129 = vpack.c.b16 %v101, %v100
  %v130 = vpack.c.b16 %v103, %v102
  %v131 = vpack.c.b16 %v105, %v104
  %v132 = vpack.c.b16 %v107, %v106
  %v133 = vpack.c.b16 %v109, %v108
  %v134 = vpack.c.b16 %v111, %v110
  %v135 = vpack.c.b16 %v113, %v112
  %v136 = vpack.c.b16 %v115, %v114
  %v137 = vpack.c.b16 %v117, %v116
  %v138 = vpack.c.b16 %v119, %v118
  %v139 = vpack.c.b16 %v121, %v120
  %v140 = vpack.c.b16 %v123, %v122
  %v141 = vpack.c.b16 %v125, %v124
  %v174 = vunpack.c.l.b16 %v46
  %v175 = vunpack.c.l.b16 %v47
  %v176 = vunpack.c.l.b16 %v48
  %v177 = vunpack.c.l.b16 %v49
  %v178 = vunpack.c.l.b16 %v50
  %v179 = vunpack.c.l.b16 %v51
  %v180 = vunpack.c.l.b16 %v52
  %v181 = vunpack.c.l.b16 %v53
  %v182 = vunpack.c.l.b16 %v54
  %v183 = vunpack.c.l.b16 %v55
  %v184 = vunpack.c.l.b16 %v56
  %v185 = vunpack.c.l.b16 %v57
  %v186 = vunpack.c.l.b16 %v58
  %v187 = vunpack.c.l.b16 %v59
  %v188 = vunpack.c.l.b16 %v60
  %v189 = vunpack.c.l.b16 %v61
  %v190 = vpack.c.b16 %v175, %v174
  %v191 = vpack.c.b16 %v177, %v176
  %v192 = vpack.c.b16 %v179, %v178
  %v193 = vpack.c.b16 %v181, %v180
  %v194 = vpack.c.b16 %v183, %v182
  %v195 = vpack.c.b16 %v185, %v184
  %v196 = vpack.c.b16 %v187, %v186
  %v197 = vpack.c.b16 %v189, %v188
  %206 = vmatprep.subr.bf16.mxu0 0
  %207 = vmatpush1.bf16.msra.mxu0 %v197
  %208 = vmatprep.subr.bf16.mxu0 0
  %209 = vmatpush1.bf16.msra.mxu0 %v196
  %210 = vmatprep.subr.bf16.mxu0 0
  %211 = vmatpush1.bf16.msra.mxu0 %v195
  %212 = vmatprep.subr.bf16.mxu0 0
  %213 = vmatpush1.bf16.msra.mxu0 %v194
  %214 = vmatprep.subr.bf16.mxu0 0
  %215 = vmatpush1.bf16.msra.mxu0 %v193
  %216 = vmatprep.subr.bf16.mxu0 0
  %217 = vmatpush1.bf16.msra.mxu0 %v192
  %218 = vmatprep.subr.bf16.mxu0 0
  %219 = vmatpush1.bf16.msra.mxu0 %v191
  %220 = vmatprep.subr.bf16.mxu0 0
  %221 = vmatpush1.bf16.msra.mxu0 %v190
  %222 = vmatprep.subr.bf16.mxu0 0
  %223 = vmatpush2.bf16.msra.mxu0 0
  %224 = vmatprep.subr.bf16.mxu0 0
  %225 = vmatpush2.bf16.msra.mxu0 0
  %226 = vmatprep.subr.bf16.mxu0 0
  %227 = vmatpush2.bf16.msra.mxu0 0
  %228 = vmatprep.subr.bf16.mxu0 0
  %229 = vmatpush2.bf16.msra.mxu0 0
  %230 = vmatprep.subr.bf16.mxu0 0
  %231 = vmatpush2.bf16.msra.mxu0 0
  %232 = vmatprep.subr.bf16.mxu0 0
  %233 = vmatpush2.bf16.msra.mxu0 0
  %234 = vmatprep.subr.bf16.mxu0 0
  %235 = vmatpush2.bf16.msra.mxu0 0
  %236 = vmatprep.subr.bf16.mxu0 0
  %237 = vmatpush2.bf16.msra.mxu0 0
  %238 = vmatprep.mubr.bf16.mxu0 0
  %239 = vmatmul.mubr.bf16.gmra.mxu0 %v126
  %v240 = vpop.f32.mrf.mxu0
  %v241 = vadd.f32 0.0, %v240
  %v242 = vpop.f32.mrf.mxu0
  %v243 = vpop.f32.mrf.mxu0
  %v244 = vadd.f32 0.0, %v243
  %v245 = vpop.f32.mrf.mxu0
  %246 = vmatprep.mubr.bf16.mxu0 0
  %247 = vmatmul.mubr.bf16.gmra.mxu0 %v127
  %v248 = vpop.f32.mrf.mxu0
  %v249 = vadd.f32 0.0, %v248
  %v250 = vpop.f32.mrf.mxu0
  %v251 = vpop.f32.mrf.mxu0
  %v252 = vadd.f32 0.0, %v251
  %v253 = vpop.f32.mrf.mxu0
  %254 = vmatprep.mubr.bf16.mxu0 0
  %255 = vmatmul.mubr.bf16.gmra.mxu0 %v128
  %v256 = vpop.f32.mrf.mxu0
  %v257 = vadd.f32 0.0, %v256
  %v258 = vpop.f32.mrf.mxu0
  %v259 = vpop.f32.mrf.mxu0
  %v260 = vadd.f32 0.0, %v259
  %v261 = vpop.f32.mrf.mxu0
  %262 = vmatprep.mubr.bf16.mxu0 0
  %263 = vmatmul.mubr.bf16.gmra.mxu0 %v129
  %v264 = vpop.f32.mrf.mxu0
  %v265 = vadd.f32 0.0, %v264
  %v266 = vpop.f32.mrf.mxu0
  %v267 = vpop.f32.mrf.mxu0
  %v268 = vadd.f32 0.0, %v267
  %v269 = vpop.f32.mrf.mxu0
  %270 = vmatprep.mubr.bf16.mxu0 0
  %271 = vmatmul.mubr.bf16.gmra.mxu0 %v130
  %v272 = vpop.f32.mrf.mxu0
  %v273 = vadd.f32 0.0, %v272
  %v274 = vpop.f32.mrf.mxu0
  %v275 = vpop.f32.mrf.mxu0
  %v276 = vadd.f32 0.0, %v275
  %v277 = vpop.f32.mrf.mxu0
  %278 = vmatprep.mubr.bf16.mxu0 0
  %279 = vmatmul.mubr.bf16.gmra.mxu0 %v131
  %v280 = vpop.f32.mrf.mxu0
  %v281 = vadd.f32 0.0, %v280
  %v282 = vpop.f32.mrf.mxu0
  %v283 = vpop.f32.mrf.mxu0
  %v284 = vadd.f32 0.0, %v283
  %v285 = vpop.f32.mrf.mxu0
  %286 = vmatprep.mubr.bf16.mxu0 0
  %287 = vmatmul.mubr.bf16.gmra.mxu0 %v132
  %v288 = vpop.f32.mrf.mxu0
  %v289 = vadd.f32 0.0, %v288
  %v290 = vpop.f32.mrf.mxu0
  %v291 = vpop.f32.mrf.mxu0
  %v292 = vadd.f32 0.0, %v291
  %v293 = vpop.f32.mrf.mxu0
  %294 = vmatprep.mubr.bf16.mxu0 0
  %295 = vmatmul.mubr.bf16.gmra.mxu0 %v133
  %v296 = vpop.f32.mrf.mxu0
  %v297 = vadd.f32 0.0, %v296
  %v298 = vpop.f32.mrf.mxu0
  %v299 = vpop.f32.mrf.mxu0
  %v300 = vadd.f32 0.0, %v299
  %v301 = vpop.f32.mrf.mxu0
  %302 = vmatprep.mubr.bf16.mxu0 0
  %303 = vmatmul.mubr.bf16.gmra.mxu0 %v134
  %v304 = vpop.f32.mrf.mxu0
  %v305 = vadd.f32 0.0, %v304
  %v306 = vpop.f32.mrf.mxu0
  %v307 = vpop.f32.mrf.mxu0
  %v308 = vadd.f32 0.0, %v307
  %v309 = vpop.f32.mrf.mxu0
  %310 = vmatprep.mubr.bf16.mxu0 0
  %311 = vmatmul.mubr.bf16.gmra.mxu0 %v135
  %v312 = vpop.f32.mrf.mxu0
  %v313 = vadd.f32 0.0, %v312
  %v314 = vpop.f32.mrf.mxu0
  %v315 = vpop.f32.mrf.mxu0
  %v316 = vadd.f32 0.0, %v315
  %v317 = vpop.f32.mrf.mxu0
  %318 = vmatprep.mubr.bf16.mxu0 0
  %319 = vmatmul.mubr.bf16.gmra.mxu0 %v136
  %v320 = vpop.f32.mrf.mxu0
  %v321 = vadd.f32 0.0, %v320
  %v322 = vpop.f32.mrf.mxu0
  %v323 = vpop.f32.mrf.mxu0
  %v324 = vadd.f32 0.0, %v323
  %v325 = vpop.f32.mrf.mxu0
  %326 = vmatprep.mubr.bf16.mxu0 0
  %327 = vmatmul.mubr.bf16.gmra.mxu0 %v137
  %v328 = vpop.f32.mrf.mxu0
  %v329 = vadd.f32 0.0, %v328
  %v330 = vpop.f32.mrf.mxu0
  %v331 = vpop.f32.mrf.mxu0
  %v332 = vadd.f32 0.0, %v331
  %v333 = vpop.f32.mrf.mxu0
  %334 = vmatprep.mubr.bf16.mxu0 0
  %335 = vmatmul.mubr.bf16.gmra.mxu0 %v138
  %v336 = vpop.f32.mrf.mxu0
  %v337 = vadd.f32 0.0, %v336
  %v338 = vpop.f32.mrf.mxu0
  %v339 = vpop.f32.mrf.mxu0
  %v340 = vadd.f32 0.0, %v339
  %v341 = vpop.f32.mrf.mxu0
  %342 = vmatprep.mubr.bf16.mxu0 0
  %343 = vmatmul.mubr.bf16.gmra.mxu0 %v139
  %v344 = vpop.f32.mrf.mxu0
  %v345 = vadd.f32 0.0, %v344
  %v346 = vpop.f32.mrf.mxu0
  %v347 = vpop.f32.mrf.mxu0
  %v348 = vadd.f32 0.0, %v347
  %v349 = vpop.f32.mrf.mxu0
  %350 = vmatprep.mubr.bf16.mxu0 0
  %351 = vmatmul.mubr.bf16.gmra.mxu0 %v140
  %v352 = vpop.f32.mrf.mxu0
  %v353 = vadd.f32 0.0, %v352
  %v354 = vpop.f32.mrf.mxu0
  %v355 = vpop.f32.mrf.mxu0
  %v356 = vadd.f32 0.0, %v355
  %v357 = vpop.f32.mrf.mxu0
  %358 = vmatprep.mubr.bf16.mxu0 0
  %359 = vmatmul.mubr.bf16.gmra.mxu0 %v141
  %v360 = vpop.f32.mrf.mxu0
  %v361 = vadd.f32 0.0, %v360
  %v362 = vpop.f32.mrf.mxu0
  %v363 = vpop.f32.mrf.mxu0
  %v364 = vadd.f32 0.0, %v363
  %v365 = vpop.f32.mrf.mxu0
  %366 = vdwg.mxu0
  %367 = vst [vmem:[%s2] sm:$0xff] %v241
  %368 = vst [vmem:[%s2 + $0x8] sm:$0xff] %v244
  %369 = vst [vmem:[%s2 + $0x10] sm:$0xff] %v249
  %370 = vst [vmem:[%s2 + $0x18] sm:$0xff] %v252
  %371 = vst [vmem:[%s2 + $0x20] sm:$0xff] %v257
  %372 = vst [vmem:[%s2 + $0x28] sm:$0xff] %v260
  %373 = vst [vmem:[%s2 + $0x30] sm:$0xff] %v265
  %374 = vst [vmem:[%s2 + $0x38] sm:$0xff] %v268
  %375 = vst [vmem:[%s2 + $0x40] sm:$0xff] %v273
  %376 = vst [vmem:[%s2 + $0x48] sm:$0xff] %v276
  %377 = vst [vmem:[%s2 + $0x50] sm:$0xff] %v281
  %378 = vst [vmem:[%s2 + $0x58] sm:$0xff] %v284
  %379 = vst [vmem:[%s2 + $0x60] sm:$0xff] %v289
  %380 = vst [vmem:[%s2 + $0x68] sm:$0xff] %v292
  %381 = vst [vmem:[%s2 + $0x70] sm:$0xff] %v297
  %382 = vst [vmem:[%s2 + $0x78] sm:$0xff] %v300
  %383 = vst [vmem:[%s2 + $0x80] sm:$0xff] %v305
  %384 = vst [vmem:[%s2 + $0x88] sm:$0xff] %v308
  %385 = vst [vmem:[%s2 + $0x90] sm:$0xff] %v313
  %386 = vst [vmem:[%s2 + $0x98] sm:$0xff] %v316
  %387 = vst [vmem:[%s2 + $0xa0] sm:$0xff] %v321
  %388 = vst [vmem:[%s2 + $0xa8] sm:$0xff] %v324
  %389 = vst [vmem:[%s2 + $0xb0] sm:$0xff] %v329
  %390 = vst [vmem:[%s2 + $0xb8] sm:$0xff] %v332
  %391 = vst [vmem:[%s2 + $0xc0] sm:$0xff] %v337
  %392 = vst [vmem:[%s2 + $0xc8] sm:$0xff] %v340
  %393 = vst [vmem:[%s2 + $0xd0] sm:$0xff] %v345
  %394 = vst [vmem:[%s2 + $0xd8] sm:$0xff] %v348
  %395 = vst [vmem:[%s2 + $0xe0] sm:$0xff] %v353
  %396 = vst [vmem:[%s2 + $0xe8] sm:$0xff] %v356
  %397 = vst [vmem:[%s2 + $0xf0] sm:$0xff] %v361
  %398 = vst [vmem:[%s2 + $0xf8] sm:$0xff] %v364
  %v399 = vadd.f32 %v241, %v244
  %v400 = vadd.f32 %v399, %v249
  %v401 = vadd.f32 %v400, %v252
  %v402 = vadd.f32 %v401, %v257
  %v403 = vadd.f32 %v402, %v260
  %v404 = vadd.f32 %v403, %v265
  %v405 = vadd.f32 %v404, %v268
  %v406 = vadd.f32 %v405, %v273
  %v407 = vadd.f32 %v406, %v276
  %v408 = vadd.f32 %v407, %v281
  %v409 = vadd.f32 %v408, %v284
  %v410 = vadd.f32 %v409, %v289
  %v411 = vadd.f32 %v410, %v292
  %v412 = vadd.f32 %v411, %v297
  %v413 = vadd.f32 %v412, %v300
  %v414 = vadd.f32 %v413, %v305
  %v415 = vadd.f32 %v414, %v308
  %v416 = vadd.f32 %v415, %v313
  %v417 = vadd.f32 %v416, %v316
  %v418 = vadd.f32 %v417, %v321
  %v419 = vadd.f32 %v418, %v324
  %v420 = vadd.f32 %v419, %v329
  %v421 = vadd.f32 %v420, %v332
  %v422 = vadd.f32 %v421, %v337
  %v423 = vadd.f32 %v422, %v340
  %v424 = vadd.f32 %v423, %v345
  %v425 = vadd.f32 %v424, %v348
  %v426 = vadd.f32 %v425, %v353
  %v427 = vadd.f32 %v426, %v356
  %v428 = vadd.f32 %v427, %v361
  %v429 = vadd.f32 %v428, %v364
  %v430 = vrot.slane %v429, 4
  %v431 = vadd.f32 %v429, %v430
  %v432 = vrot.slane %v431, 2
  %v433 = vadd.f32 %v431, %v432
  %v434 = vrot.slane %v433, 1
  %v435 = vadd.f32 %v433, %v434
  %v436 = vmul.f32 %v241, %v241
  %v437 = vmul.f32 %v244, %v244
  %v438 = vmul.f32 %v249, %v249
  %v439 = vmul.f32 %v252, %v252
  %v440 = vmul.f32 %v257, %v257
  %v441 = vmul.f32 %v260, %v260
  %v442 = vmul.f32 %v265, %v265
  %v443 = vmul.f32 %v268, %v268
  %v444 = vmul.f32 %v273, %v273
  %v445 = vmul.f32 %v276, %v276
  %v446 = vmul.f32 %v281, %v281
  %v447 = vmul.f32 %v284, %v284
  %v448 = vmul.f32 %v289, %v289
  %v449 = vmul.f32 %v292, %v292
  %v450 = vmul.f32 %v297, %v297
  %v451 = vmul.f32 %v300, %v300
  %v452 = vmul.f32 %v305, %v305
  %v453 = vmul.f32 %v308, %v308
  %v454 = vmul.f32 %v313, %v313
  %v455 = vmul.f32 %v316, %v316
  %v456 = vmul.f32 %v321, %v321
  %v457 = vmul.f32 %v324, %v324
  %v458 = vmul.f32 %v329, %v329
  %v459 = vmul.f32 %v332, %v332
  %v460 = vmul.f32 %v337, %v337
  %v461 = vmul.f32 %v340, %v340
  %v462 = vmul.f32 %v345, %v345
  %v463 = vmul.f32 %v348, %v348
  %v464 = vmul.f32 %v353, %v353
  %v465 = vmul.f32 %v356, %v356
  %v466 = vmul.f32 %v361, %v361
  %v467 = vmul.f32 %v364, %v364
  %v468 = vadd.f32 %v436, %v437
  %v469 = vadd.f32 %v468, %v438
  %v470 = vadd.f32 %v469, %v439
  %v471 = vadd.f32 %v470, %v440
  %v472 = vadd.f32 %v471, %v441
  %v473 = vadd.f32 %v472, %v442
  %v474 = vadd.f32 %v473, %v443
  %v475 = vadd.f32 %v474, %v444
  %v476 = vadd.f32 %v475, %v445
  %v477 = vadd.f32 %v476, %v446
  %v478 = vadd.f32 %v477, %v447
  %v479 = vadd.f32 %v478, %v448
  %v480 = vadd.f32 %v479, %v449
  %v481 = vadd.f32 %v480, %v450
  %v482 = vadd.f32 %v481, %v451
  %v483 = vadd.f32 %v482, %v452
  %v484 = vadd.f32 %v483, %v453
  %v485 = vadd.f32 %v484, %v454
  %v486 = vadd.f32 %v485, %v455
  %v487 = vadd.f32 %v486, %v456
  %v488 = vadd.f32 %v487, %v457
  %v489 = vadd.f32 %v488, %v458
  %v490 = vadd.f32 %v489, %v459
  %v491 = vadd.f32 %v490, %v460
  %v492 = vadd.f32 %v491, %v461
  %v493 = vadd.f32 %v492, %v462
  %v494 = vadd.f32 %v493, %v463
  %v495 = vadd.f32 %v494, %v464
  %v496 = vadd.f32 %v495, %v465
  %v497 = vadd.f32 %v496, %v466
  %v498 = vadd.f32 %v497, %v467
  %v499 = vrot.slane %v498, 4
  %v500 = vadd.f32 %v498, %v499
  %v501 = vrot.slane %v500, 2
  %v502 = vadd.f32 %v500, %v501
  %v503 = vrot.slane %v502, 1
  %v504 = vadd.f32 %v502, %v503
  %vm505 = vcmask 1040384
  %v506 = vsel %vm505, %v435, %v504
  %507 = vst [vmem:[%s3] sm:$0x3] %v506
  // Predicated region
  $region10: #{_lambda_.26} parent=0 // pred_check
    _
  $region11: #{_lambda_.26} parent=0 // pred_check_branch
    %509 = sbr.rel (0) target = $region13
  $region12: #{_lambda_.26} parent=0 // pred_region
    _
  $region13: #{_lambda_.26} parent=0 // pred_fallthru
    _
  // Predicated region
  $region14: #{_lambda_.26} parent=0 // pred_check
    _
  $region15: #{_lambda_.26} parent=0 // pred_check_branch
    %511 = sbr.rel (0) target = $region17
  $region16: #{_lambda_.26} parent=0 // pred_region
    _
  $region17: #{_lambda_.26} parent=0 // pred_fallthru
    _
  // Predicated region
  $region18: #{_lambda_.26} parent=0 // pred_check
    _
  $region19: #{_lambda_.26} parent=0 // pred_check_branch
    %513 = sbr.rel (0) target = $region21
  $region20: #{_lambda_.26} parent=0 // pred_region
    _
  $region21: #{_lambda_.26} parent=0 // pred_fallthru
    _
  // Predicated region
  $region22: #{_lambda_.26} parent=0 // pred_check
    _
  $region23: #{_lambda_.26} parent=0 // pred_check_branch
    %515 = sbr.rel (0) target = $region25
  $region24: #{_lambda_.26} parent=0 // pred_region
    _
  $region25: #{_lambda_.26} parent=0 // pred_fallthru
    _

// kernel: _lambda_.22
$region0: #{_lambda_.22}
  #allocation0 [shape = 'u32[]', space=smem, size = 0x4, offset = 0x4, fixed_abs, tag = 'smem constant byte address 0x4 - core index']
  #allocation1 [shape = 'u32[144,128]{1,0:T(1,128)}', space=vmem, size = 0x12000, scoped, tag = 'internal scratch']
  %s0 = inlined_call_operand.vmem [shape: bf16[256,384], index: 0, kind: input, shape index: {}]
  %s1 = inlined_call_operand.vmem [shape: bf16[384,128], index: 1, kind: input, shape index: {}]
  %s2 = inlined_call_operand.vmem [shape: f32[256,128], index: 2, kind: output, shape index: {0}]
  %s3 = inlined_call_operand.vmem [shape: f32[1,2,128], index: 3, kind: output, shape index: {1}]
  %4 = xla_tuple %s2, %s3
  %s5 = sld [smem:[#allocation0]]
  $region26: #{_lambda_.22} parent=0
    _
  %s7 = ssub.s32 1, %s5
  %s8 = scalar_select 0, %s7, %s5
  // Predicated region
  $region2: #{_lambda_.22} parent=0 // pred_check
    _
  $region3: #{_lambda_.22} parent=0 // pred_check_branch
    %10 = sbr.rel (0) target = $region5
  $region4: #{_lambda_.22} parent=0 // pred_region
    _
  $region5: #{_lambda_.22} parent=0 // pred_fallthru
    _
  // Predicated region
  $region6: #{_lambda_.22} parent=0 // pred_check
    _
  $region7: #{_lambda_.22} parent=0 // pred_check_branch
    %12 = sbr.rel (0) target = $region9
  $region8: #{_lambda_.22} parent=0 // pred_region
    _
  $region9: #{_lambda_.22} parent=0 // pred_fallthru
    _
  %v14 = vld [vmem:[%s0] sm:$0xff]
  %v15 = vld [vmem:[%s0 + $0x8] sm:$0xf]
  %v16 = vld [vmem:[%s0 + $0xc] sm:$0xff]
  %v17 = vld [vmem:[%s0 + $0x14] sm:$0xf]
  %v18 = vld [vmem:[%s0 + $0x18] sm:$0xff]
  %v19 = vld [vmem:[%s0 + $0x20] sm:$0xf]
  %v20 = vld [vmem:[%s0 + $0x24] sm:$0xff]
  %v21 = vld [vmem:[%s0 + $0x2c] sm:$0xf]
  %v22 = vld [vmem:[%s0 + $0x30] sm:$0xff]
  %v23 = vld [vmem:[%s0 + $0x38] sm:$0xf]
  %v24 = vld [vmem:[%s0 + $0x3c] sm:$0xff]
  %v25 = vld [vmem:[%s0 + $0x44] sm:$0xf]
  %v26 = vld [vmem:[%s0 + $0x48] sm:$0xff]
  %v27 = vld [vmem:[%s0 + $0x50] sm:$0xf]
  %v28 = vld [vmem:[%s0 + $0x54] sm:$0xff]
  %v29 = vld [vmem:[%s0 + $0x5c] sm:$0xf]
  %v30 = vld [vmem:[%s0 + $0x60] sm:$0xff]
  %v31 = vld [vmem:[%s0 + $0x68] sm:$0xf]
  %v32 = vld [vmem:[%s0 + $0x6c] sm:$0xff]
  %v33 = vld [vmem:[%s0 + $0x74] sm:$0xf]
  %v34 = vld [vmem:[%s0 + $0x78] sm:$0xff]
  %v35 = vld [vmem:[%s0 + $0x80] sm:$0xf]
  %v36 = vld [vmem:[%s0 + $0x84] sm:$0xff]
  %v37 = vld [vmem:[%s0 + $0x8c] sm:$0xf]
  %v38 = vld [vmem:[%s0 + $0x90] sm:$0xff]
  %v39 = vld [vmem:[%s0 + $0x98] sm:$0xf]
  %v40 = vld [vmem:[%s0 + $0x9c] sm:$0xff]
  %v41 = vld [vmem:[%s0 + $0xa4] sm:$0xf]
  %v42 = vld [vmem:[%s0 + $0xa8] sm:$0xff]
  %v43 = vld [vmem:[%s0 + $0xb0] sm:$0xf]
  %v44 = vld [vmem:[%s0 + $0xb4] sm:$0xff]
  %v45 = vld [vmem:[%s0 + $0xbc] sm:$0xf]
  %v46 = vld [vmem:[%s0 + $0xc0] sm:$0xff]
  %v47 = vld [vmem:[%s0 + $0xc8] sm:$0xf]
  %v48 = vld [vmem:[%s0 + $0xcc] sm:$0xff]
  %v49 = vld [vmem:[%s0 + $0xd4] sm:$0xf]
  %v50 = vld [vmem:[%s0 + $0xd8] sm:$0xff]
  %v51 = vld [vmem:[%s0 + $0xe0] sm:$0xf]
  %v52 = vld [vmem:[%s0 + $0xe4] sm:$0xff]
  %v53 = vld [vmem:[%s0 + $0xec] sm:$0xf]
  %v54 = vld [vmem:[%s0 + $0xf0] sm:$0xff]
  %v55 = vld [vmem:[%s0 + $0xf8] sm:$0xf]
  %v56 = vld [vmem:[%s0 + $0xfc] sm:$0xff]
  %v57 = vld [vmem:[%s0 + $0x104] sm:$0xf]
  %v58 = vld [vmem:[%s0 + $0x108] sm:$0xff]
  %v59 = vld [vmem:[%s0 + $0x110] sm:$0xf]
  %v60 = vld [vmem:[%s0 + $0x114] sm:$0xff]
  %v61 = vld [vmem:[%s0 + $0x11c] sm:$0xf]
  %v62 = vld [vmem:[%s0 + $0x120] sm:$0xff]
  %v63 = vld [vmem:[%s0 + $0x128] sm:$0xf]
  %v64 = vld [vmem:[%s0 + $0x12c] sm:$0xff]
  %v65 = vld [vmem:[%s0 + $0x134] sm:$0xf]
  %v66 = vld [vmem:[%s0 + $0x138] sm:$0xff]
  %v67 = vld [vmem:[%s0 + $0x140] sm:$0xf]
  %v68 = vld [vmem:[%s0 + $0x144] sm:$0xff]
  %v69 = vld [vmem:[%s0 + $0x14c] sm:$0xf]
  %v70 = vld [vmem:[%s0 + $0x150] sm:$0xff]
  %v71 = vld [vmem:[%s0 + $0x158] sm:$0xf]
  %v72 = vld [vmem:[%s0 + $0x15c] sm:$0xff]
  %v73 = vld [vmem:[%s0 + $0x164] sm:$0xf]
  %v74 = vld [vmem:[%s0 + $0x168] sm:$0xff]
  %v75 = vld [vmem:[%s0 + $0x170] sm:$0xf]
  %v76 = vld [vmem:[%s0 + $0x174] sm:$0xff]
  %v77 = vld [vmem:[%s0 + $0x17c] sm:$0xf]
  %v78 = vld [vmem:[%s1] sm:$0xf]
  %v79 = vld [vmem:[%s1 + $0x4] sm:$0xf]
  %v80 = vld [vmem:[%s1 + $0x8] sm:$0xf]
  %v81 = vld [vmem:[%s1 + $0xc] sm:$0xf]
  %v82 = vld [vmem:[%s1 + $0x10] sm:$0xf]
  %v83 = vld [vmem:[%s1 + $0x14] sm:$0xf]
  %v84 = vld [vmem:[%s1 + $0x18] sm:$0xf]
  %v85 = vld [vmem:[%s1 + $0x1c] sm:$0xf]
  %v86 = vld [vmem:[%s1 + $0x20] sm:$0xf]
  %v87 = vld [vmem:[%s1 + $0x24] sm:$0xf]
  %v88 = vld [vmem:[%s1 + $0x28] sm:$0xf]
  %v89 = vld [vmem:[%s1 + $0x2c] sm:$0xf]
  %v90 = vld [vmem:[%s1 + $0x30] sm:$0xf]
  %v91 = vld [vmem:[%s1 + $0x34] sm:$0xf]
  %v92 = vld [vmem:[%s1 + $0x38] sm:$0xf]
  %v93 = vld [vmem:[%s1 + $0x3c] sm:$0xf]
  %v94 = vld [vmem:[%s1 + $0x40] sm:$0xf]
  %v95 = vld [vmem:[%s1 + $0x44] sm:$0xf]
  %v96 = vld [vmem:[%s1 + $0x48] sm:$0xf]
  %v97 = vld [vmem:[%s1 + $0x4c] sm:$0xf]
  %v98 = vld [vmem:[%s1 + $0x50] sm:$0xf]
  %v99 = vld [vmem:[%s1 + $0x54] sm:$0xf]
  %v100 = vld [vmem:[%s1 + $0x58] sm:$0xf]
  %v101 = vld [vmem:[%s1 + $0x5c] sm:$0xf]
  %v102 = vld [vmem:[%s1 + $0x60] sm:$0xf]
  %v103 = vld [vmem:[%s1 + $0x64] sm:$0xf]
  %v104 = vld [vmem:[%s1 + $0x68] sm:$0xf]
  %v105 = vld [vmem:[%s1 + $0x6c] sm:$0xf]
  %v106 = vld [vmem:[%s1 + $0x70] sm:$0xf]
  %v107 = vld [vmem:[%s1 + $0x74] sm:$0xf]
  %v108 = vld [vmem:[%s1 + $0x78] sm:$0xf]
  %v109 = vld [vmem:[%s1 + $0x7c] sm:$0xf]
  %v110 = vld [vmem:[%s1 + $0x80] sm:$0xf]
  %v111 = vld [vmem:[%s1 + $0x84] sm:$0xf]
  %v112 = vld [vmem:[%s1 + $0x88] sm:$0xf]
  %v113 = vld [vmem:[%s1 + $0x8c] sm:$0xf]
  %v114 = vld [vmem:[%s1 + $0x90] sm:$0xf]
  %v115 = vld [vmem:[%s1 + $0x94] sm:$0xf]
  %v116 = vld [vmem:[%s1 + $0x98] sm:$0xf]
  %v117 = vld [vmem:[%s1 + $0x9c] sm:$0xf]
  %v118 = vld [vmem:[%s1 + $0xa0] sm:$0xf]
  %v119 = vld [vmem:[%s1 + $0xa4] sm:$0xf]
  %v120 = vld [vmem:[%s1 + $0xa8] sm:$0xf]
  %v121 = vld [vmem:[%s1 + $0xac] sm:$0xf]
  %v122 = vld [vmem:[%s1 + $0xb0] sm:$0xf]
  %v123 = vld [vmem:[%s1 + $0xb4] sm:$0xf]
  %v124 = vld [vmem:[%s1 + $0xb8] sm:$0xf]
  %v125 = vld [vmem:[%s1 + $0xbc] sm:$0xf]
  %v190 = vunpack.c.l.b16 %v14
  %v191 = vunpack.c.h.b16 %v14
  %v192 = vunpack.c.l.b16 %v15
  %v193 = vunpack.c.l.b16 %v16
  %v194 = vunpack.c.h.b16 %v16
  %v195 = vunpack.c.l.b16 %v17
  %v196 = vunpack.c.l.b16 %v18
  %v197 = vunpack.c.h.b16 %v18
  %v198 = vunpack.c.l.b16 %v19
  %v199 = vunpack.c.l.b16 %v20
  %v200 = vunpack.c.h.b16 %v20
  %v201 = vunpack.c.l.b16 %v21
  %v202 = vunpack.c.l.b16 %v22
  %v203 = vunpack.c.h.b16 %v22
  %v204 = vunpack.c.l.b16 %v23
  %v205 = vunpack.c.l.b16 %v24
  %v206 = vunpack.c.h.b16 %v24
  %v207 = vunpack.c.l.b16 %v25
  %v208 = vunpack.c.l.b16 %v26
  %v209 = vunpack.c.h.b16 %v26
  %v210 = vunpack.c.l.b16 %v27
  %v211 = vunpack.c.l.b16 %v28
  %v212 = vunpack.c.h.b16 %v28
  %v213 = vunpack.c.l.b16 %v29
  %v214 = vunpack.c.l.b16 %v30
  %v215 = vunpack.c.h.b16 %v30
  %v216 = vunpack.c.l.b16 %v31
  %v217 = vunpack.c.l.b16 %v32
  %v218 = vunpack.c.h.b16 %v32
  %v219 = vunpack.c.l.b16 %v33
  %v220 = vunpack.c.l.b16 %v34
  %v221 = vunpack.c.h.b16 %v34
  %v222 = vunpack.c.l.b16 %v35
  %v223 = vunpack.c.l.b16 %v36
  %v224 = vunpack.c.h.b16 %v36
  %v225 = vunpack.c.l.b16 %v37
  %v226 = vunpack.c.l.b16 %v38
  %v227 = vunpack.c.h.b16 %v38
  %v228 = vunpack.c.l.b16 %v39
  %v229 = vunpack.c.l.b16 %v40
  %v230 = vunpack.c.h.b16 %v40
  %v231 = vunpack.c.l.b16 %v41
  %v232 = vunpack.c.l.b16 %v42
  %v233 = vunpack.c.h.b16 %v42
  %v234 = vunpack.c.l.b16 %v43
  %v235 = vunpack.c.l.b16 %v44
  %v236 = vunpack.c.h.b16 %v44
  %v237 = vunpack.c.l.b16 %v45
  %v238 = vunpack.c.l.b16 %v46
  %v239 = vunpack.c.h.b16 %v46
  %v240 = vunpack.c.l.b16 %v47
  %v241 = vunpack.c.l.b16 %v48
  %v242 = vunpack.c.h.b16 %v48
  %v243 = vunpack.c.l.b16 %v49
  %v244 = vunpack.c.l.b16 %v50
  %v245 = vunpack.c.h.b16 %v50
  %v246 = vunpack.c.l.b16 %v51
  %v247 = vunpack.c.l.b16 %v52
  %v248 = vunpack.c.h.b16 %v52
  %v249 = vunpack.c.l.b16 %v53
  %v250 = vunpack.c.l.b16 %v54
  %v251 = vunpack.c.h.b16 %v54
  %v252 = vunpack.c.l.b16 %v55
  %v253 = vunpack.c.l.b16 %v56
  %v254 = vunpack.c.h.b16 %v56
  %v255 = vunpack.c.l.b16 %v57
  %v256 = vunpack.c.l.b16 %v58
  %v257 = vunpack.c.h.b16 %v58
  %v258 = vunpack.c.l.b16 %v59
  %v259 = vunpack.c.l.b16 %v60
  %v260 = vunpack.c.h.b16 %v60
  %v261 = vunpack.c.l.b16 %v61
  %v262 = vunpack.c.l.b16 %v62
  %v263 = vunpack.c.h.b16 %v62
  %v264 = vunpack.c.l.b16 %v63
  %v265 = vunpack.c.l.b16 %v64
  %v266 = vunpack.c.h.b16 %v64
  %v267 = vunpack.c.l.b16 %v65
  %v268 = vunpack.c.l.b16 %v66
  %v269 = vunpack.c.h.b16 %v66
  %v270 = vunpack.c.l.b16 %v67
  %v271 = vunpack.c.l.b16 %v68
  %v272 = vunpack.c.h.b16 %v68
  %v273 = vunpack.c.l.b16 %v69
  %v274 = vunpack.c.l.b16 %v70
  %v275 = vunpack.c.h.b16 %v70
  %v276 = vunpack.c.l.b16 %v71
  %v277 = vunpack.c.l.b16 %v72
  %v278 = vunpack.c.h.b16 %v72
  %v279 = vunpack.c.l.b16 %v73
  %v280 = vunpack.c.l.b16 %v74
  %v281 = vunpack.c.h.b16 %v74
  %v282 = vunpack.c.l.b16 %v75
  %v283 = vunpack.c.l.b16 %v76
  %v284 = vunpack.c.h.b16 %v76
  %v285 = vunpack.c.l.b16 %v77
  %v286 = vpack.c.b16 %v193, %v190
  %v287 = vpack.c.b16 %v194, %v191
  %v288 = vpack.c.b16 %v195, %v192
  %v289 = vpack.c.b16 %v199, %v196
  %v290 = vpack.c.b16 %v200, %v197
  %v291 = vpack.c.b16 %v201, %v198
  %v292 = vpack.c.b16 %v205, %v202
  %v293 = vpack.c.b16 %v206, %v203
  %v294 = vpack.c.b16 %v207, %v204
  %v295 = vpack.c.b16 %v211, %v208
  %v296 = vpack.c.b16 %v212, %v209
  %v297 = vpack.c.b16 %v213, %v210
  %v298 = vpack.c.b16 %v217, %v214
  %v299 = vpack.c.b16 %v218, %v215
  %v300 = vpack.c.b16 %v219, %v216
  %v301 = vpack.c.b16 %v223, %v220
  %v302 = vpack.c.b16 %v224, %v221
  %v303 = vpack.c.b16 %v225, %v222
  %v304 = vpack.c.b16 %v229, %v226
  %v305 = vpack.c.b16 %v230, %v227
  %v306 = vpack.c.b16 %v231, %v228
  %v307 = vpack.c.b16 %v235, %v232
  %v308 = vpack.c.b16 %v236, %v233
  %v309 = vpack.c.b16 %v237, %v234
  %v310 = vpack.c.b16 %v241, %v238
  %v311 = vpack.c.b16 %v242, %v239
  %v312 = vpack.c.b16 %v243, %v240
  %v313 = vpack.c.b16 %v247, %v244
  %v314 = vpack.c.b16 %v248, %v245
  %v315 = vpack.c.b16 %v249, %v246
  %v316 = vpack.c.b16 %v253, %v250
  %v317 = vpack.c.b16 %v254, %v251
  %v318 = vpack.c.b16 %v255, %v252
  %v319 = vpack.c.b16 %v259, %v256
  %v320 = vpack.c.b16 %v260, %v257
  %v321 = vpack.c.b16 %v261, %v258
  %v322 = vpack.c.b16 %v265, %v262
  %v323 = vpack.c.b16 %v266, %v263
  %v324 = vpack.c.b16 %v267, %v264
  %v325 = vpack.c.b16 %v271, %v268
  %v326 = vpack.c.b16 %v272, %v269
  %v327 = vpack.c.b16 %v273, %v270
  %v328 = vpack.c.b16 %v277, %v274
  %v329 = vpack.c.b16 %v278, %v275
  %v330 = vpack.c.b16 %v279, %v276
  %v331 = vpack.c.b16 %v283, %v280
  %v332 = vpack.c.b16 %v284, %v281
  %v333 = vpack.c.b16 %v285, %v282
  %v430 = vunpack.c.l.b16 %v78
  %v431 = vunpack.c.l.b16 %v79
  %v432 = vunpack.c.l.b16 %v80
  %v433 = vunpack.c.l.b16 %v81
  %v434 = vunpack.c.l.b16 %v82
  %v435 = vunpack.c.l.b16 %v83
  %v436 = vunpack.c.l.b16 %v84
  %v437 = vunpack.c.l.b16 %v85
  %v438 = vunpack.c.l.b16 %v86
  %v439 = vunpack.c.l.b16 %v87
  %v440 = vunpack.c.l.b16 %v88
  %v441 = vunpack.c.l.b16 %v89
  %v442 = vunpack.c.l.b16 %v90
  %v443 = vunpack.c.l.b16 %v91
  %v444 = vunpack.c.l.b16 %v92
  %v445 = vunpack.c.l.b16 %v93
  %v446 = vunpack.c.l.b16 %v94
  %v447 = vunpack.c.l.b16 %v95
  %v448 = vunpack.c.l.b16 %v96
  %v449 = vunpack.c.l.b16 %v97
  %v450 = vunpack.c.l.b16 %v98
  %v451 = vunpack.c.l.b16 %v99
  %v452 = vunpack.c.l.b16 %v100
  %v453 = vunpack.c.l.b16 %v101
  %v454 = vunpack.c.l.b16 %v102
  %v455 = vunpack.c.l.b16 %v103
  %v456 = vunpack.c.l.b16 %v104
  %v457 = vunpack.c.l.b16 %v105
  %v458 = vunpack.c.l.b16 %v106
  %v459 = vunpack.c.l.b16 %v107
  %v460 = vunpack.c.l.b16 %v108
  %v461 = vunpack.c.l.b16 %v109
  %v462 = vunpack.c.l.b16 %v110
  %v463 = vunpack.c.l.b16 %v111
  %v464 = vunpack.c.l.b16 %v112
  %v465 = vunpack.c.l.b16 %v113
  %v466 = vunpack.c.l.b16 %v114
  %v467 = vunpack.c.l.b16 %v115
  %v468 = vunpack.c.l.b16 %v116
  %v469 = vunpack.c.l.b16 %v117
  %v470 = vunpack.c.l.b16 %v118
  %v471 = vunpack.c.l.b16 %v119
  %v472 = vunpack.c.l.b16 %v120
  %v473 = vunpack.c.l.b16 %v121
  %v474 = vunpack.c.l.b16 %v122
  %v475 = vunpack.c.l.b16 %v123
  %v476 = vunpack.c.l.b16 %v124
  %v477 = vunpack.c.l.b16 %v125
  %v478 = vpack.c.b16 %v431, %v430
  %v479 = vpack.c.b16 %v433, %v432
  %v480 = vpack.c.b16 %v435, %v434
  %v481 = vpack.c.b16 %v437, %v436
  %v482 = vpack.c.b16 %v439, %v438
  %v483 = vpack.c.b16 %v441, %v440
  %v484 = vpack.c.b16 %v443, %v442
  %v485 = vpack.c.b16 %v445, %v444
  %v486 = vpack.c.b16 %v447, %v446
  %v487 = vpack.c.b16 %v449, %v448
  %v488 = vpack.c.b16 %v451, %v450
  %v489 = vpack.c.b16 %v453, %v452
  %v490 = vpack.c.b16 %v455, %v454
  %v491 = vpack.c.b16 %v457, %v456
  %v492 = vpack.c.b16 %v459, %v458
  %v493 = vpack.c.b16 %v461, %v460
  %v494 = vpack.c.b16 %v463, %v462
  %v495 = vpack.c.b16 %v465, %v464
  %v496 = vpack.c.b16 %v467, %v466
  %v497 = vpack.c.b16 %v469, %v468
  %v498 = vpack.c.b16 %v471, %v470
  %v499 = vpack.c.b16 %v473, %v472
  %v500 = vpack.c.b16 %v475, %v474
  %v501 = vpack.c.b16 %v477, %v476
  %526 = vmatprep.subr.bf16.mxu0 0
  %527 = vmatpush1.bf16.msra.mxu0 %v485
  %528 = vmatprep.subr.bf16.mxu0 0
  %529 = vmatpush1.bf16.msra.mxu0 %v484
  %530 = vmatprep.subr.bf16.mxu0 0
  %531 = vmatpush1.bf16.msra.mxu0 %v483
  %532 = vmatprep.subr.bf16.mxu0 0
  %533 = vmatpush1.bf16.msra.mxu0 %v482
  %534 = vmatprep.subr.bf16.mxu0 0
  %535 = vmatpush1.bf16.msra.mxu0 %v481
  %536 = vmatprep.subr.bf16.mxu0 0
  %537 = vmatpush1.bf16.msra.mxu0 %v480
  %538 = vmatprep.subr.bf16.mxu0 0
  %539 = vmatpush1.bf16.msra.mxu0 %v479
  %540 = vmatprep.subr.bf16.mxu0 0
  %541 = vmatpush1.bf16.msra.mxu0 %v478
  %542 = vmatprep.subr.bf16.mxu0 0
  %543 = vmatpush2.bf16.msra.mxu0 %v493
  %544 = vmatprep.subr.bf16.mxu0 0
  %545 = vmatpush2.bf16.msra.mxu0 %v492
  %546 = vmatprep.subr.bf16.mxu0 0
  %547 = vmatpush2.bf16.msra.mxu0 %v491
  %548 = vmatprep.subr.bf16.mxu0 0
  %549 = vmatpush2.bf16.msra.mxu0 %v490
  %550 = vmatprep.subr.bf16.mxu0 0
  %551 = vmatpush2.bf16.msra.mxu0 %v489
  %552 = vmatprep.subr.bf16.mxu0 0
  %553 = vmatpush2.bf16.msra.mxu0 %v488
  %554 = vmatprep.subr.bf16.mxu0 0
  %555 = vmatpush2.bf16.msra.mxu0 %v487
  %556 = vmatprep.subr.bf16.mxu0 0
  %557 = vmatpush2.bf16.msra.mxu0 %v486
  %558 = vmatprep.mubr.bf16.mxu0 %v287
  %559 = vmatmul.mubr.bf16.gmra.mxu0 %v286
  %v560 = vpop.f32.mrf.mxu0
  %v561 = vadd.f32 0.0, %v560
  %v562 = vpop.f32.mrf.mxu0
  %v563 = vpop.f32.mrf.mxu0
  %v564 = vadd.f32 0.0, %v563
  %v565 = vpop.f32.mrf.mxu0
  %566 = vmatprep.mubr.bf16.mxu0 %v290
  %567 = vmatmul.mubr.bf16.gmra.mxu0 %v289
  %v568 = vpop.f32.mrf.mxu0
  %v569 = vadd.f32 0.0, %v568
  %v570 = vpop.f32.mrf.mxu0
  %v571 = vpop.f32.mrf.mxu0
  %v572 = vadd.f32 0.0, %v571
  %v573 = vpop.f32.mrf.mxu0
  %574 = vmatprep.mubr.bf16.mxu0 %v293
  %575 = vmatmul.mubr.bf16.gmra.mxu0 %v292
  %v576 = vpop.f32.mrf.mxu0
  %v577 = vadd.f32 0.0, %v576
  %v578 = vpop.f32.mrf.mxu0
  %v579 = vpop.f32.mrf.mxu0
  %v580 = vadd.f32 0.0, %v579
  %v581 = vpop.f32.mrf.mxu0
  %582 = vmatprep.mubr.bf16.mxu0 %v296
  %583 = vmatmul.mubr.bf16.gmra.mxu0 %v295
  %v584 = vpop.f32.mrf.mxu0
  %v585 = vadd.f32 0.0, %v584
  %v586 = vpop.f32.mrf.mxu0
  %v587 = vpop.f32.mrf.mxu0
  %v588 = vadd.f32 0.0, %v587
  %v589 = vpop.f32.mrf.mxu0
  %590 = vmatprep.mubr.bf16.mxu0 %v299
  %591 = vmatmul.mubr.bf16.gmra.mxu0 %v298
  %v592 = vpop.f32.mrf.mxu0
  %v593 = vadd.f32 0.0, %v592
  %v594 = vpop.f32.mrf.mxu0
  %v595 = vpop.f32.mrf.mxu0
  %v596 = vadd.f32 0.0, %v595
  %v597 = vpop.f32.mrf.mxu0
  %598 = vmatprep.mubr.bf16.mxu0 %v302
  %599 = vmatmul.mubr.bf16.gmra.mxu0 %v301
  %v600 = vpop.f32.mrf.mxu0
  %v601 = vadd.f32 0.0, %v600
  %v602 = vpop.f32.mrf.mxu0
  %v603 = vpop.f32.mrf.mxu0
  %v604 = vadd.f32 0.0, %v603
  %v605 = vpop.f32.mrf.mxu0
  %606 = vmatprep.mubr.bf16.mxu0 %v305
  %607 = vmatmul.mubr.bf16.gmra.mxu0 %v304
  %v608 = vpop.f32.mrf.mxu0
  %v609 = vadd.f32 0.0, %v608
  %v610 = vpop.f32.mrf.mxu0
  %v611 = vpop.f32.mrf.mxu0
  %v612 = vadd.f32 0.0, %v611
  %v613 = vpop.f32.mrf.mxu0
  %614 = vmatprep.mubr.bf16.mxu0 %v308
  %615 = vmatmul.mubr.bf16.gmra.mxu0 %v307
  %v616 = vpop.f32.mrf.mxu0
  %v617 = vadd.f32 0.0, %v616
  %v618 = vpop.f32.mrf.mxu0
  %v619 = vpop.f32.mrf.mxu0
  %v620 = vadd.f32 0.0, %v619
  %v621 = vpop.f32.mrf.mxu0
  %622 = vmatprep.mubr.bf16.mxu0 %v311
  %623 = vmatmul.mubr.bf16.gmra.mxu0 %v310
  %v624 = vpop.f32.mrf.mxu0
  %v625 = vadd.f32 0.0, %v624
  %v626 = vpop.f32.mrf.mxu0
  %v627 = vpop.f32.mrf.mxu0
  %v628 = vadd.f32 0.0, %v627
  %v629 = vpop.f32.mrf.mxu0
  %630 = vmatprep.mubr.bf16.mxu0 %v314
  %631 = vmatmul.mubr.bf16.gmra.mxu0 %v313
  %v632 = vpop.f32.mrf.mxu0
  %v633 = vadd.f32 0.0, %v632
  %v634 = vpop.f32.mrf.mxu0
  %v635 = vpop.f32.mrf.mxu0
  %v636 = vadd.f32 0.0, %v635
  %v637 = vpop.f32.mrf.mxu0
  %638 = vmatprep.mubr.bf16.mxu0 %v317
  %639 = vmatmul.mubr.bf16.gmra.mxu0 %v316
  %v640 = vpop.f32.mrf.mxu0
  %v641 = vadd.f32 0.0, %v640
  %v642 = vpop.f32.mrf.mxu0
  %v643 = vpop.f32.mrf.mxu0
  %v644 = vadd.f32 0.0, %v643
  %v645 = vpop.f32.mrf.mxu0
  %646 = vmatprep.mubr.bf16.mxu0 %v320
  %647 = vmatmul.mubr.bf16.gmra.mxu0 %v319
  %v648 = vpop.f32.mrf.mxu0
  %v649 = vadd.f32 0.0, %v648
  %v650 = vpop.f32.mrf.mxu0
  %v651 = vpop.f32.mrf.mxu0
  %v652 = vadd.f32 0.0, %v651
  %v653 = vpop.f32.mrf.mxu0
  %654 = vmatprep.mubr.bf16.mxu0 %v323
  %655 = vmatmul.mubr.bf16.gmra.mxu0 %v322
  %v656 = vpop.f32.mrf.mxu0
  %v657 = vadd.f32 0.0, %v656
  %v658 = vpop.f32.mrf.mxu0
  %v659 = vpop.f32.mrf.mxu0
  %v660 = vadd.f32 0.0, %v659
  %v661 = vpop.f32.mrf.mxu0
  %662 = vmatprep.mubr.bf16.mxu0 %v326
  %663 = vmatmul.mubr.bf16.gmra.mxu0 %v325
  %v664 = vpop.f32.mrf.mxu0
  %v665 = vadd.f32 0.0, %v664
  %v666 = vpop.f32.mrf.mxu0
  %v667 = vpop.f32.mrf.mxu0
  %v668 = vadd.f32 0.0, %v667
  %v669 = vpop.f32.mrf.mxu0
  %670 = vmatprep.mubr.bf16.mxu0 %v329
  %671 = vmatmul.mubr.bf16.gmra.mxu0 %v328
  %v672 = vpop.f32.mrf.mxu0
  %v673 = vadd.f32 0.0, %v672
  %v674 = vpop.f32.mrf.mxu0
  %v675 = vpop.f32.mrf.mxu0
  %v676 = vadd.f32 0.0, %v675
  %v677 = vpop.f32.mrf.mxu0
  %678 = vmatprep.mubr.bf16.mxu0 %v332
  %679 = vmatmul.mubr.bf16.gmra.mxu0 %v331
  %v680 = vpop.f32.mrf.mxu0
  %v681 = vadd.f32 0.0, %v680
  %v682 = vpop.f32.mrf.mxu0
  %v683 = vpop.f32.mrf.mxu0
  %v684 = vadd.f32 0.0, %v683
  %v685 = vpop.f32.mrf.mxu0
  %686 = vdwg.mxu0
  %687 = vmatprep.subr.bf16.mxu0 0
  %688 = vmatpush1.bf16.msra.mxu0 %v501
  %689 = vmatprep.subr.bf16.mxu0 0
  %690 = vmatpush1.bf16.msra.mxu0 %v500
  %691 = vmatprep.subr.bf16.mxu0 0
  %692 = vmatpush1.bf16.msra.mxu0 %v499
  %693 = vmatprep.subr.bf16.mxu0 0
  %694 = vmatpush1.bf16.msra.mxu0 %v498
  %695 = vmatprep.subr.bf16.mxu0 0
  %696 = vmatpush1.bf16.msra.mxu0 %v497
  %697 = vmatprep.subr.bf16.mxu0 0
  %698 = vmatpush1.bf16.msra.mxu0 %v496
  %699 = vmatprep.subr.bf16.mxu0 0
  %700 = vmatpush1.bf16.msra.mxu0 %v495
  %701 = vmatprep.subr.bf16.mxu0 0
  %702 = vmatpush1.bf16.msra.mxu0 %v494
  %703 = vmatprep.subr.bf16.mxu0 0
  %704 = vmatpush2.bf16.msra.mxu0 0
  %705 = vmatprep.subr.bf16.mxu0 0
  %706 = vmatpush2.bf16.msra.mxu0 0
  %707 = vmatprep.subr.bf16.mxu0 0
  %708 = vmatpush2.bf16.msra.mxu0 0
  %709 = vmatprep.subr.bf16.mxu0 0
  %710 = vmatpush2.bf16.msra.mxu0 0
  %711 = vmatprep.subr.bf16.mxu0 0
  %712 = vmatpush2.bf16.msra.mxu0 0
  %713 = vmatprep.subr.bf16.mxu0 0
  %714 = vmatpush2.bf16.msra.mxu0 0
  %715 = vmatprep.subr.bf16.mxu0 0
  %716 = vmatpush2.bf16.msra.mxu0 0
  %717 = vmatprep.subr.bf16.mxu0 0
  %718 = vmatpush2.bf16.msra.mxu0 0
  %719 = vmatprep.mubr.bf16.mxu0 0
  %720 = vmatmul.mubr.bf16.gmra.mxu0 %v288
  %v721 = vpop.f32.mrf.mxu0
  %v722 = vadd.f32 %v561, %v721
  %v723 = vpop.f32.mrf.mxu0
  %v724 = vpop.f32.mrf.mxu0
  %v725 = vadd.f32 %v564, %v724
  %v726 = vpop.f32.mrf.mxu0
  %727 = vmatprep.mubr.bf16.mxu0 0
  %728 = vmatmul.mubr.bf16.gmra.mxu0 %v291
  %v729 = vpop.f32.mrf.mxu0
  %v730 = vadd.f32 %v569, %v729
  %v731 = vpop.f32.mrf.mxu0
  %v732 = vpop.f32.mrf.mxu0
  %v733 = vadd.f32 %v572, %v732
  %v734 = vpop.f32.mrf.mxu0
  %735 = vmatprep.mubr.bf16.mxu0 0
  %736 = vmatmul.mubr.bf16.gmra.mxu0 %v294
  %v737 = vpop.f32.mrf.mxu0
  %v738 = vadd.f32 %v577, %v737
  %v739 = vpop.f32.mrf.mxu0
  %v740 = vpop.f32.mrf.mxu0
  %v741 = vadd.f32 %v580, %v740
  %v742 = vpop.f32.mrf.mxu0
  %743 = vmatprep.mubr.bf16.mxu0 0
  %744 = vmatmul.mubr.bf16.gmra.mxu0 %v297
  %v745 = vpop.f32.mrf.mxu0
  %v746 = vadd.f32 %v585, %v745
  %v747 = vpop.f32.mrf.mxu0
  %v748 = vpop.f32.mrf.mxu0
  %v749 = vadd.f32 %v588, %v748
  %v750 = vpop.f32.mrf.mxu0
  %751 = vmatprep.mubr.bf16.mxu0 0
  %752 = vmatmul.mubr.bf16.gmra.mxu0 %v300
  %v753 = vpop.f32.mrf.mxu0
  %v754 = vadd.f32 %v593, %v753
  %v755 = vpop.f32.mrf.mxu0
  %v756 = vpop.f32.mrf.mxu0
  %v757 = vadd.f32 %v596, %v756
  %v758 = vpop.f32.mrf.mxu0
  %759 = vmatprep.mubr.bf16.mxu0 0
  %760 = vmatmul.mubr.bf16.gmra.mxu0 %v303
  %v761 = vpop.f32.mrf.mxu0
  %v762 = vadd.f32 %v601, %v761
  %v763 = vpop.f32.mrf.mxu0
  %v764 = vpop.f32.mrf.mxu0
  %v765 = vadd.f32 %v604, %v764
  %v766 = vpop.f32.mrf.mxu0
  %767 = vmatprep.mubr.bf16.mxu0 0
  %768 = vmatmul.mubr.bf16.gmra.mxu0 %v306
  %v769 = vpop.f32.mrf.mxu0
  %v770 = vadd.f32 %v609, %v769
  %v771 = vpop.f32.mrf.mxu0
  %v772 = vpop.f32.mrf.mxu0
  %v773 = vadd.f32 %v612, %v772
  %v774 = vpop.f32.mrf.mxu0
  %775 = vmatprep.mubr.bf16.mxu0 0
  %776 = vmatmul.mubr.bf16.gmra.mxu0 %v309
  %v777 = vpop.f32.mrf.mxu0
  %v778 = vadd.f32 %v617, %v777
  %v779 = vpop.f32.mrf.mxu0
  %v780 = vpop.f32.mrf.mxu0
  %v781 = vadd.f32 %v620, %v780
  %v782 = vpop.f32.mrf.mxu0
  %783 = vmatprep.mubr.bf16.mxu0 0
  %784 = vmatmul.mubr.bf16.gmra.mxu0 %v312
  %v785 = vpop.f32.mrf.mxu0
  %v786 = vadd.f32 %v625, %v785
  %v787 = vpop.f32.mrf.mxu0
  %v788 = vpop.f32.mrf.mxu0
  %v789 = vadd.f32 %v628, %v788
  %v790 = vpop.f32.mrf.mxu0
  %791 = vmatprep.mubr.bf16.mxu0 0
  %792 = vmatmul.mubr.bf16.gmra.mxu0 %v315
  %v793 = vpop.f32.mrf.mxu0
  %v794 = vadd.f32 %v633, %v793
  %v795 = vpop.f32.mrf.mxu0
  %v796 = vpop.f32.mrf.mxu0
  %v797 = vadd.f32 %v636, %v796
  %v798 = vpop.f32.mrf.mxu0
  %799 = vmatprep.mubr.bf16.mxu0 0
  %800 = vmatmul.mubr.bf16.gmra.mxu0 %v318
  %v801 = vpop.f32.mrf.mxu0
  %v802 = vadd.f32 %v641, %v801
  %v803 = vpop.f32.mrf.mxu0
  %v804 = vpop.f32.mrf.mxu0
  %v805 = vadd.f32 %v644, %v804
  %v806 = vpop.f32.mrf.mxu0
  %807 = vmatprep.mubr.bf16.mxu0 0
  %808 = vmatmul.mubr.bf16.gmra.mxu0 %v321
  %v809 = vpop.f32.mrf.mxu0
  %v810 = vadd.f32 %v649, %v809
  %v811 = vpop.f32.mrf.mxu0
  %v812 = vpop.f32.mrf.mxu0
  %v813 = vadd.f32 %v652, %v812
  %v814 = vpop.f32.mrf.mxu0
  %815 = vmatprep.mubr.bf16.mxu0 0
  %816 = vmatmul.mubr.bf16.gmra.mxu0 %v324
  %v817 = vpop.f32.mrf.mxu0
  %v818 = vadd.f32 %v657, %v817
  %v819 = vpop.f32.mrf.mxu0
  %v820 = vpop.f32.mrf.mxu0
  %v821 = vadd.f32 %v660, %v820
  %v822 = vpop.f32.mrf.mxu0
  %823 = vmatprep.mubr.bf16.mxu0 0
  %824 = vmatmul.mubr.bf16.gmra.mxu0 %v327
  %v825 = vpop.f32.mrf.mxu0
  %v826 = vadd.f32 %v665, %v825
  %v827 = vpop.f32.mrf.mxu0
  %v828 = vpop.f32.mrf.mxu0
  %v829 = vadd.f32 %v668, %v828
  %v830 = vpop.f32.mrf.mxu0
  %831 = vmatprep.mubr.bf16.mxu0 0
  %832 = vmatmul.mubr.bf16.gmra.mxu0 %v330
  %v833 = vpop.f32.mrf.mxu0
  %v834 = vadd.f32 %v673, %v833
  %v835 = vpop.f32.mrf.mxu0
  %v836 = vpop.f32.mrf.mxu0
  %v837 = vadd.f32 %v676, %v836
  %v838 = vpop.f32.mrf.mxu0
  %839 = vmatprep.mubr.bf16.mxu0 0
  %840 = vmatmul.mubr.bf16.gmra.mxu0 %v333
  %v841 = vpop.f32.mrf.mxu0
  %v842 = vadd.f32 %v681, %v841
  %v843 = vpop.f32.mrf.mxu0
  %v844 = vpop.f32.mrf.mxu0
  %v845 = vadd.f32 %v684, %v844
  %v846 = vpop.f32.mrf.mxu0
  %847 = vdwg.mxu0
  %848 = vst [vmem:[%s2] sm:$0xff] %v722
  %849 = vst [vmem:[%s2 + $0x8] sm:$0xff] %v725
  %850 = vst [vmem:[%s2 + $0x10] sm:$0xff] %v730
  %851 = vst [vmem:[%s2 + $0x18] sm:$0xff] %v733
  %852 = vst [vmem:[%s2 + $0x20] sm:$0xff] %v738
  %853 = vst [vmem:[%s2 + $0x28] sm:$0xff] %v741
  %854 = vst [vmem:[%s2 + $0x30] sm:$0xff] %v746
  %855 = vst [vmem:[%s2 + $0x38] sm:$0xff] %v749
  %856 = vst [vmem:[%s2 + $0x40] sm:$0xff] %v754
  %857 = vst [vmem:[%s2 + $0x48] sm:$0xff] %v757
  %858 = vst [vmem:[%s2 + $0x50] sm:$0xff] %v762
  %859 = vst [vmem:[%s2 + $0x58] sm:$0xff] %v765
  %860 = vst [vmem:[%s2 + $0x60] sm:$0xff] %v770
  %861 = vst [vmem:[%s2 + $0x68] sm:$0xff] %v773
  %862 = vst [vmem:[%s2 + $0x70] sm:$0xff] %v778
  %863 = vst [vmem:[%s2 + $0x78] sm:$0xff] %v781
  %864 = vst [vmem:[%s2 + $0x80] sm:$0xff] %v786
  %865 = vst [vmem:[%s2 + $0x88] sm:$0xff] %v789
  %866 = vst [vmem:[%s2 + $0x90] sm:$0xff] %v794
  %867 = vst [vmem:[%s2 + $0x98] sm:$0xff] %v797
  %868 = vst [vmem:[%s2 + $0xa0] sm:$0xff] %v802
  %869 = vst [vmem:[%s2 + $0xa8] sm:$0xff] %v805
  %870 = vst [vmem:[%s2 + $0xb0] sm:$0xff] %v810
  %871 = vst [vmem:[%s2 + $0xb8] sm:$0xff] %v813
  %872 = vst [vmem:[%s2 + $0xc0] sm:$0xff] %v818
  %873 = vst [vmem:[%s2 + $0xc8] sm:$0xff] %v821
  %874 = vst [vmem:[%s2 + $0xd0] sm:$0xff] %v826
  %875 = vst [vmem:[%s2 + $0xd8] sm:$0xff] %v829
  %876 = vst [vmem:[%s2 + $0xe0] sm:$0xff] %v834
  %877 = vst [vmem:[%s2 + $0xe8] sm:$0xff] %v837
  %878 = vst [vmem:[%s2 + $0xf0] sm:$0xff] %v842
  %879 = vst [vmem:[%s2 + $0xf8] sm:$0xff] %v845
  %v880 = vadd.f32 %v722, %v725
  %v881 = vadd.f32 %v880, %v730
  %v882 = vadd.f32 %v881, %v733
  %v883 = vadd.f32 %v882, %v738
  %v884 = vadd.f32 %v883, %v741
  %v885 = vadd.f32 %v884, %v746
  %v886 = vadd.f32 %v885, %v749
  %v887 = vadd.f32 %v886, %v754
  %v888 = vadd.f32 %v887, %v757
  %v889 = vadd.f32 %v888, %v762
  %v890 = vadd.f32 %v889, %v765
  %v891 = vadd.f32 %v890, %v770
  %v892 = vadd.f32 %v891, %v773
  %v893 = vadd.f32 %v892, %v778
  %v894 = vadd.f32 %v893, %v781
  %v895 = vadd.f32 %v894, %v786
  %v896 = vadd.f32 %v895, %v789
  %v897 = vadd.f32 %v896, %v794
  %v898 = vadd.f32 %v897, %v797
  %v899 = vadd.f32 %v898, %v802
  %v900 = vadd.f32 %v899, %v805
  %v901 = vadd.f32 %v900, %v810
  %v902 = vadd.f32 %v901, %v813
  %v903 = vadd.f32 %v902, %v818
  %v904 = vadd.f32 %v903, %v821
  %v905 = vadd.f32 %v904, %v826
  %v906 = vadd.f32 %v905, %v829
  %v907 = vadd.f32 %v906, %v834
  %v908 = vadd.f32 %v907, %v837
  %v909 = vadd.f32 %v908, %v842
  %v910 = vadd.f32 %v909, %v845
  %v911 = vrot.slane %v910, 4
  %v912 = vadd.f32 %v910, %v911
  %v913 = vrot.slane %v912, 2
  %v914 = vadd.f32 %v912, %v913
  %v915 = vrot.slane %v914, 1
  %v916 = vadd.f32 %v914, %v915
  %v917 = vmul.f32 %v722, %v722
  %v918 = vmul.f32 %v725, %v725
  %v919 = vmul.f32 %v730, %v730
  %v920 = vmul.f32 %v733, %v733
  %v921 = vmul.f32 %v738, %v738
  %v922 = vmul.f32 %v741, %v741
  %v923 = vmul.f32 %v746, %v746
  %v924 = vmul.f32 %v749, %v749
  %v925 = vmul.f32 %v754, %v754
  %v926 = vmul.f32 %v757, %v757
  %v927 = vmul.f32 %v762, %v762
  %v928 = vmul.f32 %v765, %v765
  %v929 = vmul.f32 %v770, %v770
  %v930 = vmul.f32 %v773, %v773
  %v931 = vmul.f32 %v778, %v778
  %v932 = vmul.f32 %v781, %v781
  %v933 = vmul.f32 %v786, %v786
  %v934 = vmul.f32 %v789, %v789
  %v935 = vmul.f32 %v794, %v794
  %v936 = vmul.f32 %v797, %v797
  %v937 = vmul.f32 %v802, %v802
  %v938 = vmul.f32 %v805, %v805
  %v939 = vmul.f32 %v810, %v810
  %v940 = vmul.f32 %v813, %v813
  %v941 = vmul.f32 %v818, %v818
  %v942 = vmul.f32 %v821, %v821
  %v943 = vmul.f32 %v826, %v826
  %v944 = vmul.f32 %v829, %v829
  %v945 = vmul.f32 %v834, %v834
  %v946 = vmul.f32 %v837, %v837
  %v947 = vmul.f32 %v842, %v842
  %v948 = vmul.f32 %v845, %v845
  %v949 = vadd.f32 %v917, %v918
  %v950 = vadd.f32 %v949, %v919
  %v951 = vadd.f32 %v950, %v920
  %v952 = vadd.f32 %v951, %v921
  %v953 = vadd.f32 %v952, %v922
  %v954 = vadd.f32 %v953, %v923
  %v955 = vadd.f32 %v954, %v924
  %v956 = vadd.f32 %v955, %v925
  %v957 = vadd.f32 %v956, %v926
  %v958 = vadd.f32 %v957, %v927
  %v959 = vadd.f32 %v958, %v928
  %v960 = vadd.f32 %v959, %v929
  %v961 = vadd.f32 %v960, %v930
  %v962 = vadd.f32 %v961, %v931
  %v963 = vadd.f32 %v962, %v932
  %v964 = vadd.f32 %v963, %v933
  %v965 = vadd.f32 %v964, %v934
  %v966 = vadd.f32 %v965, %v935
  %v967 = vadd.f32 %v966, %v936
  %v968 = vadd.f32 %v967, %v937
  %v969 = vadd.f32 %v968, %v938
  %v970 = vadd.f32 %v969, %v939
  %v971 = vadd.f32 %v970, %v940
  %v972 = vadd.f32 %v971, %v941
  %v973 = vadd.f32 %v972, %v942
  %v974 = vadd.f32 %v973, %v943
  %v975 = vadd.f32 %v974, %v944
  %v976 = vadd.f32 %v975, %v945
  %v977 = vadd.f32 %v976, %v946
  %v978 = vadd.f32 %v977, %v947
  %v979 = vadd.f32 %v978, %v948
  %v980 = vrot.slane %v979, 4
  %v981 = vadd.f32 %v979, %v980
  %v982 = vrot.slane %v981, 2
  %v983 = vadd.f32 %v981, %v982
  %v984 = vrot.slane %v983, 1
  %v985 = vadd.f32 %v983, %v984
  %vm986 = vcmask 1040384
  %v987 = vsel %vm986, %v916, %v985
  %988 = vst [vmem:[%s3] sm:$0x3] %v987
  // Predicated region
  $region10: #{_lambda_.22} parent=0 // pred_check
    _
  $region11: #{_lambda_.22} parent=0 // pred_check_branch
    %990 = sbr.rel (0) target = $region13
  $region12: #{_lambda_.22} parent=0 // pred_region
    _
  $region13: #{_lambda_.22} parent=0 // pred_fallthru
    _
  // Predicated region
  $region14: #{_lambda_.22} parent=0 // pred_check
    _
  $region15: #{_lambda_.22} parent=0 // pred_check_branch
    %992 = sbr.rel (0) target = $region17
  $region16: #{_lambda_.22} parent=0 // pred_region
    _
  $region17: #{_lambda_.22} parent=0 // pred_fallthru
    _
  // Predicated region
  $region18: #{_lambda_.22} parent=0 // pred_check
    _
  $region19: #{_lambda_.22} parent=0 // pred_check_branch
    %994 = sbr.rel (0) target = $region21
  $region20: #{_lambda_.22} parent=0 // pred_region
    _
  $region21: #{_lambda_.22} parent=0 // pred_fallthru
    _
  // Predicated region
  $region22: #{_lambda_.22} parent=0 // pred_check
    _
  $region23: #{_lambda_.22} parent=0 // pred_check_branch
    %996 = sbr.rel (0) target = $region25
  $region24: #{_lambda_.22} parent=0 // pred_region
    _
  $region25: #{_lambda_.22} parent=0 // pred_fallthru
    _

// kernel: _lambda_.20
$region0: #{_lambda_.20}
  #allocation0 [shape = 'u32[]', space=smem, size = 0x4, offset = 0x4, fixed_abs, tag = 'smem constant byte address 0x4 - core index']
  #allocation1 [shape = 'u32[144,128]{1,0:T(1,128)}', space=vmem, size = 0x12000, scoped, tag = 'internal scratch']
  %s0 = inlined_call_operand.vmem [shape: bf16[512,1152], index: 0, kind: input, shape index: {}]
  %s1 = inlined_call_operand.vmem [shape: bf16[1152,128], index: 1, kind: input, shape index: {}]
  %s2 = inlined_call_operand.vmem [shape: f32[512,128], index: 2, kind: output, shape index: {0}]
  %s3 = inlined_call_operand.vmem [shape: f32[2,2,128], index: 3, kind: output, shape index: {1}]
  %4 = xla_tuple %s2, %s3
  %s5 = sld [smem:[#allocation0]]
  $region49: #{_lambda_.20} parent=0
    _
  %s7 = ssub.s32 1, %s5
  %s8 = scalar_select 0, %s7, %s5
  loop: start=0, step=1, limit=4
  $region2: #{_lambda_.20} parent=0 // loop_pre_header
    _
  $region3: #{_lambda_.20} parent=0 // loop_header
    %s10 = sphi 0, %s14
    %p11 = scmp.ge.s32.totalorder %s10, 4
    %s20 = sphi 0, %s22
    %s23 = sphi 0, %s20
    %s24 = sphi 0, %s23
    %s40 = sphi 0, %s24
    %s44 = sphi 0, %s44
    %s46 = sphi 0, %s44
    %s47 = sphi 0, %s46
    %s61 = sphi 0, %s47
    %s67 = sphi 0, %s69
    %s70 = sphi 0, %s67
    %s71 = sphi 0, %s70
    %s87 = sphi 0, %s71
    %s93 = sphi 0, %s95
    %s96 = sphi 0, %s93
    %s97 = sphi 0, %s96
    %s113 = sphi 0, %s97
  $region4: #{_lambda_.20} parent=0 // loop_header_branch
    %13 = sbr.rel (%p11) target = $region8
  $region5: #{_lambda_.20} parent=0 // loop_body
    %s15 = ssub.s32 %s10, 1
    %s16 = ssub.s32 %s10, 2
    %s17 = sadd.s32 %s10, 1
    %s18 = ssub.s32 %s10, %s17
    %p19 = scmp.eq.s32.totalorder %s18, 0
    %s21 = sadd.s32 %s20, 1
    %s22 = scalar_select %p19, %s20, %s21
    %p25 = pneg %p19
    %p26 = scmp.eq.s32.totalorder %s10, 1
    %p27 = por %p25, %p26
    %p28 = scmp.ne.s32.totalorder %s20, %s23
    %p29 = scmp.eq.s32.totalorder %s10, 0
    %p30 = por %p28, %p29
    %p31 = scmp.ne.s32.totalorder %s20, %s23
    %p32 = scmp.eq.s32.totalorder %s15, 1
    %p33 = por %p31, %p32
    %p34 = scmp.ne.s32.totalorder %s23, %s24
    %p35 = scmp.eq.s32.totalorder %s15, 0
    %p36 = por %p34, %p35
    %p37 = scmp.ne.s32.totalorder %s23, %s24
    %p38 = scmp.eq.s32.totalorder %s16, 1
    %p39 = por %p37, %p38
    %p41 = scmp.ne.s32.totalorder %s24, %s40
    %p42 = scmp.eq.s32.totalorder %s16, 0
    %p43 = por %p41, %p42
    %s45 = sadd.s32 %s44, 1
    %p48 = scmp.eq.s32.totalorder %s10, 1
    %p49 = scmp.ne.s32.totalorder %s44, %s46
    %p50 = scmp.eq.s32.totalorder %s10, 0
    %p51 = por %p49, %p50
    %p52 = scmp.ne.s32.totalorder %s44, %s46
    %p53 = scmp.eq.s32.totalorder %s15, 1
    %p54 = por %p52, %p53
    %p55 = scmp.ne.s32.totalorder %s46, %s47
    %p56 = scmp.eq.s32.totalorder %s15, 0
    %p57 = por %p55, %p56
    %p58 = scmp.ne.s32.totalorder %s46, %s47
    %p59 = scmp.eq.s32.totalorder %s16, 1
    %p60 = por %p58, %p59
    %p62 = scmp.ne.s32.totalorder %s47, %s61
    %p63 = scmp.eq.s32.totalorder %s16, 0
    %p64 = por %p62, %p63
    %s65 = ssub.s32 %s10, %s17
    %p66 = scmp.eq.s32.totalorder %s65, 0
    %s68 = sadd.s32 %s67, 1
    %s69 = scalar_select %p66, %s67, %s68
    %p72 = pneg %p66
    %p73 = scmp.eq.s32.totalorder %s10, 1
    %p74 = por %p72, %p73
    %p75 = scmp.ne.s32.totalorder %s67, %s70
    %p76 = scmp.eq.s32.totalorder %s10, 0
    %p77 = por %p75, %p76
    %p78 = scmp.ne.s32.totalorder %s67, %s70
    %p79 = scmp.eq.s32.totalorder %s15, 1
    %p80 = por %p78, %p79
    %p81 = scmp.ne.s32.totalorder %s70, %s71
    %p82 = scmp.eq.s32.totalorder %s15, 0
    %p83 = por %p81, %p82
    %p84 = scmp.ne.s32.totalorder %s70, %s71
    %p85 = scmp.eq.s32.totalorder %s16, 1
    %p86 = por %p84, %p85
    %p88 = scmp.ne.s32.totalorder %s71, %s87
    %p89 = scmp.eq.s32.totalorder %s16, 0
    %p90 = por %p88, %p89
    %s91 = ssub.s32 %s10, %s17
    %p92 = scmp.eq.s32.totalorder %s91, 0
    %s94 = sadd.s32 %s93, 1
    %s95 = scalar_select %p92, %s93, %s94
    %p98 = pneg %p92
    %p99 = scmp.eq.s32.totalorder %s10, 1
    %p100 = por %p98, %p99
    %p101 = scmp.ne.s32.totalorder %s93, %s96
    %p102 = scmp.eq.s32.totalorder %s10, 0
    %p103 = por %p101, %p102
    %p104 = scmp.ne.s32.totalorder %s93, %s96
    %p105 = scmp.eq.s32.totalorder %s15, 1
    %p106 = por %p104, %p105
    %p107 = scmp.ne.s32.totalorder %s96, %s97
    %p108 = scmp.eq.s32.totalorder %s15, 0
    %p109 = por %p107, %p108
    %p110 = scmp.ne.s32.totalorder %s96, %s97
    %p111 = scmp.eq.s32.totalorder %s16, 1
    %p112 = por %p110, %p111
    %p114 = scmp.ne.s32.totalorder %s97, %s113
    %p115 = scmp.eq.s32.totalorder %s16, 0
    %p116 = por %p114, %p115
    %p117 = scmp.le.s32.totalorder 1, %s10
    %p118 = scmp.lt.s32.totalorder %s10, 3
    %p119 = pnand %p117, %p118
    %p120 = pneg %p119
    // Predicated region
    $region9: #{_lambda_.20} parent=5 // pred_check
      _
    $region10: #{_lambda_.20} parent=5 // pred_check_branch
      %122 = sbr.rel (%p119) target = $region12
    $region11: #{_lambda_.20} parent=5 // pred_region
      %s123 = ssub.s32 %s10, 1
      // Predicated region
      $region13: #{_lambda_.20} parent=11 // pred_check
        %p124 = pneg %p57
      $region14: #{_lambda_.20} parent=11 // pred_check_branch
        %126 = sbr.rel (%p124) target = $region16
      $region15: #{_lambda_.20} parent=11 // pred_region
        _
      $region16: #{_lambda_.20} parent=11 // pred_fallthru
        _
    $region12: #{_lambda_.20} parent=5 // pred_fallthru
      _
    %p127 = scmp.lt.s32.totalorder %s10, 2
    // Predicated region
    $region17: #{_lambda_.20} parent=5 // pred_check
      %p128 = pneg %p127
    $region18: #{_lambda_.20} parent=5 // pred_check_branch
      %130 = sbr.rel (%p128) target = $region20
    $region19: #{_lambda_.20} parent=5 // pred_region
      // Predicated region
      $region21: #{_lambda_.20} parent=19 // pred_check
        %p131 = pneg %p30
      $region22: #{_lambda_.20} parent=19 // pred_check_branch
        %133 = sbr.rel (%p131) target = $region24
      $region23: #{_lambda_.20} parent=19 // pred_region
        %s134 = smul.u32 32, %s10
        %p135 = scmp.lt.s32.totalorder %s134, 63
        %s136 = scalar_select %p135, %s134, 63
        %s137 = smul.addr %s136, 9
        %s138 = smul.addr %s137, 4
        %s139 = scalar_lea.vmem %s0, %s138
        %s140 = smul.u32 32, %s10
      $region24: #{_lambda_.20} parent=19 // pred_fallthru
        _
    $region20: #{_lambda_.20} parent=5 // pred_fallthru
      _
    %p141 = scmp.le.s32.totalorder 1, %s10
    %p142 = scmp.lt.s32.totalorder %s10, 3
    %p143 = pnand %p141, %p142
    %p144 = pneg %p143
    // Predicated region
    $region25: #{_lambda_.20} parent=5 // pred_check
      _
    $region26: #{_lambda_.20} parent=5 // pred_check_branch
      %146 = sbr.rel (%p143) target = $region28
    $region27: #{_lambda_.20} parent=5 // pred_region
      %s147 = ssub.s32 %s10, 1
      %s148 = smul.u32 32, %s15
      %p149 = scmp.lt.s32.totalorder %s148, 63
      %s150 = scalar_select %p149, %s148, 63
      %s151 = smul.addr %s150, 9
      %s152 = smul.addr %s151, 4
      %s153 = scalar_lea.vmem %s0, %s152
      %p154 = pneg %p36
      %p155 = pneg %p33
      %p156 = pneg %p57
      %p157 = pneg %p54
      %p158 = pneg %p83
      %p159 = pneg %p80
      %s160 = smul.u32 32, %s15
      %p161 = scmp.lt.s32.totalorder %s160, 63
      %s162 = scalar_select %p161, %s160, 63
      %s163 = smul.addr %s162, 8
      %s164 = scalar_lea.vmem %s2, %s163
      %p165 = pneg %p109
      %p166 = pneg %p106
      %p167 = scmp.lt.s32.totalorder %s15, 1
      %s168 = scalar_select %p167, %s15, 1
      %s169 = smul.addr %s168, 2
      %s170 = scalar_lea.vmem %s3, %s169
      %s171 = smul.u32 32, %s15
      %p172 = scmp.lt.s32.totalorder %s171, 63
      %s173 = scalar_select %p172, %s171, 63
      %s174 = smul.addr %s173, 9
      %s175 = smul.addr %s174, 4
      %s176 = scalar_lea.vmem %s0, %s175
      %s177 = smul.u32 32, %s15
      %s178 = smul.u32 32, %s15
      %p179 = scmp.lt.s32.totalorder %s178, 63
      %s180 = scalar_select %p179, %s178, 63
      %s181 = smul.addr %s180, 8
      %s182 = scalar_lea.vmem %s2, %s181
      %s183 = smul.u32 32, %s15
      %p184 = scmp.lt.s32.totalorder %s15, 1
      %s185 = scalar_select %p184, %s15, 1
      %s186 = smul.addr %s185, 2
      %s187 = scalar_lea.vmem %s3, %s186
      %v189 = vld [vmem:[%s176] sm:$0xff]
      %v190 = vld [vmem:[%s176 + $0x8] sm:$0xff]
      %v191 = vld [vmem:[%s176 + $0x10] sm:$0xff]
      %v192 = vld [vmem:[%s176 + $0x18] sm:$0xff]
      %v193 = vld [vmem:[%s176 + $0x20] sm:$0xf]
      %v194 = vld [vmem:[%s176 + $0x24] sm:$0xff]
      %v195 = vld [vmem:[%s176 + $0x2c] sm:$0xff]
      %v196 = vld [vmem:[%s176 + $0x34] sm:$0xff]
      %v197 = vld [vmem:[%s176 + $0x3c] sm:$0xff]
      %v198 = vld [vmem:[%s176 + $0x44] sm:$0xf]
      %v199 = vld [vmem:[%s176 + $0x48] sm:$0xff]
      %v200 = vld [vmem:[%s176 + $0x50] sm:$0xff]
      %v201 = vld [vmem:[%s176 + $0x58] sm:$0xff]
      %v202 = vld [vmem:[%s176 + $0x60] sm:$0xff]
      %v203 = vld [vmem:[%s176 + $0x68] sm:$0xf]
      %v204 = vld [vmem:[%s176 + $0x6c] sm:$0xff]
      %v205 = vld [vmem:[%s176 + $0x74] sm:$0xff]
      %v206 = vld [vmem:[%s176 + $0x7c] sm:$0xff]
      %v207 = vld [vmem:[%s176 + $0x84] sm:$0xff]
      %v208 = vld [vmem:[%s176 + $0x8c] sm:$0xf]
      %v209 = vld [vmem:[%s176 + $0x90] sm:$0xff]
      %v210 = vld [vmem:[%s176 + $0x98] sm:$0xff]
      %v211 = vld [vmem:[%s176 + $0xa0] sm:$0xff]
      %v212 = vld [vmem:[%s176 + $0xa8] sm:$0xff]
      %v213 = vld [vmem:[%s176 + $0xb0] sm:$0xf]
      %v214 = vld [vmem:[%s176 + $0xb4] sm:$0xff]
      %v215 = vld [vmem:[%s176 + $0xbc] sm:$0xff]
      %v216 = vld [vmem:[%s176 + $0xc4] sm:$0xff]
      %v217 = vld [vmem:[%s176 + $0xcc] sm:$0xff]
      %v218 = vld [vmem:[%s176 + $0xd4] sm:$0xf]
      %v219 = vld [vmem:[%s176 + $0xd8] sm:$0xff]
      %v220 = vld [vmem:[%s176 + $0xe0] sm:$0xff]
      %v221 = vld [vmem:[%s176 + $0xe8] sm:$0xff]
      %v222 = vld [vmem:[%s176 + $0xf0] sm:$0xff]
      %v223 = vld [vmem:[%s176 + $0xf8] sm:$0xf]
      %v224 = vld [vmem:[%s176 + $0xfc] sm:$0xff]
      %v225 = vld [vmem:[%s176 + $0x104] sm:$0xff]
      %v226 = vld [vmem:[%s176 + $0x10c] sm:$0xff]
      %v227 = vld [vmem:[%s176 + $0x114] sm:$0xff]
      %v228 = vld [vmem:[%s176 + $0x11c] sm:$0xf]
      %v229 = vld [vmem:[%s176 + $0x120] sm:$0xff]
      %v230 = vld [vmem:[%s176 + $0x128] sm:$0xff]
      %v231 = vld [vmem:[%s176 + $0x130] sm:$0xff]
      %v232 = vld [vmem:[%s176 + $0x138] sm:$0xff]
      %v233 = vld [vmem:[%s176 + $0x140] sm:$0xf]
      %v234 = vld [vmem:[%s176 + $0x144] sm:$0xff]
      %v235 = vld [vmem:[%s176 + $0x14c] sm:$0xff]
      %v236 = vld [vmem:[%s176 + $0x154] sm:$0xff]
      %v237 = vld [vmem:[%s176 + $0x15c] sm:$0xff]
      %v238 = vld [vmem:[%s176 + $0x164] sm:$0xf]
      %v239 = vld [vmem:[%s176 + $0x168] sm:$0xff]
      %v240 = vld [vmem:[%s176 + $0x170] sm:$0xff]
      %v241 = vld [vmem:[%s176 + $0x178] sm:$0xff]
      %v242 = vld [vmem:[%s176 + $0x180] sm:$0xff]
      %v243 = vld [vmem:[%s176 + $0x188] sm:$0xf]
      %v244 = vld [vmem:[%s176 + $0x18c] sm:$0xff]
      %v245 = vld [vmem:[%s176 + $0x194] sm:$0xff]
      %v246 = vld [vmem:[%s176 + $0x19c] sm:$0xff]
      %v247 = vld [vmem:[%s176 + $0x1a4] sm:$0xff]
      %v248 = vld [vmem:[%s176 + $0x1ac] sm:$0xf]
      %v249 = vld [vmem:[%s176 + $0x1b0] sm:$0xff]
      %v250 = vld [vmem:[%s176 + $0x1b8] sm:$0xff]
      %v251 = vld [vmem:[%s176 + $0x1c0] sm:$0xff]
      %v252 = vld [vmem:[%s176 + $0x1c8] sm:$0xff]
      %v253 = vld [vmem:[%s176 + $0x1d0] sm:$0xf]
      %v254 = vld [vmem:[%s176 + $0x1d4] sm:$0xff]
      %v255 = vld [vmem:[%s176 + $0x1dc] sm:$0xff]
      %v256 = vld [vmem:[%s176 + $0x1e4] sm:$0xff]
      %v257 = vld [vmem:[%s176 + $0x1ec] sm:$0xff]
      %v258 = vld [vmem:[%s176 + $0x1f4] sm:$0xf]
      %v259 = vld [vmem:[%s176 + $0x1f8] sm:$0xff]
      %v260 = vld [vmem:[%s176 + $0x200] sm:$0xff]
      %v261 = vld [vmem:[%s176 + $0x208] sm:$0xff]
      %v262 = vld [vmem:[%s176 + $0x210] sm:$0xff]
      %v263 = vld [vmem:[%s176 + $0x218] sm:$0xf]
      %v264 = vld [vmem:[%s176 + $0x21c] sm:$0xff]
      %v265 = vld [vmem:[%s176 + $0x224] sm:$0xff]
      %v266 = vld [vmem:[%s176 + $0x22c] sm:$0xff]
      %v267 = vld [vmem:[%s176 + $0x234] sm:$0xff]
      %v268 = vld [vmem:[%s176 + $0x23c] sm:$0xf]
      %v269 = vld [vmem:[%s176 + $0x240] sm:$0xff]
      %v270 = vld [vmem:[%s176 + $0x248] sm:$0xff]
      %v271 = vld [vmem:[%s176 + $0x250] sm:$0xff]
      %v272 = vld [vmem:[%s176 + $0x258] sm:$0xff]
      %v273 = vld [vmem:[%s176 + $0x260] sm:$0xf]
      %v274 = vld [vmem:[%s176 + $0x264] sm:$0xff]
      %v275 = vld [vmem:[%s176 + $0x26c] sm:$0xff]
      %v276 = vld [vmem:[%s176 + $0x274] sm:$0xff]
      %v277 = vld [vmem:[%s176 + $0x27c] sm:$0xff]
      %v278 = vld [vmem:[%s176 + $0x284] sm:$0xf]
      %v279 = vld [vmem:[%s176 + $0x288] sm:$0xff]
      %v280 = vld [vmem:[%s176 + $0x290] sm:$0xff]
      %v281 = vld [vmem:[%s176 + $0x298] sm:$0xff]
      %v282 = vld [vmem:[%s176 + $0x2a0] sm:$0xff]
      %v283 = vld [vmem:[%s176 + $0x2a8] sm:$0xf]
      %v284 = vld [vmem:[%s176 + $0x2ac] sm:$0xff]
      %v285 = vld [vmem:[%s176 + $0x2b4] sm:$0xff]
      %v286 = vld [vmem:[%s176 + $0x2bc] sm:$0xff]
      %v287 = vld [vmem:[%s176 + $0x2c4] sm:$0xff]
      %v288 = vld [vmem:[%s176 + $0x2cc] sm:$0xf]
      %v289 = vld [vmem:[%s176 + $0x2d0] sm:$0xff]
      %v290 = vld [vmem:[%s176 + $0x2d8] sm:$0xff]
      %v291 = vld [vmem:[%s176 + $0x2e0] sm:$0xff]
      %v292 = vld [vmem:[%s176 + $0x2e8] sm:$0xff]
      %v293 = vld [vmem:[%s176 + $0x2f0] sm:$0xf]
      %v294 = vld [vmem:[%s176 + $0x2f4] sm:$0xff]
      %v295 = vld [vmem:[%s176 + $0x2fc] sm:$0xff]
      %v296 = vld [vmem:[%s176 + $0x304] sm:$0xff]
      %v297 = vld [vmem:[%s176 + $0x30c] sm:$0xff]
      %v298 = vld [vmem:[%s176 + $0x314] sm:$0xf]
      %v299 = vld [vmem:[%s176 + $0x318] sm:$0xff]
      %v300 = vld [vmem:[%s176 + $0x320] sm:$0xff]
      %v301 = vld [vmem:[%s176 + $0x328] sm:$0xff]
      %v302 = vld [vmem:[%s176 + $0x330] sm:$0xff]
      %v303 = vld [vmem:[%s176 + $0x338] sm:$0xf]
      %v304 = vld [vmem:[%s176 + $0x33c] sm:$0xff]
      %v305 = vld [vmem:[%s176 + $0x344] sm:$0xff]
      %v306 = vld [vmem:[%s176 + $0x34c] sm:$0xff]
      %v307 = vld [vmem:[%s176 + $0x354] sm:$0xff]
      %v308 = vld [vmem:[%s176 + $0x35c] sm:$0xf]
      %v309 = vld [vmem:[%s176 + $0x360] sm:$0xff]
      %v310 = vld [vmem:[%s176 + $0x368] sm:$0xff]
      %v311 = vld [vmem:[%s176 + $0x370] sm:$0xff]
      %v312 = vld [vmem:[%s176 + $0x378] sm:$0xff]
      %v313 = vld [vmem:[%s176 + $0x380] sm:$0xf]
      %v314 = vld [vmem:[%s176 + $0x384] sm:$0xff]
      %v315 = vld [vmem:[%s176 + $0x38c] sm:$0xff]
      %v316 = vld [vmem:[%s176 + $0x394] sm:$0xff]
      %v317 = vld [vmem:[%s176 + $0x39c] sm:$0xff]
      %v318 = vld [vmem:[%s176 + $0x3a4] sm:$0xf]
      %v319 = vld [vmem:[%s176 + $0x3a8] sm:$0xff]
      %v320 = vld [vmem:[%s176 + $0x3b0] sm:$0xff]
      %v321 = vld [vmem:[%s176 + $0x3b8] sm:$0xff]
      %v322 = vld [vmem:[%s176 + $0x3c0] sm:$0xff]
      %v323 = vld [vmem:[%s176 + $0x3c8] sm:$0xf]
      %v324 = vld [vmem:[%s176 + $0x3cc] sm:$0xff]
      %v325 = vld [vmem:[%s176 + $0x3d4] sm:$0xff]
      %v326 = vld [vmem:[%s176 + $0x3dc] sm:$0xff]
      %v327 = vld [vmem:[%s176 + $0x3e4] sm:$0xff]
      %v328 = vld [vmem:[%s176 + $0x3ec] sm:$0xf]
      %v329 = vld [vmem:[%s176 + $0x3f0] sm:$0xff]
      %v330 = vld [vmem:[%s176 + $0x3f8] sm:$0xff]
      %v331 = vld [vmem:[%s176 + $0x400] sm:$0xff]
      %v332 = vld [vmem:[%s176 + $0x408] sm:$0xff]
      %v333 = vld [vmem:[%s176 + $0x410] sm:$0xf]
      %v334 = vld [vmem:[%s176 + $0x414] sm:$0xff]
      %v335 = vld [vmem:[%s176 + $0x41c] sm:$0xff]
      %v336 = vld [vmem:[%s176 + $0x424] sm:$0xff]
      %v337 = vld [vmem:[%s176 + $0x42c] sm:$0xff]
      %v338 = vld [vmem:[%s176 + $0x434] sm:$0xf]
      %v339 = vld [vmem:[%s176 + $0x438] sm:$0xff]
      %v340 = vld [vmem:[%s176 + $0x440] sm:$0xff]
      %v341 = vld [vmem:[%s176 + $0x448] sm:$0xff]
      %v342 = vld [vmem:[%s176 + $0x450] sm:$0xff]
      %v343 = vld [vmem:[%s176 + $0x458] sm:$0xf]
      %v344 = vld [vmem:[%s176 + $0x45c] sm:$0xff]
      %v345 = vld [vmem:[%s176 + $0x464] sm:$0xff]
      %v346 = vld [vmem:[%s176 + $0x46c] sm:$0xff]
      %v347 = vld [vmem:[%s176 + $0x474] sm:$0xff]
      %v348 = vld [vmem:[%s176 + $0x47c] sm:$0xf]
      %v349 = vld [vmem:[%s1] sm:$0xf]
      %v350 = vld [vmem:[%s1 + $0x4] sm:$0xf]
      %v351 = vld [vmem:[%s1 + $0x8] sm:$0xf]
      %v352 = vld [vmem:[%s1 + $0xc] sm:$0xf]
      %v353 = vld [vmem:[%s1 + $0x10] sm:$0xf]
      %v354 = vld [vmem:[%s1 + $0x14] sm:$0xf]
      %v355 = vld [vmem:[%s1 + $0x18] sm:$0xf]
      %v356 = vld [vmem:[%s1 + $0x1c] sm:$0xf]
      %v357 = vld [vmem:[%s1 + $0x20] sm:$0xf]
      %v358 = vld [vmem:[%s1 + $0x24] sm:$0xf]
      %v359 = vld [vmem:[%s1 + $0x28] sm:$0xf]
      %v360 = vld [vmem:[%s1 + $0x2c] sm:$0xf]
      %v361 = vld [vmem:[%s1 + $0x30] sm:$0xf]
      %v362 = vld [vmem:[%s1 + $0x34] sm:$0xf]
      %v363 = vld [vmem:[%s1 + $0x38] sm:$0xf]
      %v364 = vld [vmem:[%s1 + $0x3c] sm:$0xf]
      %v365 = vld [vmem:[%s1 + $0x40] sm:$0xf]
      %v366 = vld [vmem:[%s1 + $0x44] sm:$0xf]
      %v367 = vld [vmem:[%s1 + $0x48] sm:$0xf]
      %v368 = vld [vmem:[%s1 + $0x4c] sm:$0xf]
      %v369 = vld [vmem:[%s1 + $0x50] sm:$0xf]
      %v370 = vld [vmem:[%s1 + $0x54] sm:$0xf]
      %v371 = vld [vmem:[%s1 + $0x58] sm:$0xf]
      %v372 = vld [vmem:[%s1 + $0x5c] sm:$0xf]
      %v373 = vld [vmem:[%s1 + $0x60] sm:$0xf]
      %v374 = vld [vmem:[%s1 + $0x64] sm:$0xf]
      %v375 = vld [vmem:[%s1 + $0x68] sm:$0xf]
      %v376 = vld [vmem:[%s1 + $0x6c] sm:$0xf]
      %v377 = vld [vmem:[%s1 + $0x70] sm:$0xf]
      %v378 = vld [vmem:[%s1 + $0x74] sm:$0xf]
      %v379 = vld [vmem:[%s1 + $0x78] sm:$0xf]
      %v380 = vld [vmem:[%s1 + $0x7c] sm:$0xf]
      %v381 = vld [vmem:[%s1 + $0x80] sm:$0xf]
      %v382 = vld [vmem:[%s1 + $0x84] sm:$0xf]
      %v383 = vld [vmem:[%s1 + $0x88] sm:$0xf]
      %v384 = vld [vmem:[%s1 + $0x8c] sm:$0xf]
      %v385 = vld [vmem:[%s1 + $0x90] sm:$0xf]
      %v386 = vld [vmem:[%s1 + $0x94] sm:$0xf]
      %v387 = vld [vmem:[%s1 + $0x98] sm:$0xf]
      %v388 = vld [vmem:[%s1 + $0x9c] sm:$0xf]
      %v389 = vld [vmem:[%s1 + $0xa0] sm:$0xf]
      %v390 = vld [vmem:[%s1 + $0xa4] sm:$0xf]
      %v391 = vld [vmem:[%s1 + $0xa8] sm:$0xf]
      %v392 = vld [vmem:[%s1 + $0xac] sm:$0xf]
      %v393 = vld [vmem:[%s1 + $0xb0] sm:$0xf]
      %v394 = vld [vmem:[%s1 + $0xb4] sm:$0xf]
      %v395 = vld [vmem:[%s1 + $0xb8] sm:$0xf]
      %v396 = vld [vmem:[%s1 + $0xbc] sm:$0xf]
      %v397 = vld [vmem:[%s1 + $0xc0] sm:$0xf]
      %v398 = vld [vmem:[%s1 + $0xc4] sm:$0xf]
      %v399 = vld [vmem:[%s1 + $0xc8] sm:$0xf]
      %v400 = vld [vmem:[%s1 + $0xcc] sm:$0xf]
      %v401 = vld [vmem:[%s1 + $0xd0] sm:$0xf]
      %v402 = vld [vmem:[%s1 + $0xd4] sm:$0xf]
      %v403 = vld [vmem:[%s1 + $0xd8] sm:$0xf]
      %v404 = vld [vmem:[%s1 + $0xdc] sm:$0xf]
      %v405 = vld [vmem:[%s1 + $0xe0] sm:$0xf]
      %v406 = vld [vmem:[%s1 + $0xe4] sm:$0xf]
      %v407 = vld [vmem:[%s1 + $0xe8] sm:$0xf]
      %v408 = vld [vmem:[%s1 + $0xec] sm:$0xf]
      %v409 = vld [vmem:[%s1 + $0xf0] sm:$0xf]
      %v410 = vld [vmem:[%s1 + $0xf4] sm:$0xf]
      %v411 = vld [vmem:[%s1 + $0xf8] sm:$0xf]
      %v412 = vld [vmem:[%s1 + $0xfc] sm:$0xf]
      %v413 = vld [vmem:[%s1 + $0x100] sm:$0xf]
      %v414 = vld [vmem:[%s1 + $0x104] sm:$0xf]
      %v415 = vld [vmem:[%s1 + $0x108] sm:$0xf]
      %v416 = vld [vmem:[%s1 + $0x10c] sm:$0xf]
      %v417 = vld [vmem:[%s1 + $0x110] sm:$0xf]
      %v418 = vld [vmem:[%s1 + $0x114] sm:$0xf]
      %v419 = vld [vmem:[%s1 + $0x118] sm:$0xf]
      %v420 = vld [vmem:[%s1 + $0x11c] sm:$0xf]
      %v421 = vld [vmem:[%s1 + $0x120] sm:$0xf]
      %v422 = vld [vmem:[%s1 + $0x124] sm:$0xf]
      %v423 = vld [vmem:[%s1 + $0x128] sm:$0xf]
      %v424 = vld [vmem:[%s1 + $0x12c] sm:$0xf]
      %v425 = vld [vmem:[%s1 + $0x130] sm:$0xf]
      %v426 = vld [vmem:[%s1 + $0x134] sm:$0xf]
      %v427 = vld [vmem:[%s1 + $0x138] sm:$0xf]
      %v428 = vld [vmem:[%s1 + $0x13c] sm:$0xf]
      %v429 = vld [vmem:[%s1 + $0x140] sm:$0xf]
      %v430 = vld [vmem:[%s1 + $0x144] sm:$0xf]
      %v431 = vld [vmem:[%s1 + $0x148] sm:$0xf]
      %v432 = vld [vmem:[%s1 + $0x14c] sm:$0xf]
      %v433 = vld [vmem:[%s1 + $0x150] sm:$0xf]
      %v434 = vld [vmem:[%s1 + $0x154] sm:$0xf]
      %v435 = vld [vmem:[%s1 + $0x158] sm:$0xf]
      %v436 = vld [vmem:[%s1 + $0x15c] sm:$0xf]
      %v437 = vld [vmem:[%s1 + $0x160] sm:$0xf]
      %v438 = vld [vmem:[%s1 + $0x164] sm:$0xf]
      %v439 = vld [vmem:[%s1 + $0x168] sm:$0xf]
      %v440 = vld [vmem:[%s1 + $0x16c] sm:$0xf]
      %v441 = vld [vmem:[%s1 + $0x170] sm:$0xf]
      %v442 = vld [vmem:[%s1 + $0x174] sm:$0xf]
      %v443 = vld [vmem:[%s1 + $0x178] sm:$0xf]
      %v444 = vld [vmem:[%s1 + $0x17c] sm:$0xf]
      %v445 = vld [vmem:[%s1 + $0x180] sm:$0xf]
      %v446 = vld [vmem:[%s1 + $0x184] sm:$0xf]
      %v447 = vld [vmem:[%s1 + $0x188] sm:$0xf]
      %v448 = vld [vmem:[%s1 + $0x18c] sm:$0xf]
      %v449 = vld [vmem:[%s1 + $0x190] sm:$0xf]
      %v450 = vld [vmem:[%s1 + $0x194] sm:$0xf]
      %v451 = vld [vmem:[%s1 + $0x198] sm:$0xf]
      %v452 = vld [vmem:[%s1 + $0x19c] sm:$0xf]
      %v453 = vld [vmem:[%s1 + $0x1a0] sm:$0xf]
      %v454 = vld [vmem:[%s1 + $0x1a4] sm:$0xf]
      %v455 = vld [vmem:[%s1 + $0x1a8] sm:$0xf]
      %v456 = vld [vmem:[%s1 + $0x1ac] sm:$0xf]
      %v457 = vld [vmem:[%s1 + $0x1b0] sm:$0xf]
      %v458 = vld [vmem:[%s1 + $0x1b4] sm:$0xf]
      %v459 = vld [vmem:[%s1 + $0x1b8] sm:$0xf]
      %v460 = vld [vmem:[%s1 + $0x1bc] sm:$0xf]
      %v461 = vld [vmem:[%s1 + $0x1c0] sm:$0xf]
      %v462 = vld [vmem:[%s1 + $0x1c4] sm:$0xf]
      %v463 = vld [vmem:[%s1 + $0x1c8] sm:$0xf]
      %v464 = vld [vmem:[%s1 + $0x1cc] sm:$0xf]
      %v465 = vld [vmem:[%s1 + $0x1d0] sm:$0xf]
      %v466 = vld [vmem:[%s1 + $0x1d4] sm:$0xf]
      %v467 = vld [vmem:[%s1 + $0x1d8] sm:$0xf]
      %v468 = vld [vmem:[%s1 + $0x1dc] sm:$0xf]
      %v469 = vld [vmem:[%s1 + $0x1e0] sm:$0xf]
      %v470 = vld [vmem:[%s1 + $0x1e4] sm:$0xf]
      %v471 = vld [vmem:[%s1 + $0x1e8] sm:$0xf]
      %v472 = vld [vmem:[%s1 + $0x1ec] sm:$0xf]
      %v473 = vld [vmem:[%s1 + $0x1f0] sm:$0xf]
      %v474 = vld [vmem:[%s1 + $0x1f4] sm:$0xf]
      %v475 = vld [vmem:[%s1 + $0x1f8] sm:$0xf]
      %v476 = vld [vmem:[%s1 + $0x1fc] sm:$0xf]
      %v477 = vld [vmem:[%s1 + $0x200] sm:$0xf]
      %v478 = vld [vmem:[%s1 + $0x204] sm:$0xf]
      %v479 = vld [vmem:[%s1 + $0x208] sm:$0xf]
      %v480 = vld [vmem:[%s1 + $0x20c] sm:$0xf]
      %v481 = vld [vmem:[%s1 + $0x210] sm:$0xf]
      %v482 = vld [vmem:[%s1 + $0x214] sm:$0xf]
      %v483 = vld [vmem:[%s1 + $0x218] sm:$0xf]
      %v484 = vld [vmem:[%s1 + $0x21c] sm:$0xf]
      %v485 = vld [vmem:[%s1 + $0x220] sm:$0xf]
      %v486 = vld [vmem:[%s1 + $0x224] sm:$0xf]
      %v487 = vld [vmem:[%s1 + $0x228] sm:$0xf]
      %v488 = vld [vmem:[%s1 + $0x22c] sm:$0xf]
      %v489 = vld [vmem:[%s1 + $0x230] sm:$0xf]
      %v490 = vld [vmem:[%s1 + $0x234] sm:$0xf]
      %v491 = vld [vmem:[%s1 + $0x238] sm:$0xf]
      %v492 = vld [vmem:[%s1 + $0x23c] sm:$0xf]
      %v653 = vunpack.c.l.b16 %v189
      %v654 = vunpack.c.h.b16 %v189
      %v655 = vunpack.c.l.b16 %v190
      %v656 = vunpack.c.h.b16 %v190
      %v657 = vunpack.c.l.b16 %v191
      %v658 = vunpack.c.h.b16 %v191
      %v659 = vunpack.c.l.b16 %v192
      %v660 = vunpack.c.h.b16 %v192
      %v661 = vunpack.c.l.b16 %v193
      %v662 = vunpack.c.l.b16 %v194
      %v663 = vunpack.c.h.b16 %v194
      %v664 = vunpack.c.l.b16 %v195
      %v665 = vunpack.c.h.b16 %v195
      %v666 = vunpack.c.l.b16 %v196
      %v667 = vunpack.c.h.b16 %v196
      %v668 = vunpack.c.l.b16 %v197
      %v669 = vunpack.c.h.b16 %v197
      %v670 = vunpack.c.l.b16 %v198
      %v671 = vunpack.c.l.b16 %v199
      %v672 = vunpack.c.h.b16 %v199
      %v673 = vunpack.c.l.b16 %v200
      %v674 = vunpack.c.h.b16 %v200
      %v675 = vunpack.c.l.b16 %v201
      %v676 = vunpack.c.h.b16 %v201
      %v677 = vunpack.c.l.b16 %v202
      %v678 = vunpack.c.h.b16 %v202
      %v679 = vunpack.c.l.b16 %v203
      %v680 = vunpack.c.l.b16 %v204
      %v681 = vunpack.c.h.b16 %v204
      %v682 = vunpack.c.l.b16 %v205
      %v683 = vunpack.c.h.b16 %v205
      %v684 = vunpack.c.l.b16 %v206
      %v685 = vunpack.c.h.b16 %v206
      %v686 = vunpack.c.l.b16 %v207
      %v687 = vunpack.c.h.b16 %v207
      %v688 = vunpack.c.l.b16 %v208
      %v689 = vunpack.c.l.b16 %v209
      %v690 = vunpack.c.h.b16 %v209
      %v691 = vunpack.c.l.b16 %v210
      %v692 = vunpack.c.h.b16 %v210
      %v693 = vunpack.c.l.b16 %v211
      %v694 = vunpack.c.h.b16 %v211
      %v695 = vunpack.c.l.b16 %v212
      %v696 = vunpack.c.h.b16 %v212
      %v697 = vunpack.c.l.b16 %v213
      %v698 = vunpack.c.l.b16 %v214
      %v699 = vunpack.c.h.b16 %v214
      %v700 = vunpack.c.l.b16 %v215
      %v701 = vunpack.c.h.b16 %v215
      %v702 = vunpack.c.l.b16 %v216
      %v703 = vunpack.c.h.b16 %v216
      %v704 = vunpack.c.l.b16 %v217
      %v705 = vunpack.c.h.b16 %v217
      %v706 = vunpack.c.l.b16 %v218
      %v707 = vunpack.c.l.b16 %v219
      %v708 = vunpack.c.h.b16 %v219
      %v709 = vunpack.c.l.b16 %v220
      %v710 = vunpack.c.h.b16 %v220
      %v711 = vunpack.c.l.b16 %v221
      %v712 = vunpack.c.h.b16 %v221
      %v713 = vunpack.c.l.b16 %v222
      %v714 = vunpack.c.h.b16 %v222
      %v715 = vunpack.c.l.b16 %v223
      %v716 = vunpack.c.l.b16 %v224
      %v717 = vunpack.c.h.b16 %v224
      %v718 = vunpack.c.l.b16 %v225
      %v719 = vunpack.c.h.b16 %v225
      %v720 = vunpack.c.l.b16 %v226
      %v721 = vunpack.c.h.b16 %v226
      %v722 = vunpack.c.l.b16 %v227
      %v723 = vunpack.c.h.b16 %v227
      %v724 = vunpack.c.l.b16 %v228
      %v725 = vunpack.c.l.b16 %v229
      %v726 = vunpack.c.h.b16 %v229
      %v727 = vunpack.c.l.b16 %v230
      %v728 = vunpack.c.h.b16 %v230
      %v729 = vunpack.c.l.b16 %v231
      %v730 = vunpack.c.h.b16 %v231
      %v731 = vunpack.c.l.b16 %v232
      %v732 = vunpack.c.h.b16 %v232
      %v733 = vunpack.c.l.b16 %v233
      %v734 = vunpack.c.l.b16 %v234
      %v735 = vunpack.c.h.b16 %v234
      %v736 = vunpack.c.l.b16 %v235
      %v737 = vunpack.c.h.b16 %v235
      %v738 = vunpack.c.l.b16 %v236
      %v739 = vunpack.c.h.b16 %v236
      %v740 = vunpack.c.l.b16 %v237
      %v741 = vunpack.c.h.b16 %v237
      %v742 = vunpack.c.l.b16 %v238
      %v743 = vunpack.c.l.b16 %v239
      %v744 = vunpack.c.h.b16 %v239
      %v745 = vunpack.c.l.b16 %v240
      %v746 = vunpack.c.h.b16 %v240
      %v747 = vunpack.c.l.b16 %v241
      %v748 = vunpack.c.h.b16 %v241
      %v749 = vunpack.c.l.b16 %v242
      %v750 = vunpack.c.h.b16 %v242
      %v751 = vunpack.c.l.b16 %v243
      %v752 = vunpack.c.l.b16 %v244
      %v753 = vunpack.c.h.b16 %v244
      %v754 = vunpack.c.l.b16 %v245
      %v755 = vunpack.c.h.b16 %v245
      %v756 = vunpack.c.l.b16 %v246
      %v757 = vunpack.c.h.b16 %v246
      %v758 = vunpack.c.l.b16 %v247
      %v759 = vunpack.c.h.b16 %v247
      %v760 = vunpack.c.l.b16 %v248
      %v761 = vunpack.c.l.b16 %v249
      %v762 = vunpack.c.h.b16 %v249
      %v763 = vunpack.c.l.b16 %v250
      %v764 = vunpack.c.h.b16 %v250
      %v765 = vunpack.c.l.b16 %v251
      %v766 = vunpack.c.h.b16 %v251
      %v767 = vunpack.c.l.b16 %v252
      %v768 = vunpack.c.h.b16 %v252
      %v769 = vunpack.c.l.b16 %v253
      %v770 = vunpack.c.l.b16 %v254
      %v771 = vunpack.c.h.b16 %v254
      %v772 = vunpack.c.l.b16 %v255
      %v773 = vunpack.c.h.b16 %v255
      %v774 = vunpack.c.l.b16 %v256
      %v775 = vunpack.c.h.b16 %v256
      %v776 = vunpack.c.l.b16 %v257
      %v777 = vunpack.c.h.b16 %v257
      %v778 = vunpack.c.l.b16 %v258
      %v779 = vunpack.c.l.b16 %v259
      %v780 = vunpack.c.h.b16 %v259
      %v781 = vunpack.c.l.b16 %v260
      %v782 = vunpack.c.h.b16 %v260
      %v783 = vunpack.c.l.b16 %v261
      %v784 = vunpack.c.h.b16 %v261
      %v785 = vunpack.c.l.b16 %v262
      %v786 = vunpack.c.h.b16 %v262
      %v787 = vunpack.c.l.b16 %v263
      %v788 = vunpack.c.l.b16 %v264
      %v789 = vunpack.c.h.b16 %v264
      %v790 = vunpack.c.l.b16 %v265
      %v791 = vunpack.c.h.b16 %v265
      %v792 = vunpack.c.l.b16 %v266
      %v793 = vunpack.c.h.b16 %v266
      %v794 = vunpack.c.l.b16 %v267
      %v795 = vunpack.c.h.b16 %v267
      %v796 = vunpack.c.l.b16 %v268
      %v797 = vunpack.c.l.b16 %v269
      %v798 = vunpack.c.h.b16 %v269
      %v799 = vunpack.c.l.b16 %v270
      %v800 = vunpack.c.h.b16 %v270
      %v801 = vunpack.c.l.b16 %v271
      %v802 = vunpack.c.h.b16 %v271
      %v803 = vunpack.c.l.b16 %v272
      %v804 = vunpack.c.h.b16 %v272
      %v805 = vunpack.c.l.b16 %v273
      %v806 = vunpack.c.l.b16 %v274
      %v807 = vunpack.c.h.b16 %v274
      %v808 = vunpack.c.l.b16 %v275
      %v809 = vunpack.c.h.b16 %v275
      %v810 = vunpack.c.l.b16 %v276
      %v811 = vunpack.c.h.b16 %v276
      %v812 = vunpack.c.l.b16 %v277
      %v813 = vunpack.c.h.b16 %v277
      %v814 = vunpack.c.l.b16 %v278
      %v815 = vunpack.c.l.b16 %v279
      %v816 = vunpack.c.h.b16 %v279
      %v817 = vunpack.c.l.b16 %v280
      %v818 = vunpack.c.h.b16 %v280
      %v819 = vunpack.c.l.b16 %v281
      %v820 = vunpack.c.h.b16 %v281
      %v821 = vunpack.c.l.b16 %v282
      %v822 = vunpack.c.h.b16 %v282
      %v823 = vunpack.c.l.b16 %v283
      %v824 = vunpack.c.l.b16 %v284
      %v825 = vunpack.c.h.b16 %v284
      %v826 = vunpack.c.l.b16 %v285
      %v827 = vunpack.c.h.b16 %v285
      %v828 = vunpack.c.l.b16 %v286
      %v829 = vunpack.c.h.b16 %v286
      %v830 = vunpack.c.l.b16 %v287
      %v831 = vunpack.c.h.b16 %v287
      %v832 = vunpack.c.l.b16 %v288
      %v833 = vunpack.c.l.b16 %v289
      %v834 = vunpack.c.h.b16 %v289
      %v835 = vunpack.c.l.b16 %v290
      %v836 = vunpack.c.h.b16 %v290
      %v837 = vunpack.c.l.b16 %v291
      %v838 = vunpack.c.h.b16 %v291
      %v839 = vunpack.c.l.b16 %v292
      %v840 = vunpack.c.h.b16 %v292
      %v841 = vunpack.c.l.b16 %v293
      %v842 = vunpack.c.l.b16 %v294
      %v843 = vunpack.c.h.b16 %v294
      %v844 = vunpack.c.l.b16 %v295
      %v845 = vunpack.c.h.b16 %v295
      %v846 = vunpack.c.l.b16 %v296
      %v847 = vunpack.c.h.b16 %v296
      %v848 = vunpack.c.l.b16 %v297
      %v849 = vunpack.c.h.b16 %v297
      %v850 = vunpack.c.l.b16 %v298
      %v851 = vunpack.c.l.b16 %v299
      %v852 = vunpack.c.h.b16 %v299
      %v853 = vunpack.c.l.b16 %v300
      %v854 = vunpack.c.h.b16 %v300
      %v855 = vunpack.c.l.b16 %v301
      %v856 = vunpack.c.h.b16 %v301
      %v857 = vunpack.c.l.b16 %v302
      %v858 = vunpack.c.h.b16 %v302
      %v859 = vunpack.c.l.b16 %v303
      %v860 = vunpack.c.l.b16 %v304
      %v861 = vunpack.c.h.b16 %v304
      %v862 = vunpack.c.l.b16 %v305
      %v863 = vunpack.c.h.b16 %v305
      %v864 = vunpack.c.l.b16 %v306
      %v865 = vunpack.c.h.b16 %v306
      %v866 = vunpack.c.l.b16 %v307
      %v867 = vunpack.c.h.b16 %v307
      %v868 = vunpack.c.l.b16 %v308
      %v869 = vunpack.c.l.b16 %v309
      %v870 = vunpack.c.h.b16 %v309
      %v871 = vunpack.c.l.b16 %v310
      %v872 = vunpack.c.h.b16 %v310
      %v873 = vunpack.c.l.b16 %v311
      %v874 = vunpack.c.h.b16 %v311
      %v875 = vunpack.c.l.b16 %v312
      %v876 = vunpack.c.h.b16 %v312
      %v877 = vunpack.c.l.b16 %v313
      %v878 = vunpack.c.l.b16 %v314
      %v879 = vunpack.c.h.b16 %v314
      %v880 = vunpack.c.l.b16 %v315
      %v881 = vunpack.c.h.b16 %v315
      %v882 = vunpack.c.l.b16 %v316
      %v883 = vunpack.c.h.b16 %v316
      %v884 = vunpack.c.l.b16 %v317
      %v885 = vunpack.c.h.b16 %v317
      %v886 = vunpack.c.l.b16 %v318
      %v887 = vunpack.c.l.b16 %v319
      %v888 = vunpack.c.h.b16 %v319
      %v889 = vunpack.c.l.b16 %v320
      %v890 = vunpack.c.h.b16 %v320
      %v891 = vunpack.c.l.b16 %v321
      %v892 = vunpack.c.h.b16 %v321
      %v893 = vunpack.c.l.b16 %v322
      %v894 = vunpack.c.h.b16 %v322
      %v895 = vunpack.c.l.b16 %v323
      %v896 = vunpack.c.l.b16 %v324
      %v897 = vunpack.c.h.b16 %v324
      %v898 = vunpack.c.l.b16 %v325
      %v899 = vunpack.c.h.b16 %v325
      %v900 = vunpack.c.l.b16 %v326
      %v901 = vunpack.c.h.b16 %v326
      %v902 = vunpack.c.l.b16 %v327
      %v903 = vunpack.c.h.b16 %v327
      %v904 = vunpack.c.l.b16 %v328
      %v905 = vunpack.c.l.b16 %v329
      %v906 = vunpack.c.h.b16 %v329
      %v907 = vunpack.c.l.b16 %v330
      %v908 = vunpack.c.h.b16 %v330
      %v909 = vunpack.c.l.b16 %v331
      %v910 = vunpack.c.h.b16 %v331
      %v911 = vunpack.c.l.b16 %v332
      %v912 = vunpack.c.h.b16 %v332
      %v913 = vunpack.c.l.b16 %v333
      %v914 = vunpack.c.l.b16 %v334
      %v915 = vunpack.c.h.b16 %v334
      %v916 = vunpack.c.l.b16 %v335
      %v917 = vunpack.c.h.b16 %v335
      %v918 = vunpack.c.l.b16 %v336
      %v919 = vunpack.c.h.b16 %v336
      %v920 = vunpack.c.l.b16 %v337
      %v921 = vunpack.c.h.b16 %v337
      %v922 = vunpack.c.l.b16 %v338
      %v923 = vunpack.c.l.b16 %v339
      %v924 = vunpack.c.h.b16 %v339
      %v925 = vunpack.c.l.b16 %v340
      %v926 = vunpack.c.h.b16 %v340
      %v927 = vunpack.c.l.b16 %v341
      %v928 = vunpack.c.h.b16 %v341
      %v929 = vunpack.c.l.b16 %v342
      %v930 = vunpack.c.h.b16 %v342
      %v931 = vunpack.c.l.b16 %v343
      %v932 = vunpack.c.l.b16 %v344
      %v933 = vunpack.c.h.b16 %v344
      %v934 = vunpack.c.l.b16 %v345
      %v935 = vunpack.c.h.b16 %v345
      %v936 = vunpack.c.l.b16 %v346
      %v937 = vunpack.c.h.b16 %v346
      %v938 = vunpack.c.l.b16 %v347
      %v939 = vunpack.c.h.b16 %v347
      %v940 = vunpack.c.l.b16 %v348
      %v941 = vpack.c.b16 %v662, %v653
      %v942 = vpack.c.b16 %v663, %v654
      %v943 = vpack.c.b16 %v664, %v655
      %v944 = vpack.c.b16 %v665, %v656
      %v945 = vpack.c.b16 %v666, %v657
      %v946 = vpack.c.b16 %v667, %v658
      %v947 = vpack.c.b16 %v668, %v659
      %v948 = vpack.c.b16 %v669, %v660
      %v949 = vpack.c.b16 %v670, %v661
      %v950 = vpack.c.b16 %v680, %v671
      %v951 = vpack.c.b16 %v681, %v672
      %v952 = vpack.c.b16 %v682, %v673
      %v953 = vpack.c.b16 %v683, %v674
      %v954 = vpack.c.b16 %v684, %v675
      %v955 = vpack.c.b16 %v685, %v676
      %v956 = vpack.c.b16 %v686, %v677
      %v957 = vpack.c.b16 %v687, %v678
      %v958 = vpack.c.b16 %v688, %v679
      %v959 = vpack.c.b16 %v698, %v689
      %v960 = vpack.c.b16 %v699, %v690
      %v961 = vpack.c.b16 %v700, %v691
      %v962 = vpack.c.b16 %v701, %v692
      %v963 = vpack.c.b16 %v702, %v693
      %v964 = vpack.c.b16 %v703, %v694
      %v965 = vpack.c.b16 %v704, %v695
      %v966 = vpack.c.b16 %v705, %v696
      %v967 = vpack.c.b16 %v706, %v697
      %v968 = vpack.c.b16 %v716, %v707
      %v969 = vpack.c.b16 %v717, %v708
      %v970 = vpack.c.b16 %v718, %v709
      %v971 = vpack.c.b16 %v719, %v710
      %v972 = vpack.c.b16 %v720, %v711
      %v973 = vpack.c.b16 %v721, %v712
      %v974 = vpack.c.b16 %v722, %v713
      %v975 = vpack.c.b16 %v723, %v714
      %v976 = vpack.c.b16 %v724, %v715
      %v977 = vpack.c.b16 %v734, %v725
      %v978 = vpack.c.b16 %v735, %v726
      %v979 = vpack.c.b16 %v736, %v727
      %v980 = vpack.c.b16 %v737, %v728
      %v981 = vpack.c.b16 %v738, %v729
      %v982 = vpack.c.b16 %v739, %v730
      %v983 = vpack.c.b16 %v740, %v731
      %v984 = vpack.c.b16 %v741, %v732
      %v985 = vpack.c.b16 %v742, %v733
      %v986 = vpack.c.b16 %v752, %v743
      %v987 = vpack.c.b16 %v753, %v744
      %v988 = vpack.c.b16 %v754, %v745
      %v989 = vpack.c.b16 %v755, %v746
      %v990 = vpack.c.b16 %v756, %v747
      %v991 = vpack.c.b16 %v757, %v748
      %v992 = vpack.c.b16 %v758, %v749
      %v993 = vpack.c.b16 %v759, %v750
      %v994 = vpack.c.b16 %v760, %v751
      %v995 = vpack.c.b16 %v770, %v761
      %v996 = vpack.c.b16 %v771, %v762
      %v997 = vpack.c.b16 %v772, %v763
      %v998 = vpack.c.b16 %v773, %v764
      %v999 = vpack.c.b16 %v774, %v765
      %v1000 = vpack.c.b16 %v775, %v766
      %v1001 = vpack.c.b16 %v776, %v767
      %v1002 = vpack.c.b16 %v777, %v768
      %v1003 = vpack.c.b16 %v778, %v769
      %v1004 = vpack.c.b16 %v788, %v779
      %v1005 = vpack.c.b16 %v789, %v780
      %v1006 = vpack.c.b16 %v790, %v781
      %v1007 = vpack.c.b16 %v791, %v782
      %v1008 = vpack.c.b16 %v792, %v783
      %v1009 = vpack.c.b16 %v793, %v784
      %v1010 = vpack.c.b16 %v794, %v785
      %v1011 = vpack.c.b16 %v795, %v786
      %v1012 = vpack.c.b16 %v796, %v787
      %v1013 = vpack.c.b16 %v806, %v797
      %v1014 = vpack.c.b16 %v807, %v798
      %v1015 = vpack.c.b16 %v808, %v799
      %v1016 = vpack.c.b16 %v809, %v800
      %v1017 = vpack.c.b16 %v810, %v801
      %v1018 = vpack.c.b16 %v811, %v802
      %v1019 = vpack.c.b16 %v812, %v803
      %v1020 = vpack.c.b16 %v813, %v804
      %v1021 = vpack.c.b16 %v814, %v805
      %v1022 = vpack.c.b16 %v824, %v815
      %v1023 = vpack.c.b16 %v825, %v816
      %v1024 = vpack.c.b16 %v826, %v817
      %v1025 = vpack.c.b16 %v827, %v818
      %v1026 = vpack.c.b16 %v828, %v819
      %v1027 = vpack.c.b16 %v829, %v820
      %v1028 = vpack.c.b16 %v830, %v821
      %v1029 = vpack.c.b16 %v831, %v822
      %v1030 = vpack.c.b16 %v832, %v823
      %v1031 = vpack.c.b16 %v842, %v833
      %v1032 = vpack.c.b16 %v843, %v834
      %v1033 = vpack.c.b16 %v844, %v835
      %v1034 = vpack.c.b16 %v845, %v836
      %v1035 = vpack.c.b16 %v846, %v837
      %v1036 = vpack.c.b16 %v847, %v838
      %v1037 = vpack.c.b16 %v848, %v839
      %v1038 = vpack.c.b16 %v849, %v840
      %v1039 = vpack.c.b16 %v850, %v841
      %v1040 = vpack.c.b16 %v860, %v851
      %v1041 = vpack.c.b16 %v861, %v852
      %v1042 = vpack.c.b16 %v862, %v853
      %v1043 = vpack.c.b16 %v863, %v854
      %v1044 = vpack.c.b16 %v864, %v855
      %v1045 = vpack.c.b16 %v865, %v856
      %v1046 = vpack.c.b16 %v866, %v857
      %v1047 = vpack.c.b16 %v867, %v858
      %v1048 = vpack.c.b16 %v868, %v859
      %v1049 = vpack.c.b16 %v878, %v869
      %v1050 = vpack.c.b16 %v879, %v870
      %v1051 = vpack.c.b16 %v880, %v871
      %v1052 = vpack.c.b16 %v881, %v872
      %v1053 = vpack.c.b16 %v882, %v873
      %v1054 = vpack.c.b16 %v883, %v874
      %v1055 = vpack.c.b16 %v884, %v875
      %v1056 = vpack.c.b16 %v885, %v876
      %v1057 = vpack.c.b16 %v886, %v877
      %v1058 = vpack.c.b16 %v896, %v887
      %v1059 = vpack.c.b16 %v897, %v888
      %v1060 = vpack.c.b16 %v898, %v889
      %v1061 = vpack.c.b16 %v899, %v890
      %v1062 = vpack.c.b16 %v900, %v891
      %v1063 = vpack.c.b16 %v901, %v892
      %v1064 = vpack.c.b16 %v902, %v893
      %v1065 = vpack.c.b16 %v903, %v894
      %v1066 = vpack.c.b16 %v904, %v895
      %v1067 = vpack.c.b16 %v914, %v905
      %v1068 = vpack.c.b16 %v915, %v906
      %v1069 = vpack.c.b16 %v916, %v907
      %v1070 = vpack.c.b16 %v917, %v908
      %v1071 = vpack.c.b16 %v918, %v909
      %v1072 = vpack.c.b16 %v919, %v910
      %v1073 = vpack.c.b16 %v920, %v911
      %v1074 = vpack.c.b16 %v921, %v912
      %v1075 = vpack.c.b16 %v922, %v913
      %v1076 = vpack.c.b16 %v932, %v923
      %v1077 = vpack.c.b16 %v933, %v924
      %v1078 = vpack.c.b16 %v934, %v925
      %v1079 = vpack.c.b16 %v935, %v926
      %v1080 = vpack.c.b16 %v936, %v927
      %v1081 = vpack.c.b16 %v937, %v928
      %v1082 = vpack.c.b16 %v938, %v929
      %v1083 = vpack.c.b16 %v939, %v930
      %v1084 = vpack.c.b16 %v940, %v931
      %v1373 = vunpack.c.l.b16 %v349
      %v1374 = vunpack.c.l.b16 %v350
      %v1375 = vunpack.c.l.b16 %v351
      %v1376 = vunpack.c.l.b16 %v352
      %v1377 = vunpack.c.l.b16 %v353
      %v1378 = vunpack.c.l.b16 %v354
      %v1379 = vunpack.c.l.b16 %v355
      %v1380 = vunpack.c.l.b16 %v356
      %v1381 = vunpack.c.l.b16 %v357
      %v1382 = vunpack.c.l.b16 %v358
      %v1383 = vunpack.c.l.b16 %v359
      %v1384 = vunpack.c.l.b16 %v360
      %v1385 = vunpack.c.l.b16 %v361
      %v1386 = vunpack.c.l.b16 %v362
      %v1387 = vunpack.c.l.b16 %v363
      %v1388 = vunpack.c.l.b16 %v364
      %v1389 = vunpack.c.l.b16 %v365
      %v1390 = vunpack.c.l.b16 %v366
      %v1391 = vunpack.c.l.b16 %v367
      %v1392 = vunpack.c.l.b16 %v368
      %v1393 = vunpack.c.l.b16 %v369
      %v1394 = vunpack.c.l.b16 %v370
      %v1395 = vunpack.c.l.b16 %v371
      %v1396 = vunpack.c.l.b16 %v372
      %v1397 = vunpack.c.l.b16 %v373
      %v1398 = vunpack.c.l.b16 %v374
      %v1399 = vunpack.c.l.b16 %v375
      %v1400 = vunpack.c.l.b16 %v376
      %v1401 = vunpack.c.l.b16 %v377
      %v1402 = vunpack.c.l.b16 %v378
      %v1403 = vunpack.c.l.b16 %v379
      %v1404 = vunpack.c.l.b16 %v380
      %v1405 = vunpack.c.l.b16 %v381
      %v1406 = vunpack.c.l.b16 %v382
      %v1407 = vunpack.c.l.b16 %v383
      %v1408 = vunpack.c.l.b16 %v384
      %v1409 = vunpack.c.l.b16 %v385
      %v1410 = vunpack.c.l.b16 %v386
      %v1411 = vunpack.c.l.b16 %v387
      %v1412 = vunpack.c.l.b16 %v388
      %v1413 = vunpack.c.l.b16 %v389
      %v1414 = vunpack.c.l.b16 %v390
      %v1415 = vunpack.c.l.b16 %v391
      %v1416 = vunpack.c.l.b16 %v392
      %v1417 = vunpack.c.l.b16 %v393
      %v1418 = vunpack.c.l.b16 %v394
      %v1419 = vunpack.c.l.b16 %v395
      %v1420 = vunpack.c.l.b16 %v396
      %v1421 = vunpack.c.l.b16 %v397
      %v1422 = vunpack.c.l.b16 %v398
      %v1423 = vunpack.c.l.b16 %v399
      %v1424 = vunpack.c.l.b16 %v400
      %v1425 = vunpack.c.l.b16 %v401
      %v1426 = vunpack.c.l.b16 %v402
      %v1427 = vunpack.c.l.b16 %v403
      %v1428 = vunpack.c.l.b16 %v404
      %v1429 = vunpack.c.l.b16 %v405
      %v1430 = vunpack.c.l.b16 %v406
      %v1431 = vunpack.c.l.b16 %v407
      %v1432 = vunpack.c.l.b16 %v408
      %v1433 = vunpack.c.l.b16 %v409
      %v1434 = vunpack.c.l.b16 %v410
      %v1435 = vunpack.c.l.b16 %v411
      %v1436 = vunpack.c.l.b16 %v412
      %v1437 = vunpack.c.l.b16 %v413
      %v1438 = vunpack.c.l.b16 %v414
      %v1439 = vunpack.c.l.b16 %v415
      %v1440 = vunpack.c.l.b16 %v416
      %v1441 = vunpack.c.l.b16 %v417
      %v1442 = vunpack.c.l.b16 %v418
      %v1443 = vunpack.c.l.b16 %v419
      %v1444 = vunpack.c.l.b16 %v420
      %v1445 = vunpack.c.l.b16 %v421
      %v1446 = vunpack.c.l.b16 %v422
      %v1447 = vunpack.c.l.b16 %v423
      %v1448 = vunpack.c.l.b16 %v424
      %v1449 = vunpack.c.l.b16 %v425
      %v1450 = vunpack.c.l.b16 %v426
      %v1451 = vunpack.c.l.b16 %v427
      %v1452 = vunpack.c.l.b16 %v428
      %v1453 = vunpack.c.l.b16 %v429
      %v1454 = vunpack.c.l.b16 %v430
      %v1455 = vunpack.c.l.b16 %v431
      %v1456 = vunpack.c.l.b16 %v432
      %v1457 = vunpack.c.l.b16 %v433
      %v1458 = vunpack.c.l.b16 %v434
      %v1459 = vunpack.c.l.b16 %v435
      %v1460 = vunpack.c.l.b16 %v436
      %v1461 = vunpack.c.l.b16 %v437
      %v1462 = vunpack.c.l.b16 %v438
      %v1463 = vunpack.c.l.b16 %v439
      %v1464 = vunpack.c.l.b16 %v440
      %v1465 = vunpack.c.l.b16 %v441
      %v1466 = vunpack.c.l.b16 %v442
      %v1467 = vunpack.c.l.b16 %v443
      %v1468 = vunpack.c.l.b16 %v444
      %v1469 = vunpack.c.l.b16 %v445
      %v1470 = vunpack.c.l.b16 %v446
      %v1471 = vunpack.c.l.b16 %v447
      %v1472 = vunpack.c.l.b16 %v448
      %v1473 = vunpack.c.l.b16 %v449
      %v1474 = vunpack.c.l.b16 %v450
      %v1475 = vunpack.c.l.b16 %v451
      %v1476 = vunpack.c.l.b16 %v452
      %v1477 = vunpack.c.l.b16 %v453
      %v1478 = vunpack.c.l.b16 %v454
      %v1479 = vunpack.c.l.b16 %v455
      %v1480 = vunpack.c.l.b16 %v456
      %v1481 = vunpack.c.l.b16 %v457
      %v1482 = vunpack.c.l.b16 %v458
      %v1483 = vunpack.c.l.b16 %v459
      %v1484 = vunpack.c.l.b16 %v460
      %v1485 = vunpack.c.l.b16 %v461
      %v1486 = vunpack.c.l.b16 %v462
      %v1487 = vunpack.c.l.b16 %v463
      %v1488 = vunpack.c.l.b16 %v464
      %v1489 = vunpack.c.l.b16 %v465
      %v1490 = vunpack.c.l.b16 %v466
      %v1491 = vunpack.c.l.b16 %v467
      %v1492 = vunpack.c.l.b16 %v468
      %v1493 = vunpack.c.l.b16 %v469
      %v1494 = vunpack.c.l.b16 %v470
      %v1495 = vunpack.c.l.b16 %v471
      %v1496 = vunpack.c.l.b16 %v472
      %v1497 = vunpack.c.l.b16 %v473
      %v1498 = vunpack.c.l.b16 %v474
      %v1499 = vunpack.c.l.b16 %v475
      %v1500 = vunpack.c.l.b16 %v476
      %v1501 = vunpack.c.l.b16 %v477
      %v1502 = vunpack.c.l.b16 %v478
      %v1503 = vunpack.c.l.b16 %v479
      %v1504 = vunpack.c.l.b16 %v480
      %v1505 = vunpack.c.l.b16 %v481
      %v1506 = vunpack.c.l.b16 %v482
      %v1507 = vunpack.c.l.b16 %v483
      %v1508 = vunpack.c.l.b16 %v484
      %v1509 = vunpack.c.l.b16 %v485
      %v1510 = vunpack.c.l.b16 %v486
      %v1511 = vunpack.c.l.b16 %v487
      %v1512 = vunpack.c.l.b16 %v488
      %v1513 = vunpack.c.l.b16 %v489
      %v1514 = vunpack.c.l.b16 %v490
      %v1515 = vunpack.c.l.b16 %v491
      %v1516 = vunpack.c.l.b16 %v492
      %v1517 = vpack.c.b16 %v1374, %v1373
      %v1518 = vpack.c.b16 %v1376, %v1375
      %v1519 = vpack.c.b16 %v1378, %v1377
      %v1520 = vpack.c.b16 %v1380, %v1379
      %v1521 = vpack.c.b16 %v1382, %v1381
      %v1522 = vpack.c.b16 %v1384, %v1383
      %v1523 = vpack.c.b16 %v1386, %v1385
      %v1524 = vpack.c.b16 %v1388, %v1387
      %v1525 = vpack.c.b16 %v1390, %v1389
      %v1526 = vpack.c.b16 %v1392, %v1391
      %v1527 = vpack.c.b16 %v1394, %v1393
      %v1528 = vpack.c.b16 %v1396, %v1395
      %v1529 = vpack.c.b16 %v1398, %v1397
      %v1530 = vpack.c.b16 %v1400, %v1399
      %v1531 = vpack.c.b16 %v1402, %v1401
      %v1532 = vpack.c.b16 %v1404, %v1403
      %v1533 = vpack.c.b16 %v1406, %v1405
      %v1534 = vpack.c.b16 %v1408, %v1407
      %v1535 = vpack.c.b16 %v1410, %v1409
      %v1536 = vpack.c.b16 %v1412, %v1411
      %v1537 = vpack.c.b16 %v1414, %v1413
      %v1538 = vpack.c.b16 %v1416, %v1415
      %v1539 = vpack.c.b16 %v1418, %v1417
      %v1540 = vpack.c.b16 %v1420, %v1419
      %v1541 = vpack.c.b16 %v1422, %v1421
      %v1542 = vpack.c.b16 %v1424, %v1423
      %v1543 = vpack.c.b16 %v1426, %v1425
      %v1544 = vpack.c.b16 %v1428, %v1427
      %v1545 = vpack.c.b16 %v1430, %v1429
      %v1546 = vpack.c.b16 %v1432, %v1431
      %v1547 = vpack.c.b16 %v1434, %v1433
      %v1548 = vpack.c.b16 %v1436, %v1435
      %v1549 = vpack.c.b16 %v1438, %v1437
      %v1550 = vpack.c.b16 %v1440, %v1439
      %v1551 = vpack.c.b16 %v1442, %v1441
      %v1552 = vpack.c.b16 %v1444, %v1443
      %v1553 = vpack.c.b16 %v1446, %v1445
      %v1554 = vpack.c.b16 %v1448, %v1447
      %v1555 = vpack.c.b16 %v1450, %v1449
      %v1556 = vpack.c.b16 %v1452, %v1451
      %v1557 = vpack.c.b16 %v1454, %v1453
      %v1558 = vpack.c.b16 %v1456, %v1455
      %v1559 = vpack.c.b16 %v1458, %v1457
      %v1560 = vpack.c.b16 %v1460, %v1459
      %v1561 = vpack.c.b16 %v1462, %v1461
      %v1562 = vpack.c.b16 %v1464, %v1463
      %v1563 = vpack.c.b16 %v1466, %v1465
      %v1564 = vpack.c.b16 %v1468, %v1467
      %v1565 = vpack.c.b16 %v1470, %v1469
      %v1566 = vpack.c.b16 %v1472, %v1471
      %v1567 = vpack.c.b16 %v1474, %v1473
      %v1568 = vpack.c.b16 %v1476, %v1475
      %v1569 = vpack.c.b16 %v1478, %v1477
      %v1570 = vpack.c.b16 %v1480, %v1479
      %v1571 = vpack.c.b16 %v1482, %v1481
      %v1572 = vpack.c.b16 %v1484, %v1483
      %v1573 = vpack.c.b16 %v1486, %v1485
      %v1574 = vpack.c.b16 %v1488, %v1487
      %v1575 = vpack.c.b16 %v1490, %v1489
      %v1576 = vpack.c.b16 %v1492, %v1491
      %v1577 = vpack.c.b16 %v1494, %v1493
      %v1578 = vpack.c.b16 %v1496, %v1495
      %v1579 = vpack.c.b16 %v1498, %v1497
      %v1580 = vpack.c.b16 %v1500, %v1499
      %v1581 = vpack.c.b16 %v1502, %v1501
      %v1582 = vpack.c.b16 %v1504, %v1503
      %v1583 = vpack.c.b16 %v1506, %v1505
      %v1584 = vpack.c.b16 %v1508, %v1507
      %v1585 = vpack.c.b16 %v1510, %v1509
      %v1586 = vpack.c.b16 %v1512, %v1511
      %v1587 = vpack.c.b16 %v1514, %v1513
      %v1588 = vpack.c.b16 %v1516, %v1515
      %1661 = vmatprep.subr.bf16.mxu0 0
      %1662 = vmatpush1.bf16.msra.mxu0 %v1524
      %1663 = vmatprep.subr.bf16.mxu0 0
      %1664 = vmatpush1.bf16.msra.mxu0 %v1523
      %1665 = vmatprep.subr.bf16.mxu0 0
      %1666 = vmatpush1.bf16.msra.mxu0 %v1522
      %1667 = vmatprep.subr.bf16.mxu0 0
      %1668 = vmatpush1.bf16.msra.mxu0 %v1521
      %1669 = vmatprep.subr.bf16.mxu0 0
      %1670 = vmatpush1.bf16.msra.mxu0 %v1520
      %1671 = vmatprep.subr.bf16.mxu0 0
      %1672 = vmatpush1.bf16.msra.mxu0 %v1519
      %1673 = vmatprep.subr.bf16.mxu0 0
      %1674 = vmatpush1.bf16.msra.mxu0 %v1518
      %1675 = vmatprep.subr.bf16.mxu0 0
      %1676 = vmatpush1.bf16.msra.mxu0 %v1517
      %1677 = vmatprep.subr.bf16.mxu0 0
      %1678 = vmatpush2.bf16.msra.mxu0 %v1532
      %1679 = vmatprep.subr.bf16.mxu0 0
      %1680 = vmatpush2.bf16.msra.mxu0 %v1531
      %1681 = vmatprep.subr.bf16.mxu0 0
      %1682 = vmatpush2.bf16.msra.mxu0 %v1530
      %1683 = vmatprep.subr.bf16.mxu0 0
      %1684 = vmatpush2.bf16.msra.mxu0 %v1529
      %1685 = vmatprep.subr.bf16.mxu0 0
      %1686 = vmatpush2.bf16.msra.mxu0 %v1528
      %1687 = vmatprep.subr.bf16.mxu0 0
      %1688 = vmatpush2.bf16.msra.mxu0 %v1527
      %1689 = vmatprep.subr.bf16.mxu0 0
      %1690 = vmatpush2.bf16.msra.mxu0 %v1526
      %1691 = vmatprep.subr.bf16.mxu0 0
      %1692 = vmatpush2.bf16.msra.mxu0 %v1525
      %1693 = vmatprep.mubr.bf16.mxu0 %v942
      %1694 = vmatmul.mubr.bf16.gmra.mxu0 %v941
      %v1695 = vpop.f32.mrf.mxu0
      %v1696 = vadd.f32 0.0, %v1695
      %v1697 = vpop.f32.mrf.mxu0
      %v1698 = vpop.f32.mrf.mxu0
      %v1699 = vadd.f32 0.0, %v1698
      %v1700 = vpop.f32.mrf.mxu0
      %1701 = vmatprep.mubr.bf16.mxu0 %v951
      %1702 = vmatmul.mubr.bf16.gmra.mxu0 %v950
      %v1703 = vpop.f32.mrf.mxu0
      %v1704 = vadd.f32 0.0, %v1703
      %v1705 = vpop.f32.mrf.mxu0
      %v1706 = vpop.f32.mrf.mxu0
      %v1707 = vadd.f32 0.0, %v1706
      %v1708 = vpop.f32.mrf.mxu0
      %1709 = vmatprep.mubr.bf16.mxu0 %v960
      %1710 = vmatmul.mubr.bf16.gmra.mxu0 %v959
      %v1711 = vpop.f32.mrf.mxu0
      %v1712 = vadd.f32 0.0, %v1711
      %v1713 = vpop.f32.mrf.mxu0
      %v1714 = vpop.f32.mrf.mxu0
      %v1715 = vadd.f32 0.0, %v1714
      %v1716 = vpop.f32.mrf.mxu0
      %1717 = vmatprep.mubr.bf16.mxu0 %v969
      %1718 = vmatmul.mubr.bf16.gmra.mxu0 %v968
      %v1719 = vpop.f32.mrf.mxu0
      %v1720 = vadd.f32 0.0, %v1719
      %v1721 = vpop.f32.mrf.mxu0
      %v1722 = vpop.f32.mrf.mxu0
      %v1723 = vadd.f32 0.0, %v1722
      %v1724 = vpop.f32.mrf.mxu0
      %1725 = vmatprep.mubr.bf16.mxu0 %v978
      %1726 = vmatmul.mubr.bf16.gmra.mxu0 %v977
      %v1727 = vpop.f32.mrf.mxu0
      %v1728 = vadd.f32 0.0, %v1727
      %v1729 = vpop.f32.mrf.mxu0
      %v1730 = vpop.f32.mrf.mxu0
      %v1731 = vadd.f32 0.0, %v1730
      %v1732 = vpop.f32.mrf.mxu0
      %1733 = vmatprep.mubr.bf16.mxu0 %v987
      %1734 = vmatmul.mubr.bf16.gmra.mxu0 %v986
      %v1735 = vpop.f32.mrf.mxu0
      %v1736 = vadd.f32 0.0, %v1735
      %v1737 = vpop.f32.mrf.mxu0
      %v1738 = vpop.f32.mrf.mxu0
      %v1739 = vadd.f32 0.0, %v1738
      %v1740 = vpop.f32.mrf.mxu0
      %1741 = vmatprep.mubr.bf16.mxu0 %v996
      %1742 = vmatmul.mubr.bf16.gmra.mxu0 %v995
      %v1743 = vpop.f32.mrf.mxu0
      %v1744 = vadd.f32 0.0, %v1743
      %v1745 = vpop.f32.mrf.mxu0
      %v1746 = vpop.f32.mrf.mxu0
      %v1747 = vadd.f32 0.0, %v1746
      %v1748 = vpop.f32.mrf.mxu0
      %1749 = vmatprep.mubr.bf16.mxu0 %v1005
      %1750 = vmatmul.mubr.bf16.gmra.mxu0 %v1004
      %v1751 = vpop.f32.mrf.mxu0
      %v1752 = vadd.f32 0.0, %v1751
      %v1753 = vpop.f32.mrf.mxu0
      %v1754 = vpop.f32.mrf.mxu0
      %v1755 = vadd.f32 0.0, %v1754
      %v1756 = vpop.f32.mrf.mxu0
      %1757 = vmatprep.mubr.bf16.mxu0 %v1014
      %1758 = vmatmul.mubr.bf16.gmra.mxu0 %v1013
      %v1759 = vpop.f32.mrf.mxu0
      %v1760 = vadd.f32 0.0, %v1759
      %v1761 = vpop.f32.mrf.mxu0
      %v1762 = vpop.f32.mrf.mxu0
      %v1763 = vadd.f32 0.0, %v1762
      %v1764 = vpop.f32.mrf.mxu0
      %1765 = vmatprep.mubr.bf16.mxu0 %v1023
      %1766 = vmatmul.mubr.bf16.gmra.mxu0 %v1022
      %v1767 = vpop.f32.mrf.mxu0
      %v1768 = vadd.f32 0.0, %v1767
      %v1769 = vpop.f32.mrf.mxu0
      %v1770 = vpop.f32.mrf.mxu0
      %v1771 = vadd.f32 0.0, %v1770
      %v1772 = vpop.f32.mrf.mxu0
      %1773 = vmatprep.mubr.bf16.mxu0 %v1032
      %1774 = vmatmul.mubr.bf16.gmra.mxu0 %v1031
      %v1775 = vpop.f32.mrf.mxu0
      %v1776 = vadd.f32 0.0, %v1775
      %v1777 = vpop.f32.mrf.mxu0
      %v1778 = vpop.f32.mrf.mxu0
      %v1779 = vadd.f32 0.0, %v1778
      %v1780 = vpop.f32.mrf.mxu0
      %1781 = vmatprep.mubr.bf16.mxu0 %v1041
      %1782 = vmatmul.mubr.bf16.gmra.mxu0 %v1040
      %v1783 = vpop.f32.mrf.mxu0
      %v1784 = vadd.f32 0.0, %v1783
      %v1785 = vpop.f32.mrf.mxu0
      %v1786 = vpop.f32.mrf.mxu0
      %v1787 = vadd.f32 0.0, %v1786
      %v1788 = vpop.f32.mrf.mxu0
      %1789 = vmatprep.mubr.bf16.mxu0 %v1050
      %1790 = vmatmul.mubr.bf16.gmra.mxu0 %v1049
      %v1791 = vpop.f32.mrf.mxu0
      %v1792 = vadd.f32 0.0, %v1791
      %v1793 = vpop.f32.mrf.mxu0
      %v1794 = vpop.f32.mrf.mxu0
      %v1795 = vadd.f32 0.0, %v1794
      %v1796 = vpop.f32.mrf.mxu0
      %1797 = vmatprep.mubr.bf16.mxu0 %v1059
      %1798 = vmatmul.mubr.bf16.gmra.mxu0 %v1058
      %v1799 = vpop.f32.mrf.mxu0
      %v1800 = vadd.f32 0.0, %v1799
      %v1801 = vpop.f32.mrf.mxu0
      %v1802 = vpop.f32.mrf.mxu0
      %v1803 = vadd.f32 0.0, %v1802
      %v1804 = vpop.f32.mrf.mxu0
      %1805 = vmatprep.mubr.bf16.mxu0 %v1068
      %1806 = vmatmul.mubr.bf16.gmra.mxu0 %v1067
      %v1807 = vpop.f32.mrf.mxu0
      %v1808 = vadd.f32 0.0, %v1807
      %v1809 = vpop.f32.mrf.mxu0
      %v1810 = vpop.f32.mrf.mxu0
      %v1811 = vadd.f32 0.0, %v1810
      %v1812 = vpop.f32.mrf.mxu0
      %1813 = vmatprep.mubr.bf16.mxu0 %v1077
      %1814 = vmatmul.mubr.bf16.gmra.mxu0 %v1076
      %v1815 = vpop.f32.mrf.mxu0
      %v1816 = vadd.f32 0.0, %v1815
      %v1817 = vpop.f32.mrf.mxu0
      %v1818 = vpop.f32.mrf.mxu0
      %v1819 = vadd.f32 0.0, %v1818
      %v1820 = vpop.f32.mrf.mxu0
      %1821 = vdwg.mxu0
      %1822 = vmatprep.subr.bf16.mxu0 0
      %1823 = vmatpush1.bf16.msra.mxu0 %v1540
      %1824 = vmatprep.subr.bf16.mxu0 0
      %1825 = vmatpush1.bf16.msra.mxu0 %v1539
      %1826 = vmatprep.subr.bf16.mxu0 0
      %1827 = vmatpush1.bf16.msra.mxu0 %v1538
      %1828 = vmatprep.subr.bf16.mxu0 0
      %1829 = vmatpush1.bf16.msra.mxu0 %v1537
      %1830 = vmatprep.subr.bf16.mxu0 0
      %1831 = vmatpush1.bf16.msra.mxu0 %v1536
      %1832 = vmatprep.subr.bf16.mxu0 0
      %1833 = vmatpush1.bf16.msra.mxu0 %v1535
      %1834 = vmatprep.subr.bf16.mxu0 0
      %1835 = vmatpush1.bf16.msra.mxu0 %v1534
      %1836 = vmatprep.subr.bf16.mxu0 0
      %1837 = vmatpush1.bf16.msra.mxu0 %v1533
      %1838 = vmatprep.subr.bf16.mxu0 0
      %1839 = vmatpush2.bf16.msra.mxu0 %v1548
      %1840 = vmatprep.subr.bf16.mxu0 0
      %1841 = vmatpush2.bf16.msra.mxu0 %v1547
      %1842 = vmatprep.subr.bf16.mxu0 0
      %1843 = vmatpush2.bf16.msra.mxu0 %v1546
      %1844 = vmatprep.subr.bf16.mxu0 0
      %1845 = vmatpush2.bf16.msra.mxu0 %v1545
      %1846 = vmatprep.subr.bf16.mxu0 0
      %1847 = vmatpush2.bf16.msra.mxu0 %v1544
      %1848 = vmatprep.subr.bf16.mxu0 0
      %1849 = vmatpush2.bf16.msra.mxu0 %v1543
      %1850 = vmatprep.subr.bf16.mxu0 0
      %1851 = vmatpush2.bf16.msra.mxu0 %v1542
      %1852 = vmatprep.subr.bf16.mxu0 0
      %1853 = vmatpush2.bf16.msra.mxu0 %v1541
      %1854 = vmatprep.mubr.bf16.mxu0 %v944
      %1855 = vmatmul.mubr.bf16.gmra.mxu0 %v943
      %v1856 = vpop.f32.mrf.mxu0
      %v1857 = vadd.f32 %v1696, %v1856
      %v1858 = vpop.f32.mrf.mxu0
      %v1859 = vpop.f32.mrf.mxu0
      %v1860 = vadd.f32 %v1699, %v1859
      %v1861 = vpop.f32.mrf.mxu0
      %1862 = vmatprep.mubr.bf16.mxu0 %v953
      %1863 = vmatmul.mubr.bf16.gmra.mxu0 %v952
      %v1864 = vpop.f32.mrf.mxu0
      %v1865 = vadd.f32 %v1704, %v1864
      %v1866 = vpop.f32.mrf.mxu0
      %v1867 = vpop.f32.mrf.mxu0
      %v1868 = vadd.f32 %v1707, %v1867
      %v1869 = vpop.f32.mrf.mxu0
      %1870 = vmatprep.mubr.bf16.mxu0 %v962
      %1871 = vmatmul.mubr.bf16.gmra.mxu0 %v961
      %v1872 = vpop.f32.mrf.mxu0
      %v1873 = vadd.f32 %v1712, %v1872
      %v1874 = vpop.f32.mrf.mxu0
      %v1875 = vpop.f32.mrf.mxu0
      %v1876 = vadd.f32 %v1715, %v1875
      %v1877 = vpop.f32.mrf.mxu0
      %1878 = vmatprep.mubr.bf16.mxu0 %v971
      %1879 = vmatmul.mubr.bf16.gmra.mxu0 %v970
      %v1880 = vpop.f32.mrf.mxu0
      %v1881 = vadd.f32 %v1720, %v1880
      %v1882 = vpop.f32.mrf.mxu0
      %v1883 = vpop.f32.mrf.mxu0
      %v1884 = vadd.f32 %v1723, %v1883
      %v1885 = vpop.f32.mrf.mxu0
      %1886 = vmatprep.mubr.bf16.mxu0 %v980
      %1887 = vmatmul.mubr.bf16.gmra.mxu0 %v979
      %v1888 = vpop.f32.mrf.mxu0
      %v1889 = vadd.f32 %v1728, %v1888
      %v1890 = vpop.f32.mrf.mxu0
      %v1891 = vpop.f32.mrf.mxu0
      %v1892 = vadd.f32 %v1731, %v1891
      %v1893 = vpop.f32.mrf.mxu0
      %1894 = vmatprep.mubr.bf16.mxu0 %v989
      %1895 = vmatmul.mubr.bf16.gmra.mxu0 %v988
      %v1896 = vpop.f32.mrf.mxu0
      %v1897 = vadd.f32 %v1736, %v1896
      %v1898 = vpop.f32.mrf.mxu0
      %v1899 = vpop.f32.mrf.mxu0
      %v1900 = vadd.f32 %v1739, %v1899
      %v1901 = vpop.f32.mrf.mxu0
      %1902 = vmatprep.mubr.bf16.mxu0 %v998
      %1903 = vmatmul.mubr.bf16.gmra.mxu0 %v997
      %v1904 = vpop.f32.mrf.mxu0
      %v1905 = vadd.f32 %v1744, %v1904
      %v1906 = vpop.f32.mrf.mxu0
      %v1907 = vpop.f32.mrf.mxu0
      %v1908 = vadd.f32 %v1747, %v1907
      %v1909 = vpop.f32.mrf.mxu0
      %1910 = vmatprep.mubr.bf16.mxu0 %v1007
      %1911 = vmatmul.mubr.bf16.gmra.mxu0 %v1006
      %v1912 = vpop.f32.mrf.mxu0
      %v1913 = vadd.f32 %v1752, %v1912
      %v1914 = vpop.f32.mrf.mxu0
      %v1915 = vpop.f32.mrf.mxu0
      %v1916 = vadd.f32 %v1755, %v1915
      %v1917 = vpop.f32.mrf.mxu0
      %1918 = vmatprep.mubr.bf16.mxu0 %v1016
      %1919 = vmatmul.mubr.bf16.gmra.mxu0 %v1015
      %v1920 = vpop.f32.mrf.mxu0
      %v1921 = vadd.f32 %v1760, %v1920
      %v1922 = vpop.f32.mrf.mxu0
      %v1923 = vpop.f32.mrf.mxu0
      %v1924 = vadd.f32 %v1763, %v1923
      %v1925 = vpop.f32.mrf.mxu0
      %1926 = vmatprep.mubr.bf16.mxu0 %v1025
      %1927 = vmatmul.mubr.bf16.gmra.mxu0 %v1024
      %v1928 = vpop.f32.mrf.mxu0
      %v1929 = vadd.f32 %v1768, %v1928
      %v1930 = vpop.f32.mrf.mxu0
      %v1931 = vpop.f32.mrf.mxu0
      %v1932 = vadd.f32 %v1771, %v1931
      %v1933 = vpop.f32.mrf.mxu0
      %1934 = vmatprep.mubr.bf16.mxu0 %v1034
      %1935 = vmatmul.mubr.bf16.gmra.mxu0 %v1033
      %v1936 = vpop.f32.mrf.mxu0
      %v1937 = vadd.f32 %v1776, %v1936
      %v1938 = vpop.f32.mrf.mxu0
      %v1939 = vpop.f32.mrf.mxu0
      %v1940 = vadd.f32 %v1779, %v1939
      %v1941 = vpop.f32.mrf.mxu0
      %1942 = vmatprep.mubr.bf16.mxu0 %v1043
      %1943 = vmatmul.mubr.bf16.gmra.mxu0 %v1042
      %v1944 = vpop.f32.mrf.mxu0
      %v1945 = vadd.f32 %v1784, %v1944
      %v1946 = vpop.f32.mrf.mxu0
      %v1947 = vpop.f32.mrf.mxu0
      %v1948 = vadd.f32 %v1787, %v1947
      %v1949 = vpop.f32.mrf.mxu0
      %1950 = vmatprep.mubr.bf16.mxu0 %v1052
      %1951 = vmatmul.mubr.bf16.gmra.mxu0 %v1051
      %v1952 = vpop.f32.mrf.mxu0
      %v1953 = vadd.f32 %v1792, %v1952
      %v1954 = vpop.f32.mrf.mxu0
      %v1955 = vpop.f32.mrf.mxu0
      %v1956 = vadd.f32 %v1795, %v1955
      %v1957 = vpop.f32.mrf.mxu0
      %1958 = vmatprep.mubr.bf16.mxu0 %v1061
      %1959 = vmatmul.mubr.bf16.gmra.mxu0 %v1060
      %v1960 = vpop.f32.mrf.mxu0
      %v1961 = vadd.f32 %v1800, %v1960
      %v1962 = vpop.f32.mrf.mxu0
      %v1963 = vpop.f32.mrf.mxu0
      %v1964 = vadd.f32 %v1803, %v1963
      %v1965 = vpop.f32.mrf.mxu0
      %1966 = vmatprep.mubr.bf16.mxu0 %v1070
      %1967 = vmatmul.mubr.bf16.gmra.mxu0 %v1069
      %v1968 = vpop.f32.mrf.mxu0
      %v1969 = vadd.f32 %v1808, %v1968
      %v1970 = vpop.f32.mrf.mxu0
      %v1971 = vpop.f32.mrf.mxu0
      %v1972 = vadd.f32 %v1811, %v1971
      %v1973 = vpop.f32.mrf.mxu0
      %1974 = vmatprep.mubr.bf16.mxu0 %v1079
      %1975 = vmatmul.mubr.bf16.gmra.mxu0 %v1078
      %v1976 = vpop.f32.mrf.mxu0
      %v1977 = vadd.f32 %v1816, %v1976
      %v1978 = vpop.f32.mrf.mxu0
      %v1979 = vpop.f32.mrf.mxu0
      %v1980 = vadd.f32 %v1819, %v1979
      %v1981 = vpop.f32.mrf.mxu0
      %1982 = vdwg.mxu0
      %1983 = vmatprep.subr.bf16.mxu0 0
      %1984 = vmatpush1.bf16.msra.mxu0 %v1556
      %1985 = vmatprep.subr.bf16.mxu0 0
      %1986 = vmatpush1.bf16.msra.mxu0 %v1555
      %1987 = vmatprep.subr.bf16.mxu0 0
      %1988 = vmatpush1.bf16.msra.mxu0 %v1554
      %1989 = vmatprep.subr.bf16.mxu0 0
      %1990 = vmatpush1.bf16.msra.mxu0 %v1553
      %1991 = vmatprep.subr.bf16.mxu0 0
      %1992 = vmatpush1.bf16.msra.mxu0 %v1552
      %1993 = vmatprep.subr.bf16.mxu0 0
      %1994 = vmatpush1.bf16.msra.mxu0 %v1551
      %1995 = vmatprep.subr.bf16.mxu0 0
      %1996 = vmatpush1.bf16.msra.mxu0 %v1550
      %1997 = vmatprep.subr.bf16.mxu0 0
      %1998 = vmatpush1.bf16.msra.mxu0 %v1549
      %1999 = vmatprep.subr.bf16.mxu0 0
      %2000 = vmatpush2.bf16.msra.mxu0 %v1564
      %2001 = vmatprep.subr.bf16.mxu0 0
      %2002 = vmatpush2.bf16.msra.mxu0 %v1563
      %2003 = vmatprep.subr.bf16.mxu0 0
      %2004 = vmatpush2.bf16.msra.mxu0 %v1562
      %2005 = vmatprep.subr.bf16.mxu0 0
      %2006 = vmatpush2.bf16.msra.mxu0 %v1561
      %2007 = vmatprep.subr.bf16.mxu0 0
      %2008 = vmatpush2.bf16.msra.mxu0 %v1560
      %2009 = vmatprep.subr.bf16.mxu0 0
      %2010 = vmatpush2.bf16.msra.mxu0 %v1559
      %2011 = vmatprep.subr.bf16.mxu0 0
      %2012 = vmatpush2.bf16.msra.mxu0 %v1558
      %2013 = vmatprep.subr.bf16.mxu0 0
      %2014 = vmatpush2.bf16.msra.mxu0 %v1557
      %2015 = vmatprep.mubr.bf16.mxu0 %v946
      %2016 = vmatmul.mubr.bf16.gmra.mxu0 %v945
      %v2017 = vpop.f32.mrf.mxu0
      %v2018 = vadd.f32 %v1857, %v2017
      %v2019 = vpop.f32.mrf.mxu0
      %v2020 = vpop.f32.mrf.mxu0
      %v2021 = vadd.f32 %v1860, %v2020
      %v2022 = vpop.f32.mrf.mxu0
      %2023 = vmatprep.mubr.bf16.mxu0 %v955
      %2024 = vmatmul.mubr.bf16.gmra.mxu0 %v954
      %v2025 = vpop.f32.mrf.mxu0
      %v2026 = vadd.f32 %v1865, %v2025
      %v2027 = vpop.f32.mrf.mxu0
      %v2028 = vpop.f32.mrf.mxu0
      %v2029 = vadd.f32 %v1868, %v2028
      %v2030 = vpop.f32.mrf.mxu0
      %2031 = vmatprep.mubr.bf16.mxu0 %v964
      %2032 = vmatmul.mubr.bf16.gmra.mxu0 %v963
      %v2033 = vpop.f32.mrf.mxu0
      %v2034 = vadd.f32 %v1873, %v2033
      %v2035 = vpop.f32.mrf.mxu0
      %v2036 = vpop.f32.mrf.mxu0
      %v2037 = vadd.f32 %v1876, %v2036
      %v2038 = vpop.f32.mrf.mxu0
      %2039 = vmatprep.mubr.bf16.mxu0 %v973
      %2040 = vmatmul.mubr.bf16.gmra.mxu0 %v972
      %v2041 = vpop.f32.mrf.mxu0
      %v2042 = vadd.f32 %v1881, %v2041
      %v2043 = vpop.f32.mrf.mxu0
      %v2044 = vpop.f32.mrf.mxu0
      %v2045 = vadd.f32 %v1884, %v2044
      %v2046 = vpop.f32.mrf.mxu0
      %2047 = vmatprep.mubr.bf16.mxu0 %v982
      %2048 = vmatmul.mubr.bf16.gmra.mxu0 %v981
      %v2049 = vpop.f32.mrf.mxu0
      %v2050 = vadd.f32 %v1889, %v2049
      %v2051 = vpop.f32.mrf.mxu0
      %v2052 = vpop.f32.mrf.mxu0
      %v2053 = vadd.f32 %v1892, %v2052
      %v2054 = vpop.f32.mrf.mxu0
      %2055 = vmatprep.mubr.bf16.mxu0 %v991
      %2056 = vmatmul.mubr.bf16.gmra.mxu0 %v990
      %v2057 = vpop.f32.mrf.mxu0
      %v2058 = vadd.f32 %v1897, %v2057
      %v2059 = vpop.f32.mrf.mxu0
      %v2060 = vpop.f32.mrf.mxu0
      %v2061 = vadd.f32 %v1900, %v2060
      %v2062 = vpop.f32.mrf.mxu0
      %2063 = vmatprep.mubr.bf16.mxu0 %v1000
      %2064 = vmatmul.mubr.bf16.gmra.mxu0 %v999
      %v2065 = vpop.f32.mrf.mxu0
      %v2066 = vadd.f32 %v1905, %v2065
      %v2067 = vpop.f32.mrf.mxu0
      %v2068 = vpop.f32.mrf.mxu0
      %v2069 = vadd.f32 %v1908, %v2068
      %v2070 = vpop.f32.mrf.mxu0
      %2071 = vmatprep.mubr.bf16.mxu0 %v1009
      %2072 = vmatmul.mubr.bf16.gmra.mxu0 %v1008
      %v2073 = vpop.f32.mrf.mxu0
      %v2074 = vadd.f32 %v1913, %v2073
      %v2075 = vpop.f32.mrf.mxu0
      %v2076 = vpop.f32.mrf.mxu0
      %v2077 = vadd.f32 %v1916, %v2076
      %v2078 = vpop.f32.mrf.mxu0
      %2079 = vmatprep.mubr.bf16.mxu0 %v1018
      %2080 = vmatmul.mubr.bf16.gmra.mxu0 %v1017
      %v2081 = vpop.f32.mrf.mxu0
      %v2082 = vadd.f32 %v1921, %v2081
      %v2083 = vpop.f32.mrf.mxu0
      %v2084 = vpop.f32.mrf.mxu0
      %v2085 = vadd.f32 %v1924, %v2084
      %v2086 = vpop.f32.mrf.mxu0
      %2087 = vmatprep.mubr.bf16.mxu0 %v1027
      %2088 = vmatmul.mubr.bf16.gmra.mxu0 %v1026
      %v2089 = vpop.f32.mrf.mxu0
      %v2090 = vadd.f32 %v1929, %v2089
      %v2091 = vpop.f32.mrf.mxu0
      %v2092 = vpop.f32.mrf.mxu0
      %v2093 = vadd.f32 %v1932, %v2092
      %v2094 = vpop.f32.mrf.mxu0
      %2095 = vmatprep.mubr.bf16.mxu0 %v1036
      %2096 = vmatmul.mubr.bf16.gmra.mxu0 %v1035
      %v2097 = vpop.f32.mrf.mxu0
      %v2098 = vadd.f32 %v1937, %v2097
      %v2099 = vpop.f32.mrf.mxu0
      %v2100 = vpop.f32.mrf.mxu0
      %v2101 = vadd.f32 %v1940, %v2100
      %v2102 = vpop.f32.mrf.mxu0
      %2103 = vmatprep.mubr.bf16.mxu0 %v1045
      %2104 = vmatmul.mubr.bf16.gmra.mxu0 %v1044
      %v2105 = vpop.f32.mrf.mxu0
      %v2106 = vadd.f32 %v1945, %v2105
      %v2107 = vpop.f32.mrf.mxu0
      %v2108 = vpop.f32.mrf.mxu0
      %v2109 = vadd.f32 %v1948, %v2108
      %v2110 = vpop.f32.mrf.mxu0
      %2111 = vmatprep.mubr.bf16.mxu0 %v1054
      %2112 = vmatmul.mubr.bf16.gmra.mxu0 %v1053
      %v2113 = vpop.f32.mrf.mxu0
      %v2114 = vadd.f32 %v1953, %v2113
      %v2115 = vpop.f32.mrf.mxu0
      %v2116 = vpop.f32.mrf.mxu0
      %v2117 = vadd.f32 %v1956, %v2116
      %v2118 = vpop.f32.mrf.mxu0
      %2119 = vmatprep.mubr.bf16.mxu0 %v1063
      %2120 = vmatmul.mubr.bf16.gmra.mxu0 %v1062
      %v2121 = vpop.f32.mrf.mxu0
      %v2122 = vadd.f32 %v1961, %v2121
      %v2123 = vpop.f32.mrf.mxu0
      %v2124 = vpop.f32.mrf.mxu0
      %v2125 = vadd.f32 %v1964, %v2124
      %v2126 = vpop.f32.mrf.mxu0
      %2127 = vmatprep.mubr.bf16.mxu0 %v1072
      %2128 = vmatmul.mubr.bf16.gmra.mxu0 %v1071
      %v2129 = vpop.f32.mrf.mxu0
      %v2130 = vadd.f32 %v1969, %v2129
      %v2131 = vpop.f32.mrf.mxu0
      %v2132 = vpop.f32.mrf.mxu0
      %v2133 = vadd.f32 %v1972, %v2132
      %v2134 = vpop.f32.mrf.mxu0
      %2135 = vmatprep.mubr.bf16.mxu0 %v1081
      %2136 = vmatmul.mubr.bf16.gmra.mxu0 %v1080
      %v2137 = vpop.f32.mrf.mxu0
      %v2138 = vadd.f32 %v1977, %v2137
      %v2139 = vpop.f32.mrf.mxu0
      %v2140 = vpop.f32.mrf.mxu0
      %v2141 = vadd.f32 %v1980, %v2140
      %v2142 = vpop.f32.mrf.mxu0
      %2143 = vdwg.mxu0
      %2144 = vmatprep.subr.bf16.mxu0 0
      %2145 = vmatpush1.bf16.msra.mxu0 %v1572
      %2146 = vmatprep.subr.bf16.mxu0 0
      %2147 = vmatpush1.bf16.msra.mxu0 %v1571
      %2148 = vmatprep.subr.bf16.mxu0 0
      %2149 = vmatpush1.bf16.msra.mxu0 %v1570
      %2150 = vmatprep.subr.bf16.mxu0 0
      %2151 = vmatpush1.bf16.msra.mxu0 %v1569
      %2152 = vmatprep.subr.bf16.mxu0 0
      %2153 = vmatpush1.bf16.msra.mxu0 %v1568
      %2154 = vmatprep.subr.bf16.mxu0 0
      %2155 = vmatpush1.bf16.msra.mxu0 %v1567
      %2156 = vmatprep.subr.bf16.mxu0 0
      %2157 = vmatpush1.bf16.msra.mxu0 %v1566
      %2158 = vmatprep.subr.bf16.mxu0 0
      %2159 = vmatpush1.bf16.msra.mxu0 %v1565
      %2160 = vmatprep.subr.bf16.mxu0 0
      %2161 = vmatpush2.bf16.msra.mxu0 %v1580
      %2162 = vmatprep.subr.bf16.mxu0 0
      %2163 = vmatpush2.bf16.msra.mxu0 %v1579
      %2164 = vmatprep.subr.bf16.mxu0 0
      %2165 = vmatpush2.bf16.msra.mxu0 %v1578
      %2166 = vmatprep.subr.bf16.mxu0 0
      %2167 = vmatpush2.bf16.msra.mxu0 %v1577
      %2168 = vmatprep.subr.bf16.mxu0 0
      %2169 = vmatpush2.bf16.msra.mxu0 %v1576
      %2170 = vmatprep.subr.bf16.mxu0 0
      %2171 = vmatpush2.bf16.msra.mxu0 %v1575
      %2172 = vmatprep.subr.bf16.mxu0 0
      %2173 = vmatpush2.bf16.msra.mxu0 %v1574
      %2174 = vmatprep.subr.bf16.mxu0 0
      %2175 = vmatpush2.bf16.msra.mxu0 %v1573
      %2176 = vmatprep.mubr.bf16.mxu0 %v948
      %2177 = vmatmul.mubr.bf16.gmra.mxu0 %v947
      %v2178 = vpop.f32.mrf.mxu0
      %v2179 = vadd.f32 %v2018, %v2178
      %v2180 = vpop.f32.mrf.mxu0
      %v2181 = vpop.f32.mrf.mxu0
      %v2182 = vadd.f32 %v2021, %v2181
      %v2183 = vpop.f32.mrf.mxu0
      %2184 = vmatprep.mubr.bf16.mxu0 %v957
      %2185 = vmatmul.mubr.bf16.gmra.mxu0 %v956
      %v2186 = vpop.f32.mrf.mxu0
      %v2187 = vadd.f32 %v2026, %v2186
      %v2188 = vpop.f32.mrf.mxu0
      %v2189 = vpop.f32.mrf.mxu0
      %v2190 = vadd.f32 %v2029, %v2189
      %v2191 = vpop.f32.mrf.mxu0
      %2192 = vmatprep.mubr.bf16.mxu0 %v966
      %2193 = vmatmul.mubr.bf16.gmra.mxu0 %v965
      %v2194 = vpop.f32.mrf.mxu0
      %v2195 = vadd.f32 %v2034, %v2194
      %v2196 = vpop.f32.mrf.mxu0
      %v2197 = vpop.f32.mrf.mxu0
      %v2198 = vadd.f32 %v2037, %v2197
      %v2199 = vpop.f32.mrf.mxu0
      %2200 = vmatprep.mubr.bf16.mxu0 %v975
      %2201 = vmatmul.mubr.bf16.gmra.mxu0 %v974
      %v2202 = vpop.f32.mrf.mxu0
      %v2203 = vadd.f32 %v2042, %v2202
      %v2204 = vpop.f32.mrf.mxu0
      %v2205 = vpop.f32.mrf.mxu0
      %v2206 = vadd.f32 %v2045, %v2205
      %v2207 = vpop.f32.mrf.mxu0
      %2208 = vmatprep.mubr.bf16.mxu0 %v984
      %2209 = vmatmul.mubr.bf16.gmra.mxu0 %v983
      %v2210 = vpop.f32.mrf.mxu0
      %v2211 = vadd.f32 %v2050, %v2210
      %v2212 = vpop.f32.mrf.mxu0
      %v2213 = vpop.f32.mrf.mxu0
      %v2214 = vadd.f32 %v2053, %v2213
      %v2215 = vpop.f32.mrf.mxu0
      %2216 = vmatprep.mubr.bf16.mxu0 %v993
      %2217 = vmatmul.mubr.bf16.gmra.mxu0 %v992
      %v2218 = vpop.f32.mrf.mxu0
      %v2219 = vadd.f32 %v2058, %v2218
      %v2220 = vpop.f32.mrf.mxu0
      %v2221 = vpop.f32.mrf.mxu0
      %v2222 = vadd.f32 %v2061, %v2221
      %v2223 = vpop.f32.mrf.mxu0
      %2224 = vmatprep.mubr.bf16.mxu0 %v1002
      %2225 = vmatmul.mubr.bf16.gmra.mxu0 %v1001
      %v2226 = vpop.f32.mrf.mxu0
      %v2227 = vadd.f32 %v2066, %v2226
      %v2228 = vpop.f32.mrf.mxu0
      %v2229 = vpop.f32.mrf.mxu0
      %v2230 = vadd.f32 %v2069, %v2229
      %v2231 = vpop.f32.mrf.mxu0
      %2232 = vmatprep.mubr.bf16.mxu0 %v1011
      %2233 = vmatmul.mubr.bf16.gmra.mxu0 %v1010
      %v2234 = vpop.f32.mrf.mxu0
      %v2235 = vadd.f32 %v2074, %v2234
      %v2236 = vpop.f32.mrf.mxu0
      %v2237 = vpop.f32.mrf.mxu0
      %v2238 = vadd.f32 %v2077, %v2237
      %v2239 = vpop.f32.mrf.mxu0
      %2240 = vmatprep.mubr.bf16.mxu0 %v1020
      %2241 = vmatmul.mubr.bf16.gmra.mxu0 %v1019
      %v2242 = vpop.f32.mrf.mxu0
      %v2243 = vadd.f32 %v2082, %v2242
      %v2244 = vpop.f32.mrf.mxu0
      %v2245 = vpop.f32.mrf.mxu0
      %v2246 = vadd.f32 %v2085, %v2245
      %v2247 = vpop.f32.mrf.mxu0
      %2248 = vmatprep.mubr.bf16.mxu0 %v1029
      %2249 = vmatmul.mubr.bf16.gmra.mxu0 %v1028
      %v2250 = vpop.f32.mrf.mxu0
      %v2251 = vadd.f32 %v2090, %v2250
      %v2252 = vpop.f32.mrf.mxu0
      %v2253 = vpop.f32.mrf.mxu0
      %v2254 = vadd.f32 %v2093, %v2253
      %v2255 = vpop.f32.mrf.mxu0
      %2256 = vmatprep.mubr.bf16.mxu0 %v1038
      %2257 = vmatmul.mubr.bf16.gmra.mxu0 %v1037
      %v2258 = vpop.f32.mrf.mxu0
      %v2259 = vadd.f32 %v2098, %v2258
      %v2260 = vpop.f32.mrf.mxu0
      %v2261 = vpop.f32.mrf.mxu0
      %v2262 = vadd.f32 %v2101, %v2261
      %v2263 = vpop.f32.mrf.mxu0
      %2264 = vmatprep.mubr.bf16.mxu0 %v1047
      %2265 = vmatmul.mubr.bf16.gmra.mxu0 %v1046
      %v2266 = vpop.f32.mrf.mxu0
      %v2267 = vadd.f32 %v2106, %v2266
      %v2268 = vpop.f32.mrf.mxu0
      %v2269 = vpop.f32.mrf.mxu0
      %v2270 = vadd.f32 %v2109, %v2269
      %v2271 = vpop.f32.mrf.mxu0
      %2272 = vmatprep.mubr.bf16.mxu0 %v1056
      %2273 = vmatmul.mubr.bf16.gmra.mxu0 %v1055
      %v2274 = vpop.f32.mrf.mxu0
      %v2275 = vadd.f32 %v2114, %v2274
      %v2276 = vpop.f32.mrf.mxu0
      %v2277 = vpop.f32.mrf.mxu0
      %v2278 = vadd.f32 %v2117, %v2277
      %v2279 = vpop.f32.mrf.mxu0
      %2280 = vmatprep.mubr.bf16.mxu0 %v1065
      %2281 = vmatmul.mubr.bf16.gmra.mxu0 %v1064
      %v2282 = vpop.f32.mrf.mxu0
      %v2283 = vadd.f32 %v2122, %v2282
      %v2284 = vpop.f32.mrf.mxu0
      %v2285 = vpop.f32.mrf.mxu0
      %v2286 = vadd.f32 %v2125, %v2285
      %v2287 = vpop.f32.mrf.mxu0
      %2288 = vmatprep.mubr.bf16.mxu0 %v1074
      %2289 = vmatmul.mubr.bf16.gmra.mxu0 %v1073
      %v2290 = vpop.f32.mrf.mxu0
      %v2291 = vadd.f32 %v2130, %v2290
      %v2292 = vpop.f32.mrf.mxu0
      %v2293 = vpop.f32.mrf.mxu0
      %v2294 = vadd.f32 %v2133, %v2293
      %v2295 = vpop.f32.mrf.mxu0
      %2296 = vmatprep.mubr.bf16.mxu0 %v1083
      %2297 = vmatmul.mubr.bf16.gmra.mxu0 %v1082
      %v2298 = vpop.f32.mrf.mxu0
      %v2299 = vadd.f32 %v2138, %v2298
      %v2300 = vpop.f32.mrf.mxu0
      %v2301 = vpop.f32.mrf.mxu0
      %v2302 = vadd.f32 %v2141, %v2301
      %v2303 = vpop.f32.mrf.mxu0
      %2304 = vdwg.mxu0
      %2305 = vmatprep.subr.bf16.mxu0 0
      %2306 = vmatpush1.bf16.msra.mxu0 %v1588
      %2307 = vmatprep.subr.bf16.mxu0 0
      %2308 = vmatpush1.bf16.msra.mxu0 %v1587
      %2309 = vmatprep.subr.bf16.mxu0 0
      %2310 = vmatpush1.bf16.msra.mxu0 %v1586
      %2311 = vmatprep.subr.bf16.mxu0 0
      %2312 = vmatpush1.bf16.msra.mxu0 %v1585
      %2313 = vmatprep.subr.bf16.mxu0 0
      %2314 = vmatpush1.bf16.msra.mxu0 %v1584
      %2315 = vmatprep.subr.bf16.mxu0 0
      %2316 = vmatpush1.bf16.msra.mxu0 %v1583
      %2317 = vmatprep.subr.bf16.mxu0 0
      %2318 = vmatpush1.bf16.msra.mxu0 %v1582
      %2319 = vmatprep.subr.bf16.mxu0 0
      %2320 = vmatpush1.bf16.msra.mxu0 %v1581
      %2321 = vmatprep.subr.bf16.mxu0 0
      %2322 = vmatpush2.bf16.msra.mxu0 0
      %2323 = vmatprep.subr.bf16.mxu0 0
      %2324 = vmatpush2.bf16.msra.mxu0 0
      %2325 = vmatprep.subr.bf16.mxu0 0
      %2326 = vmatpush2.bf16.msra.mxu0 0
      %2327 = vmatprep.subr.bf16.mxu0 0
      %2328 = vmatpush2.bf16.msra.mxu0 0
      %2329 = vmatprep.subr.bf16.mxu0 0
      %2330 = vmatpush2.bf16.msra.mxu0 0
      %2331 = vmatprep.subr.bf16.mxu0 0
      %2332 = vmatpush2.bf16.msra.mxu0 0
      %2333 = vmatprep.subr.bf16.mxu0 0
      %2334 = vmatpush2.bf16.msra.mxu0 0
      %2335 = vmatprep.subr.bf16.mxu0 0
      %2336 = vmatpush2.bf16.msra.mxu0 0
      %2337 = vmatprep.mubr.bf16.mxu0 0
      %2338 = vmatmul.mubr.bf16.gmra.mxu0 %v949
      %v2339 = vpop.f32.mrf.mxu0
      %v2340 = vadd.f32 %v2179, %v2339
      %v2341 = vpop.f32.mrf.mxu0
      %v2342 = vpop.f32.mrf.mxu0
      %v2343 = vadd.f32 %v2182, %v2342
      %v2344 = vpop.f32.mrf.mxu0
      %2345 = vmatprep.mubr.bf16.mxu0 0
      %2346 = vmatmul.mubr.bf16.gmra.mxu0 %v958
      %v2347 = vpop.f32.mrf.mxu0
      %v2348 = vadd.f32 %v2187, %v2347
      %v2349 = vpop.f32.mrf.mxu0
      %v2350 = vpop.f32.mrf.mxu0
      %v2351 = vadd.f32 %v2190, %v2350
      %v2352 = vpop.f32.mrf.mxu0
      %2353 = vmatprep.mubr.bf16.mxu0 0
      %2354 = vmatmul.mubr.bf16.gmra.mxu0 %v967
      %v2355 = vpop.f32.mrf.mxu0
      %v2356 = vadd.f32 %v2195, %v2355
      %v2357 = vpop.f32.mrf.mxu0
      %v2358 = vpop.f32.mrf.mxu0
      %v2359 = vadd.f32 %v2198, %v2358
      %v2360 = vpop.f32.mrf.mxu0
      %2361 = vmatprep.mubr.bf16.mxu0 0
      %2362 = vmatmul.mubr.bf16.gmra.mxu0 %v976
      %v2363 = vpop.f32.mrf.mxu0
      %v2364 = vadd.f32 %v2203, %v2363
      %v2365 = vpop.f32.mrf.mxu0
      %v2366 = vpop.f32.mrf.mxu0
      %v2367 = vadd.f32 %v2206, %v2366
      %v2368 = vpop.f32.mrf.mxu0
      %2369 = vmatprep.mubr.bf16.mxu0 0
      %2370 = vmatmul.mubr.bf16.gmra.mxu0 %v985
      %v2371 = vpop.f32.mrf.mxu0
      %v2372 = vadd.f32 %v2211, %v2371
      %v2373 = vpop.f32.mrf.mxu0
      %v2374 = vpop.f32.mrf.mxu0
      %v2375 = vadd.f32 %v2214, %v2374
      %v2376 = vpop.f32.mrf.mxu0
      %2377 = vmatprep.mubr.bf16.mxu0 0
      %2378 = vmatmul.mubr.bf16.gmra.mxu0 %v994
      %v2379 = vpop.f32.mrf.mxu0
      %v2380 = vadd.f32 %v2219, %v2379
      %v2381 = vpop.f32.mrf.mxu0
      %v2382 = vpop.f32.mrf.mxu0
      %v2383 = vadd.f32 %v2222, %v2382
      %v2384 = vpop.f32.mrf.mxu0
      %2385 = vmatprep.mubr.bf16.mxu0 0
      %2386 = vmatmul.mubr.bf16.gmra.mxu0 %v1003
      %v2387 = vpop.f32.mrf.mxu0
      %v2388 = vadd.f32 %v2227, %v2387
      %v2389 = vpop.f32.mrf.mxu0
      %v2390 = vpop.f32.mrf.mxu0
      %v2391 = vadd.f32 %v2230, %v2390
      %v2392 = vpop.f32.mrf.mxu0
      %2393 = vmatprep.mubr.bf16.mxu0 0
      %2394 = vmatmul.mubr.bf16.gmra.mxu0 %v1012
      %v2395 = vpop.f32.mrf.mxu0
      %v2396 = vadd.f32 %v2235, %v2395
      %v2397 = vpop.f32.mrf.mxu0
      %v2398 = vpop.f32.mrf.mxu0
      %v2399 = vadd.f32 %v2238, %v2398
      %v2400 = vpop.f32.mrf.mxu0
      %2401 = vmatprep.mubr.bf16.mxu0 0
      %2402 = vmatmul.mubr.bf16.gmra.mxu0 %v1021
      %v2403 = vpop.f32.mrf.mxu0
      %v2404 = vadd.f32 %v2243, %v2403
      %v2405 = vpop.f32.mrf.mxu0
      %v2406 = vpop.f32.mrf.mxu0
      %v2407 = vadd.f32 %v2246, %v2406
      %v2408 = vpop.f32.mrf.mxu0
      %2409 = vmatprep.mubr.bf16.mxu0 0
      %2410 = vmatmul.mubr.bf16.gmra.mxu0 %v1030
      %v2411 = vpop.f32.mrf.mxu0
      %v2412 = vadd.f32 %v2251, %v2411
      %v2413 = vpop.f32.mrf.mxu0
      %v2414 = vpop.f32.mrf.mxu0
      %v2415 = vadd.f32 %v2254, %v2414
      %v2416 = vpop.f32.mrf.mxu0
      %2417 = vmatprep.mubr.bf16.mxu0 0
      %2418 = vmatmul.mubr.bf16.gmra.mxu0 %v1039
      %v2419 = vpop.f32.mrf.mxu0
      %v2420 = vadd.f32 %v2259, %v2419
      %v2421 = vpop.f32.mrf.mxu0
      %v2422 = vpop.f32.mrf.mxu0
      %v2423 = vadd.f32 %v2262, %v2422
      %v2424 = vpop.f32.mrf.mxu0
      %2425 = vmatprep.mubr.bf16.mxu0 0
      %2426 = vmatmul.mubr.bf16.gmra.mxu0 %v1048
      %v2427 = vpop.f32.mrf.mxu0
      %v2428 = vadd.f32 %v2267, %v2427
      %v2429 = vpop.f32.mrf.mxu0
      %v2430 = vpop.f32.mrf.mxu0
      %v2431 = vadd.f32 %v2270, %v2430
      %v2432 = vpop.f32.mrf.mxu0
      %2433 = vmatprep.mubr.bf16.mxu0 0
      %2434 = vmatmul.mubr.bf16.gmra.mxu0 %v1057
      %v2435 = vpop.f32.mrf.mxu0
      %v2436 = vadd.f32 %v2275, %v2435
      %v2437 = vpop.f32.mrf.mxu0
      %v2438 = vpop.f32.mrf.mxu0
      %v2439 = vadd.f32 %v2278, %v2438
      %v2440 = vpop.f32.mrf.mxu0
      %2441 = vmatprep.mubr.bf16.mxu0 0
      %2442 = vmatmul.mubr.bf16.gmra.mxu0 %v1066
      %v2443 = vpop.f32.mrf.mxu0
      %v2444 = vadd.f32 %v2283, %v2443
      %v2445 = vpop.f32.mrf.mxu0
      %v2446 = vpop.f32.mrf.mxu0
      %v2447 = vadd.f32 %v2286, %v2446
      %v2448 = vpop.f32.mrf.mxu0
      %2449 = vmatprep.mubr.bf16.mxu0 0
      %2450 = vmatmul.mubr.bf16.gmra.mxu0 %v1075
      %v2451 = vpop.f32.mrf.mxu0
      %v2452 = vadd.f32 %v2291, %v2451
      %v2453 = vpop.f32.mrf.mxu0
      %v2454 = vpop.f32.mrf.mxu0
      %v2455 = vadd.f32 %v2294, %v2454
      %v2456 = vpop.f32.mrf.mxu0
      %2457 = vmatprep.mubr.bf16.mxu0 0
      %2458 = vmatmul.mubr.bf16.gmra.mxu0 %v1084
      %v2459 = vpop.f32.mrf.mxu0
      %v2460 = vadd.f32 %v2299, %v2459
      %v2461 = vpop.f32.mrf.mxu0
      %v2462 = vpop.f32.mrf.mxu0
      %v2463 = vadd.f32 %v2302, %v2462
      %v2464 = vpop.f32.mrf.mxu0
      %2465 = vdwg.mxu0
      %2466 = vst [vmem:[%s182] sm:$0xff] %v2340
      %2467 = vst [vmem:[%s182 + $0x8] sm:$0xff] %v2343
      %2468 = vst [vmem:[%s182 + $0x10] sm:$0xff] %v2348
      %2469 = vst [vmem:[%s182 + $0x18] sm:$0xff] %v2351
      %2470 = vst [vmem:[%s182 + $0x20] sm:$0xff] %v2356
      %2471 = vst [vmem:[%s182 + $0x28] sm:$0xff] %v2359
      %2472 = vst [vmem:[%s182 + $0x30] sm:$0xff] %v2364
      %2473 = vst [vmem:[%s182 + $0x38] sm:$0xff] %v2367
      %2474 = vst [vmem:[%s182 + $0x40] sm:$0xff] %v2372
      %2475 = vst [vmem:[%s182 + $0x48] sm:$0xff] %v2375
      %2476 = vst [vmem:[%s182 + $0x50] sm:$0xff] %v2380
      %2477 = vst [vmem:[%s182 + $0x58] sm:$0xff] %v2383
      %2478 = vst [vmem:[%s182 + $0x60] sm:$0xff] %v2388
      %2479 = vst [vmem:[%s182 + $0x68] sm:$0xff] %v2391
      %2480 = vst [vmem:[%s182 + $0x70] sm:$0xff] %v2396
      %2481 = vst [vmem:[%s182 + $0x78] sm:$0xff] %v2399
      %2482 = vst [vmem:[%s182 + $0x80] sm:$0xff] %v2404
      %2483 = vst [vmem:[%s182 + $0x88] sm:$0xff] %v2407
      %2484 = vst [vmem:[%s182 + $0x90] sm:$0xff] %v2412
      %2485 = vst [vmem:[%s182 + $0x98] sm:$0xff] %v2415
      %2486 = vst [vmem:[%s182 + $0xa0] sm:$0xff] %v2420
      %2487 = vst [vmem:[%s182 + $0xa8] sm:$0xff] %v2423
      %2488 = vst [vmem:[%s182 + $0xb0] sm:$0xff] %v2428
      %2489 = vst [vmem:[%s182 + $0xb8] sm:$0xff] %v2431
      %2490 = vst [vmem:[%s182 + $0xc0] sm:$0xff] %v2436
      %2491 = vst [vmem:[%s182 + $0xc8] sm:$0xff] %v2439
      %2492 = vst [vmem:[%s182 + $0xd0] sm:$0xff] %v2444
      %2493 = vst [vmem:[%s182 + $0xd8] sm:$0xff] %v2447
      %2494 = vst [vmem:[%s182 + $0xe0] sm:$0xff] %v2452
      %2495 = vst [vmem:[%s182 + $0xe8] sm:$0xff] %v2455
      %2496 = vst [vmem:[%s182 + $0xf0] sm:$0xff] %v2460
      %2497 = vst [vmem:[%s182 + $0xf8] sm:$0xff] %v2463
      %v2498 = vadd.f32 %v2340, %v2343
      %v2499 = vadd.f32 %v2498, %v2348
      %v2500 = vadd.f32 %v2499, %v2351
      %v2501 = vadd.f32 %v2500, %v2356
      %v2502 = vadd.f32 %v2501, %v2359
      %v2503 = vadd.f32 %v2502, %v2364
      %v2504 = vadd.f32 %v2503, %v2367
      %v2505 = vadd.f32 %v2504, %v2372
      %v2506 = vadd.f32 %v2505, %v2375
      %v2507 = vadd.f32 %v2506, %v2380
      %v2508 = vadd.f32 %v2507, %v2383
      %v2509 = vadd.f32 %v2508, %v2388
      %v2510 = vadd.f32 %v2509, %v2391
      %v2511 = vadd.f32 %v2510, %v2396
      %v2512 = vadd.f32 %v2511, %v2399
      %v2513 = vadd.f32 %v2512, %v2404
      %v2514 = vadd.f32 %v2513, %v2407
      %v2515 = vadd.f32 %v2514, %v2412
      %v2516 = vadd.f32 %v2515, %v2415
      %v2517 = vadd.f32 %v2516, %v2420
      %v2518 = vadd.f32 %v2517, %v2423
      %v2519 = vadd.f32 %v2518, %v2428
      %v2520 = vadd.f32 %v2519, %v2431
      %v2521 = vadd.f32 %v2520, %v2436
      %v2522 = vadd.f32 %v2521, %v2439
      %v2523 = vadd.f32 %v2522, %v2444
      %v2524 = vadd.f32 %v2523, %v2447
      %v2525 = vadd.f32 %v2524, %v2452
      %v2526 = vadd.f32 %v2525, %v2455
      %v2527 = vadd.f32 %v2526, %v2460
      %v2528 = vadd.f32 %v2527, %v2463
      %v2529 = vrot.slane %v2528, 4
      %v2530 = vadd.f32 %v2528, %v2529
      %v2531 = vrot.slane %v2530, 2
      %v2532 = vadd.f32 %v2530, %v2531
      %v2533 = vrot.slane %v2532, 1
      %v2534 = vadd.f32 %v2532, %v2533
      %v2535 = vmul.f32 %v2340, %v2340
      %v2536 = vmul.f32 %v2343, %v2343
      %v2537 = vmul.f32 %v2348, %v2348
      %v2538 = vmul.f32 %v2351, %v2351
      %v2539 = vmul.f32 %v2356, %v2356
      %v2540 = vmul.f32 %v2359, %v2359
      %v2541 = vmul.f32 %v2364, %v2364
      %v2542 = vmul.f32 %v2367, %v2367
      %v2543 = vmul.f32 %v2372, %v2372
      %v2544 = vmul.f32 %v2375, %v2375
      %v2545 = vmul.f32 %v2380, %v2380
      %v2546 = vmul.f32 %v2383, %v2383
      %v2547 = vmul.f32 %v2388, %v2388
      %v2548 = vmul.f32 %v2391, %v2391
      %v2549 = vmul.f32 %v2396, %v2396
      %v2550 = vmul.f32 %v2399, %v2399
      %v2551 = vmul.f32 %v2404, %v2404
      %v2552 = vmul.f32 %v2407, %v2407
      %v2553 = vmul.f32 %v2412, %v2412
      %v2554 = vmul.f32 %v2415, %v2415
      %v2555 = vmul.f32 %v2420, %v2420
      %v2556 = vmul.f32 %v2423, %v2423
      %v2557 = vmul.f32 %v2428, %v2428
      %v2558 = vmul.f32 %v2431, %v2431
      %v2559 = vmul.f32 %v2436, %v2436
      %v2560 = vmul.f32 %v2439, %v2439
      %v2561 = vmul.f32 %v2444, %v2444
      %v2562 = vmul.f32 %v2447, %v2447
      %v2563 = vmul.f32 %v2452, %v2452
      %v2564 = vmul.f32 %v2455, %v2455
      %v2565 = vmul.f32 %v2460, %v2460
      %v2566 = vmul.f32 %v2463, %v2463
      %v2567 = vadd.f32 %v2535, %v2536
      %v2568 = vadd.f32 %v2567, %v2537
      %v2569 = vadd.f32 %v2568, %v2538
      %v2570 = vadd.f32 %v2569, %v2539
      %v2571 = vadd.f32 %v2570, %v2540
      %v2572 = vadd.f32 %v2571, %v2541
      %v2573 = vadd.f32 %v2572, %v2542
      %v2574 = vadd.f32 %v2573, %v2543
      %v2575 = vadd.f32 %v2574, %v2544
      %v2576 = vadd.f32 %v2575, %v2545
      %v2577 = vadd.f32 %v2576, %v2546
      %v2578 = vadd.f32 %v2577, %v2547
      %v2579 = vadd.f32 %v2578, %v2548
      %v2580 = vadd.f32 %v2579, %v2549
      %v2581 = vadd.f32 %v2580, %v2550
      %v2582 = vadd.f32 %v2581, %v2551
      %v2583 = vadd.f32 %v2582, %v2552
      %v2584 = vadd.f32 %v2583, %v2553
      %v2585 = vadd.f32 %v2584, %v2554
      %v2586 = vadd.f32 %v2585, %v2555
      %v2587 = vadd.f32 %v2586, %v2556
      %v2588 = vadd.f32 %v2587, %v2557
      %v2589 = vadd.f32 %v2588, %v2558
      %v2590 = vadd.f32 %v2589, %v2559
      %v2591 = vadd.f32 %v2590, %v2560
      %v2592 = vadd.f32 %v2591, %v2561
      %v2593 = vadd.f32 %v2592, %v2562
      %v2594 = vadd.f32 %v2593, %v2563
      %v2595 = vadd.f32 %v2594, %v2564
      %v2596 = vadd.f32 %v2595, %v2565
      %v2597 = vadd.f32 %v2596, %v2566
      %v2598 = vrot.slane %v2597, 4
      %v2599 = vadd.f32 %v2597, %v2598
      %v2600 = vrot.slane %v2599, 2
      %v2601 = vadd.f32 %v2599, %v2600
      %v2602 = vrot.slane %v2601, 1
      %v2603 = vadd.f32 %v2601, %v2602
      %vm2604 = vcmask 1040384
      %v2605 = vsel %vm2604, %v2534, %v2603
      %2606 = vst [vmem:[%s187] sm:$0x3] %v2605
      %s2607 = smul.u32 32, %s15
      %p2608 = scmp.lt.s32.totalorder %s2607, 63
      %s2609 = scalar_select %p2608, %s2607, 63
      %s2610 = smul.addr %s2609, 8
      %s2611 = scalar_lea.vmem %s2, %s2610
      %p2612 = scmp.lt.s32.totalorder %s15, 1
      %s2613 = scalar_select %p2612, %s15, 1
      %s2614 = smul.addr %s2613, 2
      %s2615 = scalar_lea.vmem %s3, %s2614
      // Predicated region
      $region29: #{_lambda_.20} parent=27 // pred_check
        %p2616 = pneg %p80
      $region30: #{_lambda_.20} parent=27 // pred_check_branch
        %2618 = sbr.rel (%p2616) target = $region32
      $region31: #{_lambda_.20} parent=27 // pred_region
        %s2619 = smul.u32 32, %s15
      $region32: #{_lambda_.20} parent=27 // pred_fallthru
        _
      // Predicated region
      $region33: #{_lambda_.20} parent=27 // pred_check
        %p2620 = pneg %p106
      $region34: #{_lambda_.20} parent=27 // pred_check_branch
        %2622 = sbr.rel (%p2620) target = $region36
      $region35: #{_lambda_.20} parent=27 // pred_region
        _
      $region36: #{_lambda_.20} parent=27 // pred_fallthru
        _
    $region28: #{_lambda_.20} parent=5 // pred_fallthru
      _
    %p2623 = scmp.le.s32.totalorder 2, %s10
    // Predicated region
    $region37: #{_lambda_.20} parent=5 // pred_check
      %p2624 = pneg %p2623
    $region38: #{_lambda_.20} parent=5 // pred_check_branch
      %2626 = sbr.rel (%p2624) target = $region40
    $region39: #{_lambda_.20} parent=5 // pred_region
      %s2627 = ssub.s32 %s10, 2
      // Predicated region
      $region41: #{_lambda_.20} parent=39 // pred_check
        %p2628 = pneg %p86
      $region42: #{_lambda_.20} parent=39 // pred_check_branch
        %2630 = sbr.rel (%p2628) target = $region44
      $region43: #{_lambda_.20} parent=39 // pred_region
        %s2631 = smul.u32 32, %s16
        %p2632 = scmp.lt.s32.totalorder %s2631, 63
        %s2633 = scalar_select %p2632, %s2631, 63
        %s2634 = smul.addr %s2633, 8
        %s2635 = scalar_lea.vmem %s2, %s2634
      $region44: #{_lambda_.20} parent=39 // pred_fallthru
        _
      // Predicated region
      $region45: #{_lambda_.20} parent=39 // pred_check
        %p2636 = pneg %p112
      $region46: #{_lambda_.20} parent=39 // pred_check_branch
        %2638 = sbr.rel (%p2636) target = $region48
      $region47: #{_lambda_.20} parent=39 // pred_region
        %p2639 = scmp.lt.s32.totalorder %s16, 1
        %s2640 = scalar_select %p2639, %s16, 1
        %s2641 = smul.addr %s2640, 2
        %s2642 = scalar_lea.vmem %s3, %s2641
      $region48: #{_lambda_.20} parent=39 // pred_fallthru
        _
    $region40: #{_lambda_.20} parent=5 // pred_fallthru
      _
  $region6: #{_lambda_.20} parent=0 // loop_footer
    %s14 = sadd.s32 1, %s10
  $region7: #{_lambda_.20} parent=0 // loop_footer_branch
    %9 = sbr.rel target = $region3
  $region8: #{_lambda_.20} parent=0 // loop_exit
    _

// kernel: _lambda_.23
$region0: #{_lambda_.23}
  #allocation0 [shape = 'u32[]', space=smem, size = 0x4, offset = 0x4, fixed_abs, tag = 'smem constant byte address 0x4 - core index']
  #allocation1 [shape = 'u32[144,128]{1,0:T(1,128)}', space=vmem, size = 0x12000, scoped, tag = 'internal scratch']
  %s0 = inlined_call_operand.vmem [shape: f32[256,128], index: 0, kind: input, shape index: {}]
  %s1 = inlined_call_operand.vmem [shape: f32[2,128], index: 1, kind: input, shape index: {}]
  %s2 = inlined_call_operand.vmem [shape: f32[256,128], index: 2, kind: output, shape index: {}]
  %s3 = sld [smem:[#allocation0]]
  $region18: #{_lambda_.23} parent=0
    _
  %s5 = ssub.s32 1, %s3
  %s6 = scalar_select 0, %s5, %s3
  // Predicated region
  $region2: #{_lambda_.23} parent=0 // pred_check
    _
  $region3: #{_lambda_.23} parent=0 // pred_check_branch
    %8 = sbr.rel (0) target = $region5
  $region4: #{_lambda_.23} parent=0 // pred_region
    _
  $region5: #{_lambda_.23} parent=0 // pred_fallthru
    _
  // Predicated region
  $region6: #{_lambda_.23} parent=0 // pred_check
    _
  $region7: #{_lambda_.23} parent=0 // pred_check_branch
    %10 = sbr.rel (0) target = $region9
  $region8: #{_lambda_.23} parent=0 // pred_region
    _
  $region9: #{_lambda_.23} parent=0 // pred_fallthru
    _
  %v11 = vld [vmem:[%s0] sm:$0xff]
  %v12 = vld [vmem:[%s0 + $0x8] sm:$0xff]
  %v13 = vld [vmem:[%s0 + $0x10] sm:$0xff]
  %v14 = vld [vmem:[%s0 + $0x18] sm:$0xff]
  %v15 = vld [vmem:[%s0 + $0x20] sm:$0xff]
  %v16 = vld [vmem:[%s0 + $0x28] sm:$0xff]
  %v17 = vld [vmem:[%s0 + $0x30] sm:$0xff]
  %v18 = vld [vmem:[%s0 + $0x38] sm:$0xff]
  %v19 = vld [vmem:[%s0 + $0x40] sm:$0xff]
  %v20 = vld [vmem:[%s0 + $0x48] sm:$0xff]
  %v21 = vld [vmem:[%s0 + $0x50] sm:$0xff]
  %v22 = vld [vmem:[%s0 + $0x58] sm:$0xff]
  %v23 = vld [vmem:[%s0 + $0x60] sm:$0xff]
  %v24 = vld [vmem:[%s0 + $0x68] sm:$0xff]
  %v25 = vld [vmem:[%s0 + $0x70] sm:$0xff]
  %v26 = vld [vmem:[%s0 + $0x78] sm:$0xff]
  %v27 = vld [vmem:[%s0 + $0x80] sm:$0xff]
  %v28 = vld [vmem:[%s0 + $0x88] sm:$0xff]
  %v29 = vld [vmem:[%s0 + $0x90] sm:$0xff]
  %v30 = vld [vmem:[%s0 + $0x98] sm:$0xff]
  %v31 = vld [vmem:[%s0 + $0xa0] sm:$0xff]
  %v32 = vld [vmem:[%s0 + $0xa8] sm:$0xff]
  %v33 = vld [vmem:[%s0 + $0xb0] sm:$0xff]
  %v34 = vld [vmem:[%s0 + $0xb8] sm:$0xff]
  %v35 = vld [vmem:[%s0 + $0xc0] sm:$0xff]
  %v36 = vld [vmem:[%s0 + $0xc8] sm:$0xff]
  %v37 = vld [vmem:[%s0 + $0xd0] sm:$0xff]
  %v38 = vld [vmem:[%s0 + $0xd8] sm:$0xff]
  %v39 = vld [vmem:[%s0 + $0xe0] sm:$0xff]
  %v40 = vld [vmem:[%s0 + $0xe8] sm:$0xff]
  %v41 = vld [vmem:[%s0 + $0xf0] sm:$0xff]
  %v42 = vld [vmem:[%s0 + $0xf8] sm:$0xff]
  %v43 = vld [vmem:[%s1] sm:$0x1]
  %v44 = vlaneseq
  %v45 = vshrl.u32 %v44, 7
  %v46 = vsub.s32 0, %v45
  %v47 = vrot.slane %v43, %v46
  %v48 = vmul.f32 %v11, %v47
  %v49 = vmul.f32 %v12, %v47
  %v50 = vmul.f32 %v13, %v47
  %v51 = vmul.f32 %v14, %v47
  %v52 = vmul.f32 %v15, %v47
  %v53 = vmul.f32 %v16, %v47
  %v54 = vmul.f32 %v17, %v47
  %v55 = vmul.f32 %v18, %v47
  %v56 = vmul.f32 %v19, %v47
  %v57 = vmul.f32 %v20, %v47
  %v58 = vmul.f32 %v21, %v47
  %v59 = vmul.f32 %v22, %v47
  %v60 = vmul.f32 %v23, %v47
  %v61 = vmul.f32 %v24, %v47
  %v62 = vmul.f32 %v25, %v47
  %v63 = vmul.f32 %v26, %v47
  %v64 = vmul.f32 %v27, %v47
  %v65 = vmul.f32 %v28, %v47
  %v66 = vmul.f32 %v29, %v47
  %v67 = vmul.f32 %v30, %v47
  %v68 = vmul.f32 %v31, %v47
  %v69 = vmul.f32 %v32, %v47
  %v70 = vmul.f32 %v33, %v47
  %v71 = vmul.f32 %v34, %v47
  %v72 = vmul.f32 %v35, %v47
  %v73 = vmul.f32 %v36, %v47
  %v74 = vmul.f32 %v37, %v47
  %v75 = vmul.f32 %v38, %v47
  %v76 = vmul.f32 %v39, %v47
  %v77 = vmul.f32 %v40, %v47
  %v78 = vmul.f32 %v41, %v47
  %v79 = vmul.f32 %v42, %v47
  %v80 = vld [vmem:[%s1 + $0x1] sm:$0x1]
  %v81 = vlaneseq
  %v82 = vshrl.u32 %v81, 7
  %v83 = vsub.s32 0, %v82
  %v84 = vrot.slane %v80, %v83
  %v85 = vadd.f32 %v48, %v84
  %v86 = vadd.f32 %v49, %v84
  %v87 = vadd.f32 %v50, %v84
  %v88 = vadd.f32 %v51, %v84
  %v89 = vadd.f32 %v52, %v84
  %v90 = vadd.f32 %v53, %v84
  %v91 = vadd.f32 %v54, %v84
  %v92 = vadd.f32 %v55, %v84
  %v93 = vadd.f32 %v56, %v84
  %v94 = vadd.f32 %v57, %v84
  %v95 = vadd.f32 %v58, %v84
  %v96 = vadd.f32 %v59, %v84
  %v97 = vadd.f32 %v60, %v84
  %v98 = vadd.f32 %v61, %v84
  %v99 = vadd.f32 %v62, %v84
  %v100 = vadd.f32 %v63, %v84
  %v101 = vadd.f32 %v64, %v84
  %v102 = vadd.f32 %v65, %v84
  %v103 = vadd.f32 %v66, %v84
  %v104 = vadd.f32 %v67, %v84
  %v105 = vadd.f32 %v68, %v84
  %v106 = vadd.f32 %v69, %v84
  %v107 = vadd.f32 %v70, %v84
  %v108 = vadd.f32 %v71, %v84
  %v109 = vadd.f32 %v72, %v84
  %v110 = vadd.f32 %v73, %v84
  %v111 = vadd.f32 %v74, %v84
  %v112 = vadd.f32 %v75, %v84
  %v113 = vadd.f32 %v76, %v84
  %v114 = vadd.f32 %v77, %v84
  %v115 = vadd.f32 %v78, %v84
  %v116 = vadd.f32 %v79, %v84
  %v117 = vmax.f32 %v85, 0.0
  %v118 = vmax.f32 %v86, 0.0
  %v119 = vmax.f32 %v87, 0.0
  %v120 = vmax.f32 %v88, 0.0
  %v121 = vmax.f32 %v89, 0.0
  %v122 = vmax.f32 %v90, 0.0
  %v123 = vmax.f32 %v91, 0.0
  %v124 = vmax.f32 %v92, 0.0
  %v125 = vmax.f32 %v93, 0.0
  %v126 = vmax.f32 %v94, 0.0
  %v127 = vmax.f32 %v95, 0.0
  %v128 = vmax.f32 %v96, 0.0
  %v129 = vmax.f32 %v97, 0.0
  %v130 = vmax.f32 %v98, 0.0
  %v131 = vmax.f32 %v99, 0.0
  %v132 = vmax.f32 %v100, 0.0
  %v133 = vmax.f32 %v101, 0.0
  %v134 = vmax.f32 %v102, 0.0
  %v135 = vmax.f32 %v103, 0.0
  %v136 = vmax.f32 %v104, 0.0
  %v137 = vmax.f32 %v105, 0.0
  %v138 = vmax.f32 %v106, 0.0
  %v139 = vmax.f32 %v107, 0.0
  %v140 = vmax.f32 %v108, 0.0
  %v141 = vmax.f32 %v109, 0.0
  %v142 = vmax.f32 %v110, 0.0
  %v143 = vmax.f32 %v111, 0.0
  %v144 = vmax.f32 %v112, 0.0
  %v145 = vmax.f32 %v113, 0.0
  %v146 = vmax.f32 %v114, 0.0
  %v147 = vmax.f32 %v115, 0.0
  %v148 = vmax.f32 %v116, 0.0
  %149 = vst [vmem:[%s2] sm:$0xff] %v117
  %150 = vst [vmem:[%s2 + $0x8] sm:$0xff] %v118
  %151 = vst [vmem:[%s2 + $0x10] sm:$0xff] %v119
  %152 = vst [vmem:[%s2 + $0x18] sm:$0xff] %v120
  %153 = vst [vmem:[%s2 + $0x20] sm:$0xff] %v121
  %154 = vst [vmem:[%s2 + $0x28] sm:$0xff] %v122
  %155 = vst [vmem:[%s2 + $0x30] sm:$0xff] %v123
  %156 = vst [vmem:[%s2 + $0x38] sm:$0xff] %v124
  %157 = vst [vmem:[%s2 + $0x40] sm:$0xff] %v125
  %158 = vst [vmem:[%s2 + $0x48] sm:$0xff] %v126
  %159 = vst [vmem:[%s2 + $0x50] sm:$0xff] %v127
  %160 = vst [vmem:[%s2 + $0x58] sm:$0xff] %v128
  %161 = vst [vmem:[%s2 + $0x60] sm:$0xff] %v129
  %162 = vst [vmem:[%s2 + $0x68] sm:$0xff] %v130
  %163 = vst [vmem:[%s2 + $0x70] sm:$0xff] %v131
  %164 = vst [vmem:[%s2 + $0x78] sm:$0xff] %v132
  %165 = vst [vmem:[%s2 + $0x80] sm:$0xff] %v133
  %166 = vst [vmem:[%s2 + $0x88] sm:$0xff] %v134
  %167 = vst [vmem:[%s2 + $0x90] sm:$0xff] %v135
  %168 = vst [vmem:[%s2 + $0x98] sm:$0xff] %v136
  %169 = vst [vmem:[%s2 + $0xa0] sm:$0xff] %v137
  %170 = vst [vmem:[%s2 + $0xa8] sm:$0xff] %v138
  %171 = vst [vmem:[%s2 + $0xb0] sm:$0xff] %v139
  %172 = vst [vmem:[%s2 + $0xb8] sm:$0xff] %v140
  %173 = vst [vmem:[%s2 + $0xc0] sm:$0xff] %v141
  %174 = vst [vmem:[%s2 + $0xc8] sm:$0xff] %v142
  %175 = vst [vmem:[%s2 + $0xd0] sm:$0xff] %v143
  %176 = vst [vmem:[%s2 + $0xd8] sm:$0xff] %v144
  %177 = vst [vmem:[%s2 + $0xe0] sm:$0xff] %v145
  %178 = vst [vmem:[%s2 + $0xe8] sm:$0xff] %v146
  %179 = vst [vmem:[%s2 + $0xf0] sm:$0xff] %v147
  %180 = vst [vmem:[%s2 + $0xf8] sm:$0xff] %v148
  // Predicated region
  $region10: #{_lambda_.23} parent=0 // pred_check
    _
  $region11: #{_lambda_.23} parent=0 // pred_check_branch
    %182 = sbr.rel (0) target = $region13
  $region12: #{_lambda_.23} parent=0 // pred_region
    _
  $region13: #{_lambda_.23} parent=0 // pred_fallthru
    _
  // Predicated region
  $region14: #{_lambda_.23} parent=0 // pred_check
    _
  $region15: #{_lambda_.23} parent=0 // pred_check_branch
    %184 = sbr.rel (0) target = $region17
  $region16: #{_lambda_.23} parent=0 // pred_region
    _
  $region17: #{_lambda_.23} parent=0 // pred_fallthru
    _

// kernel: _lambda_.31
$region0: #{_lambda_.31}
  #allocation0 [shape = 'u32[]', space=smem, size = 0x4, offset = 0x4, fixed_abs, tag = 'smem constant byte address 0x4 - core index']
  #allocation1 [shape = 'u32[144,128]{1,0:T(1,128)}', space=vmem, size = 0x12000, scoped, tag = 'internal scratch']
  %s0 = inlined_call_operand.vmem [shape: f32[256,128], index: 0, kind: input, shape index: {}]
  %s1 = inlined_call_operand.vmem [shape: f32[2,128], index: 1, kind: input, shape index: {}]
  %s2 = inlined_call_operand.vmem [shape: f32[256,128], index: 2, kind: input, shape index: {}]
  %s3 = inlined_call_operand.vmem [shape: f32[256,128], index: 3, kind: output, shape index: {}]
  %s4 = sld [smem:[#allocation0]]
  $region22: #{_lambda_.31} parent=0
    _
  %s6 = ssub.s32 1, %s4
  %s7 = scalar_select 0, %s6, %s4
  // Predicated region
  $region2: #{_lambda_.31} parent=0 // pred_check
    _
  $region3: #{_lambda_.31} parent=0 // pred_check_branch
    %9 = sbr.rel (0) target = $region5
  $region4: #{_lambda_.31} parent=0 // pred_region
    _
  $region5: #{_lambda_.31} parent=0 // pred_fallthru
    _
  // Predicated region
  $region6: #{_lambda_.31} parent=0 // pred_check
    _
  $region7: #{_lambda_.31} parent=0 // pred_check_branch
    %11 = sbr.rel (0) target = $region9
  $region8: #{_lambda_.31} parent=0 // pred_region
    _
  $region9: #{_lambda_.31} parent=0 // pred_fallthru
    _
  // Predicated region
  $region10: #{_lambda_.31} parent=0 // pred_check
    _
  $region11: #{_lambda_.31} parent=0 // pred_check_branch
    %13 = sbr.rel (0) target = $region13
  $region12: #{_lambda_.31} parent=0 // pred_region
    _
  $region13: #{_lambda_.31} parent=0 // pred_fallthru
    _
  %v14 = vld [vmem:[%s0] sm:$0xff]
  %v15 = vld [vmem:[%s0 + $0x8] sm:$0xff]
  %v16 = vld [vmem:[%s0 + $0x10] sm:$0xff]
  %v17 = vld [vmem:[%s0 + $0x18] sm:$0xff]
  %v18 = vld [vmem:[%s0 + $0x20] sm:$0xff]
  %v19 = vld [vmem:[%s0 + $0x28] sm:$0xff]
  %v20 = vld [vmem:[%s0 + $0x30] sm:$0xff]
  %v21 = vld [vmem:[%s0 + $0x38] sm:$0xff]
  %v22 = vld [vmem:[%s0 + $0x40] sm:$0xff]
  %v23 = vld [vmem:[%s0 + $0x48] sm:$0xff]
  %v24 = vld [vmem:[%s0 + $0x50] sm:$0xff]
  %v25 = vld [vmem:[%s0 + $0x58] sm:$0xff]
  %v26 = vld [vmem:[%s0 + $0x60] sm:$0xff]
  %v27 = vld [vmem:[%s0 + $0x68] sm:$0xff]
  %v28 = vld [vmem:[%s0 + $0x70] sm:$0xff]
  %v29 = vld [vmem:[%s0 + $0x78] sm:$0xff]
  %v30 = vld [vmem:[%s0 + $0x80] sm:$0xff]
  %v31 = vld [vmem:[%s0 + $0x88] sm:$0xff]
  %v32 = vld [vmem:[%s0 + $0x90] sm:$0xff]
  %v33 = vld [vmem:[%s0 + $0x98] sm:$0xff]
  %v34 = vld [vmem:[%s0 + $0xa0] sm:$0xff]
  %v35 = vld [vmem:[%s0 + $0xa8] sm:$0xff]
  %v36 = vld [vmem:[%s0 + $0xb0] sm:$0xff]
  %v37 = vld [vmem:[%s0 + $0xb8] sm:$0xff]
  %v38 = vld [vmem:[%s0 + $0xc0] sm:$0xff]
  %v39 = vld [vmem:[%s0 + $0xc8] sm:$0xff]
  %v40 = vld [vmem:[%s0 + $0xd0] sm:$0xff]
  %v41 = vld [vmem:[%s0 + $0xd8] sm:$0xff]
  %v42 = vld [vmem:[%s0 + $0xe0] sm:$0xff]
  %v43 = vld [vmem:[%s0 + $0xe8] sm:$0xff]
  %v44 = vld [vmem:[%s0 + $0xf0] sm:$0xff]
  %v45 = vld [vmem:[%s0 + $0xf8] sm:$0xff]
  %v46 = vld [vmem:[%s1] sm:$0x1]
  %v47 = vlaneseq
  %v48 = vshrl.u32 %v47, 7
  %v49 = vsub.s32 0, %v48
  %v50 = vrot.slane %v46, %v49
  %v51 = vmul.f32 %v14, %v50
  %v52 = vmul.f32 %v15, %v50
  %v53 = vmul.f32 %v16, %v50
  %v54 = vmul.f32 %v17, %v50
  %v55 = vmul.f32 %v18, %v50
  %v56 = vmul.f32 %v19, %v50
  %v57 = vmul.f32 %v20, %v50
  %v58 = vmul.f32 %v21, %v50
  %v59 = vmul.f32 %v22, %v50
  %v60 = vmul.f32 %v23, %v50
  %v61 = vmul.f32 %v24, %v50
  %v62 = vmul.f32 %v25, %v50
  %v63 = vmul.f32 %v26, %v50
  %v64 = vmul.f32 %v27, %v50
  %v65 = vmul.f32 %v28, %v50
  %v66 = vmul.f32 %v29, %v50
  %v67 = vmul.f32 %v30, %v50
  %v68 = vmul.f32 %v31, %v50
  %v69 = vmul.f32 %v32, %v50
  %v70 = vmul.f32 %v33, %v50
  %v71 = vmul.f32 %v34, %v50
  %v72 = vmul.f32 %v35, %v50
  %v73 = vmul.f32 %v36, %v50
  %v74 = vmul.f32 %v37, %v50
  %v75 = vmul.f32 %v38, %v50
  %v76 = vmul.f32 %v39, %v50
  %v77 = vmul.f32 %v40, %v50
  %v78 = vmul.f32 %v41, %v50
  %v79 = vmul.f32 %v42, %v50
  %v80 = vmul.f32 %v43, %v50
  %v81 = vmul.f32 %v44, %v50
  %v82 = vmul.f32 %v45, %v50
  %v83 = vld [vmem:[%s1 + $0x1] sm:$0x1]
  %v84 = vlaneseq
  %v85 = vshrl.u32 %v84, 7
  %v86 = vsub.s32 0, %v85
  %v87 = vrot.slane %v83, %v86
  %v88 = vadd.f32 %v51, %v87
  %v89 = vadd.f32 %v52, %v87
  %v90 = vadd.f32 %v53, %v87
  %v91 = vadd.f32 %v54, %v87
  %v92 = vadd.f32 %v55, %v87
  %v93 = vadd.f32 %v56, %v87
  %v94 = vadd.f32 %v57, %v87
  %v95 = vadd.f32 %v58, %v87
  %v96 = vadd.f32 %v59, %v87
  %v97 = vadd.f32 %v60, %v87
  %v98 = vadd.f32 %v61, %v87
  %v99 = vadd.f32 %v62, %v87
  %v100 = vadd.f32 %v63, %v87
  %v101 = vadd.f32 %v64, %v87
  %v102 = vadd.f32 %v65, %v87
  %v103 = vadd.f32 %v66, %v87
  %v104 = vadd.f32 %v67, %v87
  %v105 = vadd.f32 %v68, %v87
  %v106 = vadd.f32 %v69, %v87
  %v107 = vadd.f32 %v70, %v87
  %v108 = vadd.f32 %v71, %v87
  %v109 = vadd.f32 %v72, %v87
  %v110 = vadd.f32 %v73, %v87
  %v111 = vadd.f32 %v74, %v87
  %v112 = vadd.f32 %v75, %v87
  %v113 = vadd.f32 %v76, %v87
  %v114 = vadd.f32 %v77, %v87
  %v115 = vadd.f32 %v78, %v87
  %v116 = vadd.f32 %v79, %v87
  %v117 = vadd.f32 %v80, %v87
  %v118 = vadd.f32 %v81, %v87
  %v119 = vadd.f32 %v82, %v87
  %v120 = vld [vmem:[%s2] sm:$0xff]
  %v121 = vld [vmem:[%s2 + $0x8] sm:$0xff]
  %v122 = vld [vmem:[%s2 + $0x10] sm:$0xff]
  %v123 = vld [vmem:[%s2 + $0x18] sm:$0xff]
  %v124 = vld [vmem:[%s2 + $0x20] sm:$0xff]
  %v125 = vld [vmem:[%s2 + $0x28] sm:$0xff]
  %v126 = vld [vmem:[%s2 + $0x30] sm:$0xff]
  %v127 = vld [vmem:[%s2 + $0x38] sm:$0xff]
  %v128 = vld [vmem:[%s2 + $0x40] sm:$0xff]
  %v129 = vld [vmem:[%s2 + $0x48] sm:$0xff]
  %v130 = vld [vmem:[%s2 + $0x50] sm:$0xff]
  %v131 = vld [vmem:[%s2 + $0x58] sm:$0xff]
  %v132 = vld [vmem:[%s2 + $0x60] sm:$0xff]
  %v133 = vld [vmem:[%s2 + $0x68] sm:$0xff]
  %v134 = vld [vmem:[%s2 + $0x70] sm:$0xff]
  %v135 = vld [vmem:[%s2 + $0x78] sm:$0xff]
  %v136 = vld [vmem:[%s2 + $0x80] sm:$0xff]
  %v137 = vld [vmem:[%s2 + $0x88] sm:$0xff]
  %v138 = vld [vmem:[%s2 + $0x90] sm:$0xff]
  %v139 = vld [vmem:[%s2 + $0x98] sm:$0xff]
  %v140 = vld [vmem:[%s2 + $0xa0] sm:$0xff]
  %v141 = vld [vmem:[%s2 + $0xa8] sm:$0xff]
  %v142 = vld [vmem:[%s2 + $0xb0] sm:$0xff]
  %v143 = vld [vmem:[%s2 + $0xb8] sm:$0xff]
  %v144 = vld [vmem:[%s2 + $0xc0] sm:$0xff]
  %v145 = vld [vmem:[%s2 + $0xc8] sm:$0xff]
  %v146 = vld [vmem:[%s2 + $0xd0] sm:$0xff]
  %v147 = vld [vmem:[%s2 + $0xd8] sm:$0xff]
  %v148 = vld [vmem:[%s2 + $0xe0] sm:$0xff]
  %v149 = vld [vmem:[%s2 + $0xe8] sm:$0xff]
  %v150 = vld [vmem:[%s2 + $0xf0] sm:$0xff]
  %v151 = vld [vmem:[%s2 + $0xf8] sm:$0xff]
  %v152 = vadd.f32 %v88, %v120
  %v153 = vadd.f32 %v89, %v121
  %v154 = vadd.f32 %v90, %v122
  %v155 = vadd.f32 %v91, %v123
  %v156 = vadd.f32 %v92, %v124
  %v157 = vadd.f32 %v93, %v125
  %v158 = vadd.f32 %v94, %v126
  %v159 = vadd.f32 %v95, %v127
  %v160 = vadd.f32 %v96, %v128
  %v161 = vadd.f32 %v97, %v129
  %v162 = vadd.f32 %v98, %v130
  %v163 = vadd.f32 %v99, %v131
  %v164 = vadd.f32 %v100, %v132
  %v165 = vadd.f32 %v101, %v133
  %v166 = vadd.f32 %v102, %v134
  %v167 = vadd.f32 %v103, %v135
  %v168 = vadd.f32 %v104, %v136
  %v169 = vadd.f32 %v105, %v137
  %v170 = vadd.f32 %v106, %v138
  %v171 = vadd.f32 %v107, %v139
  %v172 = vadd.f32 %v108, %v140
  %v173 = vadd.f32 %v109, %v141
  %v174 = vadd.f32 %v110, %v142
  %v175 = vadd.f32 %v111, %v143
  %v176 = vadd.f32 %v112, %v144
  %v177 = vadd.f32 %v113, %v145
  %v178 = vadd.f32 %v114, %v146
  %v179 = vadd.f32 %v115, %v147
  %v180 = vadd.f32 %v116, %v148
  %v181 = vadd.f32 %v117, %v149
  %v182 = vadd.f32 %v118, %v150
  %v183 = vadd.f32 %v119, %v151
  %v184 = vmax.f32 %v152, 0.0
  %v185 = vmax.f32 %v153, 0.0
  %v186 = vmax.f32 %v154, 0.0
  %v187 = vmax.f32 %v155, 0.0
  %v188 = vmax.f32 %v156, 0.0
  %v189 = vmax.f32 %v157, 0.0
  %v190 = vmax.f32 %v158, 0.0
  %v191 = vmax.f32 %v159, 0.0
  %v192 = vmax.f32 %v160, 0.0
  %v193 = vmax.f32 %v161, 0.0
  %v194 = vmax.f32 %v162, 0.0
  %v195 = vmax.f32 %v163, 0.0
  %v196 = vmax.f32 %v164, 0.0
  %v197 = vmax.f32 %v165, 0.0
  %v198 = vmax.f32 %v166, 0.0
  %v199 = vmax.f32 %v167, 0.0
  %v200 = vmax.f32 %v168, 0.0
  %v201 = vmax.f32 %v169, 0.0
  %v202 = vmax.f32 %v170, 0.0
  %v203 = vmax.f32 %v171, 0.0
  %v204 = vmax.f32 %v172, 0.0
  %v205 = vmax.f32 %v173, 0.0
  %v206 = vmax.f32 %v174, 0.0
  %v207 = vmax.f32 %v175, 0.0
  %v208 = vmax.f32 %v176, 0.0
  %v209 = vmax.f32 %v177, 0.0
  %v210 = vmax.f32 %v178, 0.0
  %v211 = vmax.f32 %v179, 0.0
  %v212 = vmax.f32 %v180, 0.0
  %v213 = vmax.f32 %v181, 0.0
  %v214 = vmax.f32 %v182, 0.0
  %v215 = vmax.f32 %v183, 0.0
  %216 = vst [vmem:[%s3] sm:$0xff] %v184
  %217 = vst [vmem:[%s3 + $0x8] sm:$0xff] %v185
  %218 = vst [vmem:[%s3 + $0x10] sm:$0xff] %v186
  %219 = vst [vmem:[%s3 + $0x18] sm:$0xff] %v187
  %220 = vst [vmem:[%s3 + $0x20] sm:$0xff] %v188
  %221 = vst [vmem:[%s3 + $0x28] sm:$0xff] %v189
  %222 = vst [vmem:[%s3 + $0x30] sm:$0xff] %v190
  %223 = vst [vmem:[%s3 + $0x38] sm:$0xff] %v191
  %224 = vst [vmem:[%s3 + $0x40] sm:$0xff] %v192
  %225 = vst [vmem:[%s3 + $0x48] sm:$0xff] %v193
  %226 = vst [vmem:[%s3 + $0x50] sm:$0xff] %v194
  %227 = vst [vmem:[%s3 + $0x58] sm:$0xff] %v195
  %228 = vst [vmem:[%s3 + $0x60] sm:$0xff] %v196
  %229 = vst [vmem:[%s3 + $0x68] sm:$0xff] %v197
  %230 = vst [vmem:[%s3 + $0x70] sm:$0xff] %v198
  %231 = vst [vmem:[%s3 + $0x78] sm:$0xff] %v199
  %232 = vst [vmem:[%s3 + $0x80] sm:$0xff] %v200
  %233 = vst [vmem:[%s3 + $0x88] sm:$0xff] %v201
  %234 = vst [vmem:[%s3 + $0x90] sm:$0xff] %v202
  %235 = vst [vmem:[%s3 + $0x98] sm:$0xff] %v203
  %236 = vst [vmem:[%s3 + $0xa0] sm:$0xff] %v204
  %237 = vst [vmem:[%s3 + $0xa8] sm:$0xff] %v205
  %238 = vst [vmem:[%s3 + $0xb0] sm:$0xff] %v206
  %239 = vst [vmem:[%s3 + $0xb8] sm:$0xff] %v207
  %240 = vst [vmem:[%s3 + $0xc0] sm:$0xff] %v208
  %241 = vst [vmem:[%s3 + $0xc8] sm:$0xff] %v209
  %242 = vst [vmem:[%s3 + $0xd0] sm:$0xff] %v210
  %243 = vst [vmem:[%s3 + $0xd8] sm:$0xff] %v211
  %244 = vst [vmem:[%s3 + $0xe0] sm:$0xff] %v212
  %245 = vst [vmem:[%s3 + $0xe8] sm:$0xff] %v213
  %246 = vst [vmem:[%s3 + $0xf0] sm:$0xff] %v214
  %247 = vst [vmem:[%s3 + $0xf8] sm:$0xff] %v215
  // Predicated region
  $region14: #{_lambda_.31} parent=0 // pred_check
    _
  $region15: #{_lambda_.31} parent=0 // pred_check_branch
    %249 = sbr.rel (0) target = $region17
  $region16: #{_lambda_.31} parent=0 // pred_region
    _
  $region17: #{_lambda_.31} parent=0 // pred_fallthru
    _
  // Predicated region
  $region18: #{_lambda_.31} parent=0 // pred_check
    _
  $region19: #{_lambda_.31} parent=0 // pred_check_branch
    %251 = sbr.rel (0) target = $region21
  $region20: #{_lambda_.31} parent=0 // pred_region
    _
  $region21: #{_lambda_.31} parent=0 // pred_fallthru
    _

// kernel: _lambda_.28
$region0: #{_lambda_.28}
  #allocation0 [shape = 'u32[]', space=smem, size = 0x4, offset = 0x4, fixed_abs, tag = 'smem constant byte address 0x4 - core index']
  #allocation1 [shape = 'u32[144,128]{1,0:T(1,128)}', space=vmem, size = 0x12000, scoped, tag = 'internal scratch']
  %s0 = inlined_call_operand.vmem [shape: bf16[256,1152], index: 0, kind: input, shape index: {}]
  %s1 = inlined_call_operand.vmem [shape: bf16[1152,128], index: 1, kind: input, shape index: {}]
  %s2 = inlined_call_operand.vmem [shape: f32[256,128], index: 2, kind: output, shape index: {0}]
  %s3 = inlined_call_operand.vmem [shape: f32[1,2,128], index: 3, kind: output, shape index: {1}]
  %4 = xla_tuple %s2, %s3
  %s5 = sld [smem:[#allocation0]]
  $region26: #{_lambda_.28} parent=0
    _
  %s7 = ssub.s32 1, %s5
  %s8 = scalar_select 0, %s7, %s5
  // Predicated region
  $region2: #{_lambda_.28} parent=0 // pred_check
    _
  $region3: #{_lambda_.28} parent=0 // pred_check_branch
    %10 = sbr.rel (0) target = $region5
  $region4: #{_lambda_.28} parent=0 // pred_region
    _
  $region5: #{_lambda_.28} parent=0 // pred_fallthru
    _
  // Predicated region
  $region6: #{_lambda_.28} parent=0 // pred_check
    _
  $region7: #{_lambda_.28} parent=0 // pred_check_branch
    %12 = sbr.rel (0) target = $region9
  $region8: #{_lambda_.28} parent=0 // pred_region
    _
  $region9: #{_lambda_.28} parent=0 // pred_fallthru
    _
  %v14 = vld [vmem:[%s0] sm:$0xff]
  %v15 = vld [vmem:[%s0 + $0x8] sm:$0xff]
  %v16 = vld [vmem:[%s0 + $0x10] sm:$0xff]
  %v17 = vld [vmem:[%s0 + $0x18] sm:$0xff]
  %v18 = vld [vmem:[%s0 + $0x20] sm:$0xf]
  %v19 = vld [vmem:[%s0 + $0x24] sm:$0xff]
  %v20 = vld [vmem:[%s0 + $0x2c] sm:$0xff]
  %v21 = vld [vmem:[%s0 + $0x34] sm:$0xff]
  %v22 = vld [vmem:[%s0 + $0x3c] sm:$0xff]
  %v23 = vld [vmem:[%s0 + $0x44] sm:$0xf]
  %v24 = vld [vmem:[%s0 + $0x48] sm:$0xff]
  %v25 = vld [vmem:[%s0 + $0x50] sm:$0xff]
  %v26 = vld [vmem:[%s0 + $0x58] sm:$0xff]
  %v27 = vld [vmem:[%s0 + $0x60] sm:$0xff]
  %v28 = vld [vmem:[%s0 + $0x68] sm:$0xf]
  %v29 = vld [vmem:[%s0 + $0x6c] sm:$0xff]
  %v30 = vld [vmem:[%s0 + $0x74] sm:$0xff]
  %v31 = vld [vmem:[%s0 + $0x7c] sm:$0xff]
  %v32 = vld [vmem:[%s0 + $0x84] sm:$0xff]
  %v33 = vld [vmem:[%s0 + $0x8c] sm:$0xf]
  %v34 = vld [vmem:[%s0 + $0x90] sm:$0xff]
  %v35 = vld [vmem:[%s0 + $0x98] sm:$0xff]
  %v36 = vld [vmem:[%s0 + $0xa0] sm:$0xff]
  %v37 = vld [vmem:[%s0 + $0xa8] sm:$0xff]
  %v38 = vld [vmem:[%s0 + $0xb0] sm:$0xf]
  %v39 = vld [vmem:[%s0 + $0xb4] sm:$0xff]
  %v40 = vld [vmem:[%s0 + $0xbc] sm:$0xff]
  %v41 = vld [vmem:[%s0 + $0xc4] sm:$0xff]
  %v42 = vld [vmem:[%s0 + $0xcc] sm:$0xff]
  %v43 = vld [vmem:[%s0 + $0xd4] sm:$0xf]
  %v44 = vld [vmem:[%s0 + $0xd8] sm:$0xff]
  %v45 = vld [vmem:[%s0 + $0xe0] sm:$0xff]
  %v46 = vld [vmem:[%s0 + $0xe8] sm:$0xff]
  %v47 = vld [vmem:[%s0 + $0xf0] sm:$0xff]
  %v48 = vld [vmem:[%s0 + $0xf8] sm:$0xf]
  %v49 = vld [vmem:[%s0 + $0xfc] sm:$0xff]
  %v50 = vld [vmem:[%s0 + $0x104] sm:$0xff]
  %v51 = vld [vmem:[%s0 + $0x10c] sm:$0xff]
  %v52 = vld [vmem:[%s0 + $0x114] sm:$0xff]
  %v53 = vld [vmem:[%s0 + $0x11c] sm:$0xf]
  %v54 = vld [vmem:[%s0 + $0x120] sm:$0xff]
  %v55 = vld [vmem:[%s0 + $0x128] sm:$0xff]
  %v56 = vld [vmem:[%s0 + $0x130] sm:$0xff]
  %v57 = vld [vmem:[%s0 + $0x138] sm:$0xff]
  %v58 = vld [vmem:[%s0 + $0x140] sm:$0xf]
  %v59 = vld [vmem:[%s0 + $0x144] sm:$0xff]
  %v60 = vld [vmem:[%s0 + $0x14c] sm:$0xff]
  %v61 = vld [vmem:[%s0 + $0x154] sm:$0xff]
  %v62 = vld [vmem:[%s0 + $0x15c] sm:$0xff]
  %v63 = vld [vmem:[%s0 + $0x164] sm:$0xf]
  %v64 = vld [vmem:[%s0 + $0x168] sm:$0xff]
  %v65 = vld [vmem:[%s0 + $0x170] sm:$0xff]
  %v66 = vld [vmem:[%s0 + $0x178] sm:$0xff]
  %v67 = vld [vmem:[%s0 + $0x180] sm:$0xff]
  %v68 = vld [vmem:[%s0 + $0x188] sm:$0xf]
  %v69 = vld [vmem:[%s0 + $0x18c] sm:$0xff]
  %v70 = vld [vmem:[%s0 + $0x194] sm:$0xff]
  %v71 = vld [vmem:[%s0 + $0x19c] sm:$0xff]
  %v72 = vld [vmem:[%s0 + $0x1a4] sm:$0xff]
  %v73 = vld [vmem:[%s0 + $0x1ac] sm:$0xf]
  %v74 = vld [vmem:[%s0 + $0x1b0] sm:$0xff]
  %v75 = vld [vmem:[%s0 + $0x1b8] sm:$0xff]
  %v76 = vld [vmem:[%s0 + $0x1c0] sm:$0xff]
  %v77 = vld [vmem:[%s0 + $0x1c8] sm:$0xff]
  %v78 = vld [vmem:[%s0 + $0x1d0] sm:$0xf]
  %v79 = vld [vmem:[%s0 + $0x1d4] sm:$0xff]
  %v80 = vld [vmem:[%s0 + $0x1dc] sm:$0xff]
  %v81 = vld [vmem:[%s0 + $0x1e4] sm:$0xff]
  %v82 = vld [vmem:[%s0 + $0x1ec] sm:$0xff]
  %v83 = vld [vmem:[%s0 + $0x1f4] sm:$0xf]
  %v84 = vld [vmem:[%s0 + $0x1f8] sm:$0xff]
  %v85 = vld [vmem:[%s0 + $0x200] sm:$0xff]
  %v86 = vld [vmem:[%s0 + $0x208] sm:$0xff]
  %v87 = vld [vmem:[%s0 + $0x210] sm:$0xff]
  %v88 = vld [vmem:[%s0 + $0x218] sm:$0xf]
  %v89 = vld [vmem:[%s0 + $0x21c] sm:$0xff]
  %v90 = vld [vmem:[%s0 + $0x224] sm:$0xff]
  %v91 = vld [vmem:[%s0 + $0x22c] sm:$0xff]
  %v92 = vld [vmem:[%s0 + $0x234] sm:$0xff]
  %v93 = vld [vmem:[%s0 + $0x23c] sm:$0xf]
  %v94 = vld [vmem:[%s0 + $0x240] sm:$0xff]
  %v95 = vld [vmem:[%s0 + $0x248] sm:$0xff]
  %v96 = vld [vmem:[%s0 + $0x250] sm:$0xff]
  %v97 = vld [vmem:[%s0 + $0x258] sm:$0xff]
  %v98 = vld [vmem:[%s0 + $0x260] sm:$0xf]
  %v99 = vld [vmem:[%s0 + $0x264] sm:$0xff]
  %v100 = vld [vmem:[%s0 + $0x26c] sm:$0xff]
  %v101 = vld [vmem:[%s0 + $0x274] sm:$0xff]
  %v102 = vld [vmem:[%s0 + $0x27c] sm:$0xff]
  %v103 = vld [vmem:[%s0 + $0x284] sm:$0xf]
  %v104 = vld [vmem:[%s0 + $0x288] sm:$0xff]
  %v105 = vld [vmem:[%s0 + $0x290] sm:$0xff]
  %v106 = vld [vmem:[%s0 + $0x298] sm:$0xff]
  %v107 = vld [vmem:[%s0 + $0x2a0] sm:$0xff]
  %v108 = vld [vmem:[%s0 + $0x2a8] sm:$0xf]
  %v109 = vld [vmem:[%s0 + $0x2ac] sm:$0xff]
  %v110 = vld [vmem:[%s0 + $0x2b4] sm:$0xff]
  %v111 = vld [vmem:[%s0 + $0x2bc] sm:$0xff]
  %v112 = vld [vmem:[%s0 + $0x2c4] sm:$0xff]
  %v113 = vld [vmem:[%s0 + $0x2cc] sm:$0xf]
  %v114 = vld [vmem:[%s0 + $0x2d0] sm:$0xff]
  %v115 = vld [vmem:[%s0 + $0x2d8] sm:$0xff]
  %v116 = vld [vmem:[%s0 + $0x2e0] sm:$0xff]
  %v117 = vld [vmem:[%s0 + $0x2e8] sm:$0xff]
  %v118 = vld [vmem:[%s0 + $0x2f0] sm:$0xf]
  %v119 = vld [vmem:[%s0 + $0x2f4] sm:$0xff]
  %v120 = vld [vmem:[%s0 + $0x2fc] sm:$0xff]
  %v121 = vld [vmem:[%s0 + $0x304] sm:$0xff]
  %v122 = vld [vmem:[%s0 + $0x30c] sm:$0xff]
  %v123 = vld [vmem:[%s0 + $0x314] sm:$0xf]
  %v124 = vld [vmem:[%s0 + $0x318] sm:$0xff]
  %v125 = vld [vmem:[%s0 + $0x320] sm:$0xff]
  %v126 = vld [vmem:[%s0 + $0x328] sm:$0xff]
  %v127 = vld [vmem:[%s0 + $0x330] sm:$0xff]
  %v128 = vld [vmem:[%s0 + $0x338] sm:$0xf]
  %v129 = vld [vmem:[%s0 + $0x33c] sm:$0xff]
  %v130 = vld [vmem:[%s0 + $0x344] sm:$0xff]
  %v131 = vld [vmem:[%s0 + $0x34c] sm:$0xff]
  %v132 = vld [vmem:[%s0 + $0x354] sm:$0xff]
  %v133 = vld [vmem:[%s0 + $0x35c] sm:$0xf]
  %v134 = vld [vmem:[%s0 + $0x360] sm:$0xff]
  %v135 = vld [vmem:[%s0 + $0x368] sm:$0xff]
  %v136 = vld [vmem:[%s0 + $0x370] sm:$0xff]
  %v137 = vld [vmem:[%s0 + $0x378] sm:$0xff]
  %v138 = vld [vmem:[%s0 + $0x380] sm:$0xf]
  %v139 = vld [vmem:[%s0 + $0x384] sm:$0xff]
  %v140 = vld [vmem:[%s0 + $0x38c] sm:$0xff]
  %v141 = vld [vmem:[%s0 + $0x394] sm:$0xff]
  %v142 = vld [vmem:[%s0 + $0x39c] sm:$0xff]
  %v143 = vld [vmem:[%s0 + $0x3a4] sm:$0xf]
  %v144 = vld [vmem:[%s0 + $0x3a8] sm:$0xff]
  %v145 = vld [vmem:[%s0 + $0x3b0] sm:$0xff]
  %v146 = vld [vmem:[%s0 + $0x3b8] sm:$0xff]
  %v147 = vld [vmem:[%s0 + $0x3c0] sm:$0xff]
  %v148 = vld [vmem:[%s0 + $0x3c8] sm:$0xf]
  %v149 = vld [vmem:[%s0 + $0x3cc] sm:$0xff]
  %v150 = vld [vmem:[%s0 + $0x3d4] sm:$0xff]
  %v151 = vld [vmem:[%s0 + $0x3dc] sm:$0xff]
  %v152 = vld [vmem:[%s0 + $0x3e4] sm:$0xff]
  %v153 = vld [vmem:[%s0 + $0x3ec] sm:$0xf]
  %v154 = vld [vmem:[%s0 + $0x3f0] sm:$0xff]
  %v155 = vld [vmem:[%s0 + $0x3f8] sm:$0xff]
  %v156 = vld [vmem:[%s0 + $0x400] sm:$0xff]
  %v157 = vld [vmem:[%s0 + $0x408] sm:$0xff]
  %v158 = vld [vmem:[%s0 + $0x410] sm:$0xf]
  %v159 = vld [vmem:[%s0 + $0x414] sm:$0xff]
  %v160 = vld [vmem:[%s0 + $0x41c] sm:$0xff]
  %v161 = vld [vmem:[%s0 + $0x424] sm:$0xff]
  %v162 = vld [vmem:[%s0 + $0x42c] sm:$0xff]
  %v163 = vld [vmem:[%s0 + $0x434] sm:$0xf]
  %v164 = vld [vmem:[%s0 + $0x438] sm:$0xff]
  %v165 = vld [vmem:[%s0 + $0x440] sm:$0xff]
  %v166 = vld [vmem:[%s0 + $0x448] sm:$0xff]
  %v167 = vld [vmem:[%s0 + $0x450] sm:$0xff]
  %v168 = vld [vmem:[%s0 + $0x458] sm:$0xf]
  %v169 = vld [vmem:[%s0 + $0x45c] sm:$0xff]
  %v170 = vld [vmem:[%s0 + $0x464] sm:$0xff]
  %v171 = vld [vmem:[%s0 + $0x46c] sm:$0xff]
  %v172 = vld [vmem:[%s0 + $0x474] sm:$0xff]
  %v173 = vld [vmem:[%s0 + $0x47c] sm:$0xf]
  %v174 = vld [vmem:[%s1] sm:$0xf]
  %v175 = vld [vmem:[%s1 + $0x4] sm:$0xf]
  %v176 = vld [vmem:[%s1 + $0x8] sm:$0xf]
  %v177 = vld [vmem:[%s1 + $0xc] sm:$0xf]
  %v178 = vld [vmem:[%s1 + $0x10] sm:$0xf]
  %v179 = vld [vmem:[%s1 + $0x14] sm:$0xf]
  %v180 = vld [vmem:[%s1 + $0x18] sm:$0xf]
  %v181 = vld [vmem:[%s1 + $0x1c] sm:$0xf]
  %v182 = vld [vmem:[%s1 + $0x20] sm:$0xf]
  %v183 = vld [vmem:[%s1 + $0x24] sm:$0xf]
  %v184 = vld [vmem:[%s1 + $0x28] sm:$0xf]
  %v185 = vld [vmem:[%s1 + $0x2c] sm:$0xf]
  %v186 = vld [vmem:[%s1 + $0x30] sm:$0xf]
  %v187 = vld [vmem:[%s1 + $0x34] sm:$0xf]
  %v188 = vld [vmem:[%s1 + $0x38] sm:$0xf]
  %v189 = vld [vmem:[%s1 + $0x3c] sm:$0xf]
  %v190 = vld [vmem:[%s1 + $0x40] sm:$0xf]
  %v191 = vld [vmem:[%s1 + $0x44] sm:$0xf]
  %v192 = vld [vmem:[%s1 + $0x48] sm:$0xf]
  %v193 = vld [vmem:[%s1 + $0x4c] sm:$0xf]
  %v194 = vld [vmem:[%s1 + $0x50] sm:$0xf]
  %v195 = vld [vmem:[%s1 + $0x54] sm:$0xf]
  %v196 = vld [vmem:[%s1 + $0x58] sm:$0xf]
  %v197 = vld [vmem:[%s1 + $0x5c] sm:$0xf]
  %v198 = vld [vmem:[%s1 + $0x60] sm:$0xf]
  %v199 = vld [vmem:[%s1 + $0x64] sm:$0xf]
  %v200 = vld [vmem:[%s1 + $0x68] sm:$0xf]
  %v201 = vld [vmem:[%s1 + $0x6c] sm:$0xf]
  %v202 = vld [vmem:[%s1 + $0x70] sm:$0xf]
  %v203 = vld [vmem:[%s1 + $0x74] sm:$0xf]
  %v204 = vld [vmem:[%s1 + $0x78] sm:$0xf]
  %v205 = vld [vmem:[%s1 + $0x7c] sm:$0xf]
  %v206 = vld [vmem:[%s1 + $0x80] sm:$0xf]
  %v207 = vld [vmem:[%s1 + $0x84] sm:$0xf]
  %v208 = vld [vmem:[%s1 + $0x88] sm:$0xf]
  %v209 = vld [vmem:[%s1 + $0x8c] sm:$0xf]
  %v210 = vld [vmem:[%s1 + $0x90] sm:$0xf]
  %v211 = vld [vmem:[%s1 + $0x94] sm:$0xf]
  %v212 = vld [vmem:[%s1 + $0x98] sm:$0xf]
  %v213 = vld [vmem:[%s1 + $0x9c] sm:$0xf]
  %v214 = vld [vmem:[%s1 + $0xa0] sm:$0xf]
  %v215 = vld [vmem:[%s1 + $0xa4] sm:$0xf]
  %v216 = vld [vmem:[%s1 + $0xa8] sm:$0xf]
  %v217 = vld [vmem:[%s1 + $0xac] sm:$0xf]
  %v218 = vld [vmem:[%s1 + $0xb0] sm:$0xf]
  %v219 = vld [vmem:[%s1 + $0xb4] sm:$0xf]
  %v220 = vld [vmem:[%s1 + $0xb8] sm:$0xf]
  %v221 = vld [vmem:[%s1 + $0xbc] sm:$0xf]
  %v222 = vld [vmem:[%s1 + $0xc0] sm:$0xf]
  %v223 = vld [vmem:[%s1 + $0xc4] sm:$0xf]
  %v224 = vld [vmem:[%s1 + $0xc8] sm:$0xf]
  %v225 = vld [vmem:[%s1 + $0xcc] sm:$0xf]
  %v226 = vld [vmem:[%s1 + $0xd0] sm:$0xf]
  %v227 = vld [vmem:[%s1 + $0xd4] sm:$0xf]
  %v228 = vld [vmem:[%s1 + $0xd8] sm:$0xf]
  %v229 = vld [vmem:[%s1 + $0xdc] sm:$0xf]
  %v230 = vld [vmem:[%s1 + $0xe0] sm:$0xf]
  %v231 = vld [vmem:[%s1 + $0xe4] sm:$0xf]
  %v232 = vld [vmem:[%s1 + $0xe8] sm:$0xf]
  %v233 = vld [vmem:[%s1 + $0xec] sm:$0xf]
  %v234 = vld [vmem:[%s1 + $0xf0] sm:$0xf]
  %v235 = vld [vmem:[%s1 + $0xf4] sm:$0xf]
  %v236 = vld [vmem:[%s1 + $0xf8] sm:$0xf]
  %v237 = vld [vmem:[%s1 + $0xfc] sm:$0xf]
  %v238 = vld [vmem:[%s1 + $0x100] sm:$0xf]
  %v239 = vld [vmem:[%s1 + $0x104] sm:$0xf]
  %v240 = vld [vmem:[%s1 + $0x108] sm:$0xf]
  %v241 = vld [vmem:[%s1 + $0x10c] sm:$0xf]
  %v242 = vld [vmem:[%s1 + $0x110] sm:$0xf]
  %v243 = vld [vmem:[%s1 + $0x114] sm:$0xf]
  %v244 = vld [vmem:[%s1 + $0x118] sm:$0xf]
  %v245 = vld [vmem:[%s1 + $0x11c] sm:$0xf]
  %v246 = vld [vmem:[%s1 + $0x120] sm:$0xf]
  %v247 = vld [vmem:[%s1 + $0x124] sm:$0xf]
  %v248 = vld [vmem:[%s1 + $0x128] sm:$0xf]
  %v249 = vld [vmem:[%s1 + $0x12c] sm:$0xf]
  %v250 = vld [vmem:[%s1 + $0x130] sm:$0xf]
  %v251 = vld [vmem:[%s1 + $0x134] sm:$0xf]
  %v252 = vld [vmem:[%s1 + $0x138] sm:$0xf]
  %v253 = vld [vmem:[%s1 + $0x13c] sm:$0xf]
  %v254 = vld [vmem:[%s1 + $0x140] sm:$0xf]
  %v255 = vld [vmem:[%s1 + $0x144] sm:$0xf]
  %v256 = vld [vmem:[%s1 + $0x148] sm:$0xf]
  %v257 = vld [vmem:[%s1 + $0x14c] sm:$0xf]
  %v258 = vld [vmem:[%s1 + $0x150] sm:$0xf]
  %v259 = vld [vmem:[%s1 + $0x154] sm:$0xf]
  %v260 = vld [vmem:[%s1 + $0x158] sm:$0xf]
  %v261 = vld [vmem:[%s1 + $0x15c] sm:$0xf]
  %v262 = vld [vmem:[%s1 + $0x160] sm:$0xf]
  %v263 = vld [vmem:[%s1 + $0x164] sm:$0xf]
  %v264 = vld [vmem:[%s1 + $0x168] sm:$0xf]
  %v265 = vld [vmem:[%s1 + $0x16c] sm:$0xf]
  %v266 = vld [vmem:[%s1 + $0x170] sm:$0xf]
  %v267 = vld [vmem:[%s1 + $0x174] sm:$0xf]
  %v268 = vld [vmem:[%s1 + $0x178] sm:$0xf]
  %v269 = vld [vmem:[%s1 + $0x17c] sm:$0xf]
  %v270 = vld [vmem:[%s1 + $0x180] sm:$0xf]
  %v271 = vld [vmem:[%s1 + $0x184] sm:$0xf]
  %v272 = vld [vmem:[%s1 + $0x188] sm:$0xf]
  %v273 = vld [vmem:[%s1 + $0x18c] sm:$0xf]
  %v274 = vld [vmem:[%s1 + $0x190] sm:$0xf]
  %v275 = vld [vmem:[%s1 + $0x194] sm:$0xf]
  %v276 = vld [vmem:[%s1 + $0x198] sm:$0xf]
  %v277 = vld [vmem:[%s1 + $0x19c] sm:$0xf]
  %v278 = vld [vmem:[%s1 + $0x1a0] sm:$0xf]
  %v279 = vld [vmem:[%s1 + $0x1a4] sm:$0xf]
  %v280 = vld [vmem:[%s1 + $0x1a8] sm:$0xf]
  %v281 = vld [vmem:[%s1 + $0x1ac] sm:$0xf]
  %v282 = vld [vmem:[%s1 + $0x1b0] sm:$0xf]
  %v283 = vld [vmem:[%s1 + $0x1b4] sm:$0xf]
  %v284 = vld [vmem:[%s1 + $0x1b8] sm:$0xf]
  %v285 = vld [vmem:[%s1 + $0x1bc] sm:$0xf]
  %v286 = vld [vmem:[%s1 + $0x1c0] sm:$0xf]
  %v287 = vld [vmem:[%s1 + $0x1c4] sm:$0xf]
  %v288 = vld [vmem:[%s1 + $0x1c8] sm:$0xf]
  %v289 = vld [vmem:[%s1 + $0x1cc] sm:$0xf]
  %v290 = vld [vmem:[%s1 + $0x1d0] sm:$0xf]
  %v291 = vld [vmem:[%s1 + $0x1d4] sm:$0xf]
  %v292 = vld [vmem:[%s1 + $0x1d8] sm:$0xf]
  %v293 = vld [vmem:[%s1 + $0x1dc] sm:$0xf]
  %v294 = vld [vmem:[%s1 + $0x1e0] sm:$0xf]
  %v295 = vld [vmem:[%s1 + $0x1e4] sm:$0xf]
  %v296 = vld [vmem:[%s1 + $0x1e8] sm:$0xf]
  %v297 = vld [vmem:[%s1 + $0x1ec] sm:$0xf]
  %v298 = vld [vmem:[%s1 + $0x1f0] sm:$0xf]
  %v299 = vld [vmem:[%s1 + $0x1f4] sm:$0xf]
  %v300 = vld [vmem:[%s1 + $0x1f8] sm:$0xf]
  %v301 = vld [vmem:[%s1 + $0x1fc] sm:$0xf]
  %v302 = vld [vmem:[%s1 + $0x200] sm:$0xf]
  %v303 = vld [vmem:[%s1 + $0x204] sm:$0xf]
  %v304 = vld [vmem:[%s1 + $0x208] sm:$0xf]
  %v305 = vld [vmem:[%s1 + $0x20c] sm:$0xf]
  %v306 = vld [vmem:[%s1 + $0x210] sm:$0xf]
  %v307 = vld [vmem:[%s1 + $0x214] sm:$0xf]
  %v308 = vld [vmem:[%s1 + $0x218] sm:$0xf]
  %v309 = vld [vmem:[%s1 + $0x21c] sm:$0xf]
  %v310 = vld [vmem:[%s1 + $0x220] sm:$0xf]
  %v311 = vld [vmem:[%s1 + $0x224] sm:$0xf]
  %v312 = vld [vmem:[%s1 + $0x228] sm:$0xf]
  %v313 = vld [vmem:[%s1 + $0x22c] sm:$0xf]
  %v314 = vld [vmem:[%s1 + $0x230] sm:$0xf]
  %v315 = vld [vmem:[%s1 + $0x234] sm:$0xf]
  %v316 = vld [vmem:[%s1 + $0x238] sm:$0xf]
  %v317 = vld [vmem:[%s1 + $0x23c] sm:$0xf]
  %v478 = vunpack.c.l.b16 %v14
  %v479 = vunpack.c.h.b16 %v14
  %v480 = vunpack.c.l.b16 %v15
  %v481 = vunpack.c.h.b16 %v15
  %v482 = vunpack.c.l.b16 %v16
  %v483 = vunpack.c.h.b16 %v16
  %v484 = vunpack.c.l.b16 %v17
  %v485 = vunpack.c.h.b16 %v17
  %v486 = vunpack.c.l.b16 %v18
  %v487 = vunpack.c.l.b16 %v19
  %v488 = vunpack.c.h.b16 %v19
  %v489 = vunpack.c.l.b16 %v20
  %v490 = vunpack.c.h.b16 %v20
  %v491 = vunpack.c.l.b16 %v21
  %v492 = vunpack.c.h.b16 %v21
  %v493 = vunpack.c.l.b16 %v22
  %v494 = vunpack.c.h.b16 %v22
  %v495 = vunpack.c.l.b16 %v23
  %v496 = vunpack.c.l.b16 %v24
  %v497 = vunpack.c.h.b16 %v24
  %v498 = vunpack.c.l.b16 %v25
  %v499 = vunpack.c.h.b16 %v25
  %v500 = vunpack.c.l.b16 %v26
  %v501 = vunpack.c.h.b16 %v26
  %v502 = vunpack.c.l.b16 %v27
  %v503 = vunpack.c.h.b16 %v27
  %v504 = vunpack.c.l.b16 %v28
  %v505 = vunpack.c.l.b16 %v29
  %v506 = vunpack.c.h.b16 %v29
  %v507 = vunpack.c.l.b16 %v30
  %v508 = vunpack.c.h.b16 %v30
  %v509 = vunpack.c.l.b16 %v31
  %v510 = vunpack.c.h.b16 %v31
  %v511 = vunpack.c.l.b16 %v32
  %v512 = vunpack.c.h.b16 %v32
  %v513 = vunpack.c.l.b16 %v33
  %v514 = vunpack.c.l.b16 %v34
  %v515 = vunpack.c.h.b16 %v34
  %v516 = vunpack.c.l.b16 %v35
  %v517 = vunpack.c.h.b16 %v35
  %v518 = vunpack.c.l.b16 %v36
  %v519 = vunpack.c.h.b16 %v36
  %v520 = vunpack.c.l.b16 %v37
  %v521 = vunpack.c.h.b16 %v37
  %v522 = vunpack.c.l.b16 %v38
  %v523 = vunpack.c.l.b16 %v39
  %v524 = vunpack.c.h.b16 %v39
  %v525 = vunpack.c.l.b16 %v40
  %v526 = vunpack.c.h.b16 %v40
  %v527 = vunpack.c.l.b16 %v41
  %v528 = vunpack.c.h.b16 %v41
  %v529 = vunpack.c.l.b16 %v42
  %v530 = vunpack.c.h.b16 %v42
  %v531 = vunpack.c.l.b16 %v43
  %v532 = vunpack.c.l.b16 %v44
  %v533 = vunpack.c.h.b16 %v44
  %v534 = vunpack.c.l.b16 %v45
  %v535 = vunpack.c.h.b16 %v45
  %v536 = vunpack.c.l.b16 %v46
  %v537 = vunpack.c.h.b16 %v46
  %v538 = vunpack.c.l.b16 %v47
  %v539 = vunpack.c.h.b16 %v47
  %v540 = vunpack.c.l.b16 %v48
  %v541 = vunpack.c.l.b16 %v49
  %v542 = vunpack.c.h.b16 %v49
  %v543 = vunpack.c.l.b16 %v50
  %v544 = vunpack.c.h.b16 %v50
  %v545 = vunpack.c.l.b16 %v51
  %v546 = vunpack.c.h.b16 %v51
  %v547 = vunpack.c.l.b16 %v52
  %v548 = vunpack.c.h.b16 %v52
  %v549 = vunpack.c.l.b16 %v53
  %v550 = vunpack.c.l.b16 %v54
  %v551 = vunpack.c.h.b16 %v54
  %v552 = vunpack.c.l.b16 %v55
  %v553 = vunpack.c.h.b16 %v55
  %v554 = vunpack.c.l.b16 %v56
  %v555 = vunpack.c.h.b16 %v56
  %v556 = vunpack.c.l.b16 %v57
  %v557 = vunpack.c.h.b16 %v57
  %v558 = vunpack.c.l.b16 %v58
  %v559 = vunpack.c.l.b16 %v59
  %v560 = vunpack.c.h.b16 %v59
  %v561 = vunpack.c.l.b16 %v60
  %v562 = vunpack.c.h.b16 %v60
  %v563 = vunpack.c.l.b16 %v61
  %v564 = vunpack.c.h.b16 %v61
  %v565 = vunpack.c.l.b16 %v62
  %v566 = vunpack.c.h.b16 %v62
  %v567 = vunpack.c.l.b16 %v63
  %v568 = vunpack.c.l.b16 %v64
  %v569 = vunpack.c.h.b16 %v64
  %v570 = vunpack.c.l.b16 %v65
  %v571 = vunpack.c.h.b16 %v65
  %v572 = vunpack.c.l.b16 %v66
  %v573 = vunpack.c.h.b16 %v66
  %v574 = vunpack.c.l.b16 %v67
  %v575 = vunpack.c.h.b16 %v67
  %v576 = vunpack.c.l.b16 %v68
  %v577 = vunpack.c.l.b16 %v69
  %v578 = vunpack.c.h.b16 %v69
  %v579 = vunpack.c.l.b16 %v70
  %v580 = vunpack.c.h.b16 %v70
  %v581 = vunpack.c.l.b16 %v71
  %v582 = vunpack.c.h.b16 %v71
  %v583 = vunpack.c.l.b16 %v72
  %v584 = vunpack.c.h.b16 %v72
  %v585 = vunpack.c.l.b16 %v73
  %v586 = vunpack.c.l.b16 %v74
  %v587 = vunpack.c.h.b16 %v74
  %v588 = vunpack.c.l.b16 %v75
  %v589 = vunpack.c.h.b16 %v75
  %v590 = vunpack.c.l.b16 %v76
  %v591 = vunpack.c.h.b16 %v76
  %v592 = vunpack.c.l.b16 %v77
  %v593 = vunpack.c.h.b16 %v77
  %v594 = vunpack.c.l.b16 %v78
  %v595 = vunpack.c.l.b16 %v79
  %v596 = vunpack.c.h.b16 %v79
  %v597 = vunpack.c.l.b16 %v80
  %v598 = vunpack.c.h.b16 %v80
  %v599 = vunpack.c.l.b16 %v81
  %v600 = vunpack.c.h.b16 %v81
  %v601 = vunpack.c.l.b16 %v82
  %v602 = vunpack.c.h.b16 %v82
  %v603 = vunpack.c.l.b16 %v83
  %v604 = vunpack.c.l.b16 %v84
  %v605 = vunpack.c.h.b16 %v84
  %v606 = vunpack.c.l.b16 %v85
  %v607 = vunpack.c.h.b16 %v85
  %v608 = vunpack.c.l.b16 %v86
  %v609 = vunpack.c.h.b16 %v86
  %v610 = vunpack.c.l.b16 %v87
  %v611 = vunpack.c.h.b16 %v87
  %v612 = vunpack.c.l.b16 %v88
  %v613 = vunpack.c.l.b16 %v89
  %v614 = vunpack.c.h.b16 %v89
  %v615 = vunpack.c.l.b16 %v90
  %v616 = vunpack.c.h.b16 %v90
  %v617 = vunpack.c.l.b16 %v91
  %v618 = vunpack.c.h.b16 %v91
  %v619 = vunpack.c.l.b16 %v92
  %v620 = vunpack.c.h.b16 %v92
  %v621 = vunpack.c.l.b16 %v93
  %v622 = vunpack.c.l.b16 %v94
  %v623 = vunpack.c.h.b16 %v94
  %v624 = vunpack.c.l.b16 %v95
  %v625 = vunpack.c.h.b16 %v95
  %v626 = vunpack.c.l.b16 %v96
  %v627 = vunpack.c.h.b16 %v96
  %v628 = vunpack.c.l.b16 %v97
  %v629 = vunpack.c.h.b16 %v97
  %v630 = vunpack.c.l.b16 %v98
  %v631 = vunpack.c.l.b16 %v99
  %v632 = vunpack.c.h.b16 %v99
  %v633 = vunpack.c.l.b16 %v100
  %v634 = vunpack.c.h.b16 %v100
  %v635 = vunpack.c.l.b16 %v101
  %v636 = vunpack.c.h.b16 %v101
  %v637 = vunpack.c.l.b16 %v102
  %v638 = vunpack.c.h.b16 %v102
  %v639 = vunpack.c.l.b16 %v103
  %v640 = vunpack.c.l.b16 %v104
  %v641 = vunpack.c.h.b16 %v104
  %v642 = vunpack.c.l.b16 %v105
  %v643 = vunpack.c.h.b16 %v105
  %v644 = vunpack.c.l.b16 %v106
  %v645 = vunpack.c.h.b16 %v106
  %v646 = vunpack.c.l.b16 %v107
  %v647 = vunpack.c.h.b16 %v107
  %v648 = vunpack.c.l.b16 %v108
  %v649 = vunpack.c.l.b16 %v109
  %v650 = vunpack.c.h.b16 %v109
  %v651 = vunpack.c.l.b16 %v110
  %v652 = vunpack.c.h.b16 %v110
  %v653 = vunpack.c.l.b16 %v111
  %v654 = vunpack.c.h.b16 %v111
  %v655 = vunpack.c.l.b16 %v112
  %v656 = vunpack.c.h.b16 %v112
  %v657 = vunpack.c.l.b16 %v113
  %v658 = vunpack.c.l.b16 %v114
  %v659 = vunpack.c.h.b16 %v114
  %v660 = vunpack.c.l.b16 %v115
  %v661 = vunpack.c.h.b16 %v115
  %v662 = vunpack.c.l.b16 %v116
  %v663 = vunpack.c.h.b16 %v116
  %v664 = vunpack.c.l.b16 %v117
  %v665 = vunpack.c.h.b16 %v117
  %v666 = vunpack.c.l.b16 %v118
  %v667 = vunpack.c.l.b16 %v119
  %v668 = vunpack.c.h.b16 %v119
  %v669 = vunpack.c.l.b16 %v120
  %v670 = vunpack.c.h.b16 %v120
  %v671 = vunpack.c.l.b16 %v121
  %v672 = vunpack.c.h.b16 %v121
  %v673 = vunpack.c.l.b16 %v122
  %v674 = vunpack.c.h.b16 %v122
  %v675 = vunpack.c.l.b16 %v123
  %v676 = vunpack.c.l.b16 %v124
  %v677 = vunpack.c.h.b16 %v124
  %v678 = vunpack.c.l.b16 %v125
  %v679 = vunpack.c.h.b16 %v125
  %v680 = vunpack.c.l.b16 %v126
  %v681 = vunpack.c.h.b16 %v126
  %v682 = vunpack.c.l.b16 %v127
  %v683 = vunpack.c.h.b16 %v127
  %v684 = vunpack.c.l.b16 %v128
  %v685 = vunpack.c.l.b16 %v129
  %v686 = vunpack.c.h.b16 %v129
  %v687 = vunpack.c.l.b16 %v130
  %v688 = vunpack.c.h.b16 %v130
  %v689 = vunpack.c.l.b16 %v131
  %v690 = vunpack.c.h.b16 %v131
  %v691 = vunpack.c.l.b16 %v132
  %v692 = vunpack.c.h.b16 %v132
  %v693 = vunpack.c.l.b16 %v133
  %v694 = vunpack.c.l.b16 %v134
  %v695 = vunpack.c.h.b16 %v134
  %v696 = vunpack.c.l.b16 %v135
  %v697 = vunpack.c.h.b16 %v135
  %v698 = vunpack.c.l.b16 %v136
  %v699 = vunpack.c.h.b16 %v136
  %v700 = vunpack.c.l.b16 %v137
  %v701 = vunpack.c.h.b16 %v137
  %v702 = vunpack.c.l.b16 %v138
  %v703 = vunpack.c.l.b16 %v139
  %v704 = vunpack.c.h.b16 %v139
  %v705 = vunpack.c.l.b16 %v140
  %v706 = vunpack.c.h.b16 %v140
  %v707 = vunpack.c.l.b16 %v141
  %v708 = vunpack.c.h.b16 %v141
  %v709 = vunpack.c.l.b16 %v142
  %v710 = vunpack.c.h.b16 %v142
  %v711 = vunpack.c.l.b16 %v143
  %v712 = vunpack.c.l.b16 %v144
  %v713 = vunpack.c.h.b16 %v144
  %v714 = vunpack.c.l.b16 %v145
  %v715 = vunpack.c.h.b16 %v145
  %v716 = vunpack.c.l.b16 %v146
  %v717 = vunpack.c.h.b16 %v146
  %v718 = vunpack.c.l.b16 %v147
  %v719 = vunpack.c.h.b16 %v147
  %v720 = vunpack.c.l.b16 %v148
  %v721 = vunpack.c.l.b16 %v149
  %v722 = vunpack.c.h.b16 %v149
  %v723 = vunpack.c.l.b16 %v150
  %v724 = vunpack.c.h.b16 %v150
  %v725 = vunpack.c.l.b16 %v151
  %v726 = vunpack.c.h.b16 %v151
  %v727 = vunpack.c.l.b16 %v152
  %v728 = vunpack.c.h.b16 %v152
  %v729 = vunpack.c.l.b16 %v153
  %v730 = vunpack.c.l.b16 %v154
  %v731 = vunpack.c.h.b16 %v154
  %v732 = vunpack.c.l.b16 %v155
  %v733 = vunpack.c.h.b16 %v155
  %v734 = vunpack.c.l.b16 %v156
  %v735 = vunpack.c.h.b16 %v156
  %v736 = vunpack.c.l.b16 %v157
  %v737 = vunpack.c.h.b16 %v157
  %v738 = vunpack.c.l.b16 %v158
  %v739 = vunpack.c.l.b16 %v159
  %v740 = vunpack.c.h.b16 %v159
  %v741 = vunpack.c.l.b16 %v160
  %v742 = vunpack.c.h.b16 %v160
  %v743 = vunpack.c.l.b16 %v161
  %v744 = vunpack.c.h.b16 %v161
  %v745 = vunpack.c.l.b16 %v162
  %v746 = vunpack.c.h.b16 %v162
  %v747 = vunpack.c.l.b16 %v163
  %v748 = vunpack.c.l.b16 %v164
  %v749 = vunpack.c.h.b16 %v164
  %v750 = vunpack.c.l.b16 %v165
  %v751 = vunpack.c.h.b16 %v165
  %v752 = vunpack.c.l.b16 %v166
  %v753 = vunpack.c.h.b16 %v166
  %v754 = vunpack.c.l.b16 %v167
  %v755 = vunpack.c.h.b16 %v167
  %v756 = vunpack.c.l.b16 %v168
  %v757 = vunpack.c.l.b16 %v169
  %v758 = vunpack.c.h.b16 %v169
  %v759 = vunpack.c.l.b16 %v170
  %v760 = vunpack.c.h.b16 %v170
  %v761 = vunpack.c.l.b16 %v171
  %v762 = vunpack.c.h.b16 %v171
  %v763 = vunpack.c.l.b16 %v172
  %v764 = vunpack.c.h.b16 %v172
  %v765 = vunpack.c.l.b16 %v173
  %v766 = vpack.c.b16 %v487, %v478
  %v767 = vpack.c.b16 %v488, %v479
  %v768 = vpack.c.b16 %v489, %v480
  %v769 = vpack.c.b16 %v490, %v481
  %v770 = vpack.c.b16 %v491, %v482
  %v771 = vpack.c.b16 %v492, %v483
  %v772 = vpack.c.b16 %v493, %v484
  %v773 = vpack.c.b16 %v494, %v485
  %v774 = vpack.c.b16 %v495, %v486
  %v775 = vpack.c.b16 %v505, %v496
  %v776 = vpack.c.b16 %v506, %v497
  %v777 = vpack.c.b16 %v507, %v498
  %v778 = vpack.c.b16 %v508, %v499
  %v779 = vpack.c.b16 %v509, %v500
  %v780 = vpack.c.b16 %v510, %v501
  %v781 = vpack.c.b16 %v511, %v502
  %v782 = vpack.c.b16 %v512, %v503
  %v783 = vpack.c.b16 %v513, %v504
  %v784 = vpack.c.b16 %v523, %v514
  %v785 = vpack.c.b16 %v524, %v515
  %v786 = vpack.c.b16 %v525, %v516
  %v787 = vpack.c.b16 %v526, %v517
  %v788 = vpack.c.b16 %v527, %v518
  %v789 = vpack.c.b16 %v528, %v519
  %v790 = vpack.c.b16 %v529, %v520
  %v791 = vpack.c.b16 %v530, %v521
  %v792 = vpack.c.b16 %v531, %v522
  %v793 = vpack.c.b16 %v541, %v532
  %v794 = vpack.c.b16 %v542, %v533
  %v795 = vpack.c.b16 %v543, %v534
  %v796 = vpack.c.b16 %v544, %v535
  %v797 = vpack.c.b16 %v545, %v536
  %v798 = vpack.c.b16 %v546, %v537
  %v799 = vpack.c.b16 %v547, %v538
  %v800 = vpack.c.b16 %v548, %v539
  %v801 = vpack.c.b16 %v549, %v540
  %v802 = vpack.c.b16 %v559, %v550
  %v803 = vpack.c.b16 %v560, %v551
  %v804 = vpack.c.b16 %v561, %v552
  %v805 = vpack.c.b16 %v562, %v553
  %v806 = vpack.c.b16 %v563, %v554
  %v807 = vpack.c.b16 %v564, %v555
  %v808 = vpack.c.b16 %v565, %v556
  %v809 = vpack.c.b16 %v566, %v557
  %v810 = vpack.c.b16 %v567, %v558
  %v811 = vpack.c.b16 %v577, %v568
  %v812 = vpack.c.b16 %v578, %v569
  %v813 = vpack.c.b16 %v579, %v570
  %v814 = vpack.c.b16 %v580, %v571
  %v815 = vpack.c.b16 %v581, %v572
  %v816 = vpack.c.b16 %v582, %v573
  %v817 = vpack.c.b16 %v583, %v574
  %v818 = vpack.c.b16 %v584, %v575
  %v819 = vpack.c.b16 %v585, %v576
  %v820 = vpack.c.b16 %v595, %v586
  %v821 = vpack.c.b16 %v596, %v587
  %v822 = vpack.c.b16 %v597, %v588
  %v823 = vpack.c.b16 %v598, %v589
  %v824 = vpack.c.b16 %v599, %v590
  %v825 = vpack.c.b16 %v600, %v591
  %v826 = vpack.c.b16 %v601, %v592
  %v827 = vpack.c.b16 %v602, %v593
  %v828 = vpack.c.b16 %v603, %v594
  %v829 = vpack.c.b16 %v613, %v604
  %v830 = vpack.c.b16 %v614, %v605
  %v831 = vpack.c.b16 %v615, %v606
  %v832 = vpack.c.b16 %v616, %v607
  %v833 = vpack.c.b16 %v617, %v608
  %v834 = vpack.c.b16 %v618, %v609
  %v835 = vpack.c.b16 %v619, %v610
  %v836 = vpack.c.b16 %v620, %v611
  %v837 = vpack.c.b16 %v621, %v612
  %v838 = vpack.c.b16 %v631, %v622
  %v839 = vpack.c.b16 %v632, %v623
  %v840 = vpack.c.b16 %v633, %v624
  %v841 = vpack.c.b16 %v634, %v625
  %v842 = vpack.c.b16 %v635, %v626
  %v843 = vpack.c.b16 %v636, %v627
  %v844 = vpack.c.b16 %v637, %v628
  %v845 = vpack.c.b16 %v638, %v629
  %v846 = vpack.c.b16 %v639, %v630
  %v847 = vpack.c.b16 %v649, %v640
  %v848 = vpack.c.b16 %v650, %v641
  %v849 = vpack.c.b16 %v651, %v642
  %v850 = vpack.c.b16 %v652, %v643
  %v851 = vpack.c.b16 %v653, %v644
  %v852 = vpack.c.b16 %v654, %v645
  %v853 = vpack.c.b16 %v655, %v646
  %v854 = vpack.c.b16 %v656, %v647
  %v855 = vpack.c.b16 %v657, %v648
  %v856 = vpack.c.b16 %v667, %v658
  %v857 = vpack.c.b16 %v668, %v659
  %v858 = vpack.c.b16 %v669, %v660
  %v859 = vpack.c.b16 %v670, %v661
  %v860 = vpack.c.b16 %v671, %v662
  %v861 = vpack.c.b16 %v672, %v663
  %v862 = vpack.c.b16 %v673, %v664
  %v863 = vpack.c.b16 %v674, %v665
  %v864 = vpack.c.b16 %v675, %v666
  %v865 = vpack.c.b16 %v685, %v676
  %v866 = vpack.c.b16 %v686, %v677
  %v867 = vpack.c.b16 %v687, %v678
  %v868 = vpack.c.b16 %v688, %v679
  %v869 = vpack.c.b16 %v689, %v680
  %v870 = vpack.c.b16 %v690, %v681
  %v871 = vpack.c.b16 %v691, %v682
  %v872 = vpack.c.b16 %v692, %v683
  %v873 = vpack.c.b16 %v693, %v684
  %v874 = vpack.c.b16 %v703, %v694
  %v875 = vpack.c.b16 %v704, %v695
  %v876 = vpack.c.b16 %v705, %v696
  %v877 = vpack.c.b16 %v706, %v697
  %v878 = vpack.c.b16 %v707, %v698
  %v879 = vpack.c.b16 %v708, %v699
  %v880 = vpack.c.b16 %v709, %v700
  %v881 = vpack.c.b16 %v710, %v701
  %v882 = vpack.c.b16 %v711, %v702
  %v883 = vpack.c.b16 %v721, %v712
  %v884 = vpack.c.b16 %v722, %v713
  %v885 = vpack.c.b16 %v723, %v714
  %v886 = vpack.c.b16 %v724, %v715
  %v887 = vpack.c.b16 %v725, %v716
  %v888 = vpack.c.b16 %v726, %v717
  %v889 = vpack.c.b16 %v727, %v718
  %v890 = vpack.c.b16 %v728, %v719
  %v891 = vpack.c.b16 %v729, %v720
  %v892 = vpack.c.b16 %v739, %v730
  %v893 = vpack.c.b16 %v740, %v731
  %v894 = vpack.c.b16 %v741, %v732
  %v895 = vpack.c.b16 %v742, %v733
  %v896 = vpack.c.b16 %v743, %v734
  %v897 = vpack.c.b16 %v744, %v735
  %v898 = vpack.c.b16 %v745, %v736
  %v899 = vpack.c.b16 %v746, %v737
  %v900 = vpack.c.b16 %v747, %v738
  %v901 = vpack.c.b16 %v757, %v748
  %v902 = vpack.c.b16 %v758, %v749
  %v903 = vpack.c.b16 %v759, %v750
  %v904 = vpack.c.b16 %v760, %v751
  %v905 = vpack.c.b16 %v761, %v752
  %v906 = vpack.c.b16 %v762, %v753
  %v907 = vpack.c.b16 %v763, %v754
  %v908 = vpack.c.b16 %v764, %v755
  %v909 = vpack.c.b16 %v765, %v756
  %v1198 = vunpack.c.l.b16 %v174
  %v1199 = vunpack.c.l.b16 %v175
  %v1200 = vunpack.c.l.b16 %v176
  %v1201 = vunpack.c.l.b16 %v177
  %v1202 = vunpack.c.l.b16 %v178
  %v1203 = vunpack.c.l.b16 %v179
  %v1204 = vunpack.c.l.b16 %v180
  %v1205 = vunpack.c.l.b16 %v181
  %v1206 = vunpack.c.l.b16 %v182
  %v1207 = vunpack.c.l.b16 %v183
  %v1208 = vunpack.c.l.b16 %v184
  %v1209 = vunpack.c.l.b16 %v185
  %v1210 = vunpack.c.l.b16 %v186
  %v1211 = vunpack.c.l.b16 %v187
  %v1212 = vunpack.c.l.b16 %v188
  %v1213 = vunpack.c.l.b16 %v189
  %v1214 = vunpack.c.l.b16 %v190
  %v1215 = vunpack.c.l.b16 %v191
  %v1216 = vunpack.c.l.b16 %v192
  %v1217 = vunpack.c.l.b16 %v193
  %v1218 = vunpack.c.l.b16 %v194
  %v1219 = vunpack.c.l.b16 %v195
  %v1220 = vunpack.c.l.b16 %v196
  %v1221 = vunpack.c.l.b16 %v197
  %v1222 = vunpack.c.l.b16 %v198
  %v1223 = vunpack.c.l.b16 %v199
  %v1224 = vunpack.c.l.b16 %v200
  %v1225 = vunpack.c.l.b16 %v201
  %v1226 = vunpack.c.l.b16 %v202
  %v1227 = vunpack.c.l.b16 %v203
  %v1228 = vunpack.c.l.b16 %v204
  %v1229 = vunpack.c.l.b16 %v205
  %v1230 = vunpack.c.l.b16 %v206
  %v1231 = vunpack.c.l.b16 %v207
  %v1232 = vunpack.c.l.b16 %v208
  %v1233 = vunpack.c.l.b16 %v209
  %v1234 = vunpack.c.l.b16 %v210
  %v1235 = vunpack.c.l.b16 %v211
  %v1236 = vunpack.c.l.b16 %v212
  %v1237 = vunpack.c.l.b16 %v213
  %v1238 = vunpack.c.l.b16 %v214
  %v1239 = vunpack.c.l.b16 %v215
  %v1240 = vunpack.c.l.b16 %v216
  %v1241 = vunpack.c.l.b16 %v217
  %v1242 = vunpack.c.l.b16 %v218
  %v1243 = vunpack.c.l.b16 %v219
  %v1244 = vunpack.c.l.b16 %v220
  %v1245 = vunpack.c.l.b16 %v221
  %v1246 = vunpack.c.l.b16 %v222
  %v1247 = vunpack.c.l.b16 %v223
  %v1248 = vunpack.c.l.b16 %v224
  %v1249 = vunpack.c.l.b16 %v225
  %v1250 = vunpack.c.l.b16 %v226
  %v1251 = vunpack.c.l.b16 %v227
  %v1252 = vunpack.c.l.b16 %v228
  %v1253 = vunpack.c.l.b16 %v229
  %v1254 = vunpack.c.l.b16 %v230
  %v1255 = vunpack.c.l.b16 %v231
  %v1256 = vunpack.c.l.b16 %v232
  %v1257 = vunpack.c.l.b16 %v233
  %v1258 = vunpack.c.l.b16 %v234
  %v1259 = vunpack.c.l.b16 %v235
  %v1260 = vunpack.c.l.b16 %v236
  %v1261 = vunpack.c.l.b16 %v237
  %v1262 = vunpack.c.l.b16 %v238
  %v1263 = vunpack.c.l.b16 %v239
  %v1264 = vunpack.c.l.b16 %v240
  %v1265 = vunpack.c.l.b16 %v241
  %v1266 = vunpack.c.l.b16 %v242
  %v1267 = vunpack.c.l.b16 %v243
  %v1268 = vunpack.c.l.b16 %v244
  %v1269 = vunpack.c.l.b16 %v245
  %v1270 = vunpack.c.l.b16 %v246
  %v1271 = vunpack.c.l.b16 %v247
  %v1272 = vunpack.c.l.b16 %v248
  %v1273 = vunpack.c.l.b16 %v249
  %v1274 = vunpack.c.l.b16 %v250
  %v1275 = vunpack.c.l.b16 %v251
  %v1276 = vunpack.c.l.b16 %v252
  %v1277 = vunpack.c.l.b16 %v253
  %v1278 = vunpack.c.l.b16 %v254
  %v1279 = vunpack.c.l.b16 %v255
  %v1280 = vunpack.c.l.b16 %v256
  %v1281 = vunpack.c.l.b16 %v257
  %v1282 = vunpack.c.l.b16 %v258
  %v1283 = vunpack.c.l.b16 %v259
  %v1284 = vunpack.c.l.b16 %v260
  %v1285 = vunpack.c.l.b16 %v261
  %v1286 = vunpack.c.l.b16 %v262
  %v1287 = vunpack.c.l.b16 %v263
  %v1288 = vunpack.c.l.b16 %v264
  %v1289 = vunpack.c.l.b16 %v265
  %v1290 = vunpack.c.l.b16 %v266
  %v1291 = vunpack.c.l.b16 %v267
  %v1292 = vunpack.c.l.b16 %v268
  %v1293 = vunpack.c.l.b16 %v269
  %v1294 = vunpack.c.l.b16 %v270
  %v1295 = vunpack.c.l.b16 %v271
  %v1296 = vunpack.c.l.b16 %v272
  %v1297 = vunpack.c.l.b16 %v273
  %v1298 = vunpack.c.l.b16 %v274
  %v1299 = vunpack.c.l.b16 %v275
  %v1300 = vunpack.c.l.b16 %v276
  %v1301 = vunpack.c.l.b16 %v277
  %v1302 = vunpack.c.l.b16 %v278
  %v1303 = vunpack.c.l.b16 %v279
  %v1304 = vunpack.c.l.b16 %v280
  %v1305 = vunpack.c.l.b16 %v281
  %v1306 = vunpack.c.l.b16 %v282
  %v1307 = vunpack.c.l.b16 %v283
  %v1308 = vunpack.c.l.b16 %v284
  %v1309 = vunpack.c.l.b16 %v285
  %v1310 = vunpack.c.l.b16 %v286
  %v1311 = vunpack.c.l.b16 %v287
  %v1312 = vunpack.c.l.b16 %v288
  %v1313 = vunpack.c.l.b16 %v289
  %v1314 = vunpack.c.l.b16 %v290
  %v1315 = vunpack.c.l.b16 %v291
  %v1316 = vunpack.c.l.b16 %v292
  %v1317 = vunpack.c.l.b16 %v293
  %v1318 = vunpack.c.l.b16 %v294
  %v1319 = vunpack.c.l.b16 %v295
  %v1320 = vunpack.c.l.b16 %v296
  %v1321 = vunpack.c.l.b16 %v297
  %v1322 = vunpack.c.l.b16 %v298
  %v1323 = vunpack.c.l.b16 %v299
  %v1324 = vunpack.c.l.b16 %v300
  %v1325 = vunpack.c.l.b16 %v301
  %v1326 = vunpack.c.l.b16 %v302
  %v1327 = vunpack.c.l.b16 %v303
  %v1328 = vunpack.c.l.b16 %v304
  %v1329 = vunpack.c.l.b16 %v305
  %v1330 = vunpack.c.l.b16 %v306
  %v1331 = vunpack.c.l.b16 %v307
  %v1332 = vunpack.c.l.b16 %v308
  %v1333 = vunpack.c.l.b16 %v309
  %v1334 = vunpack.c.l.b16 %v310
  %v1335 = vunpack.c.l.b16 %v311
  %v1336 = vunpack.c.l.b16 %v312
  %v1337 = vunpack.c.l.b16 %v313
  %v1338 = vunpack.c.l.b16 %v314
  %v1339 = vunpack.c.l.b16 %v315
  %v1340 = vunpack.c.l.b16 %v316
  %v1341 = vunpack.c.l.b16 %v317
  %v1342 = vpack.c.b16 %v1199, %v1198
  %v1343 = vpack.c.b16 %v1201, %v1200
  %v1344 = vpack.c.b16 %v1203, %v1202
  %v1345 = vpack.c.b16 %v1205, %v1204
  %v1346 = vpack.c.b16 %v1207, %v1206
  %v1347 = vpack.c.b16 %v1209, %v1208
  %v1348 = vpack.c.b16 %v1211, %v1210
  %v1349 = vpack.c.b16 %v1213, %v1212
  %v1350 = vpack.c.b16 %v1215, %v1214
  %v1351 = vpack.c.b16 %v1217, %v1216
  %v1352 = vpack.c.b16 %v1219, %v1218
  %v1353 = vpack.c.b16 %v1221, %v1220
  %v1354 = vpack.c.b16 %v1223, %v1222
  %v1355 = vpack.c.b16 %v1225, %v1224
  %v1356 = vpack.c.b16 %v1227, %v1226
  %v1357 = vpack.c.b16 %v1229, %v1228
  %v1358 = vpack.c.b16 %v1231, %v1230
  %v1359 = vpack.c.b16 %v1233, %v1232
  %v1360 = vpack.c.b16 %v1235, %v1234
  %v1361 = vpack.c.b16 %v1237, %v1236
  %v1362 = vpack.c.b16 %v1239, %v1238
  %v1363 = vpack.c.b16 %v1241, %v1240
  %v1364 = vpack.c.b16 %v1243, %v1242
  %v1365 = vpack.c.b16 %v1245, %v1244
  %v1366 = vpack.c.b16 %v1247, %v1246
  %v1367 = vpack.c.b16 %v1249, %v1248
  %v1368 = vpack.c.b16 %v1251, %v1250
  %v1369 = vpack.c.b16 %v1253, %v1252
  %v1370 = vpack.c.b16 %v1255, %v1254
  %v1371 = vpack.c.b16 %v1257, %v1256
  %v1372 = vpack.c.b16 %v1259, %v1258
  %v1373 = vpack.c.b16 %v1261, %v1260
  %v1374 = vpack.c.b16 %v1263, %v1262
  %v1375 = vpack.c.b16 %v1265, %v1264
  %v1376 = vpack.c.b16 %v1267, %v1266
  %v1377 = vpack.c.b16 %v1269, %v1268
  %v1378 = vpack.c.b16 %v1271, %v1270
  %v1379 = vpack.c.b16 %v1273, %v1272
  %v1380 = vpack.c.b16 %v1275, %v1274
  %v1381 = vpack.c.b16 %v1277, %v1276
  %v1382 = vpack.c.b16 %v1279, %v1278
  %v1383 = vpack.c.b16 %v1281, %v1280
  %v1384 = vpack.c.b16 %v1283, %v1282
  %v1385 = vpack.c.b16 %v1285, %v1284
  %v1386 = vpack.c.b16 %v1287, %v1286
  %v1387 = vpack.c.b16 %v1289, %v1288
  %v1388 = vpack.c.b16 %v1291, %v1290
  %v1389 = vpack.c.b16 %v1293, %v1292
  %v1390 = vpack.c.b16 %v1295, %v1294
  %v1391 = vpack.c.b16 %v1297, %v1296
  %v1392 = vpack.c.b16 %v1299, %v1298
  %v1393 = vpack.c.b16 %v1301, %v1300
  %v1394 = vpack.c.b16 %v1303, %v1302
  %v1395 = vpack.c.b16 %v1305, %v1304
  %v1396 = vpack.c.b16 %v1307, %v1306
  %v1397 = vpack.c.b16 %v1309, %v1308
  %v1398 = vpack.c.b16 %v1311, %v1310
  %v1399 = vpack.c.b16 %v1313, %v1312
  %v1400 = vpack.c.b16 %v1315, %v1314
  %v1401 = vpack.c.b16 %v1317, %v1316
  %v1402 = vpack.c.b16 %v1319, %v1318
  %v1403 = vpack.c.b16 %v1321, %v1320
  %v1404 = vpack.c.b16 %v1323, %v1322
  %v1405 = vpack.c.b16 %v1325, %v1324
  %v1406 = vpack.c.b16 %v1327, %v1326
  %v1407 = vpack.c.b16 %v1329, %v1328
  %v1408 = vpack.c.b16 %v1331, %v1330
  %v1409 = vpack.c.b16 %v1333, %v1332
  %v1410 = vpack.c.b16 %v1335, %v1334
  %v1411 = vpack.c.b16 %v1337, %v1336
  %v1412 = vpack.c.b16 %v1339, %v1338
  %v1413 = vpack.c.b16 %v1341, %v1340
  %1486 = vmatprep.subr.bf16.mxu0 0
  %1487 = vmatpush1.bf16.msra.mxu0 %v1349
  %1488 = vmatprep.subr.bf16.mxu0 0
  %1489 = vmatpush1.bf16.msra.mxu0 %v1348
  %1490 = vmatprep.subr.bf16.mxu0 0
  %1491 = vmatpush1.bf16.msra.mxu0 %v1347
  %1492 = vmatprep.subr.bf16.mxu0 0
  %1493 = vmatpush1.bf16.msra.mxu0 %v1346
  %1494 = vmatprep.subr.bf16.mxu0 0
  %1495 = vmatpush1.bf16.msra.mxu0 %v1345
  %1496 = vmatprep.subr.bf16.mxu0 0
  %1497 = vmatpush1.bf16.msra.mxu0 %v1344
  %1498 = vmatprep.subr.bf16.mxu0 0
  %1499 = vmatpush1.bf16.msra.mxu0 %v1343
  %1500 = vmatprep.subr.bf16.mxu0 0
  %1501 = vmatpush1.bf16.msra.mxu0 %v1342
  %1502 = vmatprep.subr.bf16.mxu0 0
  %1503 = vmatpush2.bf16.msra.mxu0 %v1357
  %1504 = vmatprep.subr.bf16.mxu0 0
  %1505 = vmatpush2.bf16.msra.mxu0 %v1356
  %1506 = vmatprep.subr.bf16.mxu0 0
  %1507 = vmatpush2.bf16.msra.mxu0 %v1355
  %1508 = vmatprep.subr.bf16.mxu0 0
  %1509 = vmatpush2.bf16.msra.mxu0 %v1354
  %1510 = vmatprep.subr.bf16.mxu0 0
  %1511 = vmatpush2.bf16.msra.mxu0 %v1353
  %1512 = vmatprep.subr.bf16.mxu0 0
  %1513 = vmatpush2.bf16.msra.mxu0 %v1352
  %1514 = vmatprep.subr.bf16.mxu0 0
  %1515 = vmatpush2.bf16.msra.mxu0 %v1351
  %1516 = vmatprep.subr.bf16.mxu0 0
  %1517 = vmatpush2.bf16.msra.mxu0 %v1350
  %1518 = vmatprep.mubr.bf16.mxu0 %v767
  %1519 = vmatmul.mubr.bf16.gmra.mxu0 %v766
  %v1520 = vpop.f32.mrf.mxu0
  %v1521 = vadd.f32 0.0, %v1520
  %v1522 = vpop.f32.mrf.mxu0
  %v1523 = vpop.f32.mrf.mxu0
  %v1524 = vadd.f32 0.0, %v1523
  %v1525 = vpop.f32.mrf.mxu0
  %1526 = vmatprep.mubr.bf16.mxu0 %v776
  %1527 = vmatmul.mubr.bf16.gmra.mxu0 %v775
  %v1528 = vpop.f32.mrf.mxu0
  %v1529 = vadd.f32 0.0, %v1528
  %v1530 = vpop.f32.mrf.mxu0
  %v1531 = vpop.f32.mrf.mxu0
  %v1532 = vadd.f32 0.0, %v1531
  %v1533 = vpop.f32.mrf.mxu0
  %1534 = vmatprep.mubr.bf16.mxu0 %v785
  %1535 = vmatmul.mubr.bf16.gmra.mxu0 %v784
  %v1536 = vpop.f32.mrf.mxu0
  %v1537 = vadd.f32 0.0, %v1536
  %v1538 = vpop.f32.mrf.mxu0
  %v1539 = vpop.f32.mrf.mxu0
  %v1540 = vadd.f32 0.0, %v1539
  %v1541 = vpop.f32.mrf.mxu0
  %1542 = vmatprep.mubr.bf16.mxu0 %v794
  %1543 = vmatmul.mubr.bf16.gmra.mxu0 %v793
  %v1544 = vpop.f32.mrf.mxu0
  %v1545 = vadd.f32 0.0, %v1544
  %v1546 = vpop.f32.mrf.mxu0
  %v1547 = vpop.f32.mrf.mxu0
  %v1548 = vadd.f32 0.0, %v1547
  %v1549 = vpop.f32.mrf.mxu0
  %1550 = vmatprep.mubr.bf16.mxu0 %v803
  %1551 = vmatmul.mubr.bf16.gmra.mxu0 %v802
  %v1552 = vpop.f32.mrf.mxu0
  %v1553 = vadd.f32 0.0, %v1552
  %v1554 = vpop.f32.mrf.mxu0
  %v1555 = vpop.f32.mrf.mxu0
  %v1556 = vadd.f32 0.0, %v1555
  %v1557 = vpop.f32.mrf.mxu0
  %1558 = vmatprep.mubr.bf16.mxu0 %v812
  %1559 = vmatmul.mubr.bf16.gmra.mxu0 %v811
  %v1560 = vpop.f32.mrf.mxu0
  %v1561 = vadd.f32 0.0, %v1560
  %v1562 = vpop.f32.mrf.mxu0
  %v1563 = vpop.f32.mrf.mxu0
  %v1564 = vadd.f32 0.0, %v1563
  %v1565 = vpop.f32.mrf.mxu0
  %1566 = vmatprep.mubr.bf16.mxu0 %v821
  %1567 = vmatmul.mubr.bf16.gmra.mxu0 %v820
  %v1568 = vpop.f32.mrf.mxu0
  %v1569 = vadd.f32 0.0, %v1568
  %v1570 = vpop.f32.mrf.mxu0
  %v1571 = vpop.f32.mrf.mxu0
  %v1572 = vadd.f32 0.0, %v1571
  %v1573 = vpop.f32.mrf.mxu0
  %1574 = vmatprep.mubr.bf16.mxu0 %v830
  %1575 = vmatmul.mubr.bf16.gmra.mxu0 %v829
  %v1576 = vpop.f32.mrf.mxu0
  %v1577 = vadd.f32 0.0, %v1576
  %v1578 = vpop.f32.mrf.mxu0
  %v1579 = vpop.f32.mrf.mxu0
  %v1580 = vadd.f32 0.0, %v1579
  %v1581 = vpop.f32.mrf.mxu0
  %1582 = vmatprep.mubr.bf16.mxu0 %v839
  %1583 = vmatmul.mubr.bf16.gmra.mxu0 %v838
  %v1584 = vpop.f32.mrf.mxu0
  %v1585 = vadd.f32 0.0, %v1584
  %v1586 = vpop.f32.mrf.mxu0
  %v1587 = vpop.f32.mrf.mxu0
  %v1588 = vadd.f32 0.0, %v1587
  %v1589 = vpop.f32.mrf.mxu0
  %1590 = vmatprep.mubr.bf16.mxu0 %v848
  %1591 = vmatmul.mubr.bf16.gmra.mxu0 %v847
  %v1592 = vpop.f32.mrf.mxu0
  %v1593 = vadd.f32 0.0, %v1592
  %v1594 = vpop.f32.mrf.mxu0
  %v1595 = vpop.f32.mrf.mxu0
  %v1596 = vadd.f32 0.0, %v1595
  %v1597 = vpop.f32.mrf.mxu0
  %1598 = vmatprep.mubr.bf16.mxu0 %v857
  %1599 = vmatmul.mubr.bf16.gmra.mxu0 %v856
  %v1600 = vpop.f32.mrf.mxu0
  %v1601 = vadd.f32 0.0, %v1600
  %v1602 = vpop.f32.mrf.mxu0
  %v1603 = vpop.f32.mrf.mxu0
  %v1604 = vadd.f32 0.0, %v1603
  %v1605 = vpop.f32.mrf.mxu0
  %1606 = vmatprep.mubr.bf16.mxu0 %v866
  %1607 = vmatmul.mubr.bf16.gmra.mxu0 %v865
  %v1608 = vpop.f32.mrf.mxu0
  %v1609 = vadd.f32 0.0, %v1608
  %v1610 = vpop.f32.mrf.mxu0
  %v1611 = vpop.f32.mrf.mxu0
  %v1612 = vadd.f32 0.0, %v1611
  %v1613 = vpop.f32.mrf.mxu0
  %1614 = vmatprep.mubr.bf16.mxu0 %v875
  %1615 = vmatmul.mubr.bf16.gmra.mxu0 %v874
  %v1616 = vpop.f32.mrf.mxu0
  %v1617 = vadd.f32 0.0, %v1616
  %v1618 = vpop.f32.mrf.mxu0
  %v1619 = vpop.f32.mrf.mxu0
  %v1620 = vadd.f32 0.0, %v1619
  %v1621 = vpop.f32.mrf.mxu0
  %1622 = vmatprep.mubr.bf16.mxu0 %v884
  %1623 = vmatmul.mubr.bf16.gmra.mxu0 %v883
  %v1624 = vpop.f32.mrf.mxu0
  %v1625 = vadd.f32 0.0, %v1624
  %v1626 = vpop.f32.mrf.mxu0
  %v1627 = vpop.f32.mrf.mxu0
  %v1628 = vadd.f32 0.0, %v1627
  %v1629 = vpop.f32.mrf.mxu0
  %1630 = vmatprep.mubr.bf16.mxu0 %v893
  %1631 = vmatmul.mubr.bf16.gmra.mxu0 %v892
  %v1632 = vpop.f32.mrf.mxu0
  %v1633 = vadd.f32 0.0, %v1632
  %v1634 = vpop.f32.mrf.mxu0
  %v1635 = vpop.f32.mrf.mxu0
  %v1636 = vadd.f32 0.0, %v1635
  %v1637 = vpop.f32.mrf.mxu0
  %1638 = vmatprep.mubr.bf16.mxu0 %v902
  %1639 = vmatmul.mubr.bf16.gmra.mxu0 %v901
  %v1640 = vpop.f32.mrf.mxu0
  %v1641 = vadd.f32 0.0, %v1640
  %v1642 = vpop.f32.mrf.mxu0
  %v1643 = vpop.f32.mrf.mxu0
  %v1644 = vadd.f32 0.0, %v1643
  %v1645 = vpop.f32.mrf.mxu0
  %1646 = vdwg.mxu0
  %1647 = vmatprep.subr.bf16.mxu0 0
  %1648 = vmatpush1.bf16.msra.mxu0 %v1365
  %1649 = vmatprep.subr.bf16.mxu0 0
  %1650 = vmatpush1.bf16.msra.mxu0 %v1364
  %1651 = vmatprep.subr.bf16.mxu0 0
  %1652 = vmatpush1.bf16.msra.mxu0 %v1363
  %1653 = vmatprep.subr.bf16.mxu0 0
  %1654 = vmatpush1.bf16.msra.mxu0 %v1362
  %1655 = vmatprep.subr.bf16.mxu0 0
  %1656 = vmatpush1.bf16.msra.mxu0 %v1361
  %1657 = vmatprep.subr.bf16.mxu0 0
  %1658 = vmatpush1.bf16.msra.mxu0 %v1360
  %1659 = vmatprep.subr.bf16.mxu0 0
  %1660 = vmatpush1.bf16.msra.mxu0 %v1359
  %1661 = vmatprep.subr.bf16.mxu0 0
  %1662 = vmatpush1.bf16.msra.mxu0 %v1358
  %1663 = vmatprep.subr.bf16.mxu0 0
  %1664 = vmatpush2.bf16.msra.mxu0 %v1373
  %1665 = vmatprep.subr.bf16.mxu0 0
  %1666 = vmatpush2.bf16.msra.mxu0 %v1372
  %1667 = vmatprep.subr.bf16.mxu0 0
  %1668 = vmatpush2.bf16.msra.mxu0 %v1371
  %1669 = vmatprep.subr.bf16.mxu0 0
  %1670 = vmatpush2.bf16.msra.mxu0 %v1370
  %1671 = vmatprep.subr.bf16.mxu0 0
  %1672 = vmatpush2.bf16.msra.mxu0 %v1369
  %1673 = vmatprep.subr.bf16.mxu0 0
  %1674 = vmatpush2.bf16.msra.mxu0 %v1368
  %1675 = vmatprep.subr.bf16.mxu0 0
  %1676 = vmatpush2.bf16.msra.mxu0 %v1367
  %1677 = vmatprep.subr.bf16.mxu0 0
  %1678 = vmatpush2.bf16.msra.mxu0 %v1366
  %1679 = vmatprep.mubr.bf16.mxu0 %v769
  %1680 = vmatmul.mubr.bf16.gmra.mxu0 %v768
  %v1681 = vpop.f32.mrf.mxu0
  %v1682 = vadd.f32 %v1521, %v1681
  %v1683 = vpop.f32.mrf.mxu0
  %v1684 = vpop.f32.mrf.mxu0
  %v1685 = vadd.f32 %v1524, %v1684
  %v1686 = vpop.f32.mrf.mxu0
  %1687 = vmatprep.mubr.bf16.mxu0 %v778
  %1688 = vmatmul.mubr.bf16.gmra.mxu0 %v777
  %v1689 = vpop.f32.mrf.mxu0
  %v1690 = vadd.f32 %v1529, %v1689
  %v1691 = vpop.f32.mrf.mxu0
  %v1692 = vpop.f32.mrf.mxu0
  %v1693 = vadd.f32 %v1532, %v1692
  %v1694 = vpop.f32.mrf.mxu0
  %1695 = vmatprep.mubr.bf16.mxu0 %v787
  %1696 = vmatmul.mubr.bf16.gmra.mxu0 %v786
  %v1697 = vpop.f32.mrf.mxu0
  %v1698 = vadd.f32 %v1537, %v1697
  %v1699 = vpop.f32.mrf.mxu0
  %v1700 = vpop.f32.mrf.mxu0
  %v1701 = vadd.f32 %v1540, %v1700
  %v1702 = vpop.f32.mrf.mxu0
  %1703 = vmatprep.mubr.bf16.mxu0 %v796
  %1704 = vmatmul.mubr.bf16.gmra.mxu0 %v795
  %v1705 = vpop.f32.mrf.mxu0
  %v1706 = vadd.f32 %v1545, %v1705
  %v1707 = vpop.f32.mrf.mxu0
  %v1708 = vpop.f32.mrf.mxu0
  %v1709 = vadd.f32 %v1548, %v1708
  %v1710 = vpop.f32.mrf.mxu0
  %1711 = vmatprep.mubr.bf16.mxu0 %v805
  %1712 = vmatmul.mubr.bf16.gmra.mxu0 %v804
  %v1713 = vpop.f32.mrf.mxu0
  %v1714 = vadd.f32 %v1553, %v1713
  %v1715 = vpop.f32.mrf.mxu0
  %v1716 = vpop.f32.mrf.mxu0
  %v1717 = vadd.f32 %v1556, %v1716
  %v1718 = vpop.f32.mrf.mxu0
  %1719 = vmatprep.mubr.bf16.mxu0 %v814
  %1720 = vmatmul.mubr.bf16.gmra.mxu0 %v813
  %v1721 = vpop.f32.mrf.mxu0
  %v1722 = vadd.f32 %v1561, %v1721
  %v1723 = vpop.f32.mrf.mxu0
  %v1724 = vpop.f32.mrf.mxu0
  %v1725 = vadd.f32 %v1564, %v1724
  %v1726 = vpop.f32.mrf.mxu0
  %1727 = vmatprep.mubr.bf16.mxu0 %v823
  %1728 = vmatmul.mubr.bf16.gmra.mxu0 %v822
  %v1729 = vpop.f32.mrf.mxu0
  %v1730 = vadd.f32 %v1569, %v1729
  %v1731 = vpop.f32.mrf.mxu0
  %v1732 = vpop.f32.mrf.mxu0
  %v1733 = vadd.f32 %v1572, %v1732
  %v1734 = vpop.f32.mrf.mxu0
  %1735 = vmatprep.mubr.bf16.mxu0 %v832
  %1736 = vmatmul.mubr.bf16.gmra.mxu0 %v831
  %v1737 = vpop.f32.mrf.mxu0
  %v1738 = vadd.f32 %v1577, %v1737
  %v1739 = vpop.f32.mrf.mxu0
  %v1740 = vpop.f32.mrf.mxu0
  %v1741 = vadd.f32 %v1580, %v1740
  %v1742 = vpop.f32.mrf.mxu0
  %1743 = vmatprep.mubr.bf16.mxu0 %v841
  %1744 = vmatmul.mubr.bf16.gmra.mxu0 %v840
  %v1745 = vpop.f32.mrf.mxu0
  %v1746 = vadd.f32 %v1585, %v1745
  %v1747 = vpop.f32.mrf.mxu0
  %v1748 = vpop.f32.mrf.mxu0
  %v1749 = vadd.f32 %v1588, %v1748
  %v1750 = vpop.f32.mrf.mxu0
  %1751 = vmatprep.mubr.bf16.mxu0 %v850
  %1752 = vmatmul.mubr.bf16.gmra.mxu0 %v849
  %v1753 = vpop.f32.mrf.mxu0
  %v1754 = vadd.f32 %v1593, %v1753
  %v1755 = vpop.f32.mrf.mxu0
  %v1756 = vpop.f32.mrf.mxu0
  %v1757 = vadd.f32 %v1596, %v1756
  %v1758 = vpop.f32.mrf.mxu0
  %1759 = vmatprep.mubr.bf16.mxu0 %v859
  %1760 = vmatmul.mubr.bf16.gmra.mxu0 %v858
  %v1761 = vpop.f32.mrf.mxu0
  %v1762 = vadd.f32 %v1601, %v1761
  %v1763 = vpop.f32.mrf.mxu0
  %v1764 = vpop.f32.mrf.mxu0
  %v1765 = vadd.f32 %v1604, %v1764
  %v1766 = vpop.f32.mrf.mxu0
  %1767 = vmatprep.mubr.bf16.mxu0 %v868
  %1768 = vmatmul.mubr.bf16.gmra.mxu0 %v867
  %v1769 = vpop.f32.mrf.mxu0
  %v1770 = vadd.f32 %v1609, %v1769
  %v1771 = vpop.f32.mrf.mxu0
  %v1772 = vpop.f32.mrf.mxu0
  %v1773 = vadd.f32 %v1612, %v1772
  %v1774 = vpop.f32.mrf.mxu0
  %1775 = vmatprep.mubr.bf16.mxu0 %v877
  %1776 = vmatmul.mubr.bf16.gmra.mxu0 %v876
  %v1777 = vpop.f32.mrf.mxu0
  %v1778 = vadd.f32 %v1617, %v1777
  %v1779 = vpop.f32.mrf.mxu0
  %v1780 = vpop.f32.mrf.mxu0
  %v1781 = vadd.f32 %v1620, %v1780
  %v1782 = vpop.f32.mrf.mxu0
  %1783 = vmatprep.mubr.bf16.mxu0 %v886
  %1784 = vmatmul.mubr.bf16.gmra.mxu0 %v885
  %v1785 = vpop.f32.mrf.mxu0
  %v1786 = vadd.f32 %v1625, %v1785
  %v1787 = vpop.f32.mrf.mxu0
  %v1788 = vpop.f32.mrf.mxu0
  %v1789 = vadd.f32 %v1628, %v1788
  %v1790 = vpop.f32.mrf.mxu0
  %1791 = vmatprep.mubr.bf16.mxu0 %v895
  %1792 = vmatmul.mubr.bf16.gmra.mxu0 %v894
  %v1793 = vpop.f32.mrf.mxu0
  %v1794 = vadd.f32 %v1633, %v1793
  %v1795 = vpop.f32.mrf.mxu0
  %v1796 = vpop.f32.mrf.mxu0
  %v1797 = vadd.f32 %v1636, %v1796
  %v1798 = vpop.f32.mrf.mxu0
  %1799 = vmatprep.mubr.bf16.mxu0 %v904
  %1800 = vmatmul.mubr.bf16.gmra.mxu0 %v903
  %v1801 = vpop.f32.mrf.mxu0
  %v1802 = vadd.f32 %v1641, %v1801
  %v1803 = vpop.f32.mrf.mxu0
  %v1804 = vpop.f32.mrf.mxu0
  %v1805 = vadd.f32 %v1644, %v1804
  %v1806 = vpop.f32.mrf.mxu0
  %1807 = vdwg.mxu0
  %1808 = vmatprep.subr.bf16.mxu0 0
  %1809 = vmatpush1.bf16.msra.mxu0 %v1381
  %1810 = vmatprep.subr.bf16.mxu0 0
  %1811 = vmatpush1.bf16.msra.mxu0 %v1380
  %1812 = vmatprep.subr.bf16.mxu0 0
  %1813 = vmatpush1.bf16.msra.mxu0 %v1379
  %1814 = vmatprep.subr.bf16.mxu0 0
  %1815 = vmatpush1.bf16.msra.mxu0 %v1378
  %1816 = vmatprep.subr.bf16.mxu0 0
  %1817 = vmatpush1.bf16.msra.mxu0 %v1377
  %1818 = vmatprep.subr.bf16.mxu0 0
  %1819 = vmatpush1.bf16.msra.mxu0 %v1376
  %1820 = vmatprep.subr.bf16.mxu0 0
  %1821 = vmatpush1.bf16.msra.mxu0 %v1375
  %1822 = vmatprep.subr.bf16.mxu0 0
  %1823 = vmatpush1.bf16.msra.mxu0 %v1374
  %1824 = vmatprep.subr.bf16.mxu0 0
  %1825 = vmatpush2.bf16.msra.mxu0 %v1389
  %1826 = vmatprep.subr.bf16.mxu0 0
  %1827 = vmatpush2.bf16.msra.mxu0 %v1388
  %1828 = vmatprep.subr.bf16.mxu0 0
  %1829 = vmatpush2.bf16.msra.mxu0 %v1387
  %1830 = vmatprep.subr.bf16.mxu0 0
  %1831 = vmatpush2.bf16.msra.mxu0 %v1386
  %1832 = vmatprep.subr.bf16.mxu0 0
  %1833 = vmatpush2.bf16.msra.mxu0 %v1385
  %1834 = vmatprep.subr.bf16.mxu0 0
  %1835 = vmatpush2.bf16.msra.mxu0 %v1384
  %1836 = vmatprep.subr.bf16.mxu0 0
  %1837 = vmatpush2.bf16.msra.mxu0 %v1383
  %1838 = vmatprep.subr.bf16.mxu0 0
  %1839 = vmatpush2.bf16.msra.mxu0 %v1382
  %1840 = vmatprep.mubr.bf16.mxu0 %v771
  %1841 = vmatmul.mubr.bf16.gmra.mxu0 %v770
  %v1842 = vpop.f32.mrf.mxu0
  %v1843 = vadd.f32 %v1682, %v1842
  %v1844 = vpop.f32.mrf.mxu0
  %v1845 = vpop.f32.mrf.mxu0
  %v1846 = vadd.f32 %v1685, %v1845
  %v1847 = vpop.f32.mrf.mxu0
  %1848 = vmatprep.mubr.bf16.mxu0 %v780
  %1849 = vmatmul.mubr.bf16.gmra.mxu0 %v779
  %v1850 = vpop.f32.mrf.mxu0
  %v1851 = vadd.f32 %v1690, %v1850
  %v1852 = vpop.f32.mrf.mxu0
  %v1853 = vpop.f32.mrf.mxu0
  %v1854 = vadd.f32 %v1693, %v1853
  %v1855 = vpop.f32.mrf.mxu0
  %1856 = vmatprep.mubr.bf16.mxu0 %v789
  %1857 = vmatmul.mubr.bf16.gmra.mxu0 %v788
  %v1858 = vpop.f32.mrf.mxu0
  %v1859 = vadd.f32 %v1698, %v1858
  %v1860 = vpop.f32.mrf.mxu0
  %v1861 = vpop.f32.mrf.mxu0
  %v1862 = vadd.f32 %v1701, %v1861
  %v1863 = vpop.f32.mrf.mxu0
  %1864 = vmatprep.mubr.bf16.mxu0 %v798
  %1865 = vmatmul.mubr.bf16.gmra.mxu0 %v797
  %v1866 = vpop.f32.mrf.mxu0
  %v1867 = vadd.f32 %v1706, %v1866
  %v1868 = vpop.f32.mrf.mxu0
  %v1869 = vpop.f32.mrf.mxu0
  %v1870 = vadd.f32 %v1709, %v1869
  %v1871 = vpop.f32.mrf.mxu0
  %1872 = vmatprep.mubr.bf16.mxu0 %v807
  %1873 = vmatmul.mubr.bf16.gmra.mxu0 %v806
  %v1874 = vpop.f32.mrf.mxu0
  %v1875 = vadd.f32 %v1714, %v1874
  %v1876 = vpop.f32.mrf.mxu0
  %v1877 = vpop.f32.mrf.mxu0
  %v1878 = vadd.f32 %v1717, %v1877
  %v1879 = vpop.f32.mrf.mxu0
  %1880 = vmatprep.mubr.bf16.mxu0 %v816
  %1881 = vmatmul.mubr.bf16.gmra.mxu0 %v815
  %v1882 = vpop.f32.mrf.mxu0
  %v1883 = vadd.f32 %v1722, %v1882
  %v1884 = vpop.f32.mrf.mxu0
  %v1885 = vpop.f32.mrf.mxu0
  %v1886 = vadd.f32 %v1725, %v1885
  %v1887 = vpop.f32.mrf.mxu0
  %1888 = vmatprep.mubr.bf16.mxu0 %v825
  %1889 = vmatmul.mubr.bf16.gmra.mxu0 %v824
  %v1890 = vpop.f32.mrf.mxu0
  %v1891 = vadd.f32 %v1730, %v1890
  %v1892 = vpop.f32.mrf.mxu0
  %v1893 = vpop.f32.mrf.mxu0
  %v1894 = vadd.f32 %v1733, %v1893
  %v1895 = vpop.f32.mrf.mxu0
  %1896 = vmatprep.mubr.bf16.mxu0 %v834
  %1897 = vmatmul.mubr.bf16.gmra.mxu0 %v833
  %v1898 = vpop.f32.mrf.mxu0
  %v1899 = vadd.f32 %v1738, %v1898
  %v1900 = vpop.f32.mrf.mxu0
  %v1901 = vpop.f32.mrf.mxu0
  %v1902 = vadd.f32 %v1741, %v1901
  %v1903 = vpop.f32.mrf.mxu0
  %1904 = vmatprep.mubr.bf16.mxu0 %v843
  %1905 = vmatmul.mubr.bf16.gmra.mxu0 %v842
  %v1906 = vpop.f32.mrf.mxu0
  %v1907 = vadd.f32 %v1746, %v1906
  %v1908 = vpop.f32.mrf.mxu0
  %v1909 = vpop.f32.mrf.mxu0
  %v1910 = vadd.f32 %v1749, %v1909
  %v1911 = vpop.f32.mrf.mxu0
  %1912 = vmatprep.mubr.bf16.mxu0 %v852
  %1913 = vmatmul.mubr.bf16.gmra.mxu0 %v851
  %v1914 = vpop.f32.mrf.mxu0
  %v1915 = vadd.f32 %v1754, %v1914
  %v1916 = vpop.f32.mrf.mxu0
  %v1917 = vpop.f32.mrf.mxu0
  %v1918 = vadd.f32 %v1757, %v1917
  %v1919 = vpop.f32.mrf.mxu0
  %1920 = vmatprep.mubr.bf16.mxu0 %v861
  %1921 = vmatmul.mubr.bf16.gmra.mxu0 %v860
  %v1922 = vpop.f32.mrf.mxu0
  %v1923 = vadd.f32 %v1762, %v1922
  %v1924 = vpop.f32.mrf.mxu0
  %v1925 = vpop.f32.mrf.mxu0
  %v1926 = vadd.f32 %v1765, %v1925
  %v1927 = vpop.f32.mrf.mxu0
  %1928 = vmatprep.mubr.bf16.mxu0 %v870
  %1929 = vmatmul.mubr.bf16.gmra.mxu0 %v869
  %v1930 = vpop.f32.mrf.mxu0
  %v1931 = vadd.f32 %v1770, %v1930
  %v1932 = vpop.f32.mrf.mxu0
  %v1933 = vpop.f32.mrf.mxu0
  %v1934 = vadd.f32 %v1773, %v1933
  %v1935 = vpop.f32.mrf.mxu0
  %1936 = vmatprep.mubr.bf16.mxu0 %v879
  %1937 = vmatmul.mubr.bf16.gmra.mxu0 %v878
  %v1938 = vpop.f32.mrf.mxu0
  %v1939 = vadd.f32 %v1778, %v1938
  %v1940 = vpop.f32.mrf.mxu0
  %v1941 = vpop.f32.mrf.mxu0
  %v1942 = vadd.f32 %v1781, %v1941
  %v1943 = vpop.f32.mrf.mxu0
  %1944 = vmatprep.mubr.bf16.mxu0 %v888
  %1945 = vmatmul.mubr.bf16.gmra.mxu0 %v887
  %v1946 = vpop.f32.mrf.mxu0
  %v1947 = vadd.f32 %v1786, %v1946
  %v1948 = vpop.f32.mrf.mxu0
  %v1949 = vpop.f32.mrf.mxu0
  %v1950 = vadd.f32 %v1789, %v1949
  %v1951 = vpop.f32.mrf.mxu0
  %1952 = vmatprep.mubr.bf16.mxu0 %v897
  %1953 = vmatmul.mubr.bf16.gmra.mxu0 %v896
  %v1954 = vpop.f32.mrf.mxu0
  %v1955 = vadd.f32 %v1794, %v1954
  %v1956 = vpop.f32.mrf.mxu0
  %v1957 = vpop.f32.mrf.mxu0
  %v1958 = vadd.f32 %v1797, %v1957
  %v1959 = vpop.f32.mrf.mxu0
  %1960 = vmatprep.mubr.bf16.mxu0 %v906
  %1961 = vmatmul.mubr.bf16.gmra.mxu0 %v905
  %v1962 = vpop.f32.mrf.mxu0
  %v1963 = vadd.f32 %v1802, %v1962
  %v1964 = vpop.f32.mrf.mxu0
  %v1965 = vpop.f32.mrf.mxu0
  %v1966 = vadd.f32 %v1805, %v1965
  %v1967 = vpop.f32.mrf.mxu0
  %1968 = vdwg.mxu0
  %1969 = vmatprep.subr.bf16.mxu0 0
  %1970 = vmatpush1.bf16.msra.mxu0 %v1397
  %1971 = vmatprep.subr.bf16.mxu0 0
  %1972 = vmatpush1.bf16.msra.mxu0 %v1396
  %1973 = vmatprep.subr.bf16.mxu0 0
  %1974 = vmatpush1.bf16.msra.mxu0 %v1395
  %1975 = vmatprep.subr.bf16.mxu0 0
  %1976 = vmatpush1.bf16.msra.mxu0 %v1394
  %1977 = vmatprep.subr.bf16.mxu0 0
  %1978 = vmatpush1.bf16.msra.mxu0 %v1393
  %1979 = vmatprep.subr.bf16.mxu0 0
  %1980 = vmatpush1.bf16.msra.mxu0 %v1392
  %1981 = vmatprep.subr.bf16.mxu0 0
  %1982 = vmatpush1.bf16.msra.mxu0 %v1391
  %1983 = vmatprep.subr.bf16.mxu0 0
  %1984 = vmatpush1.bf16.msra.mxu0 %v1390
  %1985 = vmatprep.subr.bf16.mxu0 0
  %1986 = vmatpush2.bf16.msra.mxu0 %v1405
  %1987 = vmatprep.subr.bf16.mxu0 0
  %1988 = vmatpush2.bf16.msra.mxu0 %v1404
  %1989 = vmatprep.subr.bf16.mxu0 0
  %1990 = vmatpush2.bf16.msra.mxu0 %v1403
  %1991 = vmatprep.subr.bf16.mxu0 0
  %1992 = vmatpush2.bf16.msra.mxu0 %v1402
  %1993 = vmatprep.subr.bf16.mxu0 0
  %1994 = vmatpush2.bf16.msra.mxu0 %v1401
  %1995 = vmatprep.subr.bf16.mxu0 0
  %1996 = vmatpush2.bf16.msra.mxu0 %v1400
  %1997 = vmatprep.subr.bf16.mxu0 0
  %1998 = vmatpush2.bf16.msra.mxu0 %v1399
  %1999 = vmatprep.subr.bf16.mxu0 0
  %2000 = vmatpush2.bf16.msra.mxu0 %v1398
  %2001 = vmatprep.mubr.bf16.mxu0 %v773
  %2002 = vmatmul.mubr.bf16.gmra.mxu0 %v772
  %v2003 = vpop.f32.mrf.mxu0
  %v2004 = vadd.f32 %v1843, %v2003
  %v2005 = vpop.f32.mrf.mxu0
  %v2006 = vpop.f32.mrf.mxu0
  %v2007 = vadd.f32 %v1846, %v2006
  %v2008 = vpop.f32.mrf.mxu0
  %2009 = vmatprep.mubr.bf16.mxu0 %v782
  %2010 = vmatmul.mubr.bf16.gmra.mxu0 %v781
  %v2011 = vpop.f32.mrf.mxu0
  %v2012 = vadd.f32 %v1851, %v2011
  %v2013 = vpop.f32.mrf.mxu0
  %v2014 = vpop.f32.mrf.mxu0
  %v2015 = vadd.f32 %v1854, %v2014
  %v2016 = vpop.f32.mrf.mxu0
  %2017 = vmatprep.mubr.bf16.mxu0 %v791
  %2018 = vmatmul.mubr.bf16.gmra.mxu0 %v790
  %v2019 = vpop.f32.mrf.mxu0
  %v2020 = vadd.f32 %v1859, %v2019
  %v2021 = vpop.f32.mrf.mxu0
  %v2022 = vpop.f32.mrf.mxu0
  %v2023 = vadd.f32 %v1862, %v2022
  %v2024 = vpop.f32.mrf.mxu0
  %2025 = vmatprep.mubr.bf16.mxu0 %v800
  %2026 = vmatmul.mubr.bf16.gmra.mxu0 %v799
  %v2027 = vpop.f32.mrf.mxu0
  %v2028 = vadd.f32 %v1867, %v2027
  %v2029 = vpop.f32.mrf.mxu0
  %v2030 = vpop.f32.mrf.mxu0
  %v2031 = vadd.f32 %v1870, %v2030
  %v2032 = vpop.f32.mrf.mxu0
  %2033 = vmatprep.mubr.bf16.mxu0 %v809
  %2034 = vmatmul.mubr.bf16.gmra.mxu0 %v808
  %v2035 = vpop.f32.mrf.mxu0
  %v2036 = vadd.f32 %v1875, %v2035
  %v2037 = vpop.f32.mrf.mxu0
  %v2038 = vpop.f32.mrf.mxu0
  %v2039 = vadd.f32 %v1878, %v2038
  %v2040 = vpop.f32.mrf.mxu0
  %2041 = vmatprep.mubr.bf16.mxu0 %v818
  %2042 = vmatmul.mubr.bf16.gmra.mxu0 %v817
  %v2043 = vpop.f32.mrf.mxu0
  %v2044 = vadd.f32 %v1883, %v2043
  %v2045 = vpop.f32.mrf.mxu0
  %v2046 = vpop.f32.mrf.mxu0
  %v2047 = vadd.f32 %v1886, %v2046
  %v2048 = vpop.f32.mrf.mxu0
  %2049 = vmatprep.mubr.bf16.mxu0 %v827
  %2050 = vmatmul.mubr.bf16.gmra.mxu0 %v826
  %v2051 = vpop.f32.mrf.mxu0
  %v2052 = vadd.f32 %v1891, %v2051
  %v2053 = vpop.f32.mrf.mxu0
  %v2054 = vpop.f32.mrf.mxu0
  %v2055 = vadd.f32 %v1894, %v2054
  %v2056 = vpop.f32.mrf.mxu0
  %2057 = vmatprep.mubr.bf16.mxu0 %v836
  %2058 = vmatmul.mubr.bf16.gmra.mxu0 %v835
  %v2059 = vpop.f32.mrf.mxu0
  %v2060 = vadd.f32 %v1899, %v2059
  %v2061 = vpop.f32.mrf.mxu0
  %v2062 = vpop.f32.mrf.mxu0
  %v2063 = vadd.f32 %v1902, %v2062
  %v2064 = vpop.f32.mrf.mxu0
  %2065 = vmatprep.mubr.bf16.mxu0 %v845
  %2066 = vmatmul.mubr.bf16.gmra.mxu0 %v844
  %v2067 = vpop.f32.mrf.mxu0
  %v2068 = vadd.f32 %v1907, %v2067
  %v2069 = vpop.f32.mrf.mxu0
  %v2070 = vpop.f32.mrf.mxu0
  %v2071 = vadd.f32 %v1910, %v2070
  %v2072 = vpop.f32.mrf.mxu0
  %2073 = vmatprep.mubr.bf16.mxu0 %v854
  %2074 = vmatmul.mubr.bf16.gmra.mxu0 %v853
  %v2075 = vpop.f32.mrf.mxu0
  %v2076 = vadd.f32 %v1915, %v2075
  %v2077 = vpop.f32.mrf.mxu0
  %v2078 = vpop.f32.mrf.mxu0
  %v2079 = vadd.f32 %v1918, %v2078
  %v2080 = vpop.f32.mrf.mxu0
  %2081 = vmatprep.mubr.bf16.mxu0 %v863
  %2082 = vmatmul.mubr.bf16.gmra.mxu0 %v862
  %v2083 = vpop.f32.mrf.mxu0
  %v2084 = vadd.f32 %v1923, %v2083
  %v2085 = vpop.f32.mrf.mxu0
  %v2086 = vpop.f32.mrf.mxu0
  %v2087 = vadd.f32 %v1926, %v2086
  %v2088 = vpop.f32.mrf.mxu0
  %2089 = vmatprep.mubr.bf16.mxu0 %v872
  %2090 = vmatmul.mubr.bf16.gmra.mxu0 %v871
  %v2091 = vpop.f32.mrf.mxu0
  %v2092 = vadd.f32 %v1931, %v2091
  %v2093 = vpop.f32.mrf.mxu0
  %v2094 = vpop.f32.mrf.mxu0
  %v2095 = vadd.f32 %v1934, %v2094
  %v2096 = vpop.f32.mrf.mxu0
  %2097 = vmatprep.mubr.bf16.mxu0 %v881
  %2098 = vmatmul.mubr.bf16.gmra.mxu0 %v880
  %v2099 = vpop.f32.mrf.mxu0
  %v2100 = vadd.f32 %v1939, %v2099
  %v2101 = vpop.f32.mrf.mxu0
  %v2102 = vpop.f32.mrf.mxu0
  %v2103 = vadd.f32 %v1942, %v2102
  %v2104 = vpop.f32.mrf.mxu0
  %2105 = vmatprep.mubr.bf16.mxu0 %v890
  %2106 = vmatmul.mubr.bf16.gmra.mxu0 %v889
  %v2107 = vpop.f32.mrf.mxu0
  %v2108 = vadd.f32 %v1947, %v2107
  %v2109 = vpop.f32.mrf.mxu0
  %v2110 = vpop.f32.mrf.mxu0
  %v2111 = vadd.f32 %v1950, %v2110
  %v2112 = vpop.f32.mrf.mxu0
  %2113 = vmatprep.mubr.bf16.mxu0 %v899
  %2114 = vmatmul.mubr.bf16.gmra.mxu0 %v898
  %v2115 = vpop.f32.mrf.mxu0
  %v2116 = vadd.f32 %v1955, %v2115
  %v2117 = vpop.f32.mrf.mxu0
  %v2118 = vpop.f32.mrf.mxu0
  %v2119 = vadd.f32 %v1958, %v2118
  %v2120 = vpop.f32.mrf.mxu0
  %2121 = vmatprep.mubr.bf16.mxu0 %v908
  %2122 = vmatmul.mubr.bf16.gmra.mxu0 %v907
  %v2123 = vpop.f32.mrf.mxu0
  %v2124 = vadd.f32 %v1963, %v2123
  %v2125 = vpop.f32.mrf.mxu0
  %v2126 = vpop.f32.mrf.mxu0
  %v2127 = vadd.f32 %v1966, %v2126
  %v2128 = vpop.f32.mrf.mxu0
  %2129 = vdwg.mxu0
  %2130 = vmatprep.subr.bf16.mxu0 0
  %2131 = vmatpush1.bf16.msra.mxu0 %v1413
  %2132 = vmatprep.subr.bf16.mxu0 0
  %2133 = vmatpush1.bf16.msra.mxu0 %v1412
  %2134 = vmatprep.subr.bf16.mxu0 0
  %2135 = vmatpush1.bf16.msra.mxu0 %v1411
  %2136 = vmatprep.subr.bf16.mxu0 0
  %2137 = vmatpush1.bf16.msra.mxu0 %v1410
  %2138 = vmatprep.subr.bf16.mxu0 0
  %2139 = vmatpush1.bf16.msra.mxu0 %v1409
  %2140 = vmatprep.subr.bf16.mxu0 0
  %2141 = vmatpush1.bf16.msra.mxu0 %v1408
  %2142 = vmatprep.subr.bf16.mxu0 0
  %2143 = vmatpush1.bf16.msra.mxu0 %v1407
  %2144 = vmatprep.subr.bf16.mxu0 0
  %2145 = vmatpush1.bf16.msra.mxu0 %v1406
  %2146 = vmatprep.subr.bf16.mxu0 0
  %2147 = vmatpush2.bf16.msra.mxu0 0
  %2148 = vmatprep.subr.bf16.mxu0 0
  %2149 = vmatpush2.bf16.msra.mxu0 0
  %2150 = vmatprep.subr.bf16.mxu0 0
  %2151 = vmatpush2.bf16.msra.mxu0 0
  %2152 = vmatprep.subr.bf16.mxu0 0
  %2153 = vmatpush2.bf16.msra.mxu0 0
  %2154 = vmatprep.subr.bf16.mxu0 0
  %2155 = vmatpush2.bf16.msra.mxu0 0
  %2156 = vmatprep.subr.bf16.mxu0 0
  %2157 = vmatpush2.bf16.msra.mxu0 0
  %2158 = vmatprep.subr.bf16.mxu0 0
  %2159 = vmatpush2.bf16.msra.mxu0 0
  %2160 = vmatprep.subr.bf16.mxu0 0
  %2161 = vmatpush2.bf16.msra.mxu0 0
  %2162 = vmatprep.mubr.bf16.mxu0 0
  %2163 = vmatmul.mubr.bf16.gmra.mxu0 %v774
  %v2164 = vpop.f32.mrf.mxu0
  %v2165 = vadd.f32 %v2004, %v2164
  %v2166 = vpop.f32.mrf.mxu0
  %v2167 = vpop.f32.mrf.mxu0
  %v2168 = vadd.f32 %v2007, %v2167
  %v2169 = vpop.f32.mrf.mxu0
  %2170 = vmatprep.mubr.bf16.mxu0 0
  %2171 = vmatmul.mubr.bf16.gmra.mxu0 %v783
  %v2172 = vpop.f32.mrf.mxu0
  %v2173 = vadd.f32 %v2012, %v2172
  %v2174 = vpop.f32.mrf.mxu0
  %v2175 = vpop.f32.mrf.mxu0
  %v2176 = vadd.f32 %v2015, %v2175
  %v2177 = vpop.f32.mrf.mxu0
  %2178 = vmatprep.mubr.bf16.mxu0 0
  %2179 = vmatmul.mubr.bf16.gmra.mxu0 %v792
  %v2180 = vpop.f32.mrf.mxu0
  %v2181 = vadd.f32 %v2020, %v2180
  %v2182 = vpop.f32.mrf.mxu0
  %v2183 = vpop.f32.mrf.mxu0
  %v2184 = vadd.f32 %v2023, %v2183
  %v2185 = vpop.f32.mrf.mxu0
  %2186 = vmatprep.mubr.bf16.mxu0 0
  %2187 = vmatmul.mubr.bf16.gmra.mxu0 %v801
  %v2188 = vpop.f32.mrf.mxu0
  %v2189 = vadd.f32 %v2028, %v2188
  %v2190 = vpop.f32.mrf.mxu0
  %v2191 = vpop.f32.mrf.mxu0
  %v2192 = vadd.f32 %v2031, %v2191
  %v2193 = vpop.f32.mrf.mxu0
  %2194 = vmatprep.mubr.bf16.mxu0 0
  %2195 = vmatmul.mubr.bf16.gmra.mxu0 %v810
  %v2196 = vpop.f32.mrf.mxu0
  %v2197 = vadd.f32 %v2036, %v2196
  %v2198 = vpop.f32.mrf.mxu0
  %v2199 = vpop.f32.mrf.mxu0
  %v2200 = vadd.f32 %v2039, %v2199
  %v2201 = vpop.f32.mrf.mxu0
  %2202 = vmatprep.mubr.bf16.mxu0 0
  %2203 = vmatmul.mubr.bf16.gmra.mxu0 %v819
  %v2204 = vpop.f32.mrf.mxu0
  %v2205 = vadd.f32 %v2044, %v2204
  %v2206 = vpop.f32.mrf.mxu0
  %v2207 = vpop.f32.mrf.mxu0
  %v2208 = vadd.f32 %v2047, %v2207
  %v2209 = vpop.f32.mrf.mxu0
  %2210 = vmatprep.mubr.bf16.mxu0 0
  %2211 = vmatmul.mubr.bf16.gmra.mxu0 %v828
  %v2212 = vpop.f32.mrf.mxu0
  %v2213 = vadd.f32 %v2052, %v2212
  %v2214 = vpop.f32.mrf.mxu0
  %v2215 = vpop.f32.mrf.mxu0
  %v2216 = vadd.f32 %v2055, %v2215
  %v2217 = vpop.f32.mrf.mxu0
  %2218 = vmatprep.mubr.bf16.mxu0 0
  %2219 = vmatmul.mubr.bf16.gmra.mxu0 %v837
  %v2220 = vpop.f32.mrf.mxu0
  %v2221 = vadd.f32 %v2060, %v2220
  %v2222 = vpop.f32.mrf.mxu0
  %v2223 = vpop.f32.mrf.mxu0
  %v2224 = vadd.f32 %v2063, %v2223
  %v2225 = vpop.f32.mrf.mxu0
  %2226 = vmatprep.mubr.bf16.mxu0 0
  %2227 = vmatmul.mubr.bf16.gmra.mxu0 %v846
  %v2228 = vpop.f32.mrf.mxu0
  %v2229 = vadd.f32 %v2068, %v2228
  %v2230 = vpop.f32.mrf.mxu0
  %v2231 = vpop.f32.mrf.mxu0
  %v2232 = vadd.f32 %v2071, %v2231
  %v2233 = vpop.f32.mrf.mxu0
  %2234 = vmatprep.mubr.bf16.mxu0 0
  %2235 = vmatmul.mubr.bf16.gmra.mxu0 %v855
  %v2236 = vpop.f32.mrf.mxu0
  %v2237 = vadd.f32 %v2076, %v2236
  %v2238 = vpop.f32.mrf.mxu0
  %v2239 = vpop.f32.mrf.mxu0
  %v2240 = vadd.f32 %v2079, %v2239
  %v2241 = vpop.f32.mrf.mxu0
  %2242 = vmatprep.mubr.bf16.mxu0 0
  %2243 = vmatmul.mubr.bf16.gmra.mxu0 %v864
  %v2244 = vpop.f32.mrf.mxu0
  %v2245 = vadd.f32 %v2084, %v2244
  %v2246 = vpop.f32.mrf.mxu0
  %v2247 = vpop.f32.mrf.mxu0
  %v2248 = vadd.f32 %v2087, %v2247
  %v2249 = vpop.f32.mrf.mxu0
  %2250 = vmatprep.mubr.bf16.mxu0 0
  %2251 = vmatmul.mubr.bf16.gmra.mxu0 %v873
  %v2252 = vpop.f32.mrf.mxu0
  %v2253 = vadd.f32 %v2092, %v2252
  %v2254 = vpop.f32.mrf.mxu0
  %v2255 = vpop.f32.mrf.mxu0
  %v2256 = vadd.f32 %v2095, %v2255
  %v2257 = vpop.f32.mrf.mxu0
  %2258 = vmatprep.mubr.bf16.mxu0 0
  %2259 = vmatmul.mubr.bf16.gmra.mxu0 %v882
  %v2260 = vpop.f32.mrf.mxu0
  %v2261 = vadd.f32 %v2100, %v2260
  %v2262 = vpop.f32.mrf.mxu0
  %v2263 = vpop.f32.mrf.mxu0
  %v2264 = vadd.f32 %v2103, %v2263
  %v2265 = vpop.f32.mrf.mxu0
  %2266 = vmatprep.mubr.bf16.mxu0 0
  %2267 = vmatmul.mubr.bf16.gmra.mxu0 %v891
  %v2268 = vpop.f32.mrf.mxu0
  %v2269 = vadd.f32 %v2108, %v2268
  %v2270 = vpop.f32.mrf.mxu0
  %v2271 = vpop.f32.mrf.mxu0
  %v2272 = vadd.f32 %v2111, %v2271
  %v2273 = vpop.f32.mrf.mxu0
  %2274 = vmatprep.mubr.bf16.mxu0 0
  %2275 = vmatmul.mubr.bf16.gmra.mxu0 %v900
  %v2276 = vpop.f32.mrf.mxu0
  %v2277 = vadd.f32 %v2116, %v2276
  %v2278 = vpop.f32.mrf.mxu0
  %v2279 = vpop.f32.mrf.mxu0
  %v2280 = vadd.f32 %v2119, %v2279
  %v2281 = vpop.f32.mrf.mxu0
  %2282 = vmatprep.mubr.bf16.mxu0 0
  %2283 = vmatmul.mubr.bf16.gmra.mxu0 %v909
  %v2284 = vpop.f32.mrf.mxu0
  %v2285 = vadd.f32 %v2124, %v2284
  %v2286 = vpop.f32.mrf.mxu0
  %v2287 = vpop.f32.mrf.mxu0
  %v2288 = vadd.f32 %v2127, %v2287
  %v2289 = vpop.f32.mrf.mxu0
  %2290 = vdwg.mxu0
  %2291 = vst [vmem:[%s2] sm:$0xff] %v2165
  %2292 = vst [vmem:[%s2 + $0x8] sm:$0xff] %v2168
  %2293 = vst [vmem:[%s2 + $0x10] sm:$0xff] %v2173
  %2294 = vst [vmem:[%s2 + $0x18] sm:$0xff] %v2176
  %2295 = vst [vmem:[%s2 + $0x20] sm:$0xff] %v2181
  %2296 = vst [vmem:[%s2 + $0x28] sm:$0xff] %v2184
  %2297 = vst [vmem:[%s2 + $0x30] sm:$0xff] %v2189
  %2298 = vst [vmem:[%s2 + $0x38] sm:$0xff] %v2192
  %2299 = vst [vmem:[%s2 + $0x40] sm:$0xff] %v2197
  %2300 = vst [vmem:[%s2 + $0x48] sm:$0xff] %v2200
  %2301 = vst [vmem:[%s2 + $0x50] sm:$0xff] %v2205
  %2302 = vst [vmem:[%s2 + $0x58] sm:$0xff] %v2208
  %2303 = vst [vmem:[%s2 + $0x60] sm:$0xff] %v2213
  %2304 = vst [vmem:[%s2 + $0x68] sm:$0xff] %v2216
  %2305 = vst [vmem:[%s2 + $0x70] sm:$0xff] %v2221
  %2306 = vst [vmem:[%s2 + $0x78] sm:$0xff] %v2224
  %2307 = vst [vmem:[%s2 + $0x80] sm:$0xff] %v2229
  %2308 = vst [vmem:[%s2 + $0x88] sm:$0xff] %v2232
  %2309 = vst [vmem:[%s2 + $0x90] sm:$0xff] %v2237
  %2310 = vst [vmem:[%s2 + $0x98] sm:$0xff] %v2240
  %2311 = vst [vmem:[%s2 + $0xa0] sm:$0xff] %v2245
  %2312 = vst [vmem:[%s2 + $0xa8] sm:$0xff] %v2248
  %2313 = vst [vmem:[%s2 + $0xb0] sm:$0xff] %v2253
  %2314 = vst [vmem:[%s2 + $0xb8] sm:$0xff] %v2256
  %2315 = vst [vmem:[%s2 + $0xc0] sm:$0xff] %v2261
  %2316 = vst [vmem:[%s2 + $0xc8] sm:$0xff] %v2264
  %2317 = vst [vmem:[%s2 + $0xd0] sm:$0xff] %v2269
  %2318 = vst [vmem:[%s2 + $0xd8] sm:$0xff] %v2272
  %2319 = vst [vmem:[%s2 + $0xe0] sm:$0xff] %v2277
  %2320 = vst [vmem:[%s2 + $0xe8] sm:$0xff] %v2280
  %2321 = vst [vmem:[%s2 + $0xf0] sm:$0xff] %v2285
  %2322 = vst [vmem:[%s2 + $0xf8] sm:$0xff] %v2288
  %v2323 = vadd.f32 %v2165, %v2168
  %v2324 = vadd.f32 %v2323, %v2173
  %v2325 = vadd.f32 %v2324, %v2176
  %v2326 = vadd.f32 %v2325, %v2181
  %v2327 = vadd.f32 %v2326, %v2184
  %v2328 = vadd.f32 %v2327, %v2189
  %v2329 = vadd.f32 %v2328, %v2192
  %v2330 = vadd.f32 %v2329, %v2197
  %v2331 = vadd.f32 %v2330, %v2200
  %v2332 = vadd.f32 %v2331, %v2205
  %v2333 = vadd.f32 %v2332, %v2208
  %v2334 = vadd.f32 %v2333, %v2213
  %v2335 = vadd.f32 %v2334, %v2216
  %v2336 = vadd.f32 %v2335, %v2221
  %v2337 = vadd.f32 %v2336, %v2224
  %v2338 = vadd.f32 %v2337, %v2229
  %v2339 = vadd.f32 %v2338, %v2232
  %v2340 = vadd.f32 %v2339, %v2237
  %v2341 = vadd.f32 %v2340, %v2240
  %v2342 = vadd.f32 %v2341, %v2245
  %v2343 = vadd.f32 %v2342, %v2248
  %v2344 = vadd.f32 %v2343, %v2253
  %v2345 = vadd.f32 %v2344, %v2256
  %v2346 = vadd.f32 %v2345, %v2261
  %v2347 = vadd.f32 %v2346, %v2264
  %v2348 = vadd.f32 %v2347, %v2269
  %v2349 = vadd.f32 %v2348, %v2272
  %v2350 = vadd.f32 %v2349, %v2277
  %v2351 = vadd.f32 %v2350, %v2280
  %v2352 = vadd.f32 %v2351, %v2285
  %v2353 = vadd.f32 %v2352, %v2288
  %v2354 = vrot.slane %v2353, 4
  %v2355 = vadd.f32 %v2353, %v2354
  %v2356 = vrot.slane %v2355, 2
  %v2357 = vadd.f32 %v2355, %v2356
  %v2358 = vrot.slane %v2357, 1
  %v2359 = vadd.f32 %v2357, %v2358
  %v2360 = vmul.f32 %v2165, %v2165
  %v2361 = vmul.f32 %v2168, %v2168
  %v2362 = vmul.f32 %v2173, %v2173
  %v2363 = vmul.f32 %v2176, %v2176
  %v2364 = vmul.f32 %v2181, %v2181
  %v2365 = vmul.f32 %v2184, %v2184
  %v2366 = vmul.f32 %v2189, %v2189
  %v2367 = vmul.f32 %v2192, %v2192
  %v2368 = vmul.f32 %v2197, %v2197
  %v2369 = vmul.f32 %v2200, %v2200
  %v2370 = vmul.f32 %v2205, %v2205
  %v2371 = vmul.f32 %v2208, %v2208
  %v2372 = vmul.f32 %v2213, %v2213
  %v2373 = vmul.f32 %v2216, %v2216
  %v2374 = vmul.f32 %v2221, %v2221
  %v2375 = vmul.f32 %v2224, %v2224
  %v2376 = vmul.f32 %v2229, %v2229
  %v2377 = vmul.f32 %v2232, %v2232
  %v2378 = vmul.f32 %v2237, %v2237
  %v2379 = vmul.f32 %v2240, %v2240
  %v2380 = vmul.f32 %v2245, %v2245
  %v2381 = vmul.f32 %v2248, %v2248
  %v2382 = vmul.f32 %v2253, %v2253
  %v2383 = vmul.f32 %v2256, %v2256
  %v2384 = vmul.f32 %v2261, %v2261
  %v2385 = vmul.f32 %v2264, %v2264
  %v2386 = vmul.f32 %v2269, %v2269
  %v2387 = vmul.f32 %v2272, %v2272
  %v2388 = vmul.f32 %v2277, %v2277
  %v2389 = vmul.f32 %v2280, %v2280
  %v2390 = vmul.f32 %v2285, %v2285
  %v2391 = vmul.f32 %v2288, %v2288
  %v2392 = vadd.f32 %v2360, %v2361
  %v2393 = vadd.f32 %v2392, %v2362
  %v2394 = vadd.f32 %v2393, %v2363
  %v2395 = vadd.f32 %v2394, %v2364
  %v2396 = vadd.f32 %v2395, %v2365
  %v2397 = vadd.f32 %v2396, %v2366
  %v2398 = vadd.f32 %v2397, %v2367
  %v2399 = vadd.f32 %v2398, %v2368
  %v2400 = vadd.f32 %v2399, %v2369
  %v2401 = vadd.f32 %v2400, %v2370
  %v2402 = vadd.f32 %v2401, %v2371
  %v2403 = vadd.f32 %v2402, %v2372
  %v2404 = vadd.f32 %v2403, %v2373
  %v2405 = vadd.f32 %v2404, %v2374
  %v2406 = vadd.f32 %v2405, %v2375
  %v2407 = vadd.f32 %v2406, %v2376
  %v2408 = vadd.f32 %v2407, %v2377
  %v2409 = vadd.f32 %v2408, %v2378
  %v2410 = vadd.f32 %v2409, %v2379
  %v2411 = vadd.f32 %v2410, %v2380
  %v2412 = vadd.f32 %v2411, %v2381
  %v2413 = vadd.f32 %v2412, %v2382
  %v2414 = vadd.f32 %v2413, %v2383
  %v2415 = vadd.f32 %v2414, %v2384
  %v2416 = vadd.f32 %v2415, %v2385
  %v2417 = vadd.f32 %v2416, %v2386
  %v2418 = vadd.f32 %v2417, %v2387
  %v2419 = vadd.f32 %v2418, %v2388
  %v2420 = vadd.f32 %v2419, %v2389
  %v2421 = vadd.f32 %v2420, %v2390
  %v2422 = vadd.f32 %v2421, %v2391
  %v2423 = vrot.slane %v2422, 4
  %v2424 = vadd.f32 %v2422, %v2423
  %v2425 = vrot.slane %v2424, 2
  %v2426 = vadd.f32 %v2424, %v2425
  %v2427 = vrot.slane %v2426, 1
  %v2428 = vadd.f32 %v2426, %v2427
  %vm2429 = vcmask 1040384
  %v2430 = vsel %vm2429, %v2359, %v2428
  %2431 = vst [vmem:[%s3] sm:$0x3] %v2430
  // Predicated region
  $region10: #{_lambda_.28} parent=0 // pred_check
    _
  $region11: #{_lambda_.28} parent=0 // pred_check_branch
    %2433 = sbr.rel (0) target = $region13
  $region12: #{_lambda_.28} parent=0 // pred_region
    _
  $region13: #{_lambda_.28} parent=0 // pred_fallthru
    _
  // Predicated region
  $region14: #{_lambda_.28} parent=0 // pred_check
    _
  $region15: #{_lambda_.28} parent=0 // pred_check_branch
    %2435 = sbr.rel (0) target = $region17
  $region16: #{_lambda_.28} parent=0 // pred_region
    _
  $region17: #{_lambda_.28} parent=0 // pred_fallthru
    _
  // Predicated region
  $region18: #{_lambda_.28} parent=0 // pred_check
    _
  $region19: #{_lambda_.28} parent=0 // pred_check_branch
    %2437 = sbr.rel (0) target = $region21
  $region20: #{_lambda_.28} parent=0 // pred_region
    _
  $region21: #{_lambda_.28} parent=0 // pred_fallthru
    _
  // Predicated region
  $region22: #{_lambda_.28} parent=0 // pred_check
    _
  $region23: #{_lambda_.28} parent=0 // pred_check_branch
    %2439 = sbr.rel (0) target = $region25
  $region24: #{_lambda_.28} parent=0 // pred_region
    _
  $region25: #{_lambda_.28} parent=0 // pred_fallthru
    _

</llo_original>
